<compile_context>
chip_gen: v6e
topology: v6e:2x2x1
jax: 0.10.0
libtpu: 0.0.40
codegen_flags: <defaults>
</compile_context>

<pallas_src>
import functools
import math

import jax
import jax.numpy as jnp
from jax.experimental import pallas as pl
from jax.experimental.pallas import tpu as pltpu


def _silu(v):
    # act used by the score-model ResBlockpp (nn.SiLU / swish).
    return v * jax.nn.sigmoid(v)


def _group_norm_2d(v, gsum, gbcast, gamma, beta, eps):
    """GroupNorm on a flattened (N, C) tile, exact two-pass variance.

    gsum:   (C, G) with 1/Cg at each (channel, its-group) entry.
    gbcast: (G, C) 0/1 membership (broadcast group stats back to channels).
    """
    mean_c = jnp.mean(v, axis=0, keepdims=True)                     # (1, C)
    mean_ch = jnp.dot(jnp.dot(mean_c, gsum, preferred_element_type=jnp.float32),
                      gbcast, preferred_element_type=jnp.float32)   # (1, C)
    d = v - mean_ch
    var_c = jnp.mean(d * d, axis=0, keepdims=True)                  # (1, C)
    var_ch = jnp.dot(jnp.dot(var_c, gsum, preferred_element_type=jnp.float32),
                     gbcast, preferred_element_type=jnp.float32)    # (1, C)
    return d * jax.lax.rsqrt(var_ch + eps) * gamma + beta


def _conv3x3_from_padded(pad_ref, w_ref, H, W):
    """3x3 conv (stride 1, pad 1) as 9 shifted matmuls.

    pad_ref: (H+2, W+2, Cin) VMEM scratch holding the zero-padded input.
    w_ref:   (9, Cin, Cout) taps in ky*3+kx order (HWIO flattened).
    Returns (H*W, Cout) f32 (no bias).
    """
    n = H * W
    cin = pad_ref.shape[-1]
    cout = w_ref.shape[-1]
    acc = jnp.zeros((n, cout), jnp.float32)
    for ky in range(3):
        for kx in range(3):
            win = pad_ref[pl.ds(ky, H), pl.ds(kx, W), :].reshape(n, cin)
            acc = acc + jnp.dot(win, w_ref[ky * 3 + kx],
                                preferred_element_type=jnp.float32)
    return acc


def _resblockpp_kernel(x_ref, tb_ref,
                       gamma0_ref, beta0_ref, gsum0_ref, gbcast0_ref,
                       w0_ref, b0_ref,
                       gamma1_ref, beta1_ref, gsum1_ref, gbcast1_ref,
                       w1_ref, b1_ref, w2_ref, b2_ref,
                       o_ref, pad0_ref, pad1_ref,
                       *, eps, skip_rescale, use_conv_shortcut, H, W):
    N = H * W
    Cin = x_ref.shape[-1]
    Cout = o_ref.shape[-1]

    x = x_ref[0].astype(jnp.float32).reshape(N, Cin)                 # (N, Cin)

    # ---- GroupNorm_0 (two-pass variance) + SiLU -----------------------------
    h = _group_norm_2d(x, gsum0_ref[...], gbcast0_ref[...],
                       gamma0_ref[...], beta0_ref[...], eps)
    h = _silu(h)

    # ---- Conv_0: 3x3, pad 1, via zero-padded VMEM scratch -------------------
    pad0_ref[...] = jnp.zeros_like(pad0_ref)
    pad0_ref[pl.ds(1, H), pl.ds(1, W), :] = h.reshape(H, W, Cin)
    h = _conv3x3_from_padded(pad0_ref, w0_ref, H, W)                 # (N, Cout)
    h = h + b0_ref[...] + tb_ref[0]                                  # conv bias + temb bias

    # ---- GroupNorm_1 + SiLU + dropout (eval-mode identity) ------------------
    h = _group_norm_2d(h, gsum1_ref[...], gbcast1_ref[...],
                       gamma1_ref[...], beta1_ref[...], eps)
    h = _silu(h)
    # TODO(synk): training-mode Dropout_0 (p=0.1) not implemented (eval-mode
    # identity); would need pltpu.prng_seed + pltpu.prng_random_bits masking.

    # ---- Conv_1: 3x3, pad 1 --------------------------------------------------
    pad1_ref[...] = jnp.zeros_like(pad1_ref)
    pad1_ref[pl.ds(1, H), pl.ds(1, W), :] = h.reshape(H, W, Cout)
    h = _conv3x3_from_padded(pad1_ref, w1_ref, H, W) + b1_ref[...]   # (N, Cout)

    # ---- shortcut (1x1 conv when in_ch != out_ch or up/down) + residual -----
    if use_conv_shortcut:
        xs = jnp.dot(x, w2_ref[...], preferred_element_type=jnp.float32) + b2_ref[...]
    else:
        xs = x
    out = xs + h
    if skip_rescale:
        out = out * (1.0 / math.sqrt(2.0))
    o_ref[0] = out.reshape(H, W, Cout).astype(o_ref.dtype)


def _group_mats(C, G):
    Cg = C // G
    gid = jnp.arange(C) // Cg
    onehot = (gid[:, None] == jnp.arange(G)[None, :]).astype(jnp.float32)  # (C, G)
    return onehot / float(Cg), onehot.T


def _rep_spec(shape):
    nd = len(shape)

    def imap(b):
        return (0,) * nd

    return pl.BlockSpec(shape, imap)


def resblockpp_pallas(x_nchw, params, temb=None, *, skip_rescale=True,
                      eps=1e-6, up=False, down=False):
    B, Cin, H, W = x_nchw.shape
    Cout = params["b0"].shape[0]
    G0, G1 = min(Cin // 4, 32), min(Cout // 4, 32)
    assert G0 >= 1 and G1 >= 1
    assert Cin % G0 == 0 and Cout % G1 == 0, "channels must be divisible by groups"
    use_conv_shortcut = (Cin != Cout) or up or down
    # TODO(synk): up/down in this module's forward only toggle the 1x1 shortcut
    # conv (no FIR resampling in ResBlockpp.forward), which is what we implement.

    x_nhwc = jnp.transpose(x_nchw, (0, 2, 3, 1))                     # (B, H, W, Cin)

    # Tiny per-batch temb projection in plain XLA (keeps 1-row matmuls out of
    # the hot kernel).  Zero when temb is None.
    if temb is not None:
        tb = _silu(temb.astype(jnp.float32)) @ params["wd"] + params["bd"]
    else:
        tb = jnp.zeros((B, Cout), jnp.float32)
    tb = tb.reshape(B, 1, Cout)

    gsum0, gbcast0 = _group_mats(Cin, G0)
    gsum1, gbcast1 = _group_mats(Cout, G1)

    w0t = params["w0"].reshape(9, Cin, Cout).astype(jnp.float32)     # HWIO flattened
    w1t = params["w1"].reshape(9, Cout, Cout).astype(jnp.float32)
    if use_conv_shortcut:
        w2 = params["w2"].astype(jnp.float32)
        b2 = params["b2"].astype(jnp.float32)
    else:
        w2 = jnp.zeros((Cin, Cout), jnp.float32)                     # unused
        b2 = jnp.zeros((Cout,), jnp.float32)

    kernel = functools.partial(_resblockpp_kernel, eps=eps,
                               skip_rescale=skip_rescale,
                               use_conv_shortcut=use_conv_shortcut, H=H, W=W)

    out_nhwc = pl.pallas_call(
        kernel,
        out_shape=jax.ShapeDtypeStruct((B, H, W, Cout), x_nchw.dtype),
        grid_spec=pltpu.PrefetchScalarGridSpec(
            num_scalar_prefetch=0,
            grid=(B,),
            in_specs=[
                pl.BlockSpec((1, H, W, Cin), lambda b: (b, 0, 0, 0)),   # x
                pl.BlockSpec((1, 1, Cout), lambda b: (b, 0, 0)),        # temb bias
                _rep_spec((1, Cin)), _rep_spec((1, Cin)),               # gamma0, beta0
                _rep_spec((Cin, G0)), _rep_spec((G0, Cin)),             # group mats 0
                _rep_spec((9, Cin, Cout)), _rep_spec((1, Cout)),        # w0, b0
                _rep_spec((1, Cout)), _rep_spec((1, Cout)),             # gamma1, beta1
                _rep_spec((Cout, G1)), _rep_spec((G1, Cout)),           # group mats 1
                _rep_spec((9, Cout, Cout)), _rep_spec((1, Cout)),       # w1, b1
                _rep_spec((Cin, Cout)), _rep_spec((1, Cout)),           # w2, b2
            ],
            out_specs=pl.BlockSpec((1, H, W, Cout), lambda b: (b, 0, 0, 0)),
            scratch_shapes=[pltpu.VMEM((H + 2, W + 2, Cin), jnp.float32),
                            pltpu.VMEM((H + 2, W + 2, Cout), jnp.float32)],
        ),
        compiler_params=pltpu.CompilerParams(
            dimension_semantics=("parallel",),       # batch across TCs (v7x)
            vmem_limit_bytes=64 * 1024 * 1024,       # fits all generations
        ),
    )(x_nhwc, tb,
      params["gamma0"].reshape(1, Cin).astype(jnp.float32),
      params["beta0"].reshape(1, Cin).astype(jnp.float32),
      gsum0, gbcast0, w0t, params["b0"].reshape(1, Cout).astype(jnp.float32),
      params["gamma1"].reshape(1, Cout).astype(jnp.float32),
      params["beta1"].reshape(1, Cout).astype(jnp.float32),
      gsum1, gbcast1, w1t, params["b1"].reshape(1, Cout).astype(jnp.float32),
      w2, b2.reshape(1, Cout))

    return jnp.transpose(out_nhwc, (0, 3, 1, 2))


# ------------------------------ pure-JAX reference ---------------------------
def resblockpp_reference(x_nchw, params, temb=None, *, skip_rescale=True,
                         eps=1e-6, up=False, down=False):
    B, Cin, H, W = x_nchw.shape
    Cout = params["b0"].shape[0]
    G0, G1 = min(Cin // 4, 32), min(Cout // 4, 32)
    x = jnp.transpose(x_nchw, (0, 2, 3, 1)).astype(jnp.float32)      # NHWC

    def gn(v, gamma, beta, G):
        b, h, w, c = v.shape
        vg = v.reshape(b, h, w, G, c // G)
        mean = vg.mean(axis=(1, 2, 4), keepdims=True)
        var = ((vg - mean) ** 2).mean(axis=(1, 2, 4), keepdims=True)
        vn = ((vg - mean) / jnp.sqrt(var + eps)).reshape(b, h, w, c)
        return vn * gamma[None, None, None, :] + beta[None, None, None, :]

    h = _silu(gn(x, params["gamma0"], params["beta0"], G0))
    h = jax.lax.conv_general_dilated(
        h, params["w0"], (1, 1), "SAME",
        dimension_numbers=("NHWC", "HWIO", "NHWC")) + params["b0"]
    if temb is not None:
        tbias = _silu(temb.astype(jnp.float32)) @ params["wd"] + params["bd"]
        h = h + tbias[:, None, None, :]
    h = _silu(gn(h, params["gamma1"], params["beta1"], G1))
    # dropout: identity in eval mode
    h = jax.lax.conv_general_dilated(
        h, params["w1"], (1, 1), "SAME",
        dimension_numbers=("NHWC", "HWIO", "NHWC")) + params["b1"]
    if (Cin != Cout) or up or down:
        xs = jnp.einsum("bhwc,cd->bhwd", x, params["w2"]) + params["b2"]
    else:
        xs = x
    out = xs + h
    if skip_rescale:
        out = out / jnp.sqrt(2.0)
    return jnp.transpose(out, (0, 3, 1, 2))


# ------------------------- deterministic param init --------------------------
def _fan_avg_uniform(key, shape, fan_in, fan_out, scale=1.0):
    scale = 1e-10 if scale == 0 else scale
    bound = math.sqrt(3.0 * scale / ((fan_in + fan_out) / 2.0))
    return jax.random.uniform(key, shape, jnp.float32, -bound, bound)


def make_params(key, Cin, Cout, temb_dim):
    ks = jax.random.split(key, 12)
    # NOTE: the module's default init_scale=0.0 for Conv_1 would make its
    # weights ~1e-10; we use 0.1 so the second-conv path is numerically
    # exercised (init values are not part of the forward semantics).
    return {
        "gamma0": 1.0 + 0.1 * jax.random.normal(ks[0], (Cin,), jnp.float32),
        "beta0": 0.1 * jax.random.normal(ks[1], (Cin,), jnp.float32),
        "w0": _fan_avg_uniform(ks[2], (3, 3, Cin, Cout), 9 * Cin, 9 * Cout, 1.0),
        "b0": 0.05 * jax.random.normal(ks[3], (Cout,), jnp.float32),
        "wd": _fan_avg_uniform(ks[4], (temb_dim, Cout), temb_dim, Cout, 1.0),
        "bd": 0.05 * jax.random.normal(ks[5], (Cout,), jnp.float32),
        "gamma1": 1.0 + 0.1 * jax.random.normal(ks[6], (Cout,), jnp.float32),
        "beta1": 0.1 * jax.random.normal(ks[7], (Cout,), jnp.float32),
        "w1": _fan_avg_uniform(ks[8], (3, 3, Cout, Cout), 9 * Cout, 9 * Cout, 0.1),
        "b1": 0.05 * jax.random.normal(ks[9], (Cout,), jnp.float32),
        "w2": _fan_avg_uniform(ks[10], (Cin, Cout), Cin, Cout, 1.0),
        "b2": 0.05 * jax.random.normal(ks[11], (Cout,), jnp.float32),
    }


if __name__ == "__main__":
    key = jax.random.PRNGKey(0)
    B, Cin, Cout, H, W, temb_dim = 2, 4, 8, 16, 16, 32
    kx, kt, kp = jax.random.split(key, 3)
    x = jax.random.normal(kx, (B, Cin, H, W), jnp.float32)
    temb = jax.random.normal(kt, (B, temb_dim), jnp.float32)
    params = make_params(kp, Cin, Cout, temb_dim)

    out = resblockpp_pallas(x, params, temb, skip_rescale=True)
    out = jax.block_until_ready(out)

    ref = resblockpp_reference(x, params, temb, skip_rescale=True)
    assert out.shape == (B, Cout, H, W)
    err = float(jnp.max(jnp.abs(out - ref)))
    assert jnp.allclose(out, ref, atol=2e-4, rtol=2e-4), f"max abs err {err}"

    print("KERNEL_OK")
</pallas_src>

<mosaic_0001>
module attributes {stable_mosaic.version = 11 : i64} {
  func.func @_resblockpp_kernel(%arg0: i32, %arg1: memref<1x16x16x4xf32, #tpu.memory_space<vmem>>, %arg2: memref<1x1x8xf32, #tpu.memory_space<vmem>>, %arg3: memref<1x4xf32, #tpu.memory_space<vmem>>, %arg4: memref<1x4xf32, #tpu.memory_space<vmem>>, %arg5: memref<4x1xf32, #tpu.memory_space<vmem>>, %arg6: memref<1x4xf32, #tpu.memory_space<vmem>>, %arg7: memref<9x4x8xf32, #tpu.memory_space<vmem>>, %arg8: memref<1x8xf32, #tpu.memory_space<vmem>>, %arg9: memref<1x8xf32, #tpu.memory_space<vmem>>, %arg10: memref<1x8xf32, #tpu.memory_space<vmem>>, %arg11: memref<8x2xf32, #tpu.memory_space<vmem>>, %arg12: memref<2x8xf32, #tpu.memory_space<vmem>>, %arg13: memref<9x8x8xf32, #tpu.memory_space<vmem>>, %arg14: memref<1x8xf32, #tpu.memory_space<vmem>>, %arg15: memref<4x8xf32, #tpu.memory_space<vmem>>, %arg16: memref<1x8xf32, #tpu.memory_space<vmem>>, %arg17: memref<1x16x16x8xf32, #tpu.memory_space<vmem>>, %arg18: memref<18x18x4xf32, #tpu.memory_space<vmem>>, %arg19: memref<18x18x8xf32, #tpu.memory_space<vmem>>) attributes {dimension_semantics = [#tpu.dimension_semantics<parallel>], iteration_bounds = array<i64: 2>, scalar_prefetch = 0 : i64, scratch_operands = 2 : i64, tpu.core_type = #tpu.core_type<tc>, window_params = [{transform_indices = @transform_0, window_bounds = array<i64: 1, 16, 16, 4>}, {transform_indices = @transform_1, window_bounds = array<i64: 1, 1, 8>}, {pipeline_mode = #tpu.pipeline_mode<synchronous>, transform_indices = @transform_2, window_bounds = array<i64: 1, 4>}, {pipeline_mode = #tpu.pipeline_mode<synchronous>, transform_indices = @transform_3, window_bounds = array<i64: 1, 4>}, {pipeline_mode = #tpu.pipeline_mode<synchronous>, transform_indices = @transform_4, window_bounds = array<i64: 4, 1>}, {pipeline_mode = #tpu.pipeline_mode<synchronous>, transform_indices = @transform_5, window_bounds = array<i64: 1, 4>}, {pipeline_mode = #tpu.pipeline_mode<synchronous>, transform_indices = @transform_6, window_bounds = array<i64: 9, 4, 8>}, {pipeline_mode = #tpu.pipeline_mode<synchronous>, transform_indices = @transform_7, window_bounds = array<i64: 1, 8>}, {pipeline_mode = #tpu.pipeline_mode<synchronous>, transform_indices = @transform_8, window_bounds = array<i64: 1, 8>}, {pipeline_mode = #tpu.pipeline_mode<synchronous>, transform_indices = @transform_9, window_bounds = array<i64: 1, 8>}, {pipeline_mode = #tpu.pipeline_mode<synchronous>, transform_indices = @transform_10, window_bounds = array<i64: 8, 2>}, {pipeline_mode = #tpu.pipeline_mode<synchronous>, transform_indices = @transform_11, window_bounds = array<i64: 2, 8>}, {pipeline_mode = #tpu.pipeline_mode<synchronous>, transform_indices = @transform_12, window_bounds = array<i64: 9, 8, 8>}, {pipeline_mode = #tpu.pipeline_mode<synchronous>, transform_indices = @transform_13, window_bounds = array<i64: 1, 8>}, {pipeline_mode = #tpu.pipeline_mode<synchronous>, transform_indices = @transform_14, window_bounds = array<i64: 4, 8>}, {pipeline_mode = #tpu.pipeline_mode<synchronous>, transform_indices = @transform_15, window_bounds = array<i64: 1, 8>}, {transform_indices = @transform_16, window_bounds = array<i64: 1, 16, 16, 8>}]} {
    %c0 = arith.constant 0 : index
    %c0_0 = arith.constant 0 : index
    %c0_1 = arith.constant 0 : index
    %c0_2 = arith.constant 0 : index
    %0 = vector.load %arg1[%c0, %c0_0, %c0_1, %c0_2] : memref<1x16x16x4xf32, #tpu.memory_space<vmem>>, vector<1x16x16x4xf32>
    %1 = vector.shape_cast %0 : vector<1x16x16x4xf32> to vector<16x16x4xf32>
    %2 = vector.shape_cast %1 : vector<16x16x4xf32> to vector<256x4xf32>
    %c0_3 = arith.constant 0 : index
    %c0_4 = arith.constant 0 : index
    %3 = vector.load %arg5[%c0_3, %c0_4] : memref<4x1xf32, #tpu.memory_space<vmem>>, vector<4x1xf32>
    %c0_5 = arith.constant 0 : index
    %c0_6 = arith.constant 0 : index
    %4 = vector.load %arg6[%c0_5, %c0_6] : memref<1x4xf32, #tpu.memory_space<vmem>>, vector<1x4xf32>
    %c0_7 = arith.constant 0 : index
    %c0_8 = arith.constant 0 : index
    %5 = vector.load %arg3[%c0_7, %c0_8] : memref<1x4xf32, #tpu.memory_space<vmem>>, vector<1x4xf32>
    %c0_9 = arith.constant 0 : index
    %c0_10 = arith.constant 0 : index
    %6 = vector.load %arg4[%c0_9, %c0_10] : memref<1x4xf32, #tpu.memory_space<vmem>>, vector<1x4xf32>
    %cst = arith.constant dense<0.000000e+00> : vector<4xf32>
    %7 = vector.multi_reduction <add>, %2, %cst [0] : vector<256x4xf32> to vector<4xf32>
    %8 = vector.shape_cast %7 : vector<4xf32> to vector<1x4xf32>
    %cst_11 = arith.constant 2.560000e+02 : f32
    %9 = vector.broadcast %cst_11 : f32 to vector<1x4xf32>
    %10 = arith.divf %8, %9 : vector<1x4xf32>
    %cst_12 = arith.constant dense<0.000000e+00> : vector<1x1xf32>
    %11 = tpu.matmul %10, %3, %cst_12 {dimension_numbers = #tpu.dot_dimension_numbers<[1], [0], [0], [1], [0, 0, 1, 1], [], []>} : vector<1x4xf32>, vector<4x1xf32>, vector<1x1xf32> -> vector<1x1xf32>
    %cst_13 = arith.constant dense<0.000000e+00> : vector<1x4xf32>
    %12 = tpu.matmul %11, %4, %cst_13 {dimension_numbers = #tpu.dot_dimension_numbers<[1], [0], [0], [1], [0, 0, 1, 1], [], []>} : vector<1x1xf32>, vector<1x4xf32>, vector<1x4xf32> -> vector<1x4xf32>
    %13 = vector.broadcast %12 : vector<1x4xf32> to vector<256x4xf32>
    %14 = arith.subf %2, %13 : vector<256x4xf32>
    %15 = arith.mulf %14, %14 : vector<256x4xf32>
    %cst_14 = arith.constant dense<0.000000e+00> : vector<4xf32>
    %16 = vector.multi_reduction <add>, %15, %cst_14 [0] : vector<256x4xf32> to vector<4xf32>
    %17 = vector.shape_cast %16 : vector<4xf32> to vector<1x4xf32>
    %cst_15 = arith.constant 2.560000e+02 : f32
    %18 = vector.broadcast %cst_15 : f32 to vector<1x4xf32>
    %19 = arith.divf %17, %18 : vector<1x4xf32>
    %cst_16 = arith.constant dense<0.000000e+00> : vector<1x1xf32>
    %20 = tpu.matmul %19, %3, %cst_16 {dimension_numbers = #tpu.dot_dimension_numbers<[1], [0], [0], [1], [0, 0, 1, 1], [], []>} : vector<1x4xf32>, vector<4x1xf32>, vector<1x1xf32> -> vector<1x1xf32>
    %cst_17 = arith.constant dense<0.000000e+00> : vector<1x4xf32>
    %21 = tpu.matmul %20, %4, %cst_17 {dimension_numbers = #tpu.dot_dimension_numbers<[1], [0], [0], [1], [0, 0, 1, 1], [], []>} : vector<1x1xf32>, vector<1x4xf32>, vector<1x4xf32> -> vector<1x4xf32>
    %cst_18 = arith.constant 9.99999997E-7 : f32
    %22 = vector.broadcast %cst_18 : f32 to vector<1x4xf32>
    %23 = arith.addf %21, %22 : vector<1x4xf32>
    %24 = math.rsqrt %23 : vector<1x4xf32>
    %25 = vector.broadcast %24 : vector<1x4xf32> to vector<256x4xf32>
    %26 = arith.mulf %14, %25 : vector<256x4xf32>
    %27 = vector.broadcast %5 : vector<1x4xf32> to vector<256x4xf32>
    %28 = arith.mulf %26, %27 : vector<256x4xf32>
    %29 = vector.broadcast %6 : vector<1x4xf32> to vector<256x4xf32>
    %30 = arith.addf %28, %29 : vector<256x4xf32>
    %31 = arith.negf %30 : vector<256x4xf32>
    %32 = math.exp %31 : vector<256x4xf32>
    %cst_19 = arith.constant 1.000000e+00 : f32
    %33 = vector.broadcast %cst_19 : f32 to vector<256x4xf32>
    %34 = arith.addf %33, %32 : vector<256x4xf32>
    %35 = arith.divf %33, %34 : vector<256x4xf32>
    %36 = arith.mulf %30, %35 : vector<256x4xf32>
    %cst_20 = arith.constant 0.000000e+00 : f32
    %37 = vector.broadcast %cst_20 : f32 to vector<18x18x4xf32>
    %c0_21 = arith.constant 0 : index
    %c0_22 = arith.constant 0 : index
    %c0_23 = arith.constant 0 : index
    %38 = vector.load %arg18[%c0_21, %c0_22, %c0_23] : memref<18x18x4xf32, #tpu.memory_space<vmem>>, vector<18x18x4xf32>
    tpu.vector_store %arg18[%c0_21, %c0_22, %c0_23], %37 {strides = array<i32>} : memref<18x18x4xf32, #tpu.memory_space<vmem>>, vector<18x18x4xf32>,
    %39 = vector.shape_cast %36 : vector<256x4xf32> to vector<16x16x4xf32>
    %c1 = arith.constant 1 : index
    %c1_24 = arith.constant 1 : index
    %c0_25 = arith.constant 0 : index
    %40 = vector.load %arg18[%c1, %c1_24, %c0_25] : memref<18x18x4xf32, #tpu.memory_space<vmem>>, vector<16x16x4xf32>
    tpu.vector_store %arg18[%c1, %c1_24, %c0_25], %39 {strides = array<i32>} : memref<18x18x4xf32, #tpu.memory_space<vmem>>, vector<16x16x4xf32>,
    %cst_26 = arith.constant 0.000000e+00 : f32
    %41 = vector.broadcast %cst_26 : f32 to vector<256x8xf32>
    %c0_27 = arith.constant 0 : index
    %c0_28 = arith.constant 0 : index
    %c0_29 = arith.constant 0 : index
    %42 = vector.load %arg18[%c0_27, %c0_28, %c0_29] : memref<18x18x4xf32, #tpu.memory_space<vmem>>, vector<16x16x4xf32>
    %43 = vector.shape_cast %42 : vector<16x16x4xf32> to vector<256x4xf32>
    %c0_30 = arith.constant 0 : index
    %c0_31 = arith.constant 0 : index
    %c0_32 = arith.constant 0 : index
    %44 = vector.load %arg7[%c0_30, %c0_31, %c0_32] : memref<9x4x8xf32, #tpu.memory_space<vmem>>, vector<1x4x8xf32>
    %45 = vector.shape_cast %44 : vector<1x4x8xf32> to vector<4x8xf32>
    %cst_33 = arith.constant dense<0.000000e+00> : vector<256x8xf32>
    %46 = tpu.matmul %43, %45, %cst_33 {dimension_numbers = #tpu.dot_dimension_numbers<[1], [0], [0], [1], [0, 0, 1, 1], [], []>} : vector<256x4xf32>, vector<4x8xf32>, vector<256x8xf32> -> vector<256x8xf32>
    %47 = arith.addf %41, %46 : vector<256x8xf32>
    %c0_34 = arith.constant 0 : index
    %c1_35 = arith.constant 1 : index
    %c0_36 = arith.constant 0 : index
    %48 = vector.load %arg18[%c0_34, %c1_35, %c0_36] : memref<18x18x4xf32, #tpu.memory_space<vmem>>, vector<16x16x4xf32>
    %49 = vector.shape_cast %48 : vector<16x16x4xf32> to vector<256x4xf32>
    %c1_37 = arith.constant 1 : index
    %c0_38 = arith.constant 0 : index
    %c0_39 = arith.constant 0 : index
    %50 = vector.load %arg7[%c1_37, %c0_38, %c0_39] : memref<9x4x8xf32, #tpu.memory_space<vmem>>, vector<1x4x8xf32>
    %51 = vector.shape_cast %50 : vector<1x4x8xf32> to vector<4x8xf32>
    %cst_40 = arith.constant dense<0.000000e+00> : vector<256x8xf32>
    %52 = tpu.matmul %49, %51, %cst_40 {dimension_numbers = #tpu.dot_dimension_numbers<[1], [0], [0], [1], [0, 0, 1, 1], [], []>} : vector<256x4xf32>, vector<4x8xf32>, vector<256x8xf32> -> vector<256x8xf32>
    %53 = arith.addf %47, %52 : vector<256x8xf32>
    %c0_41 = arith.constant 0 : index
    %c2 = arith.constant 2 : index
    %c0_42 = arith.constant 0 : index
    %54 = vector.load %arg18[%c0_41, %c2, %c0_42] : memref<18x18x4xf32, #tpu.memory_space<vmem>>, vector<16x16x4xf32>
    %55 = vector.shape_cast %54 : vector<16x16x4xf32> to vector<256x4xf32>
    %c2_43 = arith.constant 2 : index
    %c0_44 = arith.constant 0 : index
    %c0_45 = arith.constant 0 : index
    %56 = vector.load %arg7[%c2_43, %c0_44, %c0_45] : memref<9x4x8xf32, #tpu.memory_space<vmem>>, vector<1x4x8xf32>
    %57 = vector.shape_cast %56 : vector<1x4x8xf32> to vector<4x8xf32>
    %cst_46 = arith.constant dense<0.000000e+00> : vector<256x8xf32>
    %58 = tpu.matmul %55, %57, %cst_46 {dimension_numbers = #tpu.dot_dimension_numbers<[1], [0], [0], [1], [0, 0, 1, 1], [], []>} : vector<256x4xf32>, vector<4x8xf32>, vector<256x8xf32> -> vector<256x8xf32>
    %59 = arith.addf %53, %58 : vector<256x8xf32>
    %c1_47 = arith.constant 1 : index
    %c0_48 = arith.constant 0 : index
    %c0_49 = arith.constant 0 : index
    %60 = vector.load %arg18[%c1_47, %c0_48, %c0_49] : memref<18x18x4xf32, #tpu.memory_space<vmem>>, vector<16x16x4xf32>
    %61 = vector.shape_cast %60 : vector<16x16x4xf32> to vector<256x4xf32>
    %c3 = arith.constant 3 : index
    %c0_50 = arith.constant 0 : index
    %c0_51 = arith.constant 0 : index
    %62 = vector.load %arg7[%c3, %c0_50, %c0_51] : memref<9x4x8xf32, #tpu.memory_space<vmem>>, vector<1x4x8xf32>
    %63 = vector.shape_cast %62 : vector<1x4x8xf32> to vector<4x8xf32>
    %cst_52 = arith.constant dense<0.000000e+00> : vector<256x8xf32>
    %64 = tpu.matmul %61, %63, %cst_52 {dimension_numbers = #tpu.dot_dimension_numbers<[1], [0], [0], [1], [0, 0, 1, 1], [], []>} : vector<256x4xf32>, vector<4x8xf32>, vector<256x8xf32> -> vector<256x8xf32>
    %65 = arith.addf %59, %64 : vector<256x8xf32>
    %c1_53 = arith.constant 1 : index
    %c1_54 = arith.constant 1 : index
    %c0_55 = arith.constant 0 : index
    %66 = vector.load %arg18[%c1_53, %c1_54, %c0_55] : memref<18x18x4xf32, #tpu.memory_space<vmem>>, vector<16x16x4xf32>
    %67 = vector.shape_cast %66 : vector<16x16x4xf32> to vector<256x4xf32>
    %c4 = arith.constant 4 : index
    %c0_56 = arith.constant 0 : index
    %c0_57 = arith.constant 0 : index
    %68 = vector.load %arg7[%c4, %c0_56, %c0_57] : memref<9x4x8xf32, #tpu.memory_space<vmem>>, vector<1x4x8xf32>
    %69 = vector.shape_cast %68 : vector<1x4x8xf32> to vector<4x8xf32>
    %cst_58 = arith.constant dense<0.000000e+00> : vector<256x8xf32>
    %70 = tpu.matmul %67, %69, %cst_58 {dimension_numbers = #tpu.dot_dimension_numbers<[1], [0], [0], [1], [0, 0, 1, 1], [], []>} : vector<256x4xf32>, vector<4x8xf32>, vector<256x8xf32> -> vector<256x8xf32>
    %71 = arith.addf %65, %70 : vector<256x8xf32>
    %c1_59 = arith.constant 1 : index
    %c2_60 = arith.constant 2 : index
    %c0_61 = arith.constant 0 : index
    %72 = vector.load %arg18[%c1_59, %c2_60, %c0_61] : memref<18x18x4xf32, #tpu.memory_space<vmem>>, vector<16x16x4xf32>
    %73 = vector.shape_cast %72 : vector<16x16x4xf32> to vector<256x4xf32>
    %c5 = arith.constant 5 : index
    %c0_62 = arith.constant 0 : index
    %c0_63 = arith.constant 0 : index
    %74 = vector.load %arg7[%c5, %c0_62, %c0_63] : memref<9x4x8xf32, #tpu.memory_space<vmem>>, vector<1x4x8xf32>
    %75 = vector.shape_cast %74 : vector<1x4x8xf32> to vector<4x8xf32>
    %cst_64 = arith.constant dense<0.000000e+00> : vector<256x8xf32>
    %76 = tpu.matmul %73, %75, %cst_64 {dimension_numbers = #tpu.dot_dimension_numbers<[1], [0], [0], [1], [0, 0, 1, 1], [], []>} : vector<256x4xf32>, vector<4x8xf32>, vector<256x8xf32> -> vector<256x8xf32>
    %77 = arith.addf %71, %76 : vector<256x8xf32>
    %c2_65 = arith.constant 2 : index
    %c0_66 = arith.constant 0 : index
    %c0_67 = arith.constant 0 : index
    %78 = vector.load %arg18[%c2_65, %c0_66, %c0_67] : memref<18x18x4xf32, #tpu.memory_space<vmem>>, vector<16x16x4xf32>
    %79 = vector.shape_cast %78 : vector<16x16x4xf32> to vector<256x4xf32>
    %c6 = arith.constant 6 : index
    %c0_68 = arith.constant 0 : index
    %c0_69 = arith.constant 0 : index
    %80 = vector.load %arg7[%c6, %c0_68, %c0_69] : memref<9x4x8xf32, #tpu.memory_space<vmem>>, vector<1x4x8xf32>
    %81 = vector.shape_cast %80 : vector<1x4x8xf32> to vector<4x8xf32>
    %cst_70 = arith.constant dense<0.000000e+00> : vector<256x8xf32>
    %82 = tpu.matmul %79, %81, %cst_70 {dimension_numbers = #tpu.dot_dimension_numbers<[1], [0], [0], [1], [0, 0, 1, 1], [], []>} : vector<256x4xf32>, vector<4x8xf32>, vector<256x8xf32> -> vector<256x8xf32>
    %83 = arith.addf %77, %82 : vector<256x8xf32>
    %c2_71 = arith.constant 2 : index
    %c1_72 = arith.constant 1 : index
    %c0_73 = arith.constant 0 : index
    %84 = vector.load %arg18[%c2_71, %c1_72, %c0_73] : memref<18x18x4xf32, #tpu.memory_space<vmem>>, vector<16x16x4xf32>
    %85 = vector.shape_cast %84 : vector<16x16x4xf32> to vector<256x4xf32>
    %c7 = arith.constant 7 : index
    %c0_74 = arith.constant 0 : index
    %c0_75 = arith.constant 0 : index
    %86 = vector.load %arg7[%c7, %c0_74, %c0_75] : memref<9x4x8xf32, #tpu.memory_space<vmem>>, vector<1x4x8xf32>
    %87 = vector.shape_cast %86 : vector<1x4x8xf32> to vector<4x8xf32>
    %cst_76 = arith.constant dense<0.000000e+00> : vector<256x8xf32>
    %88 = tpu.matmul %85, %87, %cst_76 {dimension_numbers = #tpu.dot_dimension_numbers<[1], [0], [0], [1], [0, 0, 1, 1], [], []>} : vector<256x4xf32>, vector<4x8xf32>, vector<256x8xf32> -> vector<256x8xf32>
    %89 = arith.addf %83, %88 : vector<256x8xf32>
    %c2_77 = arith.constant 2 : index
    %c2_78 = arith.constant 2 : index
    %c0_79 = arith.constant 0 : index
    %90 = vector.load %arg18[%c2_77, %c2_78, %c0_79] : memref<18x18x4xf32, #tpu.memory_space<vmem>>, vector<16x16x4xf32>
    %91 = vector.shape_cast %90 : vector<16x16x4xf32> to vector<256x4xf32>
    %c8 = arith.constant 8 : index
    %c0_80 = arith.constant 0 : index
    %c0_81 = arith.constant 0 : index
    %92 = vector.load %arg7[%c8, %c0_80, %c0_81] : memref<9x4x8xf32, #tpu.memory_space<vmem>>, vector<1x4x8xf32>
    %93 = vector.shape_cast %92 : vector<1x4x8xf32> to vector<4x8xf32>
    %cst_82 = arith.constant dense<0.000000e+00> : vector<256x8xf32>
    %94 = tpu.matmul %91, %93, %cst_82 {dimension_numbers = #tpu.dot_dimension_numbers<[1], [0], [0], [1], [0, 0, 1, 1], [], []>} : vector<256x4xf32>, vector<4x8xf32>, vector<256x8xf32> -> vector<256x8xf32>
    %95 = arith.addf %89, %94 : vector<256x8xf32>
    %c0_83 = arith.constant 0 : index
    %c0_84 = arith.constant 0 : index
    %96 = vector.load %arg8[%c0_83, %c0_84] : memref<1x8xf32, #tpu.memory_space<vmem>>, vector<1x8xf32>
    %97 = vector.broadcast %96 : vector<1x8xf32> to vector<256x8xf32>
    %98 = arith.addf %95, %97 : vector<256x8xf32>
    %c0_85 = arith.constant 0 : index
    %c0_86 = arith.constant 0 : index
    %c0_87 = arith.constant 0 : index
    %99 = vector.load %arg2[%c0_85, %c0_86, %c0_87] : memref<1x1x8xf32, #tpu.memory_space<vmem>>, vector<1x1x8xf32>
    %100 = vector.shape_cast %99 : vector<1x1x8xf32> to vector<1x8xf32>
    %101 = vector.broadcast %100 : vector<1x8xf32> to vector<256x8xf32>
    %102 = arith.addf %98, %101 : vector<256x8xf32>
    %c0_88 = arith.constant 0 : index
    %c0_89 = arith.constant 0 : index
    %103 = vector.load %arg11[%c0_88, %c0_89] : memref<8x2xf32, #tpu.memory_space<vmem>>, vector<8x2xf32>
    %c0_90 = arith.constant 0 : index
    %c0_91 = arith.constant 0 : index
    %104 = vector.load %arg12[%c0_90, %c0_91] : memref<2x8xf32, #tpu.memory_space<vmem>>, vector<2x8xf32>
    %c0_92 = arith.constant 0 : index
    %c0_93 = arith.constant 0 : index
    %105 = vector.load %arg9[%c0_92, %c0_93] : memref<1x8xf32, #tpu.memory_space<vmem>>, vector<1x8xf32>
    %c0_94 = arith.constant 0 : index
    %c0_95 = arith.constant 0 : index
    %106 = vector.load %arg10[%c0_94, %c0_95] : memref<1x8xf32, #tpu.memory_space<vmem>>, vector<1x8xf32>
    %cst_96 = arith.constant dense<0.000000e+00> : vector<8xf32>
    %107 = vector.multi_reduction <add>, %102, %cst_96 [0] : vector<256x8xf32> to vector<8xf32>
    %108 = vector.shape_cast %107 : vector<8xf32> to vector<1x8xf32>
    %cst_97 = arith.constant 2.560000e+02 : f32
    %109 = vector.broadcast %cst_97 : f32 to vector<1x8xf32>
    %110 = arith.divf %108, %109 : vector<1x8xf32>
    %cst_98 = arith.constant dense<0.000000e+00> : vector<1x2xf32>
    %111 = tpu.matmul %110, %103, %cst_98 {dimension_numbers = #tpu.dot_dimension_numbers<[1], [0], [0], [1], [0, 0, 1, 1], [], []>} : vector<1x8xf32>, vector<8x2xf32>, vector<1x2xf32> -> vector<1x2xf32>
    %cst_99 = arith.constant dense<0.000000e+00> : vector<1x8xf32>
    %112 = tpu.matmul %111, %104, %cst_99 {dimension_numbers = #tpu.dot_dimension_numbers<[1], [0], [0], [1], [0, 0, 1, 1], [], []>} : vector<1x2xf32>, vector<2x8xf32>, vector<1x8xf32> -> vector<1x8xf32>
    %113 = vector.broadcast %112 : vector<1x8xf32> to vector<256x8xf32>
    %114 = arith.subf %102, %113 : vector<256x8xf32>
    %115 = arith.mulf %114, %114 : vector<256x8xf32>
    %cst_100 = arith.constant dense<0.000000e+00> : vector<8xf32>
    %116 = vector.multi_reduction <add>, %115, %cst_100 [0] : vector<256x8xf32> to vector<8xf32>
    %117 = vector.shape_cast %116 : vector<8xf32> to vector<1x8xf32>
    %cst_101 = arith.constant 2.560000e+02 : f32
    %118 = vector.broadcast %cst_101 : f32 to vector<1x8xf32>
    %119 = arith.divf %117, %118 : vector<1x8xf32>
    %cst_102 = arith.constant dense<0.000000e+00> : vector<1x2xf32>
    %120 = tpu.matmul %119, %103, %cst_102 {dimension_numbers = #tpu.dot_dimension_numbers<[1], [0], [0], [1], [0, 0, 1, 1], [], []>} : vector<1x8xf32>, vector<8x2xf32>, vector<1x2xf32> -> vector<1x2xf32>
    %cst_103 = arith.constant dense<0.000000e+00> : vector<1x8xf32>
    %121 = tpu.matmul %120, %104, %cst_103 {dimension_numbers = #tpu.dot_dimension_numbers<[1], [0], [0], [1], [0, 0, 1, 1], [], []>} : vector<1x2xf32>, vector<2x8xf32>, vector<1x8xf32> -> vector<1x8xf32>
    %cst_104 = arith.constant 9.99999997E-7 : f32
    %122 = vector.broadcast %cst_104 : f32 to vector<1x8xf32>
    %123 = arith.addf %121, %122 : vector<1x8xf32>
    %124 = math.rsqrt %123 : vector<1x8xf32>
    %125 = vector.broadcast %124 : vector<1x8xf32> to vector<256x8xf32>
    %126 = arith.mulf %114, %125 : vector<256x8xf32>
    %127 = vector.broadcast %105 : vector<1x8xf32> to vector<256x8xf32>
    %128 = arith.mulf %126, %127 : vector<256x8xf32>
    %129 = vector.broadcast %106 : vector<1x8xf32> to vector<256x8xf32>
    %130 = arith.addf %128, %129 : vector<256x8xf32>
    %131 = arith.negf %130 : vector<256x8xf32>
    %132 = math.exp %131 : vector<256x8xf32>
    %cst_105 = arith.constant 1.000000e+00 : f32
    %133 = vector.broadcast %cst_105 : f32 to vector<256x8xf32>
    %134 = arith.addf %133, %132 : vector<256x8xf32>
    %135 = arith.divf %133, %134 : vector<256x8xf32>
    %136 = arith.mulf %130, %135 : vector<256x8xf32>
    %cst_106 = arith.constant 0.000000e+00 : f32
    %137 = vector.broadcast %cst_106 : f32 to vector<18x18x8xf32>
    %c0_107 = arith.constant 0 : index
    %c0_108 = arith.constant 0 : index
    %c0_109 = arith.constant 0 : index
    %138 = vector.load %arg19[%c0_107, %c0_108, %c0_109] : memref<18x18x8xf32, #tpu.memory_space<vmem>>, vector<18x18x8xf32>
    tpu.vector_store %arg19[%c0_107, %c0_108, %c0_109], %137 {strides = array<i32>} : memref<18x18x8xf32, #tpu.memory_space<vmem>>, vector<18x18x8xf32>,
    %139 = vector.shape_cast %136 : vector<256x8xf32> to vector<16x16x8xf32>
    %c1_110 = arith.constant 1 : index
    %c1_111 = arith.constant 1 : index
    %c0_112 = arith.constant 0 : index
    %140 = vector.load %arg19[%c1_110, %c1_111, %c0_112] : memref<18x18x8xf32, #tpu.memory_space<vmem>>, vector<16x16x8xf32>
    tpu.vector_store %arg19[%c1_110, %c1_111, %c0_112], %139 {strides = array<i32>} : memref<18x18x8xf32, #tpu.memory_space<vmem>>, vector<16x16x8xf32>,
    %cst_113 = arith.constant 0.000000e+00 : f32
    %141 = vector.broadcast %cst_113 : f32 to vector<256x8xf32>
    %c0_114 = arith.constant 0 : index
    %c0_115 = arith.constant 0 : index
    %c0_116 = arith.constant 0 : index
    %142 = vector.load %arg19[%c0_114, %c0_115, %c0_116] : memref<18x18x8xf32, #tpu.memory_space<vmem>>, vector<16x16x8xf32>
    %143 = vector.shape_cast %142 : vector<16x16x8xf32> to vector<256x8xf32>
    %c0_117 = arith.constant 0 : index
    %c0_118 = arith.constant 0 : index
    %c0_119 = arith.constant 0 : index
    %144 = vector.load %arg13[%c0_117, %c0_118, %c0_119] : memref<9x8x8xf32, #tpu.memory_space<vmem>>, vector<1x8x8xf32>
    %145 = vector.shape_cast %144 : vector<1x8x8xf32> to vector<8x8xf32>
    %cst_120 = arith.constant dense<0.000000e+00> : vector<256x8xf32>
    %146 = tpu.matmul %143, %145, %cst_120 {dimension_numbers = #tpu.dot_dimension_numbers<[1], [0], [0], [1], [0, 0, 1, 1], [], []>} : vector<256x8xf32>, vector<8x8xf32>, vector<256x8xf32> -> vector<256x8xf32>
    %147 = arith.addf %141, %146 : vector<256x8xf32>
    %c0_121 = arith.constant 0 : index
    %c1_122 = arith.constant 1 : index
    %c0_123 = arith.constant 0 : index
    %148 = vector.load %arg19[%c0_121, %c1_122, %c0_123] : memref<18x18x8xf32, #tpu.memory_space<vmem>>, vector<16x16x8xf32>
    %149 = vector.shape_cast %148 : vector<16x16x8xf32> to vector<256x8xf32>
    %c1_124 = arith.constant 1 : index
    %c0_125 = arith.constant 0 : index
    %c0_126 = arith.constant 0 : index
    %150 = vector.load %arg13[%c1_124, %c0_125, %c0_126] : memref<9x8x8xf32, #tpu.memory_space<vmem>>, vector<1x8x8xf32>
    %151 = vector.shape_cast %150 : vector<1x8x8xf32> to vector<8x8xf32>
    %cst_127 = arith.constant dense<0.000000e+00> : vector<256x8xf32>
    %152 = tpu.matmul %149, %151, %cst_127 {dimension_numbers = #tpu.dot_dimension_numbers<[1], [0], [0], [1], [0, 0, 1, 1], [], []>} : vector<256x8xf32>, vector<8x8xf32>, vector<256x8xf32> -> vector<256x8xf32>
    %153 = arith.addf %147, %152 : vector<256x8xf32>
    %c0_128 = arith.constant 0 : index
    %c2_129 = arith.constant 2 : index
    %c0_130 = arith.constant 0 : index
    %154 = vector.load %arg19[%c0_128, %c2_129, %c0_130] : memref<18x18x8xf32, #tpu.memory_space<vmem>>, vector<16x16x8xf32>
    %155 = vector.shape_cast %154 : vector<16x16x8xf32> to vector<256x8xf32>
    %c2_131 = arith.constant 2 : index
    %c0_132 = arith.constant 0 : index
    %c0_133 = arith.constant 0 : index
    %156 = vector.load %arg13[%c2_131, %c0_132, %c0_133] : memref<9x8x8xf32, #tpu.memory_space<vmem>>, vector<1x8x8xf32>
    %157 = vector.shape_cast %156 : vector<1x8x8xf32> to vector<8x8xf32>
    %cst_134 = arith.constant dense<0.000000e+00> : vector<256x8xf32>
    %158 = tpu.matmul %155, %157, %cst_134 {dimension_numbers = #tpu.dot_dimension_numbers<[1], [0], [0], [1], [0, 0, 1, 1], [], []>} : vector<256x8xf32>, vector<8x8xf32>, vector<256x8xf32> -> vector<256x8xf32>
    %159 = arith.addf %153, %158 : vector<256x8xf32>
    %c1_135 = arith.constant 1 : index
    %c0_136 = arith.constant 0 : index
    %c0_137 = arith.constant 0 : index
    %160 = vector.load %arg19[%c1_135, %c0_136, %c0_137] : memref<18x18x8xf32, #tpu.memory_space<vmem>>, vector<16x16x8xf32>
    %161 = vector.shape_cast %160 : vector<16x16x8xf32> to vector<256x8xf32>
    %c3_138 = arith.constant 3 : index
    %c0_139 = arith.constant 0 : index
    %c0_140 = arith.constant 0 : index
    %162 = vector.load %arg13[%c3_138, %c0_139, %c0_140] : memref<9x8x8xf32, #tpu.memory_space<vmem>>, vector<1x8x8xf32>
    %163 = vector.shape_cast %162 : vector<1x8x8xf32> to vector<8x8xf32>
    %cst_141 = arith.constant dense<0.000000e+00> : vector<256x8xf32>
    %164 = tpu.matmul %161, %163, %cst_141 {dimension_numbers = #tpu.dot_dimension_numbers<[1], [0], [0], [1], [0, 0, 1, 1], [], []>} : vector<256x8xf32>, vector<8x8xf32>, vector<256x8xf32> -> vector<256x8xf32>
    %165 = arith.addf %159, %164 : vector<256x8xf32>
    %c1_142 = arith.constant 1 : index
    %c1_143 = arith.constant 1 : index
    %c0_144 = arith.constant 0 : index
    %166 = vector.load %arg19[%c1_142, %c1_143, %c0_144] : memref<18x18x8xf32, #tpu.memory_space<vmem>>, vector<16x16x8xf32>
    %167 = vector.shape_cast %166 : vector<16x16x8xf32> to vector<256x8xf32>
    %c4_145 = arith.constant 4 : index
    %c0_146 = arith.constant 0 : index
    %c0_147 = arith.constant 0 : index
    %168 = vector.load %arg13[%c4_145, %c0_146, %c0_147] : memref<9x8x8xf32, #tpu.memory_space<vmem>>, vector<1x8x8xf32>
    %169 = vector.shape_cast %168 : vector<1x8x8xf32> to vector<8x8xf32>
    %cst_148 = arith.constant dense<0.000000e+00> : vector<256x8xf32>
    %170 = tpu.matmul %167, %169, %cst_148 {dimension_numbers = #tpu.dot_dimension_numbers<[1], [0], [0], [1], [0, 0, 1, 1], [], []>} : vector<256x8xf32>, vector<8x8xf32>, vector<256x8xf32> -> vector<256x8xf32>
    %171 = arith.addf %165, %170 : vector<256x8xf32>
    %c1_149 = arith.constant 1 : index
    %c2_150 = arith.constant 2 : index
    %c0_151 = arith.constant 0 : index
    %172 = vector.load %arg19[%c1_149, %c2_150, %c0_151] : memref<18x18x8xf32, #tpu.memory_space<vmem>>, vector<16x16x8xf32>
    %173 = vector.shape_cast %172 : vector<16x16x8xf32> to vector<256x8xf32>
    %c5_152 = arith.constant 5 : index
    %c0_153 = arith.constant 0 : index
    %c0_154 = arith.constant 0 : index
    %174 = vector.load %arg13[%c5_152, %c0_153, %c0_154] : memref<9x8x8xf32, #tpu.memory_space<vmem>>, vector<1x8x8xf32>
    %175 = vector.shape_cast %174 : vector<1x8x8xf32> to vector<8x8xf32>
    %cst_155 = arith.constant dense<0.000000e+00> : vector<256x8xf32>
    %176 = tpu.matmul %173, %175, %cst_155 {dimension_numbers = #tpu.dot_dimension_numbers<[1], [0], [0], [1], [0, 0, 1, 1], [], []>} : vector<256x8xf32>, vector<8x8xf32>, vector<256x8xf32> -> vector<256x8xf32>
    %177 = arith.addf %171, %176 : vector<256x8xf32>
    %c2_156 = arith.constant 2 : index
    %c0_157 = arith.constant 0 : index
    %c0_158 = arith.constant 0 : index
    %178 = vector.load %arg19[%c2_156, %c0_157, %c0_158] : memref<18x18x8xf32, #tpu.memory_space<vmem>>, vector<16x16x8xf32>
    %179 = vector.shape_cast %178 : vector<16x16x8xf32> to vector<256x8xf32>
    %c6_159 = arith.constant 6 : index
    %c0_160 = arith.constant 0 : index
    %c0_161 = arith.constant 0 : index
    %180 = vector.load %arg13[%c6_159, %c0_160, %c0_161] : memref<9x8x8xf32, #tpu.memory_space<vmem>>, vector<1x8x8xf32>
    %181 = vector.shape_cast %180 : vector<1x8x8xf32> to vector<8x8xf32>
    %cst_162 = arith.constant dense<0.000000e+00> : vector<256x8xf32>
    %182 = tpu.matmul %179, %181, %cst_162 {dimension_numbers = #tpu.dot_dimension_numbers<[1], [0], [0], [1], [0, 0, 1, 1], [], []>} : vector<256x8xf32>, vector<8x8xf32>, vector<256x8xf32> -> vector<256x8xf32>
    %183 = arith.addf %177, %182 : vector<256x8xf32>
    %c2_163 = arith.constant 2 : index
    %c1_164 = arith.constant 1 : index
    %c0_165 = arith.constant 0 : index
    %184 = vector.load %arg19[%c2_163, %c1_164, %c0_165] : memref<18x18x8xf32, #tpu.memory_space<vmem>>, vector<16x16x8xf32>
    %185 = vector.shape_cast %184 : vector<16x16x8xf32> to vector<256x8xf32>
    %c7_166 = arith.constant 7 : index
    %c0_167 = arith.constant 0 : index
    %c0_168 = arith.constant 0 : index
    %186 = vector.load %arg13[%c7_166, %c0_167, %c0_168] : memref<9x8x8xf32, #tpu.memory_space<vmem>>, vector<1x8x8xf32>
    %187 = vector.shape_cast %186 : vector<1x8x8xf32> to vector<8x8xf32>
    %cst_169 = arith.constant dense<0.000000e+00> : vector<256x8xf32>
    %188 = tpu.matmul %185, %187, %cst_169 {dimension_numbers = #tpu.dot_dimension_numbers<[1], [0], [0], [1], [0, 0, 1, 1], [], []>} : vector<256x8xf32>, vector<8x8xf32>, vector<256x8xf32> -> vector<256x8xf32>
    %189 = arith.addf %183, %188 : vector<256x8xf32>
    %c2_170 = arith.constant 2 : index
    %c2_171 = arith.constant 2 : index
    %c0_172 = arith.constant 0 : index
    %190 = vector.load %arg19[%c2_170, %c2_171, %c0_172] : memref<18x18x8xf32, #tpu.memory_space<vmem>>, vector<16x16x8xf32>
    %191 = vector.shape_cast %190 : vector<16x16x8xf32> to vector<256x8xf32>
    %c8_173 = arith.constant 8 : index
    %c0_174 = arith.constant 0 : index
    %c0_175 = arith.constant 0 : index
    %192 = vector.load %arg13[%c8_173, %c0_174, %c0_175] : memref<9x8x8xf32, #tpu.memory_space<vmem>>, vector<1x8x8xf32>
    %193 = vector.shape_cast %192 : vector<1x8x8xf32> to vector<8x8xf32>
    %cst_176 = arith.constant dense<0.000000e+00> : vector<256x8xf32>
    %194 = tpu.matmul %191, %193, %cst_176 {dimension_numbers = #tpu.dot_dimension_numbers<[1], [0], [0], [1], [0, 0, 1, 1], [], []>} : vector<256x8xf32>, vector<8x8xf32>, vector<256x8xf32> -> vector<256x8xf32>
    %195 = arith.addf %189, %194 : vector<256x8xf32>
    %c0_177 = arith.constant 0 : index
    %c0_178 = arith.constant 0 : index
    %196 = vector.load %arg14[%c0_177, %c0_178] : memref<1x8xf32, #tpu.memory_space<vmem>>, vector<1x8xf32>
    %197 = vector.broadcast %196 : vector<1x8xf32> to vector<256x8xf32>
    %198 = arith.addf %195, %197 : vector<256x8xf32>
    %c0_179 = arith.constant 0 : index
    %c0_180 = arith.constant 0 : index
    %199 = vector.load %arg15[%c0_179, %c0_180] : memref<4x8xf32, #tpu.memory_space<vmem>>, vector<4x8xf32>
    %cst_181 = arith.constant dense<0.000000e+00> : vector<256x8xf32>
    %200 = tpu.matmul %2, %199, %cst_181 {dimension_numbers = #tpu.dot_dimension_numbers<[1], [0], [0], [1], [0, 0, 1, 1], [], []>} : vector<256x4xf32>, vector<4x8xf32>, vector<256x8xf32> -> vector<256x8xf32>
    %c0_182 = arith.constant 0 : index
    %c0_183 = arith.constant 0 : index
    %201 = vector.load %arg16[%c0_182, %c0_183] : memref<1x8xf32, #tpu.memory_space<vmem>>, vector<1x8xf32>
    %202 = vector.broadcast %201 : vector<1x8xf32> to vector<256x8xf32>
    %203 = arith.addf %200, %202 : vector<256x8xf32>
    %204 = arith.addf %203, %198 : vector<256x8xf32>
    %cst_184 = arith.constant 0.707106769 : f32
    %205 = vector.broadcast %cst_184 : f32 to vector<256x8xf32>
    %206 = arith.mulf %204, %205 : vector<256x8xf32>
    %207 = vector.shape_cast %206 : vector<256x8xf32> to vector<16x16x8xf32>
    %c0_185 = arith.constant 0 : index
    %c0_186 = arith.constant 0 : index
    %c0_187 = arith.constant 0 : index
    %c0_188 = arith.constant 0 : index
    %208 = vector.load %arg17[%c0_185, %c0_186, %c0_187, %c0_188] : memref<1x16x16x8xf32, #tpu.memory_space<vmem>>, vector<1x16x16x8xf32>
    %209 = vector.shape_cast %208 : vector<1x16x16x8xf32> to vector<16x16x8xf32>
    %210 = vector.shape_cast %207 : vector<16x16x8xf32> to vector<1x16x16x8xf32>
    tpu.vector_store %arg17[%c0_185, %c0_186, %c0_187, %c0_188], %210 {strides = array<i32>} : memref<1x16x16x8xf32, #tpu.memory_space<vmem>>, vector<1x16x16x8xf32>,
    return
  }
  func.func @transform_0(%arg0: i32) -> (i32, i32, i32, i32) {
    %c0_i32 = arith.constant 0 : i32
    %c0_i32_0 = arith.constant 0 : i32
    %c0_i32_1 = arith.constant 0 : i32
    %c0_i32_2 = arith.constant 0 : i32
    return %arg0, %c0_i32, %c0_i32_0, %c0_i32_1 : i32, i32, i32, i32
  }
  func.func @transform_1(%arg0: i32) -> (i32, i32, i32) {
    %c0_i32 = arith.constant 0 : i32
    %c0_i32_0 = arith.constant 0 : i32
    %c0_i32_1 = arith.constant 0 : i32
    return %arg0, %c0_i32, %c0_i32_0 : i32, i32, i32
  }
  func.func @transform_2(%arg0: i32) -> (i32, i32) {
    %c0_i32 = arith.constant 0 : i32
    %c0_i32_0 = arith.constant 0 : i32
    %c0_i32_1 = arith.constant 0 : i32
    return %c0_i32, %c0_i32_0 : i32, i32
  }
  func.func @transform_3(%arg0: i32) -> (i32, i32) {
    %c0_i32 = arith.constant 0 : i32
    %c0_i32_0 = arith.constant 0 : i32
    %c0_i32_1 = arith.constant 0 : i32
    return %c0_i32, %c0_i32_0 : i32, i32
  }
  func.func @transform_4(%arg0: i32) -> (i32, i32) {
    %c0_i32 = arith.constant 0 : i32
    %c0_i32_0 = arith.constant 0 : i32
    %c0_i32_1 = arith.constant 0 : i32
    return %c0_i32, %c0_i32_0 : i32, i32
  }
  func.func @transform_5(%arg0: i32) -> (i32, i32) {
    %c0_i32 = arith.constant 0 : i32
    %c0_i32_0 = arith.constant 0 : i32
    %c0_i32_1 = arith.constant 0 : i32
    return %c0_i32, %c0_i32_0 : i32, i32
  }
  func.func @transform_6(%arg0: i32) -> (i32, i32, i32) {
    %c0_i32 = arith.constant 0 : i32
    %c0_i32_0 = arith.constant 0 : i32
    %c0_i32_1 = arith.constant 0 : i32
    %c0_i32_2 = arith.constant 0 : i32
    return %c0_i32, %c0_i32_0, %c0_i32_1 : i32, i32, i32
  }
  func.func @transform_7(%arg0: i32) -> (i32, i32) {
    %c0_i32 = arith.constant 0 : i32
    %c0_i32_0 = arith.constant 0 : i32
    %c0_i32_1 = arith.constant 0 : i32
    return %c0_i32, %c0_i32_0 : i32, i32
  }
  func.func @transform_8(%arg0: i32) -> (i32, i32) {
    %c0_i32 = arith.constant 0 : i32
    %c0_i32_0 = arith.constant 0 : i32
    %c0_i32_1 = arith.constant 0 : i32
    return %c0_i32, %c0_i32_0 : i32, i32
  }
  func.func @transform_9(%arg0: i32) -> (i32, i32) {
    %c0_i32 = arith.constant 0 : i32
    %c0_i32_0 = arith.constant 0 : i32
    %c0_i32_1 = arith.constant 0 : i32
    return %c0_i32, %c0_i32_0 : i32, i32
  }
  func.func @transform_10(%arg0: i32) -> (i32, i32) {
    %c0_i32 = arith.constant 0 : i32
    %c0_i32_0 = arith.constant 0 : i32
    %c0_i32_1 = arith.constant 0 : i32
    return %c0_i32, %c0_i32_0 : i32, i32
  }
  func.func @transform_11(%arg0: i32) -> (i32, i32) {
    %c0_i32 = arith.constant 0 : i32
    %c0_i32_0 = arith.constant 0 : i32
    %c0_i32_1 = arith.constant 0 : i32
    return %c0_i32, %c0_i32_0 : i32, i32
  }
  func.func @transform_12(%arg0: i32) -> (i32, i32, i32) {
    %c0_i32 = arith.constant 0 : i32
    %c0_i32_0 = arith.constant 0 : i32
    %c0_i32_1 = arith.constant 0 : i32
    %c0_i32_2 = arith.constant 0 : i32
    return %c0_i32, %c0_i32_0, %c0_i32_1 : i32, i32, i32
  }
  func.func @transform_13(%arg0: i32) -> (i32, i32) {
    %c0_i32 = arith.constant 0 : i32
    %c0_i32_0 = arith.constant 0 : i32
    %c0_i32_1 = arith.constant 0 : i32
    return %c0_i32, %c0_i32_0 : i32, i32
  }
  func.func @transform_14(%arg0: i32) -> (i32, i32) {
    %c0_i32 = arith.constant 0 : i32
    %c0_i32_0 = arith.constant 0 : i32
    %c0_i32_1 = arith.constant 0 : i32
    return %c0_i32, %c0_i32_0 : i32, i32
  }
  func.func @transform_15(%arg0: i32) -> (i32, i32) {
    %c0_i32 = arith.constant 0 : i32
    %c0_i32_0 = arith.constant 0 : i32
    %c0_i32_1 = arith.constant 0 : i32
    return %c0_i32, %c0_i32_0 : i32, i32
  }
  func.func @transform_16(%arg0: i32) -> (i32, i32, i32, i32) {
    %c0_i32 = arith.constant 0 : i32
    %c0_i32_0 = arith.constant 0 : i32
    %c0_i32_1 = arith.constant 0 : i32
    %c0_i32_2 = arith.constant 0 : i32
    return %arg0, %c0_i32, %c0_i32_0, %c0_i32_1 : i32, i32, i32, i32
  }
}

</mosaic_0001>

<llo_original>
// kernel: tpu_custom_call.1
$region0: #{tpu_custom_call.1}
  #allocation0 [shape = 'u32[]', space=smem, size = 0x4, offset = 0x4, fixed_abs, tag = 'smem constant byte address 0x4 - core index']
  #allocation1 [shape = 'u32[144,128]{1,0:T(1,128)}', space=vmem, size = 0x12000, scoped, tag = 'internal scratch']
  #allocation2 [shape = 'f32[18,18,4]{2,1,0:T(8,128)}', space=vmem, size = 0x36000, scoped, tag = 'scratch operand']
  #allocation3 [shape = 'f32[18,18,8]{2,1,0:T(8,128)}', space=vmem, size = 0x36000, scoped, tag = 'scratch operand']
  %s0 = inlined_call_operand.vmem [shape: f32[2,16,16,4], index: 0, kind: input, shape index: {}]
  %s1 = inlined_call_operand.vmem [shape: f32[2,1,8], index: 1, kind: input, shape index: {}]
  %s2 = inlined_call_operand.vmem [shape: f32[1,4], index: 2, kind: input, shape index: {}]
  %s3 = inlined_call_operand.vmem [shape: f32[1,4], index: 3, kind: input, shape index: {}]
  %s4 = inlined_call_operand.vmem [shape: f32[4,1], index: 4, kind: input, shape index: {}]
  %s5 = inlined_call_operand.vmem [shape: f32[1,4], index: 5, kind: input, shape index: {}]
  %s6 = inlined_call_operand.vmem [shape: f32[9,4,8], index: 6, kind: input, shape index: {}]
  %s7 = inlined_call_operand.vmem [shape: f32[1,8], index: 7, kind: input, shape index: {}]
  %s8 = inlined_call_operand.vmem [shape: f32[1,8], index: 8, kind: input, shape index: {}]
  %s9 = inlined_call_operand.vmem [shape: f32[1,8], index: 9, kind: input, shape index: {}]
  %s10 = inlined_call_operand.vmem [shape: f32[8,2], index: 10, kind: input, shape index: {}]
  %s11 = inlined_call_operand.vmem [shape: f32[2,8], index: 11, kind: input, shape index: {}]
  %s12 = inlined_call_operand.vmem [shape: f32[9,8,8], index: 12, kind: input, shape index: {}]
  %s13 = inlined_call_operand.vmem [shape: f32[1,8], index: 13, kind: input, shape index: {}]
  %s14 = inlined_call_operand.vmem [shape: f32[4,8], index: 14, kind: input, shape index: {}]
  %s15 = inlined_call_operand.vmem [shape: f32[1,8], index: 15, kind: input, shape index: {}]
  %s16 = inlined_call_operand.vmem [shape: f32[2,16,16,8], index: 16, kind: output, shape index: {}]
  %s17 = sld [smem:[#allocation0]]
  $region97: #{tpu_custom_call.1} parent=0
    _
  %s19 = ssub.s32 1, %s17
  %s20 = scalar_select 0, %s19, %s17
  loop: start=0, step=1, limit=4
  $region2: #{tpu_custom_call.1} parent=0 // loop_pre_header
    _
  $region3: #{tpu_custom_call.1} parent=0 // loop_header
    %s22 = sphi 0, %s26
    %p23 = scmp.ge.s32.totalorder %s22, 4
    %s32 = sphi 0, %s34
    %s35 = sphi 0, %s32
    %s36 = sphi 0, %s35
    %s52 = sphi 0, %s36
    %s58 = sphi 0, %s60
    %s61 = sphi 0, %s58
    %s62 = sphi 0, %s61
    %s78 = sphi 0, %s62
    %s82 = sphi 0, %s82
    %s84 = sphi 0, %s82
    %s85 = sphi 0, %s84
    %s99 = sphi 0, %s85
    %s103 = sphi 0, %s103
    %s105 = sphi 0, %s103
    %s106 = sphi 0, %s105
    %s120 = sphi 0, %s106
    %s124 = sphi 0, %s124
    %s126 = sphi 0, %s124
    %s127 = sphi 0, %s126
    %s141 = sphi 0, %s127
    %s145 = sphi 0, %s145
    %s147 = sphi 0, %s145
    %s148 = sphi 0, %s147
    %s162 = sphi 0, %s148
    %s166 = sphi 0, %s166
    %s168 = sphi 0, %s166
    %s169 = sphi 0, %s168
    %s183 = sphi 0, %s169
    %s187 = sphi 0, %s187
    %s189 = sphi 0, %s187
    %s190 = sphi 0, %s189
    %s204 = sphi 0, %s190
    %s208 = sphi 0, %s208
    %s210 = sphi 0, %s208
    %s211 = sphi 0, %s210
    %s225 = sphi 0, %s211
    %s229 = sphi 0, %s229
    %s231 = sphi 0, %s229
    %s232 = sphi 0, %s231
    %s246 = sphi 0, %s232
    %s250 = sphi 0, %s250
    %s252 = sphi 0, %s250
    %s253 = sphi 0, %s252
    %s267 = sphi 0, %s253
    %s271 = sphi 0, %s271
    %s273 = sphi 0, %s271
    %s274 = sphi 0, %s273
    %s288 = sphi 0, %s274
    %s292 = sphi 0, %s292
    %s294 = sphi 0, %s292
    %s295 = sphi 0, %s294
    %s309 = sphi 0, %s295
    %s313 = sphi 0, %s313
    %s315 = sphi 0, %s313
    %s316 = sphi 0, %s315
    %s330 = sphi 0, %s316
    %s334 = sphi 0, %s334
    %s336 = sphi 0, %s334
    %s337 = sphi 0, %s336
    %s351 = sphi 0, %s337
    %s355 = sphi 0, %s355
    %s357 = sphi 0, %s355
    %s358 = sphi 0, %s357
    %s372 = sphi 0, %s358
    %s378 = sphi 0, %s380
    %s381 = sphi 0, %s378
    %s382 = sphi 0, %s381
    %s398 = sphi 0, %s382
  $region4: #{tpu_custom_call.1} parent=0 // loop_header_branch
    %25 = sbr.rel (%p23) target = $region8
  $region5: #{tpu_custom_call.1} parent=0 // loop_body
    %s27 = ssub.s32 %s22, 1
    %s28 = ssub.s32 %s22, 2
    %s29 = sadd.s32 %s22, 1
    %s30 = ssub.s32 %s22, %s29
    %p31 = scmp.eq.s32.totalorder %s30, 0
    %s33 = sadd.s32 %s32, 1
    %s34 = scalar_select %p31, %s32, %s33
    %p37 = pneg %p31
    %p38 = scmp.eq.s32.totalorder %s22, 1
    %p39 = por %p37, %p38
    %p40 = scmp.ne.s32.totalorder %s32, %s35
    %p41 = scmp.eq.s32.totalorder %s22, 0
    %p42 = por %p40, %p41
    %p43 = scmp.ne.s32.totalorder %s32, %s35
    %p44 = scmp.eq.s32.totalorder %s27, 1
    %p45 = por %p43, %p44
    %p46 = scmp.ne.s32.totalorder %s35, %s36
    %p47 = scmp.eq.s32.totalorder %s27, 0
    %p48 = por %p46, %p47
    %p49 = scmp.ne.s32.totalorder %s35, %s36
    %p50 = scmp.eq.s32.totalorder %s28, 1
    %p51 = por %p49, %p50
    %p53 = scmp.ne.s32.totalorder %s36, %s52
    %p54 = scmp.eq.s32.totalorder %s28, 0
    %p55 = por %p53, %p54
    %s56 = ssub.s32 %s22, %s29
    %p57 = scmp.eq.s32.totalorder %s56, 0
    %s59 = sadd.s32 %s58, 1
    %s60 = scalar_select %p57, %s58, %s59
    %p63 = pneg %p57
    %p64 = scmp.eq.s32.totalorder %s22, 1
    %p65 = por %p63, %p64
    %p66 = scmp.ne.s32.totalorder %s58, %s61
    %p67 = scmp.eq.s32.totalorder %s22, 0
    %p68 = por %p66, %p67
    %p69 = scmp.ne.s32.totalorder %s58, %s61
    %p70 = scmp.eq.s32.totalorder %s27, 1
    %p71 = por %p69, %p70
    %p72 = scmp.ne.s32.totalorder %s61, %s62
    %p73 = scmp.eq.s32.totalorder %s27, 0
    %p74 = por %p72, %p73
    %p75 = scmp.ne.s32.totalorder %s61, %s62
    %p76 = scmp.eq.s32.totalorder %s28, 1
    %p77 = por %p75, %p76
    %p79 = scmp.ne.s32.totalorder %s62, %s78
    %p80 = scmp.eq.s32.totalorder %s28, 0
    %p81 = por %p79, %p80
    %s83 = sadd.s32 %s82, 1
    %p86 = scmp.eq.s32.totalorder %s22, 1
    %p87 = scmp.ne.s32.totalorder %s82, %s84
    %p88 = scmp.eq.s32.totalorder %s22, 0
    %p89 = por %p87, %p88
    %p90 = scmp.ne.s32.totalorder %s82, %s84
    %p91 = scmp.eq.s32.totalorder %s27, 1
    %p92 = por %p90, %p91
    %p93 = scmp.ne.s32.totalorder %s84, %s85
    %p94 = scmp.eq.s32.totalorder %s27, 0
    %p95 = por %p93, %p94
    %p96 = scmp.ne.s32.totalorder %s84, %s85
    %p97 = scmp.eq.s32.totalorder %s28, 1
    %p98 = por %p96, %p97
    %p100 = scmp.ne.s32.totalorder %s85, %s99
    %p101 = scmp.eq.s32.totalorder %s28, 0
    %p102 = por %p100, %p101
    %s104 = sadd.s32 %s103, 1
    %p107 = scmp.eq.s32.totalorder %s22, 1
    %p108 = scmp.ne.s32.totalorder %s103, %s105
    %p109 = scmp.eq.s32.totalorder %s22, 0
    %p110 = por %p108, %p109
    %p111 = scmp.ne.s32.totalorder %s103, %s105
    %p112 = scmp.eq.s32.totalorder %s27, 1
    %p113 = por %p111, %p112
    %p114 = scmp.ne.s32.totalorder %s105, %s106
    %p115 = scmp.eq.s32.totalorder %s27, 0
    %p116 = por %p114, %p115
    %p117 = scmp.ne.s32.totalorder %s105, %s106
    %p118 = scmp.eq.s32.totalorder %s28, 1
    %p119 = por %p117, %p118
    %p121 = scmp.ne.s32.totalorder %s106, %s120
    %p122 = scmp.eq.s32.totalorder %s28, 0
    %p123 = por %p121, %p122
    %s125 = sadd.s32 %s124, 1
    %p128 = scmp.eq.s32.totalorder %s22, 1
    %p129 = scmp.ne.s32.totalorder %s124, %s126
    %p130 = scmp.eq.s32.totalorder %s22, 0
    %p131 = por %p129, %p130
    %p132 = scmp.ne.s32.totalorder %s124, %s126
    %p133 = scmp.eq.s32.totalorder %s27, 1
    %p134 = por %p132, %p133
    %p135 = scmp.ne.s32.totalorder %s126, %s127
    %p136 = scmp.eq.s32.totalorder %s27, 0
    %p137 = por %p135, %p136
    %p138 = scmp.ne.s32.totalorder %s126, %s127
    %p139 = scmp.eq.s32.totalorder %s28, 1
    %p140 = por %p138, %p139
    %p142 = scmp.ne.s32.totalorder %s127, %s141
    %p143 = scmp.eq.s32.totalorder %s28, 0
    %p144 = por %p142, %p143
    %s146 = sadd.s32 %s145, 1
    %p149 = scmp.eq.s32.totalorder %s22, 1
    %p150 = scmp.ne.s32.totalorder %s145, %s147
    %p151 = scmp.eq.s32.totalorder %s22, 0
    %p152 = por %p150, %p151
    %p153 = scmp.ne.s32.totalorder %s145, %s147
    %p154 = scmp.eq.s32.totalorder %s27, 1
    %p155 = por %p153, %p154
    %p156 = scmp.ne.s32.totalorder %s147, %s148
    %p157 = scmp.eq.s32.totalorder %s27, 0
    %p158 = por %p156, %p157
    %p159 = scmp.ne.s32.totalorder %s147, %s148
    %p160 = scmp.eq.s32.totalorder %s28, 1
    %p161 = por %p159, %p160
    %p163 = scmp.ne.s32.totalorder %s148, %s162
    %p164 = scmp.eq.s32.totalorder %s28, 0
    %p165 = por %p163, %p164
    %s167 = sadd.s32 %s166, 1
    %p170 = scmp.eq.s32.totalorder %s22, 1
    %p171 = scmp.ne.s32.totalorder %s166, %s168
    %p172 = scmp.eq.s32.totalorder %s22, 0
    %p173 = por %p171, %p172
    %p174 = scmp.ne.s32.totalorder %s166, %s168
    %p175 = scmp.eq.s32.totalorder %s27, 1
    %p176 = por %p174, %p175
    %p177 = scmp.ne.s32.totalorder %s168, %s169
    %p178 = scmp.eq.s32.totalorder %s27, 0
    %p179 = por %p177, %p178
    %p180 = scmp.ne.s32.totalorder %s168, %s169
    %p181 = scmp.eq.s32.totalorder %s28, 1
    %p182 = por %p180, %p181
    %p184 = scmp.ne.s32.totalorder %s169, %s183
    %p185 = scmp.eq.s32.totalorder %s28, 0
    %p186 = por %p184, %p185
    %s188 = sadd.s32 %s187, 1
    %p191 = scmp.eq.s32.totalorder %s22, 1
    %p192 = scmp.ne.s32.totalorder %s187, %s189
    %p193 = scmp.eq.s32.totalorder %s22, 0
    %p194 = por %p192, %p193
    %p195 = scmp.ne.s32.totalorder %s187, %s189
    %p196 = scmp.eq.s32.totalorder %s27, 1
    %p197 = por %p195, %p196
    %p198 = scmp.ne.s32.totalorder %s189, %s190
    %p199 = scmp.eq.s32.totalorder %s27, 0
    %p200 = por %p198, %p199
    %p201 = scmp.ne.s32.totalorder %s189, %s190
    %p202 = scmp.eq.s32.totalorder %s28, 1
    %p203 = por %p201, %p202
    %p205 = scmp.ne.s32.totalorder %s190, %s204
    %p206 = scmp.eq.s32.totalorder %s28, 0
    %p207 = por %p205, %p206
    %s209 = sadd.s32 %s208, 1
    %p212 = scmp.eq.s32.totalorder %s22, 1
    %p213 = scmp.ne.s32.totalorder %s208, %s210
    %p214 = scmp.eq.s32.totalorder %s22, 0
    %p215 = por %p213, %p214
    %p216 = scmp.ne.s32.totalorder %s208, %s210
    %p217 = scmp.eq.s32.totalorder %s27, 1
    %p218 = por %p216, %p217
    %p219 = scmp.ne.s32.totalorder %s210, %s211
    %p220 = scmp.eq.s32.totalorder %s27, 0
    %p221 = por %p219, %p220
    %p222 = scmp.ne.s32.totalorder %s210, %s211
    %p223 = scmp.eq.s32.totalorder %s28, 1
    %p224 = por %p222, %p223
    %p226 = scmp.ne.s32.totalorder %s211, %s225
    %p227 = scmp.eq.s32.totalorder %s28, 0
    %p228 = por %p226, %p227
    %s230 = sadd.s32 %s229, 1
    %p233 = scmp.eq.s32.totalorder %s22, 1
    %p234 = scmp.ne.s32.totalorder %s229, %s231
    %p235 = scmp.eq.s32.totalorder %s22, 0
    %p236 = por %p234, %p235
    %p237 = scmp.ne.s32.totalorder %s229, %s231
    %p238 = scmp.eq.s32.totalorder %s27, 1
    %p239 = por %p237, %p238
    %p240 = scmp.ne.s32.totalorder %s231, %s232
    %p241 = scmp.eq.s32.totalorder %s27, 0
    %p242 = por %p240, %p241
    %p243 = scmp.ne.s32.totalorder %s231, %s232
    %p244 = scmp.eq.s32.totalorder %s28, 1
    %p245 = por %p243, %p244
    %p247 = scmp.ne.s32.totalorder %s232, %s246
    %p248 = scmp.eq.s32.totalorder %s28, 0
    %p249 = por %p247, %p248
    %s251 = sadd.s32 %s250, 1
    %p254 = scmp.eq.s32.totalorder %s22, 1
    %p255 = scmp.ne.s32.totalorder %s250, %s252
    %p256 = scmp.eq.s32.totalorder %s22, 0
    %p257 = por %p255, %p256
    %p258 = scmp.ne.s32.totalorder %s250, %s252
    %p259 = scmp.eq.s32.totalorder %s27, 1
    %p260 = por %p258, %p259
    %p261 = scmp.ne.s32.totalorder %s252, %s253
    %p262 = scmp.eq.s32.totalorder %s27, 0
    %p263 = por %p261, %p262
    %p264 = scmp.ne.s32.totalorder %s252, %s253
    %p265 = scmp.eq.s32.totalorder %s28, 1
    %p266 = por %p264, %p265
    %p268 = scmp.ne.s32.totalorder %s253, %s267
    %p269 = scmp.eq.s32.totalorder %s28, 0
    %p270 = por %p268, %p269
    %s272 = sadd.s32 %s271, 1
    %p275 = scmp.eq.s32.totalorder %s22, 1
    %p276 = scmp.ne.s32.totalorder %s271, %s273
    %p277 = scmp.eq.s32.totalorder %s22, 0
    %p278 = por %p276, %p277
    %p279 = scmp.ne.s32.totalorder %s271, %s273
    %p280 = scmp.eq.s32.totalorder %s27, 1
    %p281 = por %p279, %p280
    %p282 = scmp.ne.s32.totalorder %s273, %s274
    %p283 = scmp.eq.s32.totalorder %s27, 0
    %p284 = por %p282, %p283
    %p285 = scmp.ne.s32.totalorder %s273, %s274
    %p286 = scmp.eq.s32.totalorder %s28, 1
    %p287 = por %p285, %p286
    %p289 = scmp.ne.s32.totalorder %s274, %s288
    %p290 = scmp.eq.s32.totalorder %s28, 0
    %p291 = por %p289, %p290
    %s293 = sadd.s32 %s292, 1
    %p296 = scmp.eq.s32.totalorder %s22, 1
    %p297 = scmp.ne.s32.totalorder %s292, %s294
    %p298 = scmp.eq.s32.totalorder %s22, 0
    %p299 = por %p297, %p298
    %p300 = scmp.ne.s32.totalorder %s292, %s294
    %p301 = scmp.eq.s32.totalorder %s27, 1
    %p302 = por %p300, %p301
    %p303 = scmp.ne.s32.totalorder %s294, %s295
    %p304 = scmp.eq.s32.totalorder %s27, 0
    %p305 = por %p303, %p304
    %p306 = scmp.ne.s32.totalorder %s294, %s295
    %p307 = scmp.eq.s32.totalorder %s28, 1
    %p308 = por %p306, %p307
    %p310 = scmp.ne.s32.totalorder %s295, %s309
    %p311 = scmp.eq.s32.totalorder %s28, 0
    %p312 = por %p310, %p311
    %s314 = sadd.s32 %s313, 1
    %p317 = scmp.eq.s32.totalorder %s22, 1
    %p318 = scmp.ne.s32.totalorder %s313, %s315
    %p319 = scmp.eq.s32.totalorder %s22, 0
    %p320 = por %p318, %p319
    %p321 = scmp.ne.s32.totalorder %s313, %s315
    %p322 = scmp.eq.s32.totalorder %s27, 1
    %p323 = por %p321, %p322
    %p324 = scmp.ne.s32.totalorder %s315, %s316
    %p325 = scmp.eq.s32.totalorder %s27, 0
    %p326 = por %p324, %p325
    %p327 = scmp.ne.s32.totalorder %s315, %s316
    %p328 = scmp.eq.s32.totalorder %s28, 1
    %p329 = por %p327, %p328
    %p331 = scmp.ne.s32.totalorder %s316, %s330
    %p332 = scmp.eq.s32.totalorder %s28, 0
    %p333 = por %p331, %p332
    %s335 = sadd.s32 %s334, 1
    %p338 = scmp.eq.s32.totalorder %s22, 1
    %p339 = scmp.ne.s32.totalorder %s334, %s336
    %p340 = scmp.eq.s32.totalorder %s22, 0
    %p341 = por %p339, %p340
    %p342 = scmp.ne.s32.totalorder %s334, %s336
    %p343 = scmp.eq.s32.totalorder %s27, 1
    %p344 = por %p342, %p343
    %p345 = scmp.ne.s32.totalorder %s336, %s337
    %p346 = scmp.eq.s32.totalorder %s27, 0
    %p347 = por %p345, %p346
    %p348 = scmp.ne.s32.totalorder %s336, %s337
    %p349 = scmp.eq.s32.totalorder %s28, 1
    %p350 = por %p348, %p349
    %p352 = scmp.ne.s32.totalorder %s337, %s351
    %p353 = scmp.eq.s32.totalorder %s28, 0
    %p354 = por %p352, %p353
    %s356 = sadd.s32 %s355, 1
    %p359 = scmp.eq.s32.totalorder %s22, 1
    %p360 = scmp.ne.s32.totalorder %s355, %s357
    %p361 = scmp.eq.s32.totalorder %s22, 0
    %p362 = por %p360, %p361
    %p363 = scmp.ne.s32.totalorder %s355, %s357
    %p364 = scmp.eq.s32.totalorder %s27, 1
    %p365 = por %p363, %p364
    %p366 = scmp.ne.s32.totalorder %s357, %s358
    %p367 = scmp.eq.s32.totalorder %s27, 0
    %p368 = por %p366, %p367
    %p369 = scmp.ne.s32.totalorder %s357, %s358
    %p370 = scmp.eq.s32.totalorder %s28, 1
    %p371 = por %p369, %p370
    %p373 = scmp.ne.s32.totalorder %s358, %s372
    %p374 = scmp.eq.s32.totalorder %s28, 0
    %p375 = por %p373, %p374
    %s376 = ssub.s32 %s22, %s29
    %p377 = scmp.eq.s32.totalorder %s376, 0
    %s379 = sadd.s32 %s378, 1
    %s380 = scalar_select %p377, %s378, %s379
    %p383 = pneg %p377
    %p384 = scmp.eq.s32.totalorder %s22, 1
    %p385 = por %p383, %p384
    %p386 = scmp.ne.s32.totalorder %s378, %s381
    %p387 = scmp.eq.s32.totalorder %s22, 0
    %p388 = por %p386, %p387
    %p389 = scmp.ne.s32.totalorder %s378, %s381
    %p390 = scmp.eq.s32.totalorder %s27, 1
    %p391 = por %p389, %p390
    %p392 = scmp.ne.s32.totalorder %s381, %s382
    %p393 = scmp.eq.s32.totalorder %s27, 0
    %p394 = por %p392, %p393
    %p395 = scmp.ne.s32.totalorder %s381, %s382
    %p396 = scmp.eq.s32.totalorder %s28, 1
    %p397 = por %p395, %p396
    %p399 = scmp.ne.s32.totalorder %s382, %s398
    %p400 = scmp.eq.s32.totalorder %s28, 0
    %p401 = por %p399, %p400
    %p402 = scmp.le.s32.totalorder 1, %s22
    %p403 = scmp.lt.s32.totalorder %s22, 3
    %p404 = pnand %p402, %p403
    %p405 = pneg %p404
    // Predicated region
    $region9: #{tpu_custom_call.1} parent=5 // pred_check
      _
    $region10: #{tpu_custom_call.1} parent=5 // pred_check_branch
      %407 = sbr.rel (%p404) target = $region12
    $region11: #{tpu_custom_call.1} parent=5 // pred_region
      %s408 = ssub.s32 %s22, 1
      // Predicated region
      $region13: #{tpu_custom_call.1} parent=11 // pred_check
        %p409 = pneg %p95
      $region14: #{tpu_custom_call.1} parent=11 // pred_check_branch
        %411 = sbr.rel (%p409) target = $region16
      $region15: #{tpu_custom_call.1} parent=11 // pred_region
        _
      $region16: #{tpu_custom_call.1} parent=11 // pred_fallthru
        _
      // Predicated region
      $region17: #{tpu_custom_call.1} parent=11 // pred_check
        %p412 = pneg %p116
      $region18: #{tpu_custom_call.1} parent=11 // pred_check_branch
        %414 = sbr.rel (%p412) target = $region20
      $region19: #{tpu_custom_call.1} parent=11 // pred_region
        _
      $region20: #{tpu_custom_call.1} parent=11 // pred_fallthru
        _
      // Predicated region
      $region21: #{tpu_custom_call.1} parent=11 // pred_check
        %p415 = pneg %p137
      $region22: #{tpu_custom_call.1} parent=11 // pred_check_branch
        %417 = sbr.rel (%p415) target = $region24
      $region23: #{tpu_custom_call.1} parent=11 // pred_region
        _
      $region24: #{tpu_custom_call.1} parent=11 // pred_fallthru
        _
      // Predicated region
      $region25: #{tpu_custom_call.1} parent=11 // pred_check
        %p418 = pneg %p158
      $region26: #{tpu_custom_call.1} parent=11 // pred_check_branch
        %420 = sbr.rel (%p418) target = $region28
      $region27: #{tpu_custom_call.1} parent=11 // pred_region
        _
      $region28: #{tpu_custom_call.1} parent=11 // pred_fallthru
        _
      // Predicated region
      $region29: #{tpu_custom_call.1} parent=11 // pred_check
        %p421 = pneg %p179
      $region30: #{tpu_custom_call.1} parent=11 // pred_check_branch
        %423 = sbr.rel (%p421) target = $region32
      $region31: #{tpu_custom_call.1} parent=11 // pred_region
        _
      $region32: #{tpu_custom_call.1} parent=11 // pred_fallthru
        _
      // Predicated region
      $region33: #{tpu_custom_call.1} parent=11 // pred_check
        %p424 = pneg %p200
      $region34: #{tpu_custom_call.1} parent=11 // pred_check_branch
        %426 = sbr.rel (%p424) target = $region36
      $region35: #{tpu_custom_call.1} parent=11 // pred_region
        _
      $region36: #{tpu_custom_call.1} parent=11 // pred_fallthru
        _
      // Predicated region
      $region37: #{tpu_custom_call.1} parent=11 // pred_check
        %p427 = pneg %p221
      $region38: #{tpu_custom_call.1} parent=11 // pred_check_branch
        %429 = sbr.rel (%p427) target = $region40
      $region39: #{tpu_custom_call.1} parent=11 // pred_region
        _
      $region40: #{tpu_custom_call.1} parent=11 // pred_fallthru
        _
      // Predicated region
      $region41: #{tpu_custom_call.1} parent=11 // pred_check
        %p430 = pneg %p242
      $region42: #{tpu_custom_call.1} parent=11 // pred_check_branch
        %432 = sbr.rel (%p430) target = $region44
      $region43: #{tpu_custom_call.1} parent=11 // pred_region
        _
      $region44: #{tpu_custom_call.1} parent=11 // pred_fallthru
        _
      // Predicated region
      $region45: #{tpu_custom_call.1} parent=11 // pred_check
        %p433 = pneg %p263
      $region46: #{tpu_custom_call.1} parent=11 // pred_check_branch
        %435 = sbr.rel (%p433) target = $region48
      $region47: #{tpu_custom_call.1} parent=11 // pred_region
        _
      $region48: #{tpu_custom_call.1} parent=11 // pred_fallthru
        _
      // Predicated region
      $region49: #{tpu_custom_call.1} parent=11 // pred_check
        %p436 = pneg %p284
      $region50: #{tpu_custom_call.1} parent=11 // pred_check_branch
        %438 = sbr.rel (%p436) target = $region52
      $region51: #{tpu_custom_call.1} parent=11 // pred_region
        _
      $region52: #{tpu_custom_call.1} parent=11 // pred_fallthru
        _
      // Predicated region
      $region53: #{tpu_custom_call.1} parent=11 // pred_check
        %p439 = pneg %p305
      $region54: #{tpu_custom_call.1} parent=11 // pred_check_branch
        %441 = sbr.rel (%p439) target = $region56
      $region55: #{tpu_custom_call.1} parent=11 // pred_region
        _
      $region56: #{tpu_custom_call.1} parent=11 // pred_fallthru
        _
      // Predicated region
      $region57: #{tpu_custom_call.1} parent=11 // pred_check
        %p442 = pneg %p326
      $region58: #{tpu_custom_call.1} parent=11 // pred_check_branch
        %444 = sbr.rel (%p442) target = $region60
      $region59: #{tpu_custom_call.1} parent=11 // pred_region
        _
      $region60: #{tpu_custom_call.1} parent=11 // pred_fallthru
        _
      // Predicated region
      $region61: #{tpu_custom_call.1} parent=11 // pred_check
        %p445 = pneg %p347
      $region62: #{tpu_custom_call.1} parent=11 // pred_check_branch
        %447 = sbr.rel (%p445) target = $region64
      $region63: #{tpu_custom_call.1} parent=11 // pred_region
        _
      $region64: #{tpu_custom_call.1} parent=11 // pred_fallthru
        _
      // Predicated region
      $region65: #{tpu_custom_call.1} parent=11 // pred_check
        %p448 = pneg %p368
      $region66: #{tpu_custom_call.1} parent=11 // pred_check_branch
        %450 = sbr.rel (%p448) target = $region68
      $region67: #{tpu_custom_call.1} parent=11 // pred_region
        _
      $region68: #{tpu_custom_call.1} parent=11 // pred_fallthru
        _
    $region12: #{tpu_custom_call.1} parent=5 // pred_fallthru
      _
    %p451 = scmp.lt.s32.totalorder %s22, 2
    // Predicated region
    $region69: #{tpu_custom_call.1} parent=5 // pred_check
      %p452 = pneg %p451
    $region70: #{tpu_custom_call.1} parent=5 // pred_check_branch
      %454 = sbr.rel (%p452) target = $region72
    $region71: #{tpu_custom_call.1} parent=5 // pred_region
      // Predicated region
      $region73: #{tpu_custom_call.1} parent=71 // pred_check
        %p455 = pneg %p42
      $region74: #{tpu_custom_call.1} parent=71 // pred_check_branch
        %457 = sbr.rel (%p455) target = $region76
      $region75: #{tpu_custom_call.1} parent=71 // pred_region
        %p458 = scmp.lt.s32.totalorder %s22, 1
        %s459 = scalar_select %p458, %s22, 1
        %s460 = smul.addr %s459, 32
        %s461 = smul.addr %s460, 8
        %s462 = scalar_lea.vmem %s0, %s461
      $region76: #{tpu_custom_call.1} parent=71 // pred_fallthru
        _
      // Predicated region
      $region77: #{tpu_custom_call.1} parent=71 // pred_check
        %p463 = pneg %p68
      $region78: #{tpu_custom_call.1} parent=71 // pred_check_branch
        %465 = sbr.rel (%p463) target = $region80
      $region79: #{tpu_custom_call.1} parent=71 // pred_region
        %p466 = scmp.lt.s32.totalorder %s22, 1
        %s467 = scalar_select %p466, %s22, 1
        %s468 = scalar_lea.vmem %s1, %s467
      $region80: #{tpu_custom_call.1} parent=71 // pred_fallthru
        _
    $region72: #{tpu_custom_call.1} parent=5 // pred_fallthru
      _
    %p469 = scmp.le.s32.totalorder 1, %s22
    %p470 = scmp.lt.s32.totalorder %s22, 3
    %p471 = pnand %p469, %p470
    %p472 = pneg %p471
    // Predicated region
    $region81: #{tpu_custom_call.1} parent=5 // pred_check
      _
    $region82: #{tpu_custom_call.1} parent=5 // pred_check_branch
      %474 = sbr.rel (%p471) target = $region84
    $region83: #{tpu_custom_call.1} parent=5 // pred_region
      %s475 = ssub.s32 %s22, 1
      %p476 = scmp.lt.s32.totalorder %s27, 1
      %s477 = scalar_select %p476, %s27, 1
      %s478 = smul.addr %s477, 32
      %s479 = smul.addr %s478, 8
      %s480 = scalar_lea.vmem %s0, %s479
      %p481 = pneg %p48
      %p482 = pneg %p45
      %p483 = scmp.lt.s32.totalorder %s27, 1
      %s484 = scalar_select %p483, %s27, 1
      %s485 = scalar_lea.vmem %s1, %s484
      %p486 = pneg %p74
      %p487 = pneg %p71
      %p488 = pneg %p95
      %p489 = pneg %p92
      %p490 = pneg %p116
      %p491 = pneg %p113
      %p492 = pneg %p137
      %p493 = pneg %p134
      %p494 = pneg %p158
      %p495 = pneg %p155
      %p496 = pneg %p179
      %p497 = pneg %p176
      %p498 = pneg %p200
      %p499 = pneg %p197
      %p500 = pneg %p221
      %p501 = pneg %p218
      %p502 = pneg %p242
      %p503 = pneg %p239
      %p504 = pneg %p263
      %p505 = pneg %p260
      %p506 = pneg %p284
      %p507 = pneg %p281
      %p508 = pneg %p305
      %p509 = pneg %p302
      %p510 = pneg %p326
      %p511 = pneg %p323
      %p512 = pneg %p347
      %p513 = pneg %p344
      %p514 = pneg %p368
      %p515 = pneg %p365
      %p516 = pneg %p394
      %p517 = pneg %p391
      %p518 = scmp.lt.s32.totalorder %s27, 1
      %s519 = scalar_select %p518, %s27, 1
      %s520 = smul.addr %s519, 32
      %s521 = smul.addr %s520, 8
      %s522 = scalar_lea.vmem %s16, %s521
      %p523 = scmp.lt.s32.totalorder %s27, 1
      %s524 = scalar_select %p523, %s27, 1
      %s525 = smul.addr %s524, 32
      %s526 = smul.addr %s525, 8
      %s527 = scalar_lea.vmem %s0, %s526
      %p528 = scmp.lt.s32.totalorder %s27, 1
      %s529 = scalar_select %p528, %s27, 1
      %s530 = scalar_lea.vmem %s1, %s529
      %p531 = scmp.lt.s32.totalorder %s27, 1
      %s532 = scalar_select %p531, %s27, 1
      %s533 = smul.addr %s532, 32
      %s534 = smul.addr %s533, 8
      %s535 = scalar_lea.vmem %s16, %s534
      %v536 = vld [vmem:[%s527] sm:$0xff]
      %v537 = vld [vmem:[%s527 + $0x8] sm:$0xff]
      %v538 = vld [vmem:[%s527 + $0x10] sm:$0xff]
      %v539 = vld [vmem:[%s527 + $0x18] sm:$0xff]
      %v540 = vld [vmem:[%s527 + $0x20] sm:$0xff]
      %v541 = vld [vmem:[%s527 + $0x28] sm:$0xff]
      %v542 = vld [vmem:[%s527 + $0x30] sm:$0xff]
      %v543 = vld [vmem:[%s527 + $0x38] sm:$0xff]
      %v544 = vld [vmem:[%s527 + $0x40] sm:$0xff]
      %v545 = vld [vmem:[%s527 + $0x48] sm:$0xff]
      %v546 = vld [vmem:[%s527 + $0x50] sm:$0xff]
      %v547 = vld [vmem:[%s527 + $0x58] sm:$0xff]
      %v548 = vld [vmem:[%s527 + $0x60] sm:$0xff]
      %v549 = vld [vmem:[%s527 + $0x68] sm:$0xff]
      %v550 = vld [vmem:[%s527 + $0x70] sm:$0xff]
      %v551 = vld [vmem:[%s527 + $0x78] sm:$0xff]
      %v552 = vld [vmem:[%s527 + $0x80] sm:$0xff]
      %v553 = vld [vmem:[%s527 + $0x88] sm:$0xff]
      %v554 = vld [vmem:[%s527 + $0x90] sm:$0xff]
      %v555 = vld [vmem:[%s527 + $0x98] sm:$0xff]
      %v556 = vld [vmem:[%s527 + $0xa0] sm:$0xff]
      %v557 = vld [vmem:[%s527 + $0xa8] sm:$0xff]
      %v558 = vld [vmem:[%s527 + $0xb0] sm:$0xff]
      %v559 = vld [vmem:[%s527 + $0xb8] sm:$0xff]
      %v560 = vld [vmem:[%s527 + $0xc0] sm:$0xff]
      %v561 = vld [vmem:[%s527 + $0xc8] sm:$0xff]
      %v562 = vld [vmem:[%s527 + $0xd0] sm:$0xff]
      %v563 = vld [vmem:[%s527 + $0xd8] sm:$0xff]
      %v564 = vld [vmem:[%s527 + $0xe0] sm:$0xff]
      %v565 = vld [vmem:[%s527 + $0xe8] sm:$0xff]
      %v566 = vld [vmem:[%s527 + $0xf0] sm:$0xff]
      %v567 = vld [vmem:[%s527 + $0xf8] sm:$0xff]
      %v568 = vld [vmem:[%s4] sm:$0xf]
      %v569 = vld [vmem:[%s5] sm:$0x1]
      %v570 = vld [vmem:[%s2] sm:$0x1]
      %v571 = vld [vmem:[%s3] sm:$0x1]
      %vm572 = vcmask 31744
      %v573 = vsel %vm572, %v536, 0.0
      %v574 = vsel %vm572, %v537, 0.0
      %v575 = vadd.f32 %v573, %v574
      %v576 = vsel %vm572, %v538, 0.0
      %v577 = vadd.f32 %v575, %v576
      %v578 = vsel %vm572, %v539, 0.0
      %v579 = vadd.f32 %v577, %v578
      %v580 = vsel %vm572, %v540, 0.0
      %v581 = vadd.f32 %v579, %v580
      %v582 = vsel %vm572, %v541, 0.0
      %v583 = vadd.f32 %v581, %v582
      %v584 = vsel %vm572, %v542, 0.0
      %v585 = vadd.f32 %v583, %v584
      %v586 = vsel %vm572, %v543, 0.0
      %v587 = vadd.f32 %v585, %v586
      %v588 = vsel %vm572, %v544, 0.0
      %v589 = vadd.f32 %v587, %v588
      %v590 = vsel %vm572, %v545, 0.0
      %v591 = vadd.f32 %v589, %v590
      %v592 = vsel %vm572, %v546, 0.0
      %v593 = vadd.f32 %v591, %v592
      %v594 = vsel %vm572, %v547, 0.0
      %v595 = vadd.f32 %v593, %v594
      %v596 = vsel %vm572, %v548, 0.0
      %v597 = vadd.f32 %v595, %v596
      %v598 = vsel %vm572, %v549, 0.0
      %v599 = vadd.f32 %v597, %v598
      %v600 = vsel %vm572, %v550, 0.0
      %v601 = vadd.f32 %v599, %v600
      %v602 = vsel %vm572, %v551, 0.0
      %v603 = vadd.f32 %v601, %v602
      %v604 = vsel %vm572, %v552, 0.0
      %v605 = vadd.f32 %v603, %v604
      %v606 = vsel %vm572, %v553, 0.0
      %v607 = vadd.f32 %v605, %v606
      %v608 = vsel %vm572, %v554, 0.0
      %v609 = vadd.f32 %v607, %v608
      %v610 = vsel %vm572, %v555, 0.0
      %v611 = vadd.f32 %v609, %v610
      %v612 = vsel %vm572, %v556, 0.0
      %v613 = vadd.f32 %v611, %v612
      %v614 = vsel %vm572, %v557, 0.0
      %v615 = vadd.f32 %v613, %v614
      %v616 = vsel %vm572, %v558, 0.0
      %v617 = vadd.f32 %v615, %v616
      %v618 = vsel %vm572, %v559, 0.0
      %v619 = vadd.f32 %v617, %v618
      %v620 = vsel %vm572, %v560, 0.0
      %v621 = vadd.f32 %v619, %v620
      %v622 = vsel %vm572, %v561, 0.0
      %v623 = vadd.f32 %v621, %v622
      %v624 = vsel %vm572, %v562, 0.0
      %v625 = vadd.f32 %v623, %v624
      %v626 = vsel %vm572, %v563, 0.0
      %v627 = vadd.f32 %v625, %v626
      %v628 = vsel %vm572, %v564, 0.0
      %v629 = vadd.f32 %v627, %v628
      %v630 = vsel %vm572, %v565, 0.0
      %v631 = vadd.f32 %v629, %v630
      %v632 = vsel %vm572, %v566, 0.0
      %v633 = vadd.f32 %v631, %v632
      %v634 = vsel %vm572, %v567, 0.0
      %v635 = vadd.f32 %v633, %v634
      %v636 = vrot.slane %v635, 4
      %v637 = vadd.f32 %v635, %v636
      %v638 = vrot.slane %v637, 2
      %v639 = vadd.f32 %v637, %v638
      %v640 = vrot.slane %v639, 1
      %v641 = vadd.f32 %v639, %v640
      %v642 = vrcp.pop 256.0
      %v643 = vmul.f32 %v641, %v642
      %v645 = vsel %vm572, %v643, 0
      %vm647 = vcmask 1043456
      %v649 = vsel %vm647, %v568, 0
      %651 = vmatprep.subr.mxu0 0.0
      %652 = vmatpush1.msra.mxu0 0.0
      %653 = vmatprep.subr.mxu0 0.0
      %654 = vmatpush1.msra.mxu0 0.0
      %655 = vmatprep.subr.mxu0 0.0
      %656 = vmatpush1.msra.mxu0 0.0
      %657 = vmatprep.subr.mxu0 0.0
      %658 = vmatpush1.msra.mxu0 0.0
      %659 = vmatprep.subr.mxu0 0.0
      %660 = vmatpush1.msra.mxu0 0.0
      %661 = vmatprep.subr.mxu0 0.0
      %662 = vmatpush1.msra.mxu0 0.0
      %663 = vmatprep.subr.mxu0 0.0
      %664 = vmatpush1.msra.mxu0 0.0
      %665 = vmatprep.subr.mxu0 0.0
      %666 = vmatpush1.msra.mxu0 0.0
      %667 = vmatprep.subr.mxu0 0.0
      %668 = vmatpush1.msra.mxu0 0.0
      %669 = vmatprep.subr.mxu0 0.0
      %670 = vmatpush1.msra.mxu0 0.0
      %671 = vmatprep.subr.mxu0 0.0
      %672 = vmatpush1.msra.mxu0 0.0
      %673 = vmatprep.subr.mxu0 0.0
      %674 = vmatpush1.msra.mxu0 0.0
      %675 = vmatprep.subr.mxu0 0.0
      %676 = vmatpush1.msra.mxu0 0.0
      %677 = vmatprep.subr.mxu0 0.0
      %678 = vmatpush1.msra.mxu0 0.0
      %679 = vmatprep.subr.mxu0 0.0
      %680 = vmatpush1.msra.mxu0 0.0
      %681 = vmatprep.subr.mxu0 0.0
      %682 = vmatpush1.msra.mxu0 %v649
      %683 = vmatprep.subr.mxu0 0.0
      %684 = vmatpush2.msra.mxu0 0.0
      %685 = vmatprep.subr.mxu0 0.0
      %686 = vmatpush2.msra.mxu0 0.0
      %687 = vmatprep.subr.mxu0 0.0
      %688 = vmatpush2.msra.mxu0 0.0
      %689 = vmatprep.subr.mxu0 0.0
      %690 = vmatpush2.msra.mxu0 0.0
      %691 = vmatprep.subr.mxu0 0.0
      %692 = vmatpush2.msra.mxu0 0.0
      %693 = vmatprep.subr.mxu0 0.0
      %694 = vmatpush2.msra.mxu0 0.0
      %695 = vmatprep.subr.mxu0 0.0
      %696 = vmatpush2.msra.mxu0 0.0
      %697 = vmatprep.subr.mxu0 0.0
      %698 = vmatpush2.msra.mxu0 0.0
      %699 = vmatprep.subr.mxu0 0.0
      %700 = vmatpush2.msra.mxu0 0.0
      %701 = vmatprep.subr.mxu0 0.0
      %702 = vmatpush2.msra.mxu0 0.0
      %703 = vmatprep.subr.mxu0 0.0
      %704 = vmatpush2.msra.mxu0 0.0
      %705 = vmatprep.subr.mxu0 0.0
      %706 = vmatpush2.msra.mxu0 0.0
      %707 = vmatprep.subr.mxu0 0.0
      %708 = vmatpush2.msra.mxu0 0.0
      %709 = vmatprep.subr.mxu0 0.0
      %710 = vmatpush2.msra.mxu0 0.0
      %711 = vmatprep.subr.mxu0 0.0
      %712 = vmatpush2.msra.mxu0 0.0
      %713 = vmatprep.subr.mxu0 0.0
      %714 = vmatpush2.msra.mxu0 0.0
      %715 = vmatprep.mubr.f32.mxu0 0.0
      %716 = vmatmul.mubr.f32.gmra.mxu0 %v645
      %v717 = vpop.f32.mrf.mxu0
      %v718 = vadd.f32 0.0, %v717
      %v719 = vpop.f32.mrf.mxu0
      %720 = vdwg.mxu0
      %vm721 = vcmask 7168
      %v723 = vsel %vm721, %v718, 0
      %vm725 = vcmask 1040384
      %v727 = vsel %vm725, %v569, 0
      %729 = vmatprep.subr.mxu0 0.0
      %730 = vmatpush1.msra.mxu0 0.0
      %731 = vmatprep.subr.mxu0 0.0
      %732 = vmatpush1.msra.mxu0 0.0
      %733 = vmatprep.subr.mxu0 0.0
      %734 = vmatpush1.msra.mxu0 0.0
      %735 = vmatprep.subr.mxu0 0.0
      %736 = vmatpush1.msra.mxu0 0.0
      %737 = vmatprep.subr.mxu0 0.0
      %738 = vmatpush1.msra.mxu0 0.0
      %739 = vmatprep.subr.mxu0 0.0
      %740 = vmatpush1.msra.mxu0 0.0
      %741 = vmatprep.subr.mxu0 0.0
      %742 = vmatpush1.msra.mxu0 0.0
      %743 = vmatprep.subr.mxu0 0.0
      %744 = vmatpush1.msra.mxu0 0.0
      %745 = vmatprep.subr.mxu0 0.0
      %746 = vmatpush1.msra.mxu0 0.0
      %747 = vmatprep.subr.mxu0 0.0
      %748 = vmatpush1.msra.mxu0 0.0
      %749 = vmatprep.subr.mxu0 0.0
      %750 = vmatpush1.msra.mxu0 0.0
      %751 = vmatprep.subr.mxu0 0.0
      %752 = vmatpush1.msra.mxu0 0.0
      %753 = vmatprep.subr.mxu0 0.0
      %754 = vmatpush1.msra.mxu0 0.0
      %755 = vmatprep.subr.mxu0 0.0
      %756 = vmatpush1.msra.mxu0 0.0
      %757 = vmatprep.subr.mxu0 0.0
      %758 = vmatpush1.msra.mxu0 0.0
      %759 = vmatprep.subr.mxu0 0.0
      %760 = vmatpush1.msra.mxu0 %v727
      %761 = vmatprep.subr.mxu0 0.0
      %762 = vmatpush2.msra.mxu0 0.0
      %763 = vmatprep.subr.mxu0 0.0
      %764 = vmatpush2.msra.mxu0 0.0
      %765 = vmatprep.subr.mxu0 0.0
      %766 = vmatpush2.msra.mxu0 0.0
      %767 = vmatprep.subr.mxu0 0.0
      %768 = vmatpush2.msra.mxu0 0.0
      %769 = vmatprep.subr.mxu0 0.0
      %770 = vmatpush2.msra.mxu0 0.0
      %771 = vmatprep.subr.mxu0 0.0
      %772 = vmatpush2.msra.mxu0 0.0
      %773 = vmatprep.subr.mxu0 0.0
      %774 = vmatpush2.msra.mxu0 0.0
      %775 = vmatprep.subr.mxu0 0.0
      %776 = vmatpush2.msra.mxu0 0.0
      %777 = vmatprep.subr.mxu0 0.0
      %778 = vmatpush2.msra.mxu0 0.0
      %779 = vmatprep.subr.mxu0 0.0
      %780 = vmatpush2.msra.mxu0 0.0
      %781 = vmatprep.subr.mxu0 0.0
      %782 = vmatpush2.msra.mxu0 0.0
      %783 = vmatprep.subr.mxu0 0.0
      %784 = vmatpush2.msra.mxu0 0.0
      %785 = vmatprep.subr.mxu0 0.0
      %786 = vmatpush2.msra.mxu0 0.0
      %787 = vmatprep.subr.mxu0 0.0
      %788 = vmatpush2.msra.mxu0 0.0
      %789 = vmatprep.subr.mxu0 0.0
      %790 = vmatpush2.msra.mxu0 0.0
      %791 = vmatprep.subr.mxu0 0.0
      %792 = vmatpush2.msra.mxu0 0.0
      %793 = vmatprep.mubr.f32.mxu0 0.0
      %794 = vmatmul.mubr.f32.gmra.mxu0 %v723
      %v795 = vpop.f32.mrf.mxu0
      %v796 = vadd.f32 0.0, %v795
      %v797 = vpop.f32.mrf.mxu0
      %798 = vdwg.mxu0
      %v799 = vlaneseq
      %v800 = vshrl.u32 %v799, 7
      %v801 = vsub.s32 0, %v800
      %v802 = vrot.slane %v796, %v801
      %v803 = vsub.f32 %v536, %v802
      %v804 = vsub.f32 %v537, %v802
      %v805 = vsub.f32 %v538, %v802
      %v806 = vsub.f32 %v539, %v802
      %v807 = vsub.f32 %v540, %v802
      %v808 = vsub.f32 %v541, %v802
      %v809 = vsub.f32 %v542, %v802
      %v810 = vsub.f32 %v543, %v802
      %v811 = vsub.f32 %v544, %v802
      %v812 = vsub.f32 %v545, %v802
      %v813 = vsub.f32 %v546, %v802
      %v814 = vsub.f32 %v547, %v802
      %v815 = vsub.f32 %v548, %v802
      %v816 = vsub.f32 %v549, %v802
      %v817 = vsub.f32 %v550, %v802
      %v818 = vsub.f32 %v551, %v802
      %v819 = vsub.f32 %v552, %v802
      %v820 = vsub.f32 %v553, %v802
      %v821 = vsub.f32 %v554, %v802
      %v822 = vsub.f32 %v555, %v802
      %v823 = vsub.f32 %v556, %v802
      %v824 = vsub.f32 %v557, %v802
      %v825 = vsub.f32 %v558, %v802
      %v826 = vsub.f32 %v559, %v802
      %v827 = vsub.f32 %v560, %v802
      %v828 = vsub.f32 %v561, %v802
      %v829 = vsub.f32 %v562, %v802
      %v830 = vsub.f32 %v563, %v802
      %v831 = vsub.f32 %v564, %v802
      %v832 = vsub.f32 %v565, %v802
      %v833 = vsub.f32 %v566, %v802
      %v834 = vsub.f32 %v567, %v802
      %v835 = vmul.f32 %v803, %v803
      %v836 = vmul.f32 %v804, %v804
      %v837 = vmul.f32 %v805, %v805
      %v838 = vmul.f32 %v806, %v806
      %v839 = vmul.f32 %v807, %v807
      %v840 = vmul.f32 %v808, %v808
      %v841 = vmul.f32 %v809, %v809
      %v842 = vmul.f32 %v810, %v810
      %v843 = vmul.f32 %v811, %v811
      %v844 = vmul.f32 %v812, %v812
      %v845 = vmul.f32 %v813, %v813
      %v846 = vmul.f32 %v814, %v814
      %v847 = vmul.f32 %v815, %v815
      %v848 = vmul.f32 %v816, %v816
      %v849 = vmul.f32 %v817, %v817
      %v850 = vmul.f32 %v818, %v818
      %v851 = vmul.f32 %v819, %v819
      %v852 = vmul.f32 %v820, %v820
      %v853 = vmul.f32 %v821, %v821
      %v854 = vmul.f32 %v822, %v822
      %v855 = vmul.f32 %v823, %v823
      %v856 = vmul.f32 %v824, %v824
      %v857 = vmul.f32 %v825, %v825
      %v858 = vmul.f32 %v826, %v826
      %v859 = vmul.f32 %v827, %v827
      %v860 = vmul.f32 %v828, %v828
      %v861 = vmul.f32 %v829, %v829
      %v862 = vmul.f32 %v830, %v830
      %v863 = vmul.f32 %v831, %v831
      %v864 = vmul.f32 %v832, %v832
      %v865 = vmul.f32 %v833, %v833
      %v866 = vmul.f32 %v834, %v834
      %v867 = vsel %vm572, %v835, 0.0
      %v868 = vsel %vm572, %v836, 0.0
      %v869 = vadd.f32 %v867, %v868
      %v870 = vsel %vm572, %v837, 0.0
      %v871 = vadd.f32 %v869, %v870
      %v872 = vsel %vm572, %v838, 0.0
      %v873 = vadd.f32 %v871, %v872
      %v874 = vsel %vm572, %v839, 0.0
      %v875 = vadd.f32 %v873, %v874
      %v876 = vsel %vm572, %v840, 0.0
      %v877 = vadd.f32 %v875, %v876
      %v878 = vsel %vm572, %v841, 0.0
      %v879 = vadd.f32 %v877, %v878
      %v880 = vsel %vm572, %v842, 0.0
      %v881 = vadd.f32 %v879, %v880
      %v882 = vsel %vm572, %v843, 0.0
      %v883 = vadd.f32 %v881, %v882
      %v884 = vsel %vm572, %v844, 0.0
      %v885 = vadd.f32 %v883, %v884
      %v886 = vsel %vm572, %v845, 0.0
      %v887 = vadd.f32 %v885, %v886
      %v888 = vsel %vm572, %v846, 0.0
      %v889 = vadd.f32 %v887, %v888
      %v890 = vsel %vm572, %v847, 0.0
      %v891 = vadd.f32 %v889, %v890
      %v892 = vsel %vm572, %v848, 0.0
      %v893 = vadd.f32 %v891, %v892
      %v894 = vsel %vm572, %v849, 0.0
      %v895 = vadd.f32 %v893, %v894
      %v896 = vsel %vm572, %v850, 0.0
      %v897 = vadd.f32 %v895, %v896
      %v898 = vsel %vm572, %v851, 0.0
      %v899 = vadd.f32 %v897, %v898
      %v900 = vsel %vm572, %v852, 0.0
      %v901 = vadd.f32 %v899, %v900
      %v902 = vsel %vm572, %v853, 0.0
      %v903 = vadd.f32 %v901, %v902
      %v904 = vsel %vm572, %v854, 0.0
      %v905 = vadd.f32 %v903, %v904
      %v906 = vsel %vm572, %v855, 0.0
      %v907 = vadd.f32 %v905, %v906
      %v908 = vsel %vm572, %v856, 0.0
      %v909 = vadd.f32 %v907, %v908
      %v910 = vsel %vm572, %v857, 0.0
      %v911 = vadd.f32 %v909, %v910
      %v912 = vsel %vm572, %v858, 0.0
      %v913 = vadd.f32 %v911, %v912
      %v914 = vsel %vm572, %v859, 0.0
      %v915 = vadd.f32 %v913, %v914
      %v916 = vsel %vm572, %v860, 0.0
      %v917 = vadd.f32 %v915, %v916
      %v918 = vsel %vm572, %v861, 0.0
      %v919 = vadd.f32 %v917, %v918
      %v920 = vsel %vm572, %v862, 0.0
      %v921 = vadd.f32 %v919, %v920
      %v922 = vsel %vm572, %v863, 0.0
      %v923 = vadd.f32 %v921, %v922
      %v924 = vsel %vm572, %v864, 0.0
      %v925 = vadd.f32 %v923, %v924
      %v926 = vsel %vm572, %v865, 0.0
      %v927 = vadd.f32 %v925, %v926
      %v928 = vsel %vm572, %v866, 0.0
      %v929 = vadd.f32 %v927, %v928
      %v930 = vrot.slane %v929, 4
      %v931 = vadd.f32 %v929, %v930
      %v932 = vrot.slane %v931, 2
      %v933 = vadd.f32 %v931, %v932
      %v934 = vrot.slane %v933, 1
      %v935 = vadd.f32 %v933, %v934
      %v936 = vmul.f32 %v935, %v642
      %v938 = vsel %vm572, %v936, 0
      %940 = vmatprep.subr.mxu0 0.0
      %941 = vmatpush1.msra.mxu0 0.0
      %942 = vmatprep.subr.mxu0 0.0
      %943 = vmatpush1.msra.mxu0 0.0
      %944 = vmatprep.subr.mxu0 0.0
      %945 = vmatpush1.msra.mxu0 0.0
      %946 = vmatprep.subr.mxu0 0.0
      %947 = vmatpush1.msra.mxu0 0.0
      %948 = vmatprep.subr.mxu0 0.0
      %949 = vmatpush1.msra.mxu0 0.0
      %950 = vmatprep.subr.mxu0 0.0
      %951 = vmatpush1.msra.mxu0 0.0
      %952 = vmatprep.subr.mxu0 0.0
      %953 = vmatpush1.msra.mxu0 0.0
      %954 = vmatprep.subr.mxu0 0.0
      %955 = vmatpush1.msra.mxu0 0.0
      %956 = vmatprep.subr.mxu0 0.0
      %957 = vmatpush1.msra.mxu0 0.0
      %958 = vmatprep.subr.mxu0 0.0
      %959 = vmatpush1.msra.mxu0 0.0
      %960 = vmatprep.subr.mxu0 0.0
      %961 = vmatpush1.msra.mxu0 0.0
      %962 = vmatprep.subr.mxu0 0.0
      %963 = vmatpush1.msra.mxu0 0.0
      %964 = vmatprep.subr.mxu0 0.0
      %965 = vmatpush1.msra.mxu0 0.0
      %966 = vmatprep.subr.mxu0 0.0
      %967 = vmatpush1.msra.mxu0 0.0
      %968 = vmatprep.subr.mxu0 0.0
      %969 = vmatpush1.msra.mxu0 0.0
      %970 = vmatprep.subr.mxu0 0.0
      %971 = vmatpush1.msra.mxu0 %v649
      %972 = vmatprep.subr.mxu0 0.0
      %973 = vmatpush2.msra.mxu0 0.0
      %974 = vmatprep.subr.mxu0 0.0
      %975 = vmatpush2.msra.mxu0 0.0
      %976 = vmatprep.subr.mxu0 0.0
      %977 = vmatpush2.msra.mxu0 0.0
      %978 = vmatprep.subr.mxu0 0.0
      %979 = vmatpush2.msra.mxu0 0.0
      %980 = vmatprep.subr.mxu0 0.0
      %981 = vmatpush2.msra.mxu0 0.0
      %982 = vmatprep.subr.mxu0 0.0
      %983 = vmatpush2.msra.mxu0 0.0
      %984 = vmatprep.subr.mxu0 0.0
      %985 = vmatpush2.msra.mxu0 0.0
      %986 = vmatprep.subr.mxu0 0.0
      %987 = vmatpush2.msra.mxu0 0.0
      %988 = vmatprep.subr.mxu0 0.0
      %989 = vmatpush2.msra.mxu0 0.0
      %990 = vmatprep.subr.mxu0 0.0
      %991 = vmatpush2.msra.mxu0 0.0
      %992 = vmatprep.subr.mxu0 0.0
      %993 = vmatpush2.msra.mxu0 0.0
      %994 = vmatprep.subr.mxu0 0.0
      %995 = vmatpush2.msra.mxu0 0.0
      %996 = vmatprep.subr.mxu0 0.0
      %997 = vmatpush2.msra.mxu0 0.0
      %998 = vmatprep.subr.mxu0 0.0
      %999 = vmatpush2.msra.mxu0 0.0
      %1000 = vmatprep.subr.mxu0 0.0
      %1001 = vmatpush2.msra.mxu0 0.0
      %1002 = vmatprep.subr.mxu0 0.0
      %1003 = vmatpush2.msra.mxu0 0.0
      %1004 = vmatprep.mubr.f32.mxu0 0.0
      %1005 = vmatmul.mubr.f32.gmra.mxu0 %v938
      %v1006 = vpop.f32.mrf.mxu0
      %v1007 = vadd.f32 0.0, %v1006
      %v1008 = vpop.f32.mrf.mxu0
      %1009 = vdwg.mxu0
      %v1011 = vsel %vm721, %v1007, 0
      %1013 = vmatprep.subr.mxu0 0.0
      %1014 = vmatpush1.msra.mxu0 0.0
      %1015 = vmatprep.subr.mxu0 0.0
      %1016 = vmatpush1.msra.mxu0 0.0
      %1017 = vmatprep.subr.mxu0 0.0
      %1018 = vmatpush1.msra.mxu0 0.0
      %1019 = vmatprep.subr.mxu0 0.0
      %1020 = vmatpush1.msra.mxu0 0.0
      %1021 = vmatprep.subr.mxu0 0.0
      %1022 = vmatpush1.msra.mxu0 0.0
      %1023 = vmatprep.subr.mxu0 0.0
      %1024 = vmatpush1.msra.mxu0 0.0
      %1025 = vmatprep.subr.mxu0 0.0
      %1026 = vmatpush1.msra.mxu0 0.0
      %1027 = vmatprep.subr.mxu0 0.0
      %1028 = vmatpush1.msra.mxu0 0.0
      %1029 = vmatprep.subr.mxu0 0.0
      %1030 = vmatpush1.msra.mxu0 0.0
      %1031 = vmatprep.subr.mxu0 0.0
      %1032 = vmatpush1.msra.mxu0 0.0
      %1033 = vmatprep.subr.mxu0 0.0
      %1034 = vmatpush1.msra.mxu0 0.0
      %1035 = vmatprep.subr.mxu0 0.0
      %1036 = vmatpush1.msra.mxu0 0.0
      %1037 = vmatprep.subr.mxu0 0.0
      %1038 = vmatpush1.msra.mxu0 0.0
      %1039 = vmatprep.subr.mxu0 0.0
      %1040 = vmatpush1.msra.mxu0 0.0
      %1041 = vmatprep.subr.mxu0 0.0
      %1042 = vmatpush1.msra.mxu0 0.0
      %1043 = vmatprep.subr.mxu0 0.0
      %1044 = vmatpush1.msra.mxu0 %v727
      %1045 = vmatprep.subr.mxu0 0.0
      %1046 = vmatpush2.msra.mxu0 0.0
      %1047 = vmatprep.subr.mxu0 0.0
      %1048 = vmatpush2.msra.mxu0 0.0
      %1049 = vmatprep.subr.mxu0 0.0
      %1050 = vmatpush2.msra.mxu0 0.0
      %1051 = vmatprep.subr.mxu0 0.0
      %1052 = vmatpush2.msra.mxu0 0.0
      %1053 = vmatprep.subr.mxu0 0.0
      %1054 = vmatpush2.msra.mxu0 0.0
      %1055 = vmatprep.subr.mxu0 0.0
      %1056 = vmatpush2.msra.mxu0 0.0
      %1057 = vmatprep.subr.mxu0 0.0
      %1058 = vmatpush2.msra.mxu0 0.0
      %1059 = vmatprep.subr.mxu0 0.0
      %1060 = vmatpush2.msra.mxu0 0.0
      %1061 = vmatprep.subr.mxu0 0.0
      %1062 = vmatpush2.msra.mxu0 0.0
      %1063 = vmatprep.subr.mxu0 0.0
      %1064 = vmatpush2.msra.mxu0 0.0
      %1065 = vmatprep.subr.mxu0 0.0
      %1066 = vmatpush2.msra.mxu0 0.0
      %1067 = vmatprep.subr.mxu0 0.0
      %1068 = vmatpush2.msra.mxu0 0.0
      %1069 = vmatprep.subr.mxu0 0.0
      %1070 = vmatpush2.msra.mxu0 0.0
      %1071 = vmatprep.subr.mxu0 0.0
      %1072 = vmatpush2.msra.mxu0 0.0
      %1073 = vmatprep.subr.mxu0 0.0
      %1074 = vmatpush2.msra.mxu0 0.0
      %1075 = vmatprep.subr.mxu0 0.0
      %1076 = vmatpush2.msra.mxu0 0.0
      %1077 = vmatprep.mubr.f32.mxu0 0.0
      %1078 = vmatmul.mubr.f32.gmra.mxu0 %v1011
      %v1079 = vpop.f32.mrf.mxu0
      %v1080 = vadd.f32 1e-06, %v1079
      %v1081 = vpop.f32.mrf.mxu0
      %1082 = vdwg.mxu0
      %v1083 = vrsqrt.pop %v1080
      %v1084 = vlaneseq
      %v1085 = vshrl.u32 %v1084, 7
      %v1086 = vsub.s32 0, %v1085
      %v1087 = vrot.slane %v1083, %v1086
      %v1088 = vmul.f32 %v803, %v1087
      %v1089 = vmul.f32 %v804, %v1087
      %v1090 = vmul.f32 %v805, %v1087
      %v1091 = vmul.f32 %v806, %v1087
      %v1092 = vmul.f32 %v807, %v1087
      %v1093 = vmul.f32 %v808, %v1087
      %v1094 = vmul.f32 %v809, %v1087
      %v1095 = vmul.f32 %v810, %v1087
      %v1096 = vmul.f32 %v811, %v1087
      %v1097 = vmul.f32 %v812, %v1087
      %v1098 = vmul.f32 %v813, %v1087
      %v1099 = vmul.f32 %v814, %v1087
      %v1100 = vmul.f32 %v815, %v1087
      %v1101 = vmul.f32 %v816, %v1087
      %v1102 = vmul.f32 %v817, %v1087
      %v1103 = vmul.f32 %v818, %v1087
      %v1104 = vmul.f32 %v819, %v1087
      %v1105 = vmul.f32 %v820, %v1087
      %v1106 = vmul.f32 %v821, %v1087
      %v1107 = vmul.f32 %v822, %v1087
      %v1108 = vmul.f32 %v823, %v1087
      %v1109 = vmul.f32 %v824, %v1087
      %v1110 = vmul.f32 %v825, %v1087
      %v1111 = vmul.f32 %v826, %v1087
      %v1112 = vmul.f32 %v827, %v1087
      %v1113 = vmul.f32 %v828, %v1087
      %v1114 = vmul.f32 %v829, %v1087
      %v1115 = vmul.f32 %v830, %v1087
      %v1116 = vmul.f32 %v831, %v1087
      %v1117 = vmul.f32 %v832, %v1087
      %v1118 = vmul.f32 %v833, %v1087
      %v1119 = vmul.f32 %v834, %v1087
      %v1121 = vlaneseq
      %v1122 = vshrl.u32 %v1121, 7
      %v1123 = vsub.s32 0, %v1122
      %v1124 = vrot.slane %v570, %v1123
      %v1126 = vmul.f32 %v1088, %v1124
      %v1127 = vmul.f32 %v1089, %v1124
      %v1128 = vmul.f32 %v1090, %v1124
      %v1129 = vmul.f32 %v1091, %v1124
      %v1130 = vmul.f32 %v1092, %v1124
      %v1131 = vmul.f32 %v1093, %v1124
      %v1132 = vmul.f32 %v1094, %v1124
      %v1133 = vmul.f32 %v1095, %v1124
      %v1134 = vmul.f32 %v1096, %v1124
      %v1135 = vmul.f32 %v1097, %v1124
      %v1136 = vmul.f32 %v1098, %v1124
      %v1137 = vmul.f32 %v1099, %v1124
      %v1138 = vmul.f32 %v1100, %v1124
      %v1139 = vmul.f32 %v1101, %v1124
      %v1140 = vmul.f32 %v1102, %v1124
      %v1141 = vmul.f32 %v1103, %v1124
      %v1142 = vmul.f32 %v1104, %v1124
      %v1143 = vmul.f32 %v1105, %v1124
      %v1144 = vmul.f32 %v1106, %v1124
      %v1145 = vmul.f32 %v1107, %v1124
      %v1146 = vmul.f32 %v1108, %v1124
      %v1147 = vmul.f32 %v1109, %v1124
      %v1148 = vmul.f32 %v1110, %v1124
      %v1149 = vmul.f32 %v1111, %v1124
      %v1150 = vmul.f32 %v1112, %v1124
      %v1151 = vmul.f32 %v1113, %v1124
      %v1152 = vmul.f32 %v1114, %v1124
      %v1153 = vmul.f32 %v1115, %v1124
      %v1154 = vmul.f32 %v1116, %v1124
      %v1155 = vmul.f32 %v1117, %v1124
      %v1156 = vmul.f32 %v1118, %v1124
      %v1157 = vmul.f32 %v1119, %v1124
      %v1159 = vlaneseq
      %v1160 = vshrl.u32 %v1159, 7
      %v1161 = vsub.s32 0, %v1160
      %v1162 = vrot.slane %v571, %v1161
      %v1164 = vadd.f32 %v1126, %v1162
      %v1165 = vadd.f32 %v1127, %v1162
      %v1166 = vadd.f32 %v1128, %v1162
      %v1167 = vadd.f32 %v1129, %v1162
      %v1168 = vadd.f32 %v1130, %v1162
      %v1169 = vadd.f32 %v1131, %v1162
      %v1170 = vadd.f32 %v1132, %v1162
      %v1171 = vadd.f32 %v1133, %v1162
      %v1172 = vadd.f32 %v1134, %v1162
      %v1173 = vadd.f32 %v1135, %v1162
      %v1174 = vadd.f32 %v1136, %v1162
      %v1175 = vadd.f32 %v1137, %v1162
      %v1176 = vadd.f32 %v1138, %v1162
      %v1177 = vadd.f32 %v1139, %v1162
      %v1178 = vadd.f32 %v1140, %v1162
      %v1179 = vadd.f32 %v1141, %v1162
      %v1180 = vadd.f32 %v1142, %v1162
      %v1181 = vadd.f32 %v1143, %v1162
      %v1182 = vadd.f32 %v1144, %v1162
      %v1183 = vadd.f32 %v1145, %v1162
      %v1184 = vadd.f32 %v1146, %v1162
      %v1185 = vadd.f32 %v1147, %v1162
      %v1186 = vadd.f32 %v1148, %v1162
      %v1187 = vadd.f32 %v1149, %v1162
      %v1188 = vadd.f32 %v1150, %v1162
      %v1189 = vadd.f32 %v1151, %v1162
      %v1190 = vadd.f32 %v1152, %v1162
      %v1191 = vadd.f32 %v1153, %v1162
      %v1192 = vadd.f32 %v1154, %v1162
      %v1193 = vadd.f32 %v1155, %v1162
      %v1194 = vadd.f32 %v1156, %v1162
      %v1195 = vadd.f32 %v1157, %v1162
      %v1196 = vxor.u32 %v1164, 2147483648
      %v1197 = vxor.u32 %v1165, 2147483648
      %v1198 = vxor.u32 %v1166, 2147483648
      %v1199 = vxor.u32 %v1167, 2147483648
      %v1200 = vxor.u32 %v1168, 2147483648
      %v1201 = vxor.u32 %v1169, 2147483648
      %v1202 = vxor.u32 %v1170, 2147483648
      %v1203 = vxor.u32 %v1171, 2147483648
      %v1204 = vxor.u32 %v1172, 2147483648
      %v1205 = vxor.u32 %v1173, 2147483648
      %v1206 = vxor.u32 %v1174, 2147483648
      %v1207 = vxor.u32 %v1175, 2147483648
      %v1208 = vxor.u32 %v1176, 2147483648
      %v1209 = vxor.u32 %v1177, 2147483648
      %v1210 = vxor.u32 %v1178, 2147483648
      %v1211 = vxor.u32 %v1179, 2147483648
      %v1212 = vxor.u32 %v1180, 2147483648
      %v1213 = vxor.u32 %v1181, 2147483648
      %v1214 = vxor.u32 %v1182, 2147483648
      %v1215 = vxor.u32 %v1183, 2147483648
      %v1216 = vxor.u32 %v1184, 2147483648
      %v1217 = vxor.u32 %v1185, 2147483648
      %v1218 = vxor.u32 %v1186, 2147483648
      %v1219 = vxor.u32 %v1187, 2147483648
      %v1220 = vxor.u32 %v1188, 2147483648
      %v1221 = vxor.u32 %v1189, 2147483648
      %v1222 = vxor.u32 %v1190, 2147483648
      %v1223 = vxor.u32 %v1191, 2147483648
      %v1224 = vxor.u32 %v1192, 2147483648
      %v1225 = vxor.u32 %v1193, 2147483648
      %v1226 = vxor.u32 %v1194, 2147483648
      %v1227 = vxor.u32 %v1195, 2147483648
      %v1228 = vmul.f32 %v1196, 1.442695
      %v1229 = vpow.pop %v1228
      %v1230 = vmul.f32 %v1197, 1.442695
      %v1231 = vpow.pop %v1230
      %v1232 = vmul.f32 %v1198, 1.442695
      %v1233 = vpow.pop %v1232
      %v1234 = vmul.f32 %v1199, 1.442695
      %v1235 = vpow.pop %v1234
      %v1236 = vmul.f32 %v1200, 1.442695
      %v1237 = vpow.pop %v1236
      %v1238 = vmul.f32 %v1201, 1.442695
      %v1239 = vpow.pop %v1238
      %v1240 = vmul.f32 %v1202, 1.442695
      %v1241 = vpow.pop %v1240
      %v1242 = vmul.f32 %v1203, 1.442695
      %v1243 = vpow.pop %v1242
      %v1244 = vmul.f32 %v1204, 1.442695
      %v1245 = vpow.pop %v1244
      %v1246 = vmul.f32 %v1205, 1.442695
      %v1247 = vpow.pop %v1246
      %v1248 = vmul.f32 %v1206, 1.442695
      %v1249 = vpow.pop %v1248
      %v1250 = vmul.f32 %v1207, 1.442695
      %v1251 = vpow.pop %v1250
      %v1252 = vmul.f32 %v1208, 1.442695
      %v1253 = vpow.pop %v1252
      %v1254 = vmul.f32 %v1209, 1.442695
      %v1255 = vpow.pop %v1254
      %v1256 = vmul.f32 %v1210, 1.442695
      %v1257 = vpow.pop %v1256
      %v1258 = vmul.f32 %v1211, 1.442695
      %v1259 = vpow.pop %v1258
      %v1260 = vmul.f32 %v1212, 1.442695
      %v1261 = vpow.pop %v1260
      %v1262 = vmul.f32 %v1213, 1.442695
      %v1263 = vpow.pop %v1262
      %v1264 = vmul.f32 %v1214, 1.442695
      %v1265 = vpow.pop %v1264
      %v1266 = vmul.f32 %v1215, 1.442695
      %v1267 = vpow.pop %v1266
      %v1268 = vmul.f32 %v1216, 1.442695
      %v1269 = vpow.pop %v1268
      %v1270 = vmul.f32 %v1217, 1.442695
      %v1271 = vpow.pop %v1270
      %v1272 = vmul.f32 %v1218, 1.442695
      %v1273 = vpow.pop %v1272
      %v1274 = vmul.f32 %v1219, 1.442695
      %v1275 = vpow.pop %v1274
      %v1276 = vmul.f32 %v1220, 1.442695
      %v1277 = vpow.pop %v1276
      %v1278 = vmul.f32 %v1221, 1.442695
      %v1279 = vpow.pop %v1278
      %v1280 = vmul.f32 %v1222, 1.442695
      %v1281 = vpow.pop %v1280
      %v1282 = vmul.f32 %v1223, 1.442695
      %v1283 = vpow.pop %v1282
      %v1284 = vmul.f32 %v1224, 1.442695
      %v1285 = vpow.pop %v1284
      %v1286 = vmul.f32 %v1225, 1.442695
      %v1287 = vpow.pop %v1286
      %v1288 = vmul.f32 %v1226, 1.442695
      %v1289 = vpow.pop %v1288
      %v1290 = vmul.f32 %v1227, 1.442695
      %v1291 = vpow.pop %v1290
      %v1292 = vadd.f32 %v1229, 1.0
      %v1293 = vadd.f32 %v1231, 1.0
      %v1294 = vadd.f32 %v1233, 1.0
      %v1295 = vadd.f32 %v1235, 1.0
      %v1296 = vadd.f32 %v1237, 1.0
      %v1297 = vadd.f32 %v1239, 1.0
      %v1298 = vadd.f32 %v1241, 1.0
      %v1299 = vadd.f32 %v1243, 1.0
      %v1300 = vadd.f32 %v1245, 1.0
      %v1301 = vadd.f32 %v1247, 1.0
      %v1302 = vadd.f32 %v1249, 1.0
      %v1303 = vadd.f32 %v1251, 1.0
      %v1304 = vadd.f32 %v1253, 1.0
      %v1305 = vadd.f32 %v1255, 1.0
      %v1306 = vadd.f32 %v1257, 1.0
      %v1307 = vadd.f32 %v1259, 1.0
      %v1308 = vadd.f32 %v1261, 1.0
      %v1309 = vadd.f32 %v1263, 1.0
      %v1310 = vadd.f32 %v1265, 1.0
      %v1311 = vadd.f32 %v1267, 1.0
      %v1312 = vadd.f32 %v1269, 1.0
      %v1313 = vadd.f32 %v1271, 1.0
      %v1314 = vadd.f32 %v1273, 1.0
      %v1315 = vadd.f32 %v1275, 1.0
      %v1316 = vadd.f32 %v1277, 1.0
      %v1317 = vadd.f32 %v1279, 1.0
      %v1318 = vadd.f32 %v1281, 1.0
      %v1319 = vadd.f32 %v1283, 1.0
      %v1320 = vadd.f32 %v1285, 1.0
      %v1321 = vadd.f32 %v1287, 1.0
      %v1322 = vadd.f32 %v1289, 1.0
      %v1323 = vadd.f32 %v1291, 1.0
      %v1324 = vrcp.pop %v1292
      %v1325 = vmul.f32 1.0, %v1324
      %v1326 = vrcp.pop %v1293
      %v1327 = vmul.f32 1.0, %v1326
      %v1328 = vrcp.pop %v1294
      %v1329 = vmul.f32 1.0, %v1328
      %v1330 = vrcp.pop %v1295
      %v1331 = vmul.f32 1.0, %v1330
      %v1332 = vrcp.pop %v1296
      %v1333 = vmul.f32 1.0, %v1332
      %v1334 = vrcp.pop %v1297
      %v1335 = vmul.f32 1.0, %v1334
      %v1336 = vrcp.pop %v1298
      %v1337 = vmul.f32 1.0, %v1336
      %v1338 = vrcp.pop %v1299
      %v1339 = vmul.f32 1.0, %v1338
      %v1340 = vrcp.pop %v1300
      %v1341 = vmul.f32 1.0, %v1340
      %v1342 = vrcp.pop %v1301
      %v1343 = vmul.f32 1.0, %v1342
      %v1344 = vrcp.pop %v1302
      %v1345 = vmul.f32 1.0, %v1344
      %v1346 = vrcp.pop %v1303
      %v1347 = vmul.f32 1.0, %v1346
      %v1348 = vrcp.pop %v1304
      %v1349 = vmul.f32 1.0, %v1348
      %v1350 = vrcp.pop %v1305
      %v1351 = vmul.f32 1.0, %v1350
      %v1352 = vrcp.pop %v1306
      %v1353 = vmul.f32 1.0, %v1352
      %v1354 = vrcp.pop %v1307
      %v1355 = vmul.f32 1.0, %v1354
      %v1356 = vrcp.pop %v1308
      %v1357 = vmul.f32 1.0, %v1356
      %v1358 = vrcp.pop %v1309
      %v1359 = vmul.f32 1.0, %v1358
      %v1360 = vrcp.pop %v1310
      %v1361 = vmul.f32 1.0, %v1360
      %v1362 = vrcp.pop %v1311
      %v1363 = vmul.f32 1.0, %v1362
      %v1364 = vrcp.pop %v1312
      %v1365 = vmul.f32 1.0, %v1364
      %v1366 = vrcp.pop %v1313
      %v1367 = vmul.f32 1.0, %v1366
      %v1368 = vrcp.pop %v1314
      %v1369 = vmul.f32 1.0, %v1368
      %v1370 = vrcp.pop %v1315
      %v1371 = vmul.f32 1.0, %v1370
      %v1372 = vrcp.pop %v1316
      %v1373 = vmul.f32 1.0, %v1372
      %v1374 = vrcp.pop %v1317
      %v1375 = vmul.f32 1.0, %v1374
      %v1376 = vrcp.pop %v1318
      %v1377 = vmul.f32 1.0, %v1376
      %v1378 = vrcp.pop %v1319
      %v1379 = vmul.f32 1.0, %v1378
      %v1380 = vrcp.pop %v1320
      %v1381 = vmul.f32 1.0, %v1380
      %v1382 = vrcp.pop %v1321
      %v1383 = vmul.f32 1.0, %v1382
      %v1384 = vrcp.pop %v1322
      %v1385 = vmul.f32 1.0, %v1384
      %v1386 = vrcp.pop %v1323
      %v1387 = vmul.f32 1.0, %v1386
      %v1388 = vmul.f32 %v1164, %v1325
      %v1389 = vmul.f32 %v1165, %v1327
      %v1390 = vmul.f32 %v1166, %v1329
      %v1391 = vmul.f32 %v1167, %v1331
      %v1392 = vmul.f32 %v1168, %v1333
      %v1393 = vmul.f32 %v1169, %v1335
      %v1394 = vmul.f32 %v1170, %v1337
      %v1395 = vmul.f32 %v1171, %v1339
      %v1396 = vmul.f32 %v1172, %v1341
      %v1397 = vmul.f32 %v1173, %v1343
      %v1398 = vmul.f32 %v1174, %v1345
      %v1399 = vmul.f32 %v1175, %v1347
      %v1400 = vmul.f32 %v1176, %v1349
      %v1401 = vmul.f32 %v1177, %v1351
      %v1402 = vmul.f32 %v1178, %v1353
      %v1403 = vmul.f32 %v1179, %v1355
      %v1404 = vmul.f32 %v1180, %v1357
      %v1405 = vmul.f32 %v1181, %v1359
      %v1406 = vmul.f32 %v1182, %v1361
      %v1407 = vmul.f32 %v1183, %v1363
      %v1408 = vmul.f32 %v1184, %v1365
      %v1409 = vmul.f32 %v1185, %v1367
      %v1410 = vmul.f32 %v1186, %v1369
      %v1411 = vmul.f32 %v1187, %v1371
      %v1412 = vmul.f32 %v1188, %v1373
      %v1413 = vmul.f32 %v1189, %v1375
      %v1414 = vmul.f32 %v1190, %v1377
      %v1415 = vmul.f32 %v1191, %v1379
      %v1416 = vmul.f32 %v1192, %v1381
      %v1417 = vmul.f32 %v1193, %v1383
      %v1418 = vmul.f32 %v1194, %v1385
      %v1419 = vmul.f32 %v1195, %v1387
      %1420 = vst.msk [vmem:[#allocation2] sm:$0xff] %vm572, 0.0
      %1421 = vst.msk [vmem:[#allocation2 + $0x8] sm:$0xff] %vm572, 0.0
      %vm1422 = vcmask 25600
      %1423 = vst.msk [vmem:[#allocation2 + $0x10] sm:$0x3] %vm1422, 0.0
      %1424 = vst.msk [vmem:[#allocation2 + $0x18] sm:$0xff] %vm572, 0.0
      %1425 = vst.msk [vmem:[#allocation2 + $0x20] sm:$0xff] %vm572, 0.0
      %1426 = vst.msk [vmem:[#allocation2 + $0x28] sm:$0x3] %vm1422, 0.0
      %1427 = vst.msk [vmem:[#allocation2 + $0x30] sm:$0xff] %vm572, 0.0
      %1428 = vst.msk [vmem:[#allocation2 + $0x38] sm:$0xff] %vm572, 0.0
      %1429 = vst.msk [vmem:[#allocation2 + $0x40] sm:$0x3] %vm1422, 0.0
      %1430 = vst.msk [vmem:[#allocation2 + $0x48] sm:$0xff] %vm572, 0.0
      %1431 = vst.msk [vmem:[#allocation2 + $0x50] sm:$0xff] %vm572, 0.0
      %1432 = vst.msk [vmem:[#allocation2 + $0x58] sm:$0x3] %vm1422, 0.0
      %1433 = vst.msk [vmem:[#allocation2 + $0x60] sm:$0xff] %vm572, 0.0
      %1434 = vst.msk [vmem:[#allocation2 + $0x68] sm:$0xff] %vm572, 0.0
      %1435 = vst.msk [vmem:[#allocation2 + $0x70] sm:$0x3] %vm1422, 0.0
      %1436 = vst.msk [vmem:[#allocation2 + $0x78] sm:$0xff] %vm572, 0.0
      %1437 = vst.msk [vmem:[#allocation2 + $0x80] sm:$0xff] %vm572, 0.0
      %1438 = vst.msk [vmem:[#allocation2 + $0x88] sm:$0x3] %vm1422, 0.0
      %1439 = vst.msk [vmem:[#allocation2 + $0x90] sm:$0xff] %vm572, 0.0
      %1440 = vst.msk [vmem:[#allocation2 + $0x98] sm:$0xff] %vm572, 0.0
      %1441 = vst.msk [vmem:[#allocation2 + $0xa0] sm:$0x3] %vm1422, 0.0
      %1442 = vst.msk [vmem:[#allocation2 + $0xa8] sm:$0xff] %vm572, 0.0
      %1443 = vst.msk [vmem:[#allocation2 + $0xb0] sm:$0xff] %vm572, 0.0
      %1444 = vst.msk [vmem:[#allocation2 + $0xb8] sm:$0x3] %vm1422, 0.0
      %1445 = vst.msk [vmem:[#allocation2 + $0xc0] sm:$0xff] %vm572, 0.0
      %1446 = vst.msk [vmem:[#allocation2 + $0xc8] sm:$0xff] %vm572, 0.0
      %1447 = vst.msk [vmem:[#allocation2 + $0xd0] sm:$0x3] %vm1422, 0.0
      %1448 = vst.msk [vmem:[#allocation2 + $0xd8] sm:$0xff] %vm572, 0.0
      %1449 = vst.msk [vmem:[#allocation2 + $0xe0] sm:$0xff] %vm572, 0.0
      %1450 = vst.msk [vmem:[#allocation2 + $0xe8] sm:$0x3] %vm1422, 0.0
      %1451 = vst.msk [vmem:[#allocation2 + $0xf0] sm:$0xff] %vm572, 0.0
      %1452 = vst.msk [vmem:[#allocation2 + $0xf8] sm:$0xff] %vm572, 0.0
      %1453 = vst.msk [vmem:[#allocation2 + $0x100] sm:$0x3] %vm1422, 0.0
      %1454 = vst.msk [vmem:[#allocation2 + $0x108] sm:$0xff] %vm572, 0.0
      %1455 = vst.msk [vmem:[#allocation2 + $0x110] sm:$0xff] %vm572, 0.0
      %1456 = vst.msk [vmem:[#allocation2 + $0x118] sm:$0x3] %vm1422, 0.0
      %1457 = vst.msk [vmem:[#allocation2 + $0x120] sm:$0xff] %vm572, 0.0
      %1458 = vst.msk [vmem:[#allocation2 + $0x128] sm:$0xff] %vm572, 0.0
      %1459 = vst.msk [vmem:[#allocation2 + $0x130] sm:$0x3] %vm1422, 0.0
      %1460 = vst.msk [vmem:[#allocation2 + $0x138] sm:$0xff] %vm572, 0.0
      %1461 = vst.msk [vmem:[#allocation2 + $0x140] sm:$0xff] %vm572, 0.0
      %1462 = vst.msk [vmem:[#allocation2 + $0x148] sm:$0x3] %vm1422, 0.0
      %1463 = vst.msk [vmem:[#allocation2 + $0x150] sm:$0xff] %vm572, 0.0
      %1464 = vst.msk [vmem:[#allocation2 + $0x158] sm:$0xff] %vm572, 0.0
      %1465 = vst.msk [vmem:[#allocation2 + $0x160] sm:$0x3] %vm1422, 0.0
      %1466 = vst.msk [vmem:[#allocation2 + $0x168] sm:$0xff] %vm572, 0.0
      %1467 = vst.msk [vmem:[#allocation2 + $0x170] sm:$0xff] %vm572, 0.0
      %1468 = vst.msk [vmem:[#allocation2 + $0x178] sm:$0x3] %vm1422, 0.0
      %1469 = vst.msk [vmem:[#allocation2 + $0x180] sm:$0xff] %vm572, 0.0
      %1470 = vst.msk [vmem:[#allocation2 + $0x188] sm:$0xff] %vm572, 0.0
      %1471 = vst.msk [vmem:[#allocation2 + $0x190] sm:$0x3] %vm1422, 0.0
      %1472 = vst.msk [vmem:[#allocation2 + $0x198] sm:$0xff] %vm572, 0.0
      %1473 = vst.msk [vmem:[#allocation2 + $0x1a0] sm:$0xff] %vm572, 0.0
      %1474 = vst.msk [vmem:[#allocation2 + $0x1a8] sm:$0x3] %vm1422, 0.0
      %s1475 = scalar_lea.vmem [#allocation2], 24
      %1476 = vst.msk [vmem:[%s1475 + $0x1] sm:$0xff] %vm572, %v1388
      %1477 = vst.msk [vmem:[%s1475 + $0x9] sm:$0xff] %vm572, %v1389
      %1478 = vst.msk [vmem:[%s1475 + $0x19] sm:$0xff] %vm572, %v1390
      %1479 = vst.msk [vmem:[%s1475 + $0x21] sm:$0xff] %vm572, %v1391
      %1480 = vst.msk [vmem:[%s1475 + $0x31] sm:$0xff] %vm572, %v1392
      %1481 = vst.msk [vmem:[%s1475 + $0x39] sm:$0xff] %vm572, %v1393
      %1482 = vst.msk [vmem:[%s1475 + $0x49] sm:$0xff] %vm572, %v1394
      %1483 = vst.msk [vmem:[%s1475 + $0x51] sm:$0xff] %vm572, %v1395
      %1484 = vst.msk [vmem:[%s1475 + $0x61] sm:$0xff] %vm572, %v1396
      %1485 = vst.msk [vmem:[%s1475 + $0x69] sm:$0xff] %vm572, %v1397
      %1486 = vst.msk [vmem:[%s1475 + $0x79] sm:$0xff] %vm572, %v1398
      %1487 = vst.msk [vmem:[%s1475 + $0x81] sm:$0xff] %vm572, %v1399
      %1488 = vst.msk [vmem:[%s1475 + $0x91] sm:$0xff] %vm572, %v1400
      %1489 = vst.msk [vmem:[%s1475 + $0x99] sm:$0xff] %vm572, %v1401
      %1490 = vst.msk [vmem:[%s1475 + $0xa9] sm:$0xff] %vm572, %v1402
      %1491 = vst.msk [vmem:[%s1475 + $0xb1] sm:$0xff] %vm572, %v1403
      %1492 = vst.msk [vmem:[%s1475 + $0xc1] sm:$0xff] %vm572, %v1404
      %1493 = vst.msk [vmem:[%s1475 + $0xc9] sm:$0xff] %vm572, %v1405
      %1494 = vst.msk [vmem:[%s1475 + $0xd9] sm:$0xff] %vm572, %v1406
      %1495 = vst.msk [vmem:[%s1475 + $0xe1] sm:$0xff] %vm572, %v1407
      %1496 = vst.msk [vmem:[%s1475 + $0xf1] sm:$0xff] %vm572, %v1408
      %1497 = vst.msk [vmem:[%s1475 + $0xf9] sm:$0xff] %vm572, %v1409
      %1498 = vst.msk [vmem:[%s1475 + $0x109] sm:$0xff] %vm572, %v1410
      %1499 = vst.msk [vmem:[%s1475 + $0x111] sm:$0xff] %vm572, %v1411
      %1500 = vst.msk [vmem:[%s1475 + $0x121] sm:$0xff] %vm572, %v1412
      %1501 = vst.msk [vmem:[%s1475 + $0x129] sm:$0xff] %vm572, %v1413
      %1502 = vst.msk [vmem:[%s1475 + $0x139] sm:$0xff] %vm572, %v1414
      %1503 = vst.msk [vmem:[%s1475 + $0x141] sm:$0xff] %vm572, %v1415
      %1504 = vst.msk [vmem:[%s1475 + $0x151] sm:$0xff] %vm572, %v1416
      %1505 = vst.msk [vmem:[%s1475 + $0x159] sm:$0xff] %vm572, %v1417
      %1506 = vst.msk [vmem:[%s1475 + $0x169] sm:$0xff] %vm572, %v1418
      %1507 = vst.msk [vmem:[%s1475 + $0x171] sm:$0xff] %vm572, %v1419
      %v1508 = vld [vmem:[#allocation2] sm:$0xff]
      %v1509 = vld [vmem:[#allocation2 + $0x8] sm:$0xff]
      %v1510 = vld [vmem:[#allocation2 + $0x18] sm:$0xff]
      %v1511 = vld [vmem:[#allocation2 + $0x20] sm:$0xff]
      %v1512 = vld [vmem:[#allocation2 + $0x30] sm:$0xff]
      %v1513 = vld [vmem:[#allocation2 + $0x38] sm:$0xff]
      %v1514 = vld [vmem:[#allocation2 + $0x48] sm:$0xff]
      %v1515 = vld [vmem:[#allocation2 + $0x50] sm:$0xff]
      %v1516 = vld [vmem:[#allocation2 + $0x60] sm:$0xff]
      %v1517 = vld [vmem:[#allocation2 + $0x68] sm:$0xff]
      %v1518 = vld [vmem:[#allocation2 + $0x78] sm:$0xff]
      %v1519 = vld [vmem:[#allocation2 + $0x80] sm:$0xff]
      %v1520 = vld [vmem:[#allocation2 + $0x90] sm:$0xff]
      %v1521 = vld [vmem:[#allocation2 + $0x98] sm:$0xff]
      %v1522 = vld [vmem:[#allocation2 + $0xa8] sm:$0xff]
      %v1523 = vld [vmem:[#allocation2 + $0xb0] sm:$0xff]
      %v1524 = vld [vmem:[#allocation2 + $0xc0] sm:$0xff]
      %v1525 = vld [vmem:[#allocation2 + $0xc8] sm:$0xff]
      %v1526 = vld [vmem:[#allocation2 + $0xd8] sm:$0xff]
      %v1527 = vld [vmem:[#allocation2 + $0xe0] sm:$0xff]
      %v1528 = vld [vmem:[#allocation2 + $0xf0] sm:$0xff]
      %v1529 = vld [vmem:[#allocation2 + $0xf8] sm:$0xff]
      %v1530 = vld [vmem:[#allocation2 + $0x108] sm:$0xff]
      %v1531 = vld [vmem:[#allocation2 + $0x110] sm:$0xff]
      %v1532 = vld [vmem:[#allocation2 + $0x120] sm:$0xff]
      %v1533 = vld [vmem:[#allocation2 + $0x128] sm:$0xff]
      %v1534 = vld [vmem:[#allocation2 + $0x138] sm:$0xff]
      %v1535 = vld [vmem:[#allocation2 + $0x140] sm:$0xff]
      %v1536 = vld [vmem:[#allocation2 + $0x150] sm:$0xff]
      %v1537 = vld [vmem:[#allocation2 + $0x158] sm:$0xff]
      %v1538 = vld [vmem:[#allocation2 + $0x168] sm:$0xff]
      %v1539 = vld [vmem:[#allocation2 + $0x170] sm:$0xff]
      %v1540 = vld [vmem:[%s6] sm:$0xf]
      %v1541 = vld [vmem:[#allocation2 + $0x1] sm:$0xff]
      %v1542 = vld [vmem:[#allocation2 + $0x9] sm:$0xff]
      %v1543 = vld [vmem:[#allocation2 + $0x19] sm:$0xff]
      %v1544 = vld [vmem:[#allocation2 + $0x21] sm:$0xff]
      %v1545 = vld [vmem:[#allocation2 + $0x31] sm:$0xff]
      %v1546 = vld [vmem:[#allocation2 + $0x39] sm:$0xff]
      %v1547 = vld [vmem:[#allocation2 + $0x49] sm:$0xff]
      %v1548 = vld [vmem:[#allocation2 + $0x51] sm:$0xff]
      %v1549 = vld [vmem:[#allocation2 + $0x61] sm:$0xff]
      %v1550 = vld [vmem:[#allocation2 + $0x69] sm:$0xff]
      %v1551 = vld [vmem:[#allocation2 + $0x79] sm:$0xff]
      %v1552 = vld [vmem:[#allocation2 + $0x81] sm:$0xff]
      %v1553 = vld [vmem:[#allocation2 + $0x91] sm:$0xff]
      %v1554 = vld [vmem:[#allocation2 + $0x99] sm:$0xff]
      %v1555 = vld [vmem:[#allocation2 + $0xa9] sm:$0xff]
      %v1556 = vld [vmem:[#allocation2 + $0xb1] sm:$0xff]
      %v1557 = vld [vmem:[#allocation2 + $0xc1] sm:$0xff]
      %v1558 = vld [vmem:[#allocation2 + $0xc9] sm:$0xff]
      %v1559 = vld [vmem:[#allocation2 + $0xd9] sm:$0xff]
      %v1560 = vld [vmem:[#allocation2 + $0xe1] sm:$0xff]
      %v1561 = vld [vmem:[#allocation2 + $0xf1] sm:$0xff]
      %v1562 = vld [vmem:[#allocation2 + $0xf9] sm:$0xff]
      %v1563 = vld [vmem:[#allocation2 + $0x109] sm:$0xff]
      %v1564 = vld [vmem:[#allocation2 + $0x111] sm:$0xff]
      %v1565 = vld [vmem:[#allocation2 + $0x121] sm:$0xff]
      %v1566 = vld [vmem:[#allocation2 + $0x129] sm:$0xff]
      %v1567 = vld [vmem:[#allocation2 + $0x139] sm:$0xff]
      %v1568 = vld [vmem:[#allocation2 + $0x141] sm:$0xff]
      %v1569 = vld [vmem:[#allocation2 + $0x151] sm:$0xff]
      %v1570 = vld [vmem:[#allocation2 + $0x159] sm:$0xff]
      %v1571 = vld [vmem:[#allocation2 + $0x169] sm:$0xff]
      %v1572 = vld [vmem:[#allocation2 + $0x171] sm:$0xff]
      %s1573 = scalar_lea.vmem %s6, 4
      %v1574 = vld [vmem:[%s1573] sm:$0xf]
      %v1576 = vsel %vm572, %v1541, 0
      %v1579 = vsel %vm572, %v1542, 0
      %v1582 = vsel %vm572, %v1543, 0
      %v1585 = vsel %vm572, %v1544, 0
      %v1588 = vsel %vm572, %v1545, 0
      %v1591 = vsel %vm572, %v1546, 0
      %v1594 = vsel %vm572, %v1547, 0
      %v1597 = vsel %vm572, %v1548, 0
      %v1600 = vsel %vm572, %v1549, 0
      %v1603 = vsel %vm572, %v1550, 0
      %v1606 = vsel %vm572, %v1551, 0
      %v1609 = vsel %vm572, %v1552, 0
      %v1612 = vsel %vm572, %v1553, 0
      %v1615 = vsel %vm572, %v1554, 0
      %v1618 = vsel %vm572, %v1555, 0
      %v1621 = vsel %vm572, %v1556, 0
      %v1624 = vsel %vm572, %v1557, 0
      %v1627 = vsel %vm572, %v1558, 0
      %v1630 = vsel %vm572, %v1559, 0
      %v1633 = vsel %vm572, %v1560, 0
      %v1636 = vsel %vm572, %v1561, 0
      %v1639 = vsel %vm572, %v1562, 0
      %v1642 = vsel %vm572, %v1563, 0
      %v1645 = vsel %vm572, %v1564, 0
      %v1648 = vsel %vm572, %v1565, 0
      %v1651 = vsel %vm572, %v1566, 0
      %v1654 = vsel %vm572, %v1567, 0
      %v1657 = vsel %vm572, %v1568, 0
      %v1660 = vsel %vm572, %v1569, 0
      %v1663 = vsel %vm572, %v1570, 0
      %v1666 = vsel %vm572, %v1571, 0
      %v1669 = vsel %vm572, %v1572, 0
      %v1672 = vsel %vm647, %v1574, 0
      %1674 = vmatprep.subr.mxu0 0.0
      %1675 = vmatpush1.msra.mxu0 0.0
      %1676 = vmatprep.subr.mxu0 0.0
      %1677 = vmatpush1.msra.mxu0 0.0
      %1678 = vmatprep.subr.mxu0 0.0
      %1679 = vmatpush1.msra.mxu0 0.0
      %1680 = vmatprep.subr.mxu0 0.0
      %1681 = vmatpush1.msra.mxu0 0.0
      %1682 = vmatprep.subr.mxu0 0.0
      %1683 = vmatpush1.msra.mxu0 0.0
      %1684 = vmatprep.subr.mxu0 0.0
      %1685 = vmatpush1.msra.mxu0 0.0
      %1686 = vmatprep.subr.mxu0 0.0
      %1687 = vmatpush1.msra.mxu0 0.0
      %1688 = vmatprep.subr.mxu0 0.0
      %1689 = vmatpush1.msra.mxu0 0.0
      %1690 = vmatprep.subr.mxu0 0.0
      %1691 = vmatpush1.msra.mxu0 0.0
      %1692 = vmatprep.subr.mxu0 0.0
      %1693 = vmatpush1.msra.mxu0 0.0
      %1694 = vmatprep.subr.mxu0 0.0
      %1695 = vmatpush1.msra.mxu0 0.0
      %1696 = vmatprep.subr.mxu0 0.0
      %1697 = vmatpush1.msra.mxu0 0.0
      %1698 = vmatprep.subr.mxu0 0.0
      %1699 = vmatpush1.msra.mxu0 0.0
      %1700 = vmatprep.subr.mxu0 0.0
      %1701 = vmatpush1.msra.mxu0 0.0
      %1702 = vmatprep.subr.mxu0 0.0
      %1703 = vmatpush1.msra.mxu0 0.0
      %1704 = vmatprep.subr.mxu0 0.0
      %1705 = vmatpush1.msra.mxu0 %v1672
      %1706 = vmatprep.subr.mxu0 0.0
      %1707 = vmatpush2.msra.mxu0 0.0
      %1708 = vmatprep.subr.mxu0 0.0
      %1709 = vmatpush2.msra.mxu0 0.0
      %1710 = vmatprep.subr.mxu0 0.0
      %1711 = vmatpush2.msra.mxu0 0.0
      %1712 = vmatprep.subr.mxu0 0.0
      %1713 = vmatpush2.msra.mxu0 0.0
      %1714 = vmatprep.subr.mxu0 0.0
      %1715 = vmatpush2.msra.mxu0 0.0
      %1716 = vmatprep.subr.mxu0 0.0
      %1717 = vmatpush2.msra.mxu0 0.0
      %1718 = vmatprep.subr.mxu0 0.0
      %1719 = vmatpush2.msra.mxu0 0.0
      %1720 = vmatprep.subr.mxu0 0.0
      %1721 = vmatpush2.msra.mxu0 0.0
      %1722 = vmatprep.subr.mxu0 0.0
      %1723 = vmatpush2.msra.mxu0 0.0
      %1724 = vmatprep.subr.mxu0 0.0
      %1725 = vmatpush2.msra.mxu0 0.0
      %1726 = vmatprep.subr.mxu0 0.0
      %1727 = vmatpush2.msra.mxu0 0.0
      %1728 = vmatprep.subr.mxu0 0.0
      %1729 = vmatpush2.msra.mxu0 0.0
      %1730 = vmatprep.subr.mxu0 0.0
      %1731 = vmatpush2.msra.mxu0 0.0
      %1732 = vmatprep.subr.mxu0 0.0
      %1733 = vmatpush2.msra.mxu0 0.0
      %1734 = vmatprep.subr.mxu0 0.0
      %1735 = vmatpush2.msra.mxu0 0.0
      %1736 = vmatprep.subr.mxu0 0.0
      %1737 = vmatpush2.msra.mxu0 0.0
      %1738 = vmatprep.mubr.f32.mxu0 0.0
      %1739 = vmatmul.mubr.f32.gmra.mxu0 %v1576
      %v1740 = vpop.f32.mrf.mxu0
      %v1741 = vadd.f32 0.0, %v1740
      %v1742 = vpop.f32.mrf.mxu0
      %1743 = vmatprep.mubr.f32.mxu0 0.0
      %1744 = vmatmul.mubr.f32.gmra.mxu0 %v1579
      %v1745 = vpop.f32.mrf.mxu0
      %v1746 = vadd.f32 0.0, %v1745
      %v1747 = vpop.f32.mrf.mxu0
      %1748 = vmatprep.mubr.f32.mxu0 0.0
      %1749 = vmatmul.mubr.f32.gmra.mxu0 %v1582
      %v1750 = vpop.f32.mrf.mxu0
      %v1751 = vadd.f32 0.0, %v1750
      %v1752 = vpop.f32.mrf.mxu0
      %1753 = vmatprep.mubr.f32.mxu0 0.0
      %1754 = vmatmul.mubr.f32.gmra.mxu0 %v1585
      %v1755 = vpop.f32.mrf.mxu0
      %v1756 = vadd.f32 0.0, %v1755
      %v1757 = vpop.f32.mrf.mxu0
      %1758 = vmatprep.mubr.f32.mxu0 0.0
      %1759 = vmatmul.mubr.f32.gmra.mxu0 %v1588
      %v1760 = vpop.f32.mrf.mxu0
      %v1761 = vadd.f32 0.0, %v1760
      %v1762 = vpop.f32.mrf.mxu0
      %1763 = vmatprep.mubr.f32.mxu0 0.0
      %1764 = vmatmul.mubr.f32.gmra.mxu0 %v1591
      %v1765 = vpop.f32.mrf.mxu0
      %v1766 = vadd.f32 0.0, %v1765
      %v1767 = vpop.f32.mrf.mxu0
      %1768 = vmatprep.mubr.f32.mxu0 0.0
      %1769 = vmatmul.mubr.f32.gmra.mxu0 %v1594
      %v1770 = vpop.f32.mrf.mxu0
      %v1771 = vadd.f32 0.0, %v1770
      %v1772 = vpop.f32.mrf.mxu0
      %1773 = vmatprep.mubr.f32.mxu0 0.0
      %1774 = vmatmul.mubr.f32.gmra.mxu0 %v1597
      %v1775 = vpop.f32.mrf.mxu0
      %v1776 = vadd.f32 0.0, %v1775
      %v1777 = vpop.f32.mrf.mxu0
      %1778 = vmatprep.mubr.f32.mxu0 0.0
      %1779 = vmatmul.mubr.f32.gmra.mxu0 %v1600
      %v1780 = vpop.f32.mrf.mxu0
      %v1781 = vadd.f32 0.0, %v1780
      %v1782 = vpop.f32.mrf.mxu0
      %1783 = vmatprep.mubr.f32.mxu0 0.0
      %1784 = vmatmul.mubr.f32.gmra.mxu0 %v1603
      %v1785 = vpop.f32.mrf.mxu0
      %v1786 = vadd.f32 0.0, %v1785
      %v1787 = vpop.f32.mrf.mxu0
      %1788 = vmatprep.mubr.f32.mxu0 0.0
      %1789 = vmatmul.mubr.f32.gmra.mxu0 %v1606
      %v1790 = vpop.f32.mrf.mxu0
      %v1791 = vadd.f32 0.0, %v1790
      %v1792 = vpop.f32.mrf.mxu0
      %1793 = vmatprep.mubr.f32.mxu0 0.0
      %1794 = vmatmul.mubr.f32.gmra.mxu0 %v1609
      %v1795 = vpop.f32.mrf.mxu0
      %v1796 = vadd.f32 0.0, %v1795
      %v1797 = vpop.f32.mrf.mxu0
      %1798 = vmatprep.mubr.f32.mxu0 0.0
      %1799 = vmatmul.mubr.f32.gmra.mxu0 %v1612
      %v1800 = vpop.f32.mrf.mxu0
      %v1801 = vadd.f32 0.0, %v1800
      %v1802 = vpop.f32.mrf.mxu0
      %1803 = vmatprep.mubr.f32.mxu0 0.0
      %1804 = vmatmul.mubr.f32.gmra.mxu0 %v1615
      %v1805 = vpop.f32.mrf.mxu0
      %v1806 = vadd.f32 0.0, %v1805
      %v1807 = vpop.f32.mrf.mxu0
      %1808 = vmatprep.mubr.f32.mxu0 0.0
      %1809 = vmatmul.mubr.f32.gmra.mxu0 %v1618
      %v1810 = vpop.f32.mrf.mxu0
      %v1811 = vadd.f32 0.0, %v1810
      %v1812 = vpop.f32.mrf.mxu0
      %1813 = vmatprep.mubr.f32.mxu0 0.0
      %1814 = vmatmul.mubr.f32.gmra.mxu0 %v1621
      %v1815 = vpop.f32.mrf.mxu0
      %v1816 = vadd.f32 0.0, %v1815
      %v1817 = vpop.f32.mrf.mxu0
      %1818 = vmatprep.mubr.f32.mxu0 0.0
      %1819 = vmatmul.mubr.f32.gmra.mxu0 %v1624
      %v1820 = vpop.f32.mrf.mxu0
      %v1821 = vadd.f32 0.0, %v1820
      %v1822 = vpop.f32.mrf.mxu0
      %1823 = vmatprep.mubr.f32.mxu0 0.0
      %1824 = vmatmul.mubr.f32.gmra.mxu0 %v1627
      %v1825 = vpop.f32.mrf.mxu0
      %v1826 = vadd.f32 0.0, %v1825
      %v1827 = vpop.f32.mrf.mxu0
      %1828 = vmatprep.mubr.f32.mxu0 0.0
      %1829 = vmatmul.mubr.f32.gmra.mxu0 %v1630
      %v1830 = vpop.f32.mrf.mxu0
      %v1831 = vadd.f32 0.0, %v1830
      %v1832 = vpop.f32.mrf.mxu0
      %1833 = vmatprep.mubr.f32.mxu0 0.0
      %1834 = vmatmul.mubr.f32.gmra.mxu0 %v1633
      %v1835 = vpop.f32.mrf.mxu0
      %v1836 = vadd.f32 0.0, %v1835
      %v1837 = vpop.f32.mrf.mxu0
      %1838 = vmatprep.mubr.f32.mxu0 0.0
      %1839 = vmatmul.mubr.f32.gmra.mxu0 %v1636
      %v1840 = vpop.f32.mrf.mxu0
      %v1841 = vadd.f32 0.0, %v1840
      %v1842 = vpop.f32.mrf.mxu0
      %1843 = vmatprep.mubr.f32.mxu0 0.0
      %1844 = vmatmul.mubr.f32.gmra.mxu0 %v1639
      %v1845 = vpop.f32.mrf.mxu0
      %v1846 = vadd.f32 0.0, %v1845
      %v1847 = vpop.f32.mrf.mxu0
      %1848 = vmatprep.mubr.f32.mxu0 0.0
      %1849 = vmatmul.mubr.f32.gmra.mxu0 %v1642
      %v1850 = vpop.f32.mrf.mxu0
      %v1851 = vadd.f32 0.0, %v1850
      %v1852 = vpop.f32.mrf.mxu0
      %1853 = vmatprep.mubr.f32.mxu0 0.0
      %1854 = vmatmul.mubr.f32.gmra.mxu0 %v1645
      %v1855 = vpop.f32.mrf.mxu0
      %v1856 = vadd.f32 0.0, %v1855
      %v1857 = vpop.f32.mrf.mxu0
      %1858 = vmatprep.mubr.f32.mxu0 0.0
      %1859 = vmatmul.mubr.f32.gmra.mxu0 %v1648
      %v1860 = vpop.f32.mrf.mxu0
      %v1861 = vadd.f32 0.0, %v1860
      %v1862 = vpop.f32.mrf.mxu0
      %1863 = vmatprep.mubr.f32.mxu0 0.0
      %1864 = vmatmul.mubr.f32.gmra.mxu0 %v1651
      %v1865 = vpop.f32.mrf.mxu0
      %v1866 = vadd.f32 0.0, %v1865
      %v1867 = vpop.f32.mrf.mxu0
      %1868 = vmatprep.mubr.f32.mxu0 0.0
      %1869 = vmatmul.mubr.f32.gmra.mxu0 %v1654
      %v1870 = vpop.f32.mrf.mxu0
      %v1871 = vadd.f32 0.0, %v1870
      %v1872 = vpop.f32.mrf.mxu0
      %1873 = vmatprep.mubr.f32.mxu0 0.0
      %1874 = vmatmul.mubr.f32.gmra.mxu0 %v1657
      %v1875 = vpop.f32.mrf.mxu0
      %v1876 = vadd.f32 0.0, %v1875
      %v1877 = vpop.f32.mrf.mxu0
      %1878 = vmatprep.mubr.f32.mxu0 0.0
      %1879 = vmatmul.mubr.f32.gmra.mxu0 %v1660
      %v1880 = vpop.f32.mrf.mxu0
      %v1881 = vadd.f32 0.0, %v1880
      %v1882 = vpop.f32.mrf.mxu0
      %1883 = vmatprep.mubr.f32.mxu0 0.0
      %1884 = vmatmul.mubr.f32.gmra.mxu0 %v1663
      %v1885 = vpop.f32.mrf.mxu0
      %v1886 = vadd.f32 0.0, %v1885
      %v1887 = vpop.f32.mrf.mxu0
      %1888 = vmatprep.mubr.f32.mxu0 0.0
      %1889 = vmatmul.mubr.f32.gmra.mxu0 %v1666
      %v1890 = vpop.f32.mrf.mxu0
      %v1891 = vadd.f32 0.0, %v1890
      %v1892 = vpop.f32.mrf.mxu0
      %1893 = vmatprep.mubr.f32.mxu0 0.0
      %1894 = vmatmul.mubr.f32.gmra.mxu0 %v1669
      %v1895 = vpop.f32.mrf.mxu0
      %v1896 = vadd.f32 0.0, %v1895
      %v1897 = vpop.f32.mrf.mxu0
      %1898 = vdwg.mxu0
      %v1900 = vsel %vm572, %v1508, 0
      %v1903 = vsel %vm572, %v1509, 0
      %v1906 = vsel %vm572, %v1510, 0
      %v1909 = vsel %vm572, %v1511, 0
      %v1912 = vsel %vm572, %v1512, 0
      %v1915 = vsel %vm572, %v1513, 0
      %v1918 = vsel %vm572, %v1514, 0
      %v1921 = vsel %vm572, %v1515, 0
      %v1924 = vsel %vm572, %v1516, 0
      %v1927 = vsel %vm572, %v1517, 0
      %v1930 = vsel %vm572, %v1518, 0
      %v1933 = vsel %vm572, %v1519, 0
      %v1936 = vsel %vm572, %v1520, 0
      %v1939 = vsel %vm572, %v1521, 0
      %v1942 = vsel %vm572, %v1522, 0
      %v1945 = vsel %vm572, %v1523, 0
      %v1948 = vsel %vm572, %v1524, 0
      %v1951 = vsel %vm572, %v1525, 0
      %v1954 = vsel %vm572, %v1526, 0
      %v1957 = vsel %vm572, %v1527, 0
      %v1960 = vsel %vm572, %v1528, 0
      %v1963 = vsel %vm572, %v1529, 0
      %v1966 = vsel %vm572, %v1530, 0
      %v1969 = vsel %vm572, %v1531, 0
      %v1972 = vsel %vm572, %v1532, 0
      %v1975 = vsel %vm572, %v1533, 0
      %v1978 = vsel %vm572, %v1534, 0
      %v1981 = vsel %vm572, %v1535, 0
      %v1984 = vsel %vm572, %v1536, 0
      %v1987 = vsel %vm572, %v1537, 0
      %v1990 = vsel %vm572, %v1538, 0
      %v1993 = vsel %vm572, %v1539, 0
      %v1996 = vsel %vm647, %v1540, 0
      %1998 = vmatprep.subr.mxu0 0.0
      %1999 = vmatpush1.msra.mxu0 0.0
      %2000 = vmatprep.subr.mxu0 0.0
      %2001 = vmatpush1.msra.mxu0 0.0
      %2002 = vmatprep.subr.mxu0 0.0
      %2003 = vmatpush1.msra.mxu0 0.0
      %2004 = vmatprep.subr.mxu0 0.0
      %2005 = vmatpush1.msra.mxu0 0.0
      %2006 = vmatprep.subr.mxu0 0.0
      %2007 = vmatpush1.msra.mxu0 0.0
      %2008 = vmatprep.subr.mxu0 0.0
      %2009 = vmatpush1.msra.mxu0 0.0
      %2010 = vmatprep.subr.mxu0 0.0
      %2011 = vmatpush1.msra.mxu0 0.0
      %2012 = vmatprep.subr.mxu0 0.0
      %2013 = vmatpush1.msra.mxu0 0.0
      %2014 = vmatprep.subr.mxu0 0.0
      %2015 = vmatpush1.msra.mxu0 0.0
      %2016 = vmatprep.subr.mxu0 0.0
      %2017 = vmatpush1.msra.mxu0 0.0
      %2018 = vmatprep.subr.mxu0 0.0
      %2019 = vmatpush1.msra.mxu0 0.0
      %2020 = vmatprep.subr.mxu0 0.0
      %2021 = vmatpush1.msra.mxu0 0.0
      %2022 = vmatprep.subr.mxu0 0.0
      %2023 = vmatpush1.msra.mxu0 0.0
      %2024 = vmatprep.subr.mxu0 0.0
      %2025 = vmatpush1.msra.mxu0 0.0
      %2026 = vmatprep.subr.mxu0 0.0
      %2027 = vmatpush1.msra.mxu0 0.0
      %2028 = vmatprep.subr.mxu0 0.0
      %2029 = vmatpush1.msra.mxu0 %v1996
      %2030 = vmatprep.subr.mxu0 0.0
      %2031 = vmatpush2.msra.mxu0 0.0
      %2032 = vmatprep.subr.mxu0 0.0
      %2033 = vmatpush2.msra.mxu0 0.0
      %2034 = vmatprep.subr.mxu0 0.0
      %2035 = vmatpush2.msra.mxu0 0.0
      %2036 = vmatprep.subr.mxu0 0.0
      %2037 = vmatpush2.msra.mxu0 0.0
      %2038 = vmatprep.subr.mxu0 0.0
      %2039 = vmatpush2.msra.mxu0 0.0
      %2040 = vmatprep.subr.mxu0 0.0
      %2041 = vmatpush2.msra.mxu0 0.0
      %2042 = vmatprep.subr.mxu0 0.0
      %2043 = vmatpush2.msra.mxu0 0.0
      %2044 = vmatprep.subr.mxu0 0.0
      %2045 = vmatpush2.msra.mxu0 0.0
      %2046 = vmatprep.subr.mxu0 0.0
      %2047 = vmatpush2.msra.mxu0 0.0
      %2048 = vmatprep.subr.mxu0 0.0
      %2049 = vmatpush2.msra.mxu0 0.0
      %2050 = vmatprep.subr.mxu0 0.0
      %2051 = vmatpush2.msra.mxu0 0.0
      %2052 = vmatprep.subr.mxu0 0.0
      %2053 = vmatpush2.msra.mxu0 0.0
      %2054 = vmatprep.subr.mxu0 0.0
      %2055 = vmatpush2.msra.mxu0 0.0
      %2056 = vmatprep.subr.mxu0 0.0
      %2057 = vmatpush2.msra.mxu0 0.0
      %2058 = vmatprep.subr.mxu0 0.0
      %2059 = vmatpush2.msra.mxu0 0.0
      %2060 = vmatprep.subr.mxu0 0.0
      %2061 = vmatpush2.msra.mxu0 0.0
      %2062 = vmatprep.mubr.f32.mxu0 0.0
      %2063 = vmatmul.mubr.f32.gmra.mxu0 %v1900
      %v2064 = vpop.f32.mrf.mxu0
      %v2065 = vadd.f32 %v1741, %v2064
      %v2066 = vpop.f32.mrf.mxu0
      %2067 = vmatprep.mubr.f32.mxu0 0.0
      %2068 = vmatmul.mubr.f32.gmra.mxu0 %v1903
      %v2069 = vpop.f32.mrf.mxu0
      %v2070 = vadd.f32 %v1746, %v2069
      %v2071 = vpop.f32.mrf.mxu0
      %2072 = vmatprep.mubr.f32.mxu0 0.0
      %2073 = vmatmul.mubr.f32.gmra.mxu0 %v1906
      %v2074 = vpop.f32.mrf.mxu0
      %v2075 = vadd.f32 %v1751, %v2074
      %v2076 = vpop.f32.mrf.mxu0
      %2077 = vmatprep.mubr.f32.mxu0 0.0
      %2078 = vmatmul.mubr.f32.gmra.mxu0 %v1909
      %v2079 = vpop.f32.mrf.mxu0
      %v2080 = vadd.f32 %v1756, %v2079
      %v2081 = vpop.f32.mrf.mxu0
      %2082 = vmatprep.mubr.f32.mxu0 0.0
      %2083 = vmatmul.mubr.f32.gmra.mxu0 %v1912
      %v2084 = vpop.f32.mrf.mxu0
      %v2085 = vadd.f32 %v1761, %v2084
      %v2086 = vpop.f32.mrf.mxu0
      %2087 = vmatprep.mubr.f32.mxu0 0.0
      %2088 = vmatmul.mubr.f32.gmra.mxu0 %v1915
      %v2089 = vpop.f32.mrf.mxu0
      %v2090 = vadd.f32 %v1766, %v2089
      %v2091 = vpop.f32.mrf.mxu0
      %2092 = vmatprep.mubr.f32.mxu0 0.0
      %2093 = vmatmul.mubr.f32.gmra.mxu0 %v1918
      %v2094 = vpop.f32.mrf.mxu0
      %v2095 = vadd.f32 %v1771, %v2094
      %v2096 = vpop.f32.mrf.mxu0
      %2097 = vmatprep.mubr.f32.mxu0 0.0
      %2098 = vmatmul.mubr.f32.gmra.mxu0 %v1921
      %v2099 = vpop.f32.mrf.mxu0
      %v2100 = vadd.f32 %v1776, %v2099
      %v2101 = vpop.f32.mrf.mxu0
      %2102 = vmatprep.mubr.f32.mxu0 0.0
      %2103 = vmatmul.mubr.f32.gmra.mxu0 %v1924
      %v2104 = vpop.f32.mrf.mxu0
      %v2105 = vadd.f32 %v1781, %v2104
      %v2106 = vpop.f32.mrf.mxu0
      %2107 = vmatprep.mubr.f32.mxu0 0.0
      %2108 = vmatmul.mubr.f32.gmra.mxu0 %v1927
      %v2109 = vpop.f32.mrf.mxu0
      %v2110 = vadd.f32 %v1786, %v2109
      %v2111 = vpop.f32.mrf.mxu0
      %2112 = vmatprep.mubr.f32.mxu0 0.0
      %2113 = vmatmul.mubr.f32.gmra.mxu0 %v1930
      %v2114 = vpop.f32.mrf.mxu0
      %v2115 = vadd.f32 %v1791, %v2114
      %v2116 = vpop.f32.mrf.mxu0
      %2117 = vmatprep.mubr.f32.mxu0 0.0
      %2118 = vmatmul.mubr.f32.gmra.mxu0 %v1933
      %v2119 = vpop.f32.mrf.mxu0
      %v2120 = vadd.f32 %v1796, %v2119
      %v2121 = vpop.f32.mrf.mxu0
      %2122 = vmatprep.mubr.f32.mxu0 0.0
      %2123 = vmatmul.mubr.f32.gmra.mxu0 %v1936
      %v2124 = vpop.f32.mrf.mxu0
      %v2125 = vadd.f32 %v1801, %v2124
      %v2126 = vpop.f32.mrf.mxu0
      %2127 = vmatprep.mubr.f32.mxu0 0.0
      %2128 = vmatmul.mubr.f32.gmra.mxu0 %v1939
      %v2129 = vpop.f32.mrf.mxu0
      %v2130 = vadd.f32 %v1806, %v2129
      %v2131 = vpop.f32.mrf.mxu0
      %2132 = vmatprep.mubr.f32.mxu0 0.0
      %2133 = vmatmul.mubr.f32.gmra.mxu0 %v1942
      %v2134 = vpop.f32.mrf.mxu0
      %v2135 = vadd.f32 %v1811, %v2134
      %v2136 = vpop.f32.mrf.mxu0
      %2137 = vmatprep.mubr.f32.mxu0 0.0
      %2138 = vmatmul.mubr.f32.gmra.mxu0 %v1945
      %v2139 = vpop.f32.mrf.mxu0
      %v2140 = vadd.f32 %v1816, %v2139
      %v2141 = vpop.f32.mrf.mxu0
      %2142 = vmatprep.mubr.f32.mxu0 0.0
      %2143 = vmatmul.mubr.f32.gmra.mxu0 %v1948
      %v2144 = vpop.f32.mrf.mxu0
      %v2145 = vadd.f32 %v1821, %v2144
      %v2146 = vpop.f32.mrf.mxu0
      %2147 = vmatprep.mubr.f32.mxu0 0.0
      %2148 = vmatmul.mubr.f32.gmra.mxu0 %v1951
      %v2149 = vpop.f32.mrf.mxu0
      %v2150 = vadd.f32 %v1826, %v2149
      %v2151 = vpop.f32.mrf.mxu0
      %2152 = vmatprep.mubr.f32.mxu0 0.0
      %2153 = vmatmul.mubr.f32.gmra.mxu0 %v1954
      %v2154 = vpop.f32.mrf.mxu0
      %v2155 = vadd.f32 %v1831, %v2154
      %v2156 = vpop.f32.mrf.mxu0
      %2157 = vmatprep.mubr.f32.mxu0 0.0
      %2158 = vmatmul.mubr.f32.gmra.mxu0 %v1957
      %v2159 = vpop.f32.mrf.mxu0
      %v2160 = vadd.f32 %v1836, %v2159
      %v2161 = vpop.f32.mrf.mxu0
      %2162 = vmatprep.mubr.f32.mxu0 0.0
      %2163 = vmatmul.mubr.f32.gmra.mxu0 %v1960
      %v2164 = vpop.f32.mrf.mxu0
      %v2165 = vadd.f32 %v1841, %v2164
      %v2166 = vpop.f32.mrf.mxu0
      %2167 = vmatprep.mubr.f32.mxu0 0.0
      %2168 = vmatmul.mubr.f32.gmra.mxu0 %v1963
      %v2169 = vpop.f32.mrf.mxu0
      %v2170 = vadd.f32 %v1846, %v2169
      %v2171 = vpop.f32.mrf.mxu0
      %2172 = vmatprep.mubr.f32.mxu0 0.0
      %2173 = vmatmul.mubr.f32.gmra.mxu0 %v1966
      %v2174 = vpop.f32.mrf.mxu0
      %v2175 = vadd.f32 %v1851, %v2174
      %v2176 = vpop.f32.mrf.mxu0
      %2177 = vmatprep.mubr.f32.mxu0 0.0
      %2178 = vmatmul.mubr.f32.gmra.mxu0 %v1969
      %v2179 = vpop.f32.mrf.mxu0
      %v2180 = vadd.f32 %v1856, %v2179
      %v2181 = vpop.f32.mrf.mxu0
      %2182 = vmatprep.mubr.f32.mxu0 0.0
      %2183 = vmatmul.mubr.f32.gmra.mxu0 %v1972
      %v2184 = vpop.f32.mrf.mxu0
      %v2185 = vadd.f32 %v1861, %v2184
      %v2186 = vpop.f32.mrf.mxu0
      %2187 = vmatprep.mubr.f32.mxu0 0.0
      %2188 = vmatmul.mubr.f32.gmra.mxu0 %v1975
      %v2189 = vpop.f32.mrf.mxu0
      %v2190 = vadd.f32 %v1866, %v2189
      %v2191 = vpop.f32.mrf.mxu0
      %2192 = vmatprep.mubr.f32.mxu0 0.0
      %2193 = vmatmul.mubr.f32.gmra.mxu0 %v1978
      %v2194 = vpop.f32.mrf.mxu0
      %v2195 = vadd.f32 %v1871, %v2194
      %v2196 = vpop.f32.mrf.mxu0
      %2197 = vmatprep.mubr.f32.mxu0 0.0
      %2198 = vmatmul.mubr.f32.gmra.mxu0 %v1981
      %v2199 = vpop.f32.mrf.mxu0
      %v2200 = vadd.f32 %v1876, %v2199
      %v2201 = vpop.f32.mrf.mxu0
      %2202 = vmatprep.mubr.f32.mxu0 0.0
      %2203 = vmatmul.mubr.f32.gmra.mxu0 %v1984
      %v2204 = vpop.f32.mrf.mxu0
      %v2205 = vadd.f32 %v1881, %v2204
      %v2206 = vpop.f32.mrf.mxu0
      %2207 = vmatprep.mubr.f32.mxu0 0.0
      %2208 = vmatmul.mubr.f32.gmra.mxu0 %v1987
      %v2209 = vpop.f32.mrf.mxu0
      %v2210 = vadd.f32 %v1886, %v2209
      %v2211 = vpop.f32.mrf.mxu0
      %2212 = vmatprep.mubr.f32.mxu0 0.0
      %2213 = vmatmul.mubr.f32.gmra.mxu0 %v1990
      %v2214 = vpop.f32.mrf.mxu0
      %v2215 = vadd.f32 %v1891, %v2214
      %v2216 = vpop.f32.mrf.mxu0
      %2217 = vmatprep.mubr.f32.mxu0 0.0
      %2218 = vmatmul.mubr.f32.gmra.mxu0 %v1993
      %v2219 = vpop.f32.mrf.mxu0
      %v2220 = vadd.f32 %v1896, %v2219
      %v2221 = vpop.f32.mrf.mxu0
      %2222 = vdwg.mxu0
      %v2223 = vld [vmem:[#allocation2 + $0x2] sm:$0xff]
      %v2224 = vld [vmem:[#allocation2 + $0xa] sm:$0xff]
      %v2225 = vld [vmem:[#allocation2 + $0x1a] sm:$0xff]
      %v2226 = vld [vmem:[#allocation2 + $0x22] sm:$0xff]
      %v2227 = vld [vmem:[#allocation2 + $0x32] sm:$0xff]
      %v2228 = vld [vmem:[#allocation2 + $0x3a] sm:$0xff]
      %v2229 = vld [vmem:[#allocation2 + $0x4a] sm:$0xff]
      %v2230 = vld [vmem:[#allocation2 + $0x52] sm:$0xff]
      %v2231 = vld [vmem:[#allocation2 + $0x62] sm:$0xff]
      %v2232 = vld [vmem:[#allocation2 + $0x6a] sm:$0xff]
      %v2233 = vld [vmem:[#allocation2 + $0x7a] sm:$0xff]
      %v2234 = vld [vmem:[#allocation2 + $0x82] sm:$0xff]
      %v2235 = vld [vmem:[#allocation2 + $0x92] sm:$0xff]
      %v2236 = vld [vmem:[#allocation2 + $0x9a] sm:$0xff]
      %v2237 = vld [vmem:[#allocation2 + $0xaa] sm:$0xff]
      %v2238 = vld [vmem:[#allocation2 + $0xb2] sm:$0xff]
      %v2239 = vld [vmem:[#allocation2 + $0xc2] sm:$0xff]
      %v2240 = vld [vmem:[#allocation2 + $0xca] sm:$0xff]
      %v2241 = vld [vmem:[#allocation2 + $0xda] sm:$0xff]
      %v2242 = vld [vmem:[#allocation2 + $0xe2] sm:$0xff]
      %v2243 = vld [vmem:[#allocation2 + $0xf2] sm:$0xff]
      %v2244 = vld [vmem:[#allocation2 + $0xfa] sm:$0xff]
      %v2245 = vld [vmem:[#allocation2 + $0x10a] sm:$0xff]
      %v2246 = vld [vmem:[#allocation2 + $0x112] sm:$0xff]
      %v2247 = vld [vmem:[#allocation2 + $0x122] sm:$0xff]
      %v2248 = vld [vmem:[#allocation2 + $0x12a] sm:$0xff]
      %v2249 = vld [vmem:[#allocation2 + $0x13a] sm:$0xff]
      %v2250 = vld [vmem:[#allocation2 + $0x142] sm:$0xff]
      %v2251 = vld [vmem:[#allocation2 + $0x152] sm:$0xff]
      %v2252 = vld [vmem:[#allocation2 + $0x15a] sm:$0xff]
      %v2253 = vld [vmem:[#allocation2 + $0x16a] sm:$0xff]
      %v2254 = vld [vmem:[#allocation2 + $0x172] sm:$0xff]
      %s2255 = scalar_lea.vmem %s6, 8
      %v2256 = vld [vmem:[%s2255] sm:$0xf]
      %v2258 = vsel %vm572, %v2223, 0
      %v2261 = vsel %vm572, %v2224, 0
      %v2264 = vsel %vm572, %v2225, 0
      %v2267 = vsel %vm572, %v2226, 0
      %v2270 = vsel %vm572, %v2227, 0
      %v2273 = vsel %vm572, %v2228, 0
      %v2276 = vsel %vm572, %v2229, 0
      %v2279 = vsel %vm572, %v2230, 0
      %v2282 = vsel %vm572, %v2231, 0
      %v2285 = vsel %vm572, %v2232, 0
      %v2288 = vsel %vm572, %v2233, 0
      %v2291 = vsel %vm572, %v2234, 0
      %v2294 = vsel %vm572, %v2235, 0
      %v2297 = vsel %vm572, %v2236, 0
      %v2300 = vsel %vm572, %v2237, 0
      %v2303 = vsel %vm572, %v2238, 0
      %v2306 = vsel %vm572, %v2239, 0
      %v2309 = vsel %vm572, %v2240, 0
      %v2312 = vsel %vm572, %v2241, 0
      %v2315 = vsel %vm572, %v2242, 0
      %v2318 = vsel %vm572, %v2243, 0
      %v2321 = vsel %vm572, %v2244, 0
      %v2324 = vsel %vm572, %v2245, 0
      %v2327 = vsel %vm572, %v2246, 0
      %v2330 = vsel %vm572, %v2247, 0
      %v2333 = vsel %vm572, %v2248, 0
      %v2336 = vsel %vm572, %v2249, 0
      %v2339 = vsel %vm572, %v2250, 0
      %v2342 = vsel %vm572, %v2251, 0
      %v2345 = vsel %vm572, %v2252, 0
      %v2348 = vsel %vm572, %v2253, 0
      %v2351 = vsel %vm572, %v2254, 0
      %v2354 = vsel %vm647, %v2256, 0
      %2356 = vmatprep.subr.mxu0 0.0
      %2357 = vmatpush1.msra.mxu0 0.0
      %2358 = vmatprep.subr.mxu0 0.0
      %2359 = vmatpush1.msra.mxu0 0.0
      %2360 = vmatprep.subr.mxu0 0.0
      %2361 = vmatpush1.msra.mxu0 0.0
      %2362 = vmatprep.subr.mxu0 0.0
      %2363 = vmatpush1.msra.mxu0 0.0
      %2364 = vmatprep.subr.mxu0 0.0
      %2365 = vmatpush1.msra.mxu0 0.0
      %2366 = vmatprep.subr.mxu0 0.0
      %2367 = vmatpush1.msra.mxu0 0.0
      %2368 = vmatprep.subr.mxu0 0.0
      %2369 = vmatpush1.msra.mxu0 0.0
      %2370 = vmatprep.subr.mxu0 0.0
      %2371 = vmatpush1.msra.mxu0 0.0
      %2372 = vmatprep.subr.mxu0 0.0
      %2373 = vmatpush1.msra.mxu0 0.0
      %2374 = vmatprep.subr.mxu0 0.0
      %2375 = vmatpush1.msra.mxu0 0.0
      %2376 = vmatprep.subr.mxu0 0.0
      %2377 = vmatpush1.msra.mxu0 0.0
      %2378 = vmatprep.subr.mxu0 0.0
      %2379 = vmatpush1.msra.mxu0 0.0
      %2380 = vmatprep.subr.mxu0 0.0
      %2381 = vmatpush1.msra.mxu0 0.0
      %2382 = vmatprep.subr.mxu0 0.0
      %2383 = vmatpush1.msra.mxu0 0.0
      %2384 = vmatprep.subr.mxu0 0.0
      %2385 = vmatpush1.msra.mxu0 0.0
      %2386 = vmatprep.subr.mxu0 0.0
      %2387 = vmatpush1.msra.mxu0 %v2354
      %2388 = vmatprep.subr.mxu0 0.0
      %2389 = vmatpush2.msra.mxu0 0.0
      %2390 = vmatprep.subr.mxu0 0.0
      %2391 = vmatpush2.msra.mxu0 0.0
      %2392 = vmatprep.subr.mxu0 0.0
      %2393 = vmatpush2.msra.mxu0 0.0
      %2394 = vmatprep.subr.mxu0 0.0
      %2395 = vmatpush2.msra.mxu0 0.0
      %2396 = vmatprep.subr.mxu0 0.0
      %2397 = vmatpush2.msra.mxu0 0.0
      %2398 = vmatprep.subr.mxu0 0.0
      %2399 = vmatpush2.msra.mxu0 0.0
      %2400 = vmatprep.subr.mxu0 0.0
      %2401 = vmatpush2.msra.mxu0 0.0
      %2402 = vmatprep.subr.mxu0 0.0
      %2403 = vmatpush2.msra.mxu0 0.0
      %2404 = vmatprep.subr.mxu0 0.0
      %2405 = vmatpush2.msra.mxu0 0.0
      %2406 = vmatprep.subr.mxu0 0.0
      %2407 = vmatpush2.msra.mxu0 0.0
      %2408 = vmatprep.subr.mxu0 0.0
      %2409 = vmatpush2.msra.mxu0 0.0
      %2410 = vmatprep.subr.mxu0 0.0
      %2411 = vmatpush2.msra.mxu0 0.0
      %2412 = vmatprep.subr.mxu0 0.0
      %2413 = vmatpush2.msra.mxu0 0.0
      %2414 = vmatprep.subr.mxu0 0.0
      %2415 = vmatpush2.msra.mxu0 0.0
      %2416 = vmatprep.subr.mxu0 0.0
      %2417 = vmatpush2.msra.mxu0 0.0
      %2418 = vmatprep.subr.mxu0 0.0
      %2419 = vmatpush2.msra.mxu0 0.0
      %2420 = vmatprep.mubr.f32.mxu0 0.0
      %2421 = vmatmul.mubr.f32.gmra.mxu0 %v2258
      %v2422 = vpop.f32.mrf.mxu0
      %v2423 = vadd.f32 0.0, %v2422
      %v2424 = vpop.f32.mrf.mxu0
      %2425 = vmatprep.mubr.f32.mxu0 0.0
      %2426 = vmatmul.mubr.f32.gmra.mxu0 %v2261
      %v2427 = vpop.f32.mrf.mxu0
      %v2428 = vadd.f32 0.0, %v2427
      %v2429 = vpop.f32.mrf.mxu0
      %2430 = vmatprep.mubr.f32.mxu0 0.0
      %2431 = vmatmul.mubr.f32.gmra.mxu0 %v2264
      %v2432 = vpop.f32.mrf.mxu0
      %v2433 = vadd.f32 0.0, %v2432
      %v2434 = vpop.f32.mrf.mxu0
      %2435 = vmatprep.mubr.f32.mxu0 0.0
      %2436 = vmatmul.mubr.f32.gmra.mxu0 %v2267
      %v2437 = vpop.f32.mrf.mxu0
      %v2438 = vadd.f32 0.0, %v2437
      %v2439 = vpop.f32.mrf.mxu0
      %2440 = vmatprep.mubr.f32.mxu0 0.0
      %2441 = vmatmul.mubr.f32.gmra.mxu0 %v2270
      %v2442 = vpop.f32.mrf.mxu0
      %v2443 = vadd.f32 0.0, %v2442
      %v2444 = vpop.f32.mrf.mxu0
      %2445 = vmatprep.mubr.f32.mxu0 0.0
      %2446 = vmatmul.mubr.f32.gmra.mxu0 %v2273
      %v2447 = vpop.f32.mrf.mxu0
      %v2448 = vadd.f32 0.0, %v2447
      %v2449 = vpop.f32.mrf.mxu0
      %2450 = vmatprep.mubr.f32.mxu0 0.0
      %2451 = vmatmul.mubr.f32.gmra.mxu0 %v2276
      %v2452 = vpop.f32.mrf.mxu0
      %v2453 = vadd.f32 0.0, %v2452
      %v2454 = vpop.f32.mrf.mxu0
      %2455 = vmatprep.mubr.f32.mxu0 0.0
      %2456 = vmatmul.mubr.f32.gmra.mxu0 %v2279
      %v2457 = vpop.f32.mrf.mxu0
      %v2458 = vadd.f32 0.0, %v2457
      %v2459 = vpop.f32.mrf.mxu0
      %2460 = vmatprep.mubr.f32.mxu0 0.0
      %2461 = vmatmul.mubr.f32.gmra.mxu0 %v2282
      %v2462 = vpop.f32.mrf.mxu0
      %v2463 = vadd.f32 0.0, %v2462
      %v2464 = vpop.f32.mrf.mxu0
      %2465 = vmatprep.mubr.f32.mxu0 0.0
      %2466 = vmatmul.mubr.f32.gmra.mxu0 %v2285
      %v2467 = vpop.f32.mrf.mxu0
      %v2468 = vadd.f32 0.0, %v2467
      %v2469 = vpop.f32.mrf.mxu0
      %2470 = vmatprep.mubr.f32.mxu0 0.0
      %2471 = vmatmul.mubr.f32.gmra.mxu0 %v2288
      %v2472 = vpop.f32.mrf.mxu0
      %v2473 = vadd.f32 0.0, %v2472
      %v2474 = vpop.f32.mrf.mxu0
      %2475 = vmatprep.mubr.f32.mxu0 0.0
      %2476 = vmatmul.mubr.f32.gmra.mxu0 %v2291
      %v2477 = vpop.f32.mrf.mxu0
      %v2478 = vadd.f32 0.0, %v2477
      %v2479 = vpop.f32.mrf.mxu0
      %2480 = vmatprep.mubr.f32.mxu0 0.0
      %2481 = vmatmul.mubr.f32.gmra.mxu0 %v2294
      %v2482 = vpop.f32.mrf.mxu0
      %v2483 = vadd.f32 0.0, %v2482
      %v2484 = vpop.f32.mrf.mxu0
      %2485 = vmatprep.mubr.f32.mxu0 0.0
      %2486 = vmatmul.mubr.f32.gmra.mxu0 %v2297
      %v2487 = vpop.f32.mrf.mxu0
      %v2488 = vadd.f32 0.0, %v2487
      %v2489 = vpop.f32.mrf.mxu0
      %2490 = vmatprep.mubr.f32.mxu0 0.0
      %2491 = vmatmul.mubr.f32.gmra.mxu0 %v2300
      %v2492 = vpop.f32.mrf.mxu0
      %v2493 = vadd.f32 0.0, %v2492
      %v2494 = vpop.f32.mrf.mxu0
      %2495 = vmatprep.mubr.f32.mxu0 0.0
      %2496 = vmatmul.mubr.f32.gmra.mxu0 %v2303
      %v2497 = vpop.f32.mrf.mxu0
      %v2498 = vadd.f32 0.0, %v2497
      %v2499 = vpop.f32.mrf.mxu0
      %2500 = vmatprep.mubr.f32.mxu0 0.0
      %2501 = vmatmul.mubr.f32.gmra.mxu0 %v2306
      %v2502 = vpop.f32.mrf.mxu0
      %v2503 = vadd.f32 0.0, %v2502
      %v2504 = vpop.f32.mrf.mxu0
      %2505 = vmatprep.mubr.f32.mxu0 0.0
      %2506 = vmatmul.mubr.f32.gmra.mxu0 %v2309
      %v2507 = vpop.f32.mrf.mxu0
      %v2508 = vadd.f32 0.0, %v2507
      %v2509 = vpop.f32.mrf.mxu0
      %2510 = vmatprep.mubr.f32.mxu0 0.0
      %2511 = vmatmul.mubr.f32.gmra.mxu0 %v2312
      %v2512 = vpop.f32.mrf.mxu0
      %v2513 = vadd.f32 0.0, %v2512
      %v2514 = vpop.f32.mrf.mxu0
      %2515 = vmatprep.mubr.f32.mxu0 0.0
      %2516 = vmatmul.mubr.f32.gmra.mxu0 %v2315
      %v2517 = vpop.f32.mrf.mxu0
      %v2518 = vadd.f32 0.0, %v2517
      %v2519 = vpop.f32.mrf.mxu0
      %2520 = vmatprep.mubr.f32.mxu0 0.0
      %2521 = vmatmul.mubr.f32.gmra.mxu0 %v2318
      %v2522 = vpop.f32.mrf.mxu0
      %v2523 = vadd.f32 0.0, %v2522
      %v2524 = vpop.f32.mrf.mxu0
      %2525 = vmatprep.mubr.f32.mxu0 0.0
      %2526 = vmatmul.mubr.f32.gmra.mxu0 %v2321
      %v2527 = vpop.f32.mrf.mxu0
      %v2528 = vadd.f32 0.0, %v2527
      %v2529 = vpop.f32.mrf.mxu0
      %2530 = vmatprep.mubr.f32.mxu0 0.0
      %2531 = vmatmul.mubr.f32.gmra.mxu0 %v2324
      %v2532 = vpop.f32.mrf.mxu0
      %v2533 = vadd.f32 0.0, %v2532
      %v2534 = vpop.f32.mrf.mxu0
      %2535 = vmatprep.mubr.f32.mxu0 0.0
      %2536 = vmatmul.mubr.f32.gmra.mxu0 %v2327
      %v2537 = vpop.f32.mrf.mxu0
      %v2538 = vadd.f32 0.0, %v2537
      %v2539 = vpop.f32.mrf.mxu0
      %2540 = vmatprep.mubr.f32.mxu0 0.0
      %2541 = vmatmul.mubr.f32.gmra.mxu0 %v2330
      %v2542 = vpop.f32.mrf.mxu0
      %v2543 = vadd.f32 0.0, %v2542
      %v2544 = vpop.f32.mrf.mxu0
      %2545 = vmatprep.mubr.f32.mxu0 0.0
      %2546 = vmatmul.mubr.f32.gmra.mxu0 %v2333
      %v2547 = vpop.f32.mrf.mxu0
      %v2548 = vadd.f32 0.0, %v2547
      %v2549 = vpop.f32.mrf.mxu0
      %2550 = vmatprep.mubr.f32.mxu0 0.0
      %2551 = vmatmul.mubr.f32.gmra.mxu0 %v2336
      %v2552 = vpop.f32.mrf.mxu0
      %v2553 = vadd.f32 0.0, %v2552
      %v2554 = vpop.f32.mrf.mxu0
      %2555 = vmatprep.mubr.f32.mxu0 0.0
      %2556 = vmatmul.mubr.f32.gmra.mxu0 %v2339
      %v2557 = vpop.f32.mrf.mxu0
      %v2558 = vadd.f32 0.0, %v2557
      %v2559 = vpop.f32.mrf.mxu0
      %2560 = vmatprep.mubr.f32.mxu0 0.0
      %2561 = vmatmul.mubr.f32.gmra.mxu0 %v2342
      %v2562 = vpop.f32.mrf.mxu0
      %v2563 = vadd.f32 0.0, %v2562
      %v2564 = vpop.f32.mrf.mxu0
      %2565 = vmatprep.mubr.f32.mxu0 0.0
      %2566 = vmatmul.mubr.f32.gmra.mxu0 %v2345
      %v2567 = vpop.f32.mrf.mxu0
      %v2568 = vadd.f32 0.0, %v2567
      %v2569 = vpop.f32.mrf.mxu0
      %2570 = vmatprep.mubr.f32.mxu0 0.0
      %2571 = vmatmul.mubr.f32.gmra.mxu0 %v2348
      %v2572 = vpop.f32.mrf.mxu0
      %v2573 = vadd.f32 0.0, %v2572
      %v2574 = vpop.f32.mrf.mxu0
      %2575 = vmatprep.mubr.f32.mxu0 0.0
      %2576 = vmatmul.mubr.f32.gmra.mxu0 %v2351
      %v2577 = vpop.f32.mrf.mxu0
      %v2578 = vadd.f32 0.0, %v2577
      %v2579 = vpop.f32.mrf.mxu0
      %2580 = vdwg.mxu0
      %v2581 = vadd.f32 %v2065, %v2423
      %v2582 = vadd.f32 %v2070, %v2428
      %v2583 = vadd.f32 %v2075, %v2433
      %v2584 = vadd.f32 %v2080, %v2438
      %v2585 = vadd.f32 %v2085, %v2443
      %v2586 = vadd.f32 %v2090, %v2448
      %v2587 = vadd.f32 %v2095, %v2453
      %v2588 = vadd.f32 %v2100, %v2458
      %v2589 = vadd.f32 %v2105, %v2463
      %v2590 = vadd.f32 %v2110, %v2468
      %v2591 = vadd.f32 %v2115, %v2473
      %v2592 = vadd.f32 %v2120, %v2478
      %v2593 = vadd.f32 %v2125, %v2483
      %v2594 = vadd.f32 %v2130, %v2488
      %v2595 = vadd.f32 %v2135, %v2493
      %v2596 = vadd.f32 %v2140, %v2498
      %v2597 = vadd.f32 %v2145, %v2503
      %v2598 = vadd.f32 %v2150, %v2508
      %v2599 = vadd.f32 %v2155, %v2513
      %v2600 = vadd.f32 %v2160, %v2518
      %v2601 = vadd.f32 %v2165, %v2523
      %v2602 = vadd.f32 %v2170, %v2528
      %v2603 = vadd.f32 %v2175, %v2533
      %v2604 = vadd.f32 %v2180, %v2538
      %v2605 = vadd.f32 %v2185, %v2543
      %v2606 = vadd.f32 %v2190, %v2548
      %v2607 = vadd.f32 %v2195, %v2553
      %v2608 = vadd.f32 %v2200, %v2558
      %v2609 = vadd.f32 %v2205, %v2563
      %v2610 = vadd.f32 %v2210, %v2568
      %v2611 = vadd.f32 %v2215, %v2573
      %v2612 = vadd.f32 %v2220, %v2578
      %v2613 = vld [vmem:[%s1475] sm:$0xff]
      %v2614 = vld [vmem:[%s1475 + $0x8] sm:$0xff]
      %v2615 = vld [vmem:[%s1475 + $0x18] sm:$0xff]
      %v2616 = vld [vmem:[%s1475 + $0x20] sm:$0xff]
      %v2617 = vld [vmem:[%s1475 + $0x30] sm:$0xff]
      %v2618 = vld [vmem:[%s1475 + $0x38] sm:$0xff]
      %v2619 = vld [vmem:[%s1475 + $0x48] sm:$0xff]
      %v2620 = vld [vmem:[%s1475 + $0x50] sm:$0xff]
      %v2621 = vld [vmem:[%s1475 + $0x60] sm:$0xff]
      %v2622 = vld [vmem:[%s1475 + $0x68] sm:$0xff]
      %v2623 = vld [vmem:[%s1475 + $0x78] sm:$0xff]
      %v2624 = vld [vmem:[%s1475 + $0x80] sm:$0xff]
      %v2625 = vld [vmem:[%s1475 + $0x90] sm:$0xff]
      %v2626 = vld [vmem:[%s1475 + $0x98] sm:$0xff]
      %v2627 = vld [vmem:[%s1475 + $0xa8] sm:$0xff]
      %v2628 = vld [vmem:[%s1475 + $0xb0] sm:$0xff]
      %v2629 = vld [vmem:[%s1475 + $0xc0] sm:$0xff]
      %v2630 = vld [vmem:[%s1475 + $0xc8] sm:$0xff]
      %v2631 = vld [vmem:[%s1475 + $0xd8] sm:$0xff]
      %v2632 = vld [vmem:[%s1475 + $0xe0] sm:$0xff]
      %v2633 = vld [vmem:[%s1475 + $0xf0] sm:$0xff]
      %v2634 = vld [vmem:[%s1475 + $0xf8] sm:$0xff]
      %v2635 = vld [vmem:[%s1475 + $0x108] sm:$0xff]
      %v2636 = vld [vmem:[%s1475 + $0x110] sm:$0xff]
      %v2637 = vld [vmem:[%s1475 + $0x120] sm:$0xff]
      %v2638 = vld [vmem:[%s1475 + $0x128] sm:$0xff]
      %v2639 = vld [vmem:[%s1475 + $0x138] sm:$0xff]
      %v2640 = vld [vmem:[%s1475 + $0x140] sm:$0xff]
      %v2641 = vld [vmem:[%s1475 + $0x150] sm:$0xff]
      %v2642 = vld [vmem:[%s1475 + $0x158] sm:$0xff]
      %v2643 = vld [vmem:[%s1475 + $0x168] sm:$0xff]
      %v2644 = vld [vmem:[%s1475 + $0x170] sm:$0xff]
      %s2645 = scalar_lea.vmem %s6, 12
      %v2646 = vld [vmem:[%s2645] sm:$0xf]
      %v2648 = vsel %vm572, %v2613, 0
      %v2651 = vsel %vm572, %v2614, 0
      %v2654 = vsel %vm572, %v2615, 0
      %v2657 = vsel %vm572, %v2616, 0
      %v2660 = vsel %vm572, %v2617, 0
      %v2663 = vsel %vm572, %v2618, 0
      %v2666 = vsel %vm572, %v2619, 0
      %v2669 = vsel %vm572, %v2620, 0
      %v2672 = vsel %vm572, %v2621, 0
      %v2675 = vsel %vm572, %v2622, 0
      %v2678 = vsel %vm572, %v2623, 0
      %v2681 = vsel %vm572, %v2624, 0
      %v2684 = vsel %vm572, %v2625, 0
      %v2687 = vsel %vm572, %v2626, 0
      %v2690 = vsel %vm572, %v2627, 0
      %v2693 = vsel %vm572, %v2628, 0
      %v2696 = vsel %vm572, %v2629, 0
      %v2699 = vsel %vm572, %v2630, 0
      %v2702 = vsel %vm572, %v2631, 0
      %v2705 = vsel %vm572, %v2632, 0
      %v2708 = vsel %vm572, %v2633, 0
      %v2711 = vsel %vm572, %v2634, 0
      %v2714 = vsel %vm572, %v2635, 0
      %v2717 = vsel %vm572, %v2636, 0
      %v2720 = vsel %vm572, %v2637, 0
      %v2723 = vsel %vm572, %v2638, 0
      %v2726 = vsel %vm572, %v2639, 0
      %v2729 = vsel %vm572, %v2640, 0
      %v2732 = vsel %vm572, %v2641, 0
      %v2735 = vsel %vm572, %v2642, 0
      %v2738 = vsel %vm572, %v2643, 0
      %v2741 = vsel %vm572, %v2644, 0
      %v2744 = vsel %vm647, %v2646, 0
      %2746 = vmatprep.subr.mxu0 0.0
      %2747 = vmatpush1.msra.mxu0 0.0
      %2748 = vmatprep.subr.mxu0 0.0
      %2749 = vmatpush1.msra.mxu0 0.0
      %2750 = vmatprep.subr.mxu0 0.0
      %2751 = vmatpush1.msra.mxu0 0.0
      %2752 = vmatprep.subr.mxu0 0.0
      %2753 = vmatpush1.msra.mxu0 0.0
      %2754 = vmatprep.subr.mxu0 0.0
      %2755 = vmatpush1.msra.mxu0 0.0
      %2756 = vmatprep.subr.mxu0 0.0
      %2757 = vmatpush1.msra.mxu0 0.0
      %2758 = vmatprep.subr.mxu0 0.0
      %2759 = vmatpush1.msra.mxu0 0.0
      %2760 = vmatprep.subr.mxu0 0.0
      %2761 = vmatpush1.msra.mxu0 0.0
      %2762 = vmatprep.subr.mxu0 0.0
      %2763 = vmatpush1.msra.mxu0 0.0
      %2764 = vmatprep.subr.mxu0 0.0
      %2765 = vmatpush1.msra.mxu0 0.0
      %2766 = vmatprep.subr.mxu0 0.0
      %2767 = vmatpush1.msra.mxu0 0.0
      %2768 = vmatprep.subr.mxu0 0.0
      %2769 = vmatpush1.msra.mxu0 0.0
      %2770 = vmatprep.subr.mxu0 0.0
      %2771 = vmatpush1.msra.mxu0 0.0
      %2772 = vmatprep.subr.mxu0 0.0
      %2773 = vmatpush1.msra.mxu0 0.0
      %2774 = vmatprep.subr.mxu0 0.0
      %2775 = vmatpush1.msra.mxu0 0.0
      %2776 = vmatprep.subr.mxu0 0.0
      %2777 = vmatpush1.msra.mxu0 %v2744
      %2778 = vmatprep.subr.mxu0 0.0
      %2779 = vmatpush2.msra.mxu0 0.0
      %2780 = vmatprep.subr.mxu0 0.0
      %2781 = vmatpush2.msra.mxu0 0.0
      %2782 = vmatprep.subr.mxu0 0.0
      %2783 = vmatpush2.msra.mxu0 0.0
      %2784 = vmatprep.subr.mxu0 0.0
      %2785 = vmatpush2.msra.mxu0 0.0
      %2786 = vmatprep.subr.mxu0 0.0
      %2787 = vmatpush2.msra.mxu0 0.0
      %2788 = vmatprep.subr.mxu0 0.0
      %2789 = vmatpush2.msra.mxu0 0.0
      %2790 = vmatprep.subr.mxu0 0.0
      %2791 = vmatpush2.msra.mxu0 0.0
      %2792 = vmatprep.subr.mxu0 0.0
      %2793 = vmatpush2.msra.mxu0 0.0
      %2794 = vmatprep.subr.mxu0 0.0
      %2795 = vmatpush2.msra.mxu0 0.0
      %2796 = vmatprep.subr.mxu0 0.0
      %2797 = vmatpush2.msra.mxu0 0.0
      %2798 = vmatprep.subr.mxu0 0.0
      %2799 = vmatpush2.msra.mxu0 0.0
      %2800 = vmatprep.subr.mxu0 0.0
      %2801 = vmatpush2.msra.mxu0 0.0
      %2802 = vmatprep.subr.mxu0 0.0
      %2803 = vmatpush2.msra.mxu0 0.0
      %2804 = vmatprep.subr.mxu0 0.0
      %2805 = vmatpush2.msra.mxu0 0.0
      %2806 = vmatprep.subr.mxu0 0.0
      %2807 = vmatpush2.msra.mxu0 0.0
      %2808 = vmatprep.subr.mxu0 0.0
      %2809 = vmatpush2.msra.mxu0 0.0
      %2810 = vmatprep.mubr.f32.mxu0 0.0
      %2811 = vmatmul.mubr.f32.gmra.mxu0 %v2648
      %v2812 = vpop.f32.mrf.mxu0
      %v2813 = vadd.f32 0.0, %v2812
      %v2814 = vpop.f32.mrf.mxu0
      %2815 = vmatprep.mubr.f32.mxu0 0.0
      %2816 = vmatmul.mubr.f32.gmra.mxu0 %v2651
      %v2817 = vpop.f32.mrf.mxu0
      %v2818 = vadd.f32 0.0, %v2817
      %v2819 = vpop.f32.mrf.mxu0
      %2820 = vmatprep.mubr.f32.mxu0 0.0
      %2821 = vmatmul.mubr.f32.gmra.mxu0 %v2654
      %v2822 = vpop.f32.mrf.mxu0
      %v2823 = vadd.f32 0.0, %v2822
      %v2824 = vpop.f32.mrf.mxu0
      %2825 = vmatprep.mubr.f32.mxu0 0.0
      %2826 = vmatmul.mubr.f32.gmra.mxu0 %v2657
      %v2827 = vpop.f32.mrf.mxu0
      %v2828 = vadd.f32 0.0, %v2827
      %v2829 = vpop.f32.mrf.mxu0
      %2830 = vmatprep.mubr.f32.mxu0 0.0
      %2831 = vmatmul.mubr.f32.gmra.mxu0 %v2660
      %v2832 = vpop.f32.mrf.mxu0
      %v2833 = vadd.f32 0.0, %v2832
      %v2834 = vpop.f32.mrf.mxu0
      %2835 = vmatprep.mubr.f32.mxu0 0.0
      %2836 = vmatmul.mubr.f32.gmra.mxu0 %v2663
      %v2837 = vpop.f32.mrf.mxu0
      %v2838 = vadd.f32 0.0, %v2837
      %v2839 = vpop.f32.mrf.mxu0
      %2840 = vmatprep.mubr.f32.mxu0 0.0
      %2841 = vmatmul.mubr.f32.gmra.mxu0 %v2666
      %v2842 = vpop.f32.mrf.mxu0
      %v2843 = vadd.f32 0.0, %v2842
      %v2844 = vpop.f32.mrf.mxu0
      %2845 = vmatprep.mubr.f32.mxu0 0.0
      %2846 = vmatmul.mubr.f32.gmra.mxu0 %v2669
      %v2847 = vpop.f32.mrf.mxu0
      %v2848 = vadd.f32 0.0, %v2847
      %v2849 = vpop.f32.mrf.mxu0
      %2850 = vmatprep.mubr.f32.mxu0 0.0
      %2851 = vmatmul.mubr.f32.gmra.mxu0 %v2672
      %v2852 = vpop.f32.mrf.mxu0
      %v2853 = vadd.f32 0.0, %v2852
      %v2854 = vpop.f32.mrf.mxu0
      %2855 = vmatprep.mubr.f32.mxu0 0.0
      %2856 = vmatmul.mubr.f32.gmra.mxu0 %v2675
      %v2857 = vpop.f32.mrf.mxu0
      %v2858 = vadd.f32 0.0, %v2857
      %v2859 = vpop.f32.mrf.mxu0
      %2860 = vmatprep.mubr.f32.mxu0 0.0
      %2861 = vmatmul.mubr.f32.gmra.mxu0 %v2678
      %v2862 = vpop.f32.mrf.mxu0
      %v2863 = vadd.f32 0.0, %v2862
      %v2864 = vpop.f32.mrf.mxu0
      %2865 = vmatprep.mubr.f32.mxu0 0.0
      %2866 = vmatmul.mubr.f32.gmra.mxu0 %v2681
      %v2867 = vpop.f32.mrf.mxu0
      %v2868 = vadd.f32 0.0, %v2867
      %v2869 = vpop.f32.mrf.mxu0
      %2870 = vmatprep.mubr.f32.mxu0 0.0
      %2871 = vmatmul.mubr.f32.gmra.mxu0 %v2684
      %v2872 = vpop.f32.mrf.mxu0
      %v2873 = vadd.f32 0.0, %v2872
      %v2874 = vpop.f32.mrf.mxu0
      %2875 = vmatprep.mubr.f32.mxu0 0.0
      %2876 = vmatmul.mubr.f32.gmra.mxu0 %v2687
      %v2877 = vpop.f32.mrf.mxu0
      %v2878 = vadd.f32 0.0, %v2877
      %v2879 = vpop.f32.mrf.mxu0
      %2880 = vmatprep.mubr.f32.mxu0 0.0
      %2881 = vmatmul.mubr.f32.gmra.mxu0 %v2690
      %v2882 = vpop.f32.mrf.mxu0
      %v2883 = vadd.f32 0.0, %v2882
      %v2884 = vpop.f32.mrf.mxu0
      %2885 = vmatprep.mubr.f32.mxu0 0.0
      %2886 = vmatmul.mubr.f32.gmra.mxu0 %v2693
      %v2887 = vpop.f32.mrf.mxu0
      %v2888 = vadd.f32 0.0, %v2887
      %v2889 = vpop.f32.mrf.mxu0
      %2890 = vmatprep.mubr.f32.mxu0 0.0
      %2891 = vmatmul.mubr.f32.gmra.mxu0 %v2696
      %v2892 = vpop.f32.mrf.mxu0
      %v2893 = vadd.f32 0.0, %v2892
      %v2894 = vpop.f32.mrf.mxu0
      %2895 = vmatprep.mubr.f32.mxu0 0.0
      %2896 = vmatmul.mubr.f32.gmra.mxu0 %v2699
      %v2897 = vpop.f32.mrf.mxu0
      %v2898 = vadd.f32 0.0, %v2897
      %v2899 = vpop.f32.mrf.mxu0
      %2900 = vmatprep.mubr.f32.mxu0 0.0
      %2901 = vmatmul.mubr.f32.gmra.mxu0 %v2702
      %v2902 = vpop.f32.mrf.mxu0
      %v2903 = vadd.f32 0.0, %v2902
      %v2904 = vpop.f32.mrf.mxu0
      %2905 = vmatprep.mubr.f32.mxu0 0.0
      %2906 = vmatmul.mubr.f32.gmra.mxu0 %v2705
      %v2907 = vpop.f32.mrf.mxu0
      %v2908 = vadd.f32 0.0, %v2907
      %v2909 = vpop.f32.mrf.mxu0
      %2910 = vmatprep.mubr.f32.mxu0 0.0
      %2911 = vmatmul.mubr.f32.gmra.mxu0 %v2708
      %v2912 = vpop.f32.mrf.mxu0
      %v2913 = vadd.f32 0.0, %v2912
      %v2914 = vpop.f32.mrf.mxu0
      %2915 = vmatprep.mubr.f32.mxu0 0.0
      %2916 = vmatmul.mubr.f32.gmra.mxu0 %v2711
      %v2917 = vpop.f32.mrf.mxu0
      %v2918 = vadd.f32 0.0, %v2917
      %v2919 = vpop.f32.mrf.mxu0
      %2920 = vmatprep.mubr.f32.mxu0 0.0
      %2921 = vmatmul.mubr.f32.gmra.mxu0 %v2714
      %v2922 = vpop.f32.mrf.mxu0
      %v2923 = vadd.f32 0.0, %v2922
      %v2924 = vpop.f32.mrf.mxu0
      %2925 = vmatprep.mubr.f32.mxu0 0.0
      %2926 = vmatmul.mubr.f32.gmra.mxu0 %v2717
      %v2927 = vpop.f32.mrf.mxu0
      %v2928 = vadd.f32 0.0, %v2927
      %v2929 = vpop.f32.mrf.mxu0
      %2930 = vmatprep.mubr.f32.mxu0 0.0
      %2931 = vmatmul.mubr.f32.gmra.mxu0 %v2720
      %v2932 = vpop.f32.mrf.mxu0
      %v2933 = vadd.f32 0.0, %v2932
      %v2934 = vpop.f32.mrf.mxu0
      %2935 = vmatprep.mubr.f32.mxu0 0.0
      %2936 = vmatmul.mubr.f32.gmra.mxu0 %v2723
      %v2937 = vpop.f32.mrf.mxu0
      %v2938 = vadd.f32 0.0, %v2937
      %v2939 = vpop.f32.mrf.mxu0
      %2940 = vmatprep.mubr.f32.mxu0 0.0
      %2941 = vmatmul.mubr.f32.gmra.mxu0 %v2726
      %v2942 = vpop.f32.mrf.mxu0
      %v2943 = vadd.f32 0.0, %v2942
      %v2944 = vpop.f32.mrf.mxu0
      %2945 = vmatprep.mubr.f32.mxu0 0.0
      %2946 = vmatmul.mubr.f32.gmra.mxu0 %v2729
      %v2947 = vpop.f32.mrf.mxu0
      %v2948 = vadd.f32 0.0, %v2947
      %v2949 = vpop.f32.mrf.mxu0
      %2950 = vmatprep.mubr.f32.mxu0 0.0
      %2951 = vmatmul.mubr.f32.gmra.mxu0 %v2732
      %v2952 = vpop.f32.mrf.mxu0
      %v2953 = vadd.f32 0.0, %v2952
      %v2954 = vpop.f32.mrf.mxu0
      %2955 = vmatprep.mubr.f32.mxu0 0.0
      %2956 = vmatmul.mubr.f32.gmra.mxu0 %v2735
      %v2957 = vpop.f32.mrf.mxu0
      %v2958 = vadd.f32 0.0, %v2957
      %v2959 = vpop.f32.mrf.mxu0
      %2960 = vmatprep.mubr.f32.mxu0 0.0
      %2961 = vmatmul.mubr.f32.gmra.mxu0 %v2738
      %v2962 = vpop.f32.mrf.mxu0
      %v2963 = vadd.f32 0.0, %v2962
      %v2964 = vpop.f32.mrf.mxu0
      %2965 = vmatprep.mubr.f32.mxu0 0.0
      %2966 = vmatmul.mubr.f32.gmra.mxu0 %v2741
      %v2967 = vpop.f32.mrf.mxu0
      %v2968 = vadd.f32 0.0, %v2967
      %v2969 = vpop.f32.mrf.mxu0
      %2970 = vdwg.mxu0
      %v2971 = vadd.f32 %v2581, %v2813
      %v2972 = vadd.f32 %v2582, %v2818
      %v2973 = vadd.f32 %v2583, %v2823
      %v2974 = vadd.f32 %v2584, %v2828
      %v2975 = vadd.f32 %v2585, %v2833
      %v2976 = vadd.f32 %v2586, %v2838
      %v2977 = vadd.f32 %v2587, %v2843
      %v2978 = vadd.f32 %v2588, %v2848
      %v2979 = vadd.f32 %v2589, %v2853
      %v2980 = vadd.f32 %v2590, %v2858
      %v2981 = vadd.f32 %v2591, %v2863
      %v2982 = vadd.f32 %v2592, %v2868
      %v2983 = vadd.f32 %v2593, %v2873
      %v2984 = vadd.f32 %v2594, %v2878
      %v2985 = vadd.f32 %v2595, %v2883
      %v2986 = vadd.f32 %v2596, %v2888
      %v2987 = vadd.f32 %v2597, %v2893
      %v2988 = vadd.f32 %v2598, %v2898
      %v2989 = vadd.f32 %v2599, %v2903
      %v2990 = vadd.f32 %v2600, %v2908
      %v2991 = vadd.f32 %v2601, %v2913
      %v2992 = vadd.f32 %v2602, %v2918
      %v2993 = vadd.f32 %v2603, %v2923
      %v2994 = vadd.f32 %v2604, %v2928
      %v2995 = vadd.f32 %v2605, %v2933
      %v2996 = vadd.f32 %v2606, %v2938
      %v2997 = vadd.f32 %v2607, %v2943
      %v2998 = vadd.f32 %v2608, %v2948
      %v2999 = vadd.f32 %v2609, %v2953
      %v3000 = vadd.f32 %v2610, %v2958
      %v3001 = vadd.f32 %v2611, %v2963
      %v3002 = vadd.f32 %v2612, %v2968
      %v3003 = vld [vmem:[%s1475 + $0x1] sm:$0xff]
      %v3004 = vld [vmem:[%s1475 + $0x9] sm:$0xff]
      %v3005 = vld [vmem:[%s1475 + $0x19] sm:$0xff]
      %v3006 = vld [vmem:[%s1475 + $0x21] sm:$0xff]
      %v3007 = vld [vmem:[%s1475 + $0x31] sm:$0xff]
      %v3008 = vld [vmem:[%s1475 + $0x39] sm:$0xff]
      %v3009 = vld [vmem:[%s1475 + $0x49] sm:$0xff]
      %v3010 = vld [vmem:[%s1475 + $0x51] sm:$0xff]
      %v3011 = vld [vmem:[%s1475 + $0x61] sm:$0xff]
      %v3012 = vld [vmem:[%s1475 + $0x69] sm:$0xff]
      %v3013 = vld [vmem:[%s1475 + $0x79] sm:$0xff]
      %v3014 = vld [vmem:[%s1475 + $0x81] sm:$0xff]
      %v3015 = vld [vmem:[%s1475 + $0x91] sm:$0xff]
      %v3016 = vld [vmem:[%s1475 + $0x99] sm:$0xff]
      %v3017 = vld [vmem:[%s1475 + $0xa9] sm:$0xff]
      %v3018 = vld [vmem:[%s1475 + $0xb1] sm:$0xff]
      %v3019 = vld [vmem:[%s1475 + $0xc1] sm:$0xff]
      %v3020 = vld [vmem:[%s1475 + $0xc9] sm:$0xff]
      %v3021 = vld [vmem:[%s1475 + $0xd9] sm:$0xff]
      %v3022 = vld [vmem:[%s1475 + $0xe1] sm:$0xff]
      %v3023 = vld [vmem:[%s1475 + $0xf1] sm:$0xff]
      %v3024 = vld [vmem:[%s1475 + $0xf9] sm:$0xff]
      %v3025 = vld [vmem:[%s1475 + $0x109] sm:$0xff]
      %v3026 = vld [vmem:[%s1475 + $0x111] sm:$0xff]
      %v3027 = vld [vmem:[%s1475 + $0x121] sm:$0xff]
      %v3028 = vld [vmem:[%s1475 + $0x129] sm:$0xff]
      %v3029 = vld [vmem:[%s1475 + $0x139] sm:$0xff]
      %v3030 = vld [vmem:[%s1475 + $0x141] sm:$0xff]
      %v3031 = vld [vmem:[%s1475 + $0x151] sm:$0xff]
      %v3032 = vld [vmem:[%s1475 + $0x159] sm:$0xff]
      %v3033 = vld [vmem:[%s1475 + $0x169] sm:$0xff]
      %v3034 = vld [vmem:[%s1475 + $0x171] sm:$0xff]
      %s3035 = scalar_lea.vmem %s6, 16
      %v3036 = vld [vmem:[%s3035] sm:$0xf]
      %v3038 = vsel %vm572, %v3003, 0
      %v3041 = vsel %vm572, %v3004, 0
      %v3044 = vsel %vm572, %v3005, 0
      %v3047 = vsel %vm572, %v3006, 0
      %v3050 = vsel %vm572, %v3007, 0
      %v3053 = vsel %vm572, %v3008, 0
      %v3056 = vsel %vm572, %v3009, 0
      %v3059 = vsel %vm572, %v3010, 0
      %v3062 = vsel %vm572, %v3011, 0
      %v3065 = vsel %vm572, %v3012, 0
      %v3068 = vsel %vm572, %v3013, 0
      %v3071 = vsel %vm572, %v3014, 0
      %v3074 = vsel %vm572, %v3015, 0
      %v3077 = vsel %vm572, %v3016, 0
      %v3080 = vsel %vm572, %v3017, 0
      %v3083 = vsel %vm572, %v3018, 0
      %v3086 = vsel %vm572, %v3019, 0
      %v3089 = vsel %vm572, %v3020, 0
      %v3092 = vsel %vm572, %v3021, 0
      %v3095 = vsel %vm572, %v3022, 0
      %v3098 = vsel %vm572, %v3023, 0
      %v3101 = vsel %vm572, %v3024, 0
      %v3104 = vsel %vm572, %v3025, 0
      %v3107 = vsel %vm572, %v3026, 0
      %v3110 = vsel %vm572, %v3027, 0
      %v3113 = vsel %vm572, %v3028, 0
      %v3116 = vsel %vm572, %v3029, 0
      %v3119 = vsel %vm572, %v3030, 0
      %v3122 = vsel %vm572, %v3031, 0
      %v3125 = vsel %vm572, %v3032, 0
      %v3128 = vsel %vm572, %v3033, 0
      %v3131 = vsel %vm572, %v3034, 0
      %v3134 = vsel %vm647, %v3036, 0
      %3136 = vmatprep.subr.mxu0 0.0
      %3137 = vmatpush1.msra.mxu0 0.0
      %3138 = vmatprep.subr.mxu0 0.0
      %3139 = vmatpush1.msra.mxu0 0.0
      %3140 = vmatprep.subr.mxu0 0.0
      %3141 = vmatpush1.msra.mxu0 0.0
      %3142 = vmatprep.subr.mxu0 0.0
      %3143 = vmatpush1.msra.mxu0 0.0
      %3144 = vmatprep.subr.mxu0 0.0
      %3145 = vmatpush1.msra.mxu0 0.0
      %3146 = vmatprep.subr.mxu0 0.0
      %3147 = vmatpush1.msra.mxu0 0.0
      %3148 = vmatprep.subr.mxu0 0.0
      %3149 = vmatpush1.msra.mxu0 0.0
      %3150 = vmatprep.subr.mxu0 0.0
      %3151 = vmatpush1.msra.mxu0 0.0
      %3152 = vmatprep.subr.mxu0 0.0
      %3153 = vmatpush1.msra.mxu0 0.0
      %3154 = vmatprep.subr.mxu0 0.0
      %3155 = vmatpush1.msra.mxu0 0.0
      %3156 = vmatprep.subr.mxu0 0.0
      %3157 = vmatpush1.msra.mxu0 0.0
      %3158 = vmatprep.subr.mxu0 0.0
      %3159 = vmatpush1.msra.mxu0 0.0
      %3160 = vmatprep.subr.mxu0 0.0
      %3161 = vmatpush1.msra.mxu0 0.0
      %3162 = vmatprep.subr.mxu0 0.0
      %3163 = vmatpush1.msra.mxu0 0.0
      %3164 = vmatprep.subr.mxu0 0.0
      %3165 = vmatpush1.msra.mxu0 0.0
      %3166 = vmatprep.subr.mxu0 0.0
      %3167 = vmatpush1.msra.mxu0 %v3134
      %3168 = vmatprep.subr.mxu0 0.0
      %3169 = vmatpush2.msra.mxu0 0.0
      %3170 = vmatprep.subr.mxu0 0.0
      %3171 = vmatpush2.msra.mxu0 0.0
      %3172 = vmatprep.subr.mxu0 0.0
      %3173 = vmatpush2.msra.mxu0 0.0
      %3174 = vmatprep.subr.mxu0 0.0
      %3175 = vmatpush2.msra.mxu0 0.0
      %3176 = vmatprep.subr.mxu0 0.0
      %3177 = vmatpush2.msra.mxu0 0.0
      %3178 = vmatprep.subr.mxu0 0.0
      %3179 = vmatpush2.msra.mxu0 0.0
      %3180 = vmatprep.subr.mxu0 0.0
      %3181 = vmatpush2.msra.mxu0 0.0
      %3182 = vmatprep.subr.mxu0 0.0
      %3183 = vmatpush2.msra.mxu0 0.0
      %3184 = vmatprep.subr.mxu0 0.0
      %3185 = vmatpush2.msra.mxu0 0.0
      %3186 = vmatprep.subr.mxu0 0.0
      %3187 = vmatpush2.msra.mxu0 0.0
      %3188 = vmatprep.subr.mxu0 0.0
      %3189 = vmatpush2.msra.mxu0 0.0
      %3190 = vmatprep.subr.mxu0 0.0
      %3191 = vmatpush2.msra.mxu0 0.0
      %3192 = vmatprep.subr.mxu0 0.0
      %3193 = vmatpush2.msra.mxu0 0.0
      %3194 = vmatprep.subr.mxu0 0.0
      %3195 = vmatpush2.msra.mxu0 0.0
      %3196 = vmatprep.subr.mxu0 0.0
      %3197 = vmatpush2.msra.mxu0 0.0
      %3198 = vmatprep.subr.mxu0 0.0
      %3199 = vmatpush2.msra.mxu0 0.0
      %3200 = vmatprep.mubr.f32.mxu0 0.0
      %3201 = vmatmul.mubr.f32.gmra.mxu0 %v3038
      %v3202 = vpop.f32.mrf.mxu0
      %v3203 = vadd.f32 0.0, %v3202
      %v3204 = vpop.f32.mrf.mxu0
      %3205 = vmatprep.mubr.f32.mxu0 0.0
      %3206 = vmatmul.mubr.f32.gmra.mxu0 %v3041
      %v3207 = vpop.f32.mrf.mxu0
      %v3208 = vadd.f32 0.0, %v3207
      %v3209 = vpop.f32.mrf.mxu0
      %3210 = vmatprep.mubr.f32.mxu0 0.0
      %3211 = vmatmul.mubr.f32.gmra.mxu0 %v3044
      %v3212 = vpop.f32.mrf.mxu0
      %v3213 = vadd.f32 0.0, %v3212
      %v3214 = vpop.f32.mrf.mxu0
      %3215 = vmatprep.mubr.f32.mxu0 0.0
      %3216 = vmatmul.mubr.f32.gmra.mxu0 %v3047
      %v3217 = vpop.f32.mrf.mxu0
      %v3218 = vadd.f32 0.0, %v3217
      %v3219 = vpop.f32.mrf.mxu0
      %3220 = vmatprep.mubr.f32.mxu0 0.0
      %3221 = vmatmul.mubr.f32.gmra.mxu0 %v3050
      %v3222 = vpop.f32.mrf.mxu0
      %v3223 = vadd.f32 0.0, %v3222
      %v3224 = vpop.f32.mrf.mxu0
      %3225 = vmatprep.mubr.f32.mxu0 0.0
      %3226 = vmatmul.mubr.f32.gmra.mxu0 %v3053
      %v3227 = vpop.f32.mrf.mxu0
      %v3228 = vadd.f32 0.0, %v3227
      %v3229 = vpop.f32.mrf.mxu0
      %3230 = vmatprep.mubr.f32.mxu0 0.0
      %3231 = vmatmul.mubr.f32.gmra.mxu0 %v3056
      %v3232 = vpop.f32.mrf.mxu0
      %v3233 = vadd.f32 0.0, %v3232
      %v3234 = vpop.f32.mrf.mxu0
      %3235 = vmatprep.mubr.f32.mxu0 0.0
      %3236 = vmatmul.mubr.f32.gmra.mxu0 %v3059
      %v3237 = vpop.f32.mrf.mxu0
      %v3238 = vadd.f32 0.0, %v3237
      %v3239 = vpop.f32.mrf.mxu0
      %3240 = vmatprep.mubr.f32.mxu0 0.0
      %3241 = vmatmul.mubr.f32.gmra.mxu0 %v3062
      %v3242 = vpop.f32.mrf.mxu0
      %v3243 = vadd.f32 0.0, %v3242
      %v3244 = vpop.f32.mrf.mxu0
      %3245 = vmatprep.mubr.f32.mxu0 0.0
      %3246 = vmatmul.mubr.f32.gmra.mxu0 %v3065
      %v3247 = vpop.f32.mrf.mxu0
      %v3248 = vadd.f32 0.0, %v3247
      %v3249 = vpop.f32.mrf.mxu0
      %3250 = vmatprep.mubr.f32.mxu0 0.0
      %3251 = vmatmul.mubr.f32.gmra.mxu0 %v3068
      %v3252 = vpop.f32.mrf.mxu0
      %v3253 = vadd.f32 0.0, %v3252
      %v3254 = vpop.f32.mrf.mxu0
      %3255 = vmatprep.mubr.f32.mxu0 0.0
      %3256 = vmatmul.mubr.f32.gmra.mxu0 %v3071
      %v3257 = vpop.f32.mrf.mxu0
      %v3258 = vadd.f32 0.0, %v3257
      %v3259 = vpop.f32.mrf.mxu0
      %3260 = vmatprep.mubr.f32.mxu0 0.0
      %3261 = vmatmul.mubr.f32.gmra.mxu0 %v3074
      %v3262 = vpop.f32.mrf.mxu0
      %v3263 = vadd.f32 0.0, %v3262
      %v3264 = vpop.f32.mrf.mxu0
      %3265 = vmatprep.mubr.f32.mxu0 0.0
      %3266 = vmatmul.mubr.f32.gmra.mxu0 %v3077
      %v3267 = vpop.f32.mrf.mxu0
      %v3268 = vadd.f32 0.0, %v3267
      %v3269 = vpop.f32.mrf.mxu0
      %3270 = vmatprep.mubr.f32.mxu0 0.0
      %3271 = vmatmul.mubr.f32.gmra.mxu0 %v3080
      %v3272 = vpop.f32.mrf.mxu0
      %v3273 = vadd.f32 0.0, %v3272
      %v3274 = vpop.f32.mrf.mxu0
      %3275 = vmatprep.mubr.f32.mxu0 0.0
      %3276 = vmatmul.mubr.f32.gmra.mxu0 %v3083
      %v3277 = vpop.f32.mrf.mxu0
      %v3278 = vadd.f32 0.0, %v3277
      %v3279 = vpop.f32.mrf.mxu0
      %3280 = vmatprep.mubr.f32.mxu0 0.0
      %3281 = vmatmul.mubr.f32.gmra.mxu0 %v3086
      %v3282 = vpop.f32.mrf.mxu0
      %v3283 = vadd.f32 0.0, %v3282
      %v3284 = vpop.f32.mrf.mxu0
      %3285 = vmatprep.mubr.f32.mxu0 0.0
      %3286 = vmatmul.mubr.f32.gmra.mxu0 %v3089
      %v3287 = vpop.f32.mrf.mxu0
      %v3288 = vadd.f32 0.0, %v3287
      %v3289 = vpop.f32.mrf.mxu0
      %3290 = vmatprep.mubr.f32.mxu0 0.0
      %3291 = vmatmul.mubr.f32.gmra.mxu0 %v3092
      %v3292 = vpop.f32.mrf.mxu0
      %v3293 = vadd.f32 0.0, %v3292
      %v3294 = vpop.f32.mrf.mxu0
      %3295 = vmatprep.mubr.f32.mxu0 0.0
      %3296 = vmatmul.mubr.f32.gmra.mxu0 %v3095
      %v3297 = vpop.f32.mrf.mxu0
      %v3298 = vadd.f32 0.0, %v3297
      %v3299 = vpop.f32.mrf.mxu0
      %3300 = vmatprep.mubr.f32.mxu0 0.0
      %3301 = vmatmul.mubr.f32.gmra.mxu0 %v3098
      %v3302 = vpop.f32.mrf.mxu0
      %v3303 = vadd.f32 0.0, %v3302
      %v3304 = vpop.f32.mrf.mxu0
      %3305 = vmatprep.mubr.f32.mxu0 0.0
      %3306 = vmatmul.mubr.f32.gmra.mxu0 %v3101
      %v3307 = vpop.f32.mrf.mxu0
      %v3308 = vadd.f32 0.0, %v3307
      %v3309 = vpop.f32.mrf.mxu0
      %3310 = vmatprep.mubr.f32.mxu0 0.0
      %3311 = vmatmul.mubr.f32.gmra.mxu0 %v3104
      %v3312 = vpop.f32.mrf.mxu0
      %v3313 = vadd.f32 0.0, %v3312
      %v3314 = vpop.f32.mrf.mxu0
      %3315 = vmatprep.mubr.f32.mxu0 0.0
      %3316 = vmatmul.mubr.f32.gmra.mxu0 %v3107
      %v3317 = vpop.f32.mrf.mxu0
      %v3318 = vadd.f32 0.0, %v3317
      %v3319 = vpop.f32.mrf.mxu0
      %3320 = vmatprep.mubr.f32.mxu0 0.0
      %3321 = vmatmul.mubr.f32.gmra.mxu0 %v3110
      %v3322 = vpop.f32.mrf.mxu0
      %v3323 = vadd.f32 0.0, %v3322
      %v3324 = vpop.f32.mrf.mxu0
      %3325 = vmatprep.mubr.f32.mxu0 0.0
      %3326 = vmatmul.mubr.f32.gmra.mxu0 %v3113
      %v3327 = vpop.f32.mrf.mxu0
      %v3328 = vadd.f32 0.0, %v3327
      %v3329 = vpop.f32.mrf.mxu0
      %3330 = vmatprep.mubr.f32.mxu0 0.0
      %3331 = vmatmul.mubr.f32.gmra.mxu0 %v3116
      %v3332 = vpop.f32.mrf.mxu0
      %v3333 = vadd.f32 0.0, %v3332
      %v3334 = vpop.f32.mrf.mxu0
      %3335 = vmatprep.mubr.f32.mxu0 0.0
      %3336 = vmatmul.mubr.f32.gmra.mxu0 %v3119
      %v3337 = vpop.f32.mrf.mxu0
      %v3338 = vadd.f32 0.0, %v3337
      %v3339 = vpop.f32.mrf.mxu0
      %3340 = vmatprep.mubr.f32.mxu0 0.0
      %3341 = vmatmul.mubr.f32.gmra.mxu0 %v3122
      %v3342 = vpop.f32.mrf.mxu0
      %v3343 = vadd.f32 0.0, %v3342
      %v3344 = vpop.f32.mrf.mxu0
      %3345 = vmatprep.mubr.f32.mxu0 0.0
      %3346 = vmatmul.mubr.f32.gmra.mxu0 %v3125
      %v3347 = vpop.f32.mrf.mxu0
      %v3348 = vadd.f32 0.0, %v3347
      %v3349 = vpop.f32.mrf.mxu0
      %3350 = vmatprep.mubr.f32.mxu0 0.0
      %3351 = vmatmul.mubr.f32.gmra.mxu0 %v3128
      %v3352 = vpop.f32.mrf.mxu0
      %v3353 = vadd.f32 0.0, %v3352
      %v3354 = vpop.f32.mrf.mxu0
      %3355 = vmatprep.mubr.f32.mxu0 0.0
      %3356 = vmatmul.mubr.f32.gmra.mxu0 %v3131
      %v3357 = vpop.f32.mrf.mxu0
      %v3358 = vadd.f32 0.0, %v3357
      %v3359 = vpop.f32.mrf.mxu0
      %3360 = vdwg.mxu0
      %v3361 = vadd.f32 %v2971, %v3203
      %v3362 = vadd.f32 %v2972, %v3208
      %v3363 = vadd.f32 %v2973, %v3213
      %v3364 = vadd.f32 %v2974, %v3218
      %v3365 = vadd.f32 %v2975, %v3223
      %v3366 = vadd.f32 %v2976, %v3228
      %v3367 = vadd.f32 %v2977, %v3233
      %v3368 = vadd.f32 %v2978, %v3238
      %v3369 = vadd.f32 %v2979, %v3243
      %v3370 = vadd.f32 %v2980, %v3248
      %v3371 = vadd.f32 %v2981, %v3253
      %v3372 = vadd.f32 %v2982, %v3258
      %v3373 = vadd.f32 %v2983, %v3263
      %v3374 = vadd.f32 %v2984, %v3268
      %v3375 = vadd.f32 %v2985, %v3273
      %v3376 = vadd.f32 %v2986, %v3278
      %v3377 = vadd.f32 %v2987, %v3283
      %v3378 = vadd.f32 %v2988, %v3288
      %v3379 = vadd.f32 %v2989, %v3293
      %v3380 = vadd.f32 %v2990, %v3298
      %v3381 = vadd.f32 %v2991, %v3303
      %v3382 = vadd.f32 %v2992, %v3308
      %v3383 = vadd.f32 %v2993, %v3313
      %v3384 = vadd.f32 %v2994, %v3318
      %v3385 = vadd.f32 %v2995, %v3323
      %v3386 = vadd.f32 %v2996, %v3328
      %v3387 = vadd.f32 %v2997, %v3333
      %v3388 = vadd.f32 %v2998, %v3338
      %v3389 = vadd.f32 %v2999, %v3343
      %v3390 = vadd.f32 %v3000, %v3348
      %v3391 = vadd.f32 %v3001, %v3353
      %v3392 = vadd.f32 %v3002, %v3358
      %v3393 = vld [vmem:[%s1475 + $0x2] sm:$0xff]
      %v3394 = vld [vmem:[%s1475 + $0xa] sm:$0xff]
      %v3395 = vld [vmem:[%s1475 + $0x1a] sm:$0xff]
      %v3396 = vld [vmem:[%s1475 + $0x22] sm:$0xff]
      %v3397 = vld [vmem:[%s1475 + $0x32] sm:$0xff]
      %v3398 = vld [vmem:[%s1475 + $0x3a] sm:$0xff]
      %v3399 = vld [vmem:[%s1475 + $0x4a] sm:$0xff]
      %v3400 = vld [vmem:[%s1475 + $0x52] sm:$0xff]
      %v3401 = vld [vmem:[%s1475 + $0x62] sm:$0xff]
      %v3402 = vld [vmem:[%s1475 + $0x6a] sm:$0xff]
      %v3403 = vld [vmem:[%s1475 + $0x7a] sm:$0xff]
      %v3404 = vld [vmem:[%s1475 + $0x82] sm:$0xff]
      %v3405 = vld [vmem:[%s1475 + $0x92] sm:$0xff]
      %v3406 = vld [vmem:[%s1475 + $0x9a] sm:$0xff]
      %v3407 = vld [vmem:[%s1475 + $0xaa] sm:$0xff]
      %v3408 = vld [vmem:[%s1475 + $0xb2] sm:$0xff]
      %v3409 = vld [vmem:[%s1475 + $0xc2] sm:$0xff]
      %v3410 = vld [vmem:[%s1475 + $0xca] sm:$0xff]
      %v3411 = vld [vmem:[%s1475 + $0xda] sm:$0xff]
      %v3412 = vld [vmem:[%s1475 + $0xe2] sm:$0xff]
      %v3413 = vld [vmem:[%s1475 + $0xf2] sm:$0xff]
      %v3414 = vld [vmem:[%s1475 + $0xfa] sm:$0xff]
      %v3415 = vld [vmem:[%s1475 + $0x10a] sm:$0xff]
      %v3416 = vld [vmem:[%s1475 + $0x112] sm:$0xff]
      %v3417 = vld [vmem:[%s1475 + $0x122] sm:$0xff]
      %v3418 = vld [vmem:[%s1475 + $0x12a] sm:$0xff]
      %v3419 = vld [vmem:[%s1475 + $0x13a] sm:$0xff]
      %v3420 = vld [vmem:[%s1475 + $0x142] sm:$0xff]
      %v3421 = vld [vmem:[%s1475 + $0x152] sm:$0xff]
      %v3422 = vld [vmem:[%s1475 + $0x15a] sm:$0xff]
      %v3423 = vld [vmem:[%s1475 + $0x16a] sm:$0xff]
      %v3424 = vld [vmem:[%s1475 + $0x172] sm:$0xff]
      %s3425 = scalar_lea.vmem %s6, 20
      %v3426 = vld [vmem:[%s3425] sm:$0xf]
      %v3428 = vsel %vm572, %v3393, 0
      %v3431 = vsel %vm572, %v3394, 0
      %v3434 = vsel %vm572, %v3395, 0
      %v3437 = vsel %vm572, %v3396, 0
      %v3440 = vsel %vm572, %v3397, 0
      %v3443 = vsel %vm572, %v3398, 0
      %v3446 = vsel %vm572, %v3399, 0
      %v3449 = vsel %vm572, %v3400, 0
      %v3452 = vsel %vm572, %v3401, 0
      %v3455 = vsel %vm572, %v3402, 0
      %v3458 = vsel %vm572, %v3403, 0
      %v3461 = vsel %vm572, %v3404, 0
      %v3464 = vsel %vm572, %v3405, 0
      %v3467 = vsel %vm572, %v3406, 0
      %v3470 = vsel %vm572, %v3407, 0
      %v3473 = vsel %vm572, %v3408, 0
      %v3476 = vsel %vm572, %v3409, 0
      %v3479 = vsel %vm572, %v3410, 0
      %v3482 = vsel %vm572, %v3411, 0
      %v3485 = vsel %vm572, %v3412, 0
      %v3488 = vsel %vm572, %v3413, 0
      %v3491 = vsel %vm572, %v3414, 0
      %v3494 = vsel %vm572, %v3415, 0
      %v3497 = vsel %vm572, %v3416, 0
      %v3500 = vsel %vm572, %v3417, 0
      %v3503 = vsel %vm572, %v3418, 0
      %v3506 = vsel %vm572, %v3419, 0
      %v3509 = vsel %vm572, %v3420, 0
      %v3512 = vsel %vm572, %v3421, 0
      %v3515 = vsel %vm572, %v3422, 0
      %v3518 = vsel %vm572, %v3423, 0
      %v3521 = vsel %vm572, %v3424, 0
      %v3524 = vsel %vm647, %v3426, 0
      %3526 = vmatprep.subr.mxu0 0.0
      %3527 = vmatpush1.msra.mxu0 0.0
      %3528 = vmatprep.subr.mxu0 0.0
      %3529 = vmatpush1.msra.mxu0 0.0
      %3530 = vmatprep.subr.mxu0 0.0
      %3531 = vmatpush1.msra.mxu0 0.0
      %3532 = vmatprep.subr.mxu0 0.0
      %3533 = vmatpush1.msra.mxu0 0.0
      %3534 = vmatprep.subr.mxu0 0.0
      %3535 = vmatpush1.msra.mxu0 0.0
      %3536 = vmatprep.subr.mxu0 0.0
      %3537 = vmatpush1.msra.mxu0 0.0
      %3538 = vmatprep.subr.mxu0 0.0
      %3539 = vmatpush1.msra.mxu0 0.0
      %3540 = vmatprep.subr.mxu0 0.0
      %3541 = vmatpush1.msra.mxu0 0.0
      %3542 = vmatprep.subr.mxu0 0.0
      %3543 = vmatpush1.msra.mxu0 0.0
      %3544 = vmatprep.subr.mxu0 0.0
      %3545 = vmatpush1.msra.mxu0 0.0
      %3546 = vmatprep.subr.mxu0 0.0
      %3547 = vmatpush1.msra.mxu0 0.0
      %3548 = vmatprep.subr.mxu0 0.0
      %3549 = vmatpush1.msra.mxu0 0.0
      %3550 = vmatprep.subr.mxu0 0.0
      %3551 = vmatpush1.msra.mxu0 0.0
      %3552 = vmatprep.subr.mxu0 0.0
      %3553 = vmatpush1.msra.mxu0 0.0
      %3554 = vmatprep.subr.mxu0 0.0
      %3555 = vmatpush1.msra.mxu0 0.0
      %3556 = vmatprep.subr.mxu0 0.0
      %3557 = vmatpush1.msra.mxu0 %v3524
      %3558 = vmatprep.subr.mxu0 0.0
      %3559 = vmatpush2.msra.mxu0 0.0
      %3560 = vmatprep.subr.mxu0 0.0
      %3561 = vmatpush2.msra.mxu0 0.0
      %3562 = vmatprep.subr.mxu0 0.0
      %3563 = vmatpush2.msra.mxu0 0.0
      %3564 = vmatprep.subr.mxu0 0.0
      %3565 = vmatpush2.msra.mxu0 0.0
      %3566 = vmatprep.subr.mxu0 0.0
      %3567 = vmatpush2.msra.mxu0 0.0
      %3568 = vmatprep.subr.mxu0 0.0
      %3569 = vmatpush2.msra.mxu0 0.0
      %3570 = vmatprep.subr.mxu0 0.0
      %3571 = vmatpush2.msra.mxu0 0.0
      %3572 = vmatprep.subr.mxu0 0.0
      %3573 = vmatpush2.msra.mxu0 0.0
      %3574 = vmatprep.subr.mxu0 0.0
      %3575 = vmatpush2.msra.mxu0 0.0
      %3576 = vmatprep.subr.mxu0 0.0
      %3577 = vmatpush2.msra.mxu0 0.0
      %3578 = vmatprep.subr.mxu0 0.0
      %3579 = vmatpush2.msra.mxu0 0.0
      %3580 = vmatprep.subr.mxu0 0.0
      %3581 = vmatpush2.msra.mxu0 0.0
      %3582 = vmatprep.subr.mxu0 0.0
      %3583 = vmatpush2.msra.mxu0 0.0
      %3584 = vmatprep.subr.mxu0 0.0
      %3585 = vmatpush2.msra.mxu0 0.0
      %3586 = vmatprep.subr.mxu0 0.0
      %3587 = vmatpush2.msra.mxu0 0.0
      %3588 = vmatprep.subr.mxu0 0.0
      %3589 = vmatpush2.msra.mxu0 0.0
      %3590 = vmatprep.mubr.f32.mxu0 0.0
      %3591 = vmatmul.mubr.f32.gmra.mxu0 %v3428
      %v3592 = vpop.f32.mrf.mxu0
      %v3593 = vadd.f32 0.0, %v3592
      %v3594 = vpop.f32.mrf.mxu0
      %3595 = vmatprep.mubr.f32.mxu0 0.0
      %3596 = vmatmul.mubr.f32.gmra.mxu0 %v3431
      %v3597 = vpop.f32.mrf.mxu0
      %v3598 = vadd.f32 0.0, %v3597
      %v3599 = vpop.f32.mrf.mxu0
      %3600 = vmatprep.mubr.f32.mxu0 0.0
      %3601 = vmatmul.mubr.f32.gmra.mxu0 %v3434
      %v3602 = vpop.f32.mrf.mxu0
      %v3603 = vadd.f32 0.0, %v3602
      %v3604 = vpop.f32.mrf.mxu0
      %3605 = vmatprep.mubr.f32.mxu0 0.0
      %3606 = vmatmul.mubr.f32.gmra.mxu0 %v3437
      %v3607 = vpop.f32.mrf.mxu0
      %v3608 = vadd.f32 0.0, %v3607
      %v3609 = vpop.f32.mrf.mxu0
      %3610 = vmatprep.mubr.f32.mxu0 0.0
      %3611 = vmatmul.mubr.f32.gmra.mxu0 %v3440
      %v3612 = vpop.f32.mrf.mxu0
      %v3613 = vadd.f32 0.0, %v3612
      %v3614 = vpop.f32.mrf.mxu0
      %3615 = vmatprep.mubr.f32.mxu0 0.0
      %3616 = vmatmul.mubr.f32.gmra.mxu0 %v3443
      %v3617 = vpop.f32.mrf.mxu0
      %v3618 = vadd.f32 0.0, %v3617
      %v3619 = vpop.f32.mrf.mxu0
      %3620 = vmatprep.mubr.f32.mxu0 0.0
      %3621 = vmatmul.mubr.f32.gmra.mxu0 %v3446
      %v3622 = vpop.f32.mrf.mxu0
      %v3623 = vadd.f32 0.0, %v3622
      %v3624 = vpop.f32.mrf.mxu0
      %3625 = vmatprep.mubr.f32.mxu0 0.0
      %3626 = vmatmul.mubr.f32.gmra.mxu0 %v3449
      %v3627 = vpop.f32.mrf.mxu0
      %v3628 = vadd.f32 0.0, %v3627
      %v3629 = vpop.f32.mrf.mxu0
      %3630 = vmatprep.mubr.f32.mxu0 0.0
      %3631 = vmatmul.mubr.f32.gmra.mxu0 %v3452
      %v3632 = vpop.f32.mrf.mxu0
      %v3633 = vadd.f32 0.0, %v3632
      %v3634 = vpop.f32.mrf.mxu0
      %3635 = vmatprep.mubr.f32.mxu0 0.0
      %3636 = vmatmul.mubr.f32.gmra.mxu0 %v3455
      %v3637 = vpop.f32.mrf.mxu0
      %v3638 = vadd.f32 0.0, %v3637
      %v3639 = vpop.f32.mrf.mxu0
      %3640 = vmatprep.mubr.f32.mxu0 0.0
      %3641 = vmatmul.mubr.f32.gmra.mxu0 %v3458
      %v3642 = vpop.f32.mrf.mxu0
      %v3643 = vadd.f32 0.0, %v3642
      %v3644 = vpop.f32.mrf.mxu0
      %3645 = vmatprep.mubr.f32.mxu0 0.0
      %3646 = vmatmul.mubr.f32.gmra.mxu0 %v3461
      %v3647 = vpop.f32.mrf.mxu0
      %v3648 = vadd.f32 0.0, %v3647
      %v3649 = vpop.f32.mrf.mxu0
      %3650 = vmatprep.mubr.f32.mxu0 0.0
      %3651 = vmatmul.mubr.f32.gmra.mxu0 %v3464
      %v3652 = vpop.f32.mrf.mxu0
      %v3653 = vadd.f32 0.0, %v3652
      %v3654 = vpop.f32.mrf.mxu0
      %3655 = vmatprep.mubr.f32.mxu0 0.0
      %3656 = vmatmul.mubr.f32.gmra.mxu0 %v3467
      %v3657 = vpop.f32.mrf.mxu0
      %v3658 = vadd.f32 0.0, %v3657
      %v3659 = vpop.f32.mrf.mxu0
      %3660 = vmatprep.mubr.f32.mxu0 0.0
      %3661 = vmatmul.mubr.f32.gmra.mxu0 %v3470
      %v3662 = vpop.f32.mrf.mxu0
      %v3663 = vadd.f32 0.0, %v3662
      %v3664 = vpop.f32.mrf.mxu0
      %3665 = vmatprep.mubr.f32.mxu0 0.0
      %3666 = vmatmul.mubr.f32.gmra.mxu0 %v3473
      %v3667 = vpop.f32.mrf.mxu0
      %v3668 = vadd.f32 0.0, %v3667
      %v3669 = vpop.f32.mrf.mxu0
      %3670 = vmatprep.mubr.f32.mxu0 0.0
      %3671 = vmatmul.mubr.f32.gmra.mxu0 %v3476
      %v3672 = vpop.f32.mrf.mxu0
      %v3673 = vadd.f32 0.0, %v3672
      %v3674 = vpop.f32.mrf.mxu0
      %3675 = vmatprep.mubr.f32.mxu0 0.0
      %3676 = vmatmul.mubr.f32.gmra.mxu0 %v3479
      %v3677 = vpop.f32.mrf.mxu0
      %v3678 = vadd.f32 0.0, %v3677
      %v3679 = vpop.f32.mrf.mxu0
      %3680 = vmatprep.mubr.f32.mxu0 0.0
      %3681 = vmatmul.mubr.f32.gmra.mxu0 %v3482
      %v3682 = vpop.f32.mrf.mxu0
      %v3683 = vadd.f32 0.0, %v3682
      %v3684 = vpop.f32.mrf.mxu0
      %3685 = vmatprep.mubr.f32.mxu0 0.0
      %3686 = vmatmul.mubr.f32.gmra.mxu0 %v3485
      %v3687 = vpop.f32.mrf.mxu0
      %v3688 = vadd.f32 0.0, %v3687
      %v3689 = vpop.f32.mrf.mxu0
      %3690 = vmatprep.mubr.f32.mxu0 0.0
      %3691 = vmatmul.mubr.f32.gmra.mxu0 %v3488
      %v3692 = vpop.f32.mrf.mxu0
      %v3693 = vadd.f32 0.0, %v3692
      %v3694 = vpop.f32.mrf.mxu0
      %3695 = vmatprep.mubr.f32.mxu0 0.0
      %3696 = vmatmul.mubr.f32.gmra.mxu0 %v3491
      %v3697 = vpop.f32.mrf.mxu0
      %v3698 = vadd.f32 0.0, %v3697
      %v3699 = vpop.f32.mrf.mxu0
      %3700 = vmatprep.mubr.f32.mxu0 0.0
      %3701 = vmatmul.mubr.f32.gmra.mxu0 %v3494
      %v3702 = vpop.f32.mrf.mxu0
      %v3703 = vadd.f32 0.0, %v3702
      %v3704 = vpop.f32.mrf.mxu0
      %3705 = vmatprep.mubr.f32.mxu0 0.0
      %3706 = vmatmul.mubr.f32.gmra.mxu0 %v3497
      %v3707 = vpop.f32.mrf.mxu0
      %v3708 = vadd.f32 0.0, %v3707
      %v3709 = vpop.f32.mrf.mxu0
      %3710 = vmatprep.mubr.f32.mxu0 0.0
      %3711 = vmatmul.mubr.f32.gmra.mxu0 %v3500
      %v3712 = vpop.f32.mrf.mxu0
      %v3713 = vadd.f32 0.0, %v3712
      %v3714 = vpop.f32.mrf.mxu0
      %3715 = vmatprep.mubr.f32.mxu0 0.0
      %3716 = vmatmul.mubr.f32.gmra.mxu0 %v3503
      %v3717 = vpop.f32.mrf.mxu0
      %v3718 = vadd.f32 0.0, %v3717
      %v3719 = vpop.f32.mrf.mxu0
      %3720 = vmatprep.mubr.f32.mxu0 0.0
      %3721 = vmatmul.mubr.f32.gmra.mxu0 %v3506
      %v3722 = vpop.f32.mrf.mxu0
      %v3723 = vadd.f32 0.0, %v3722
      %v3724 = vpop.f32.mrf.mxu0
      %3725 = vmatprep.mubr.f32.mxu0 0.0
      %3726 = vmatmul.mubr.f32.gmra.mxu0 %v3509
      %v3727 = vpop.f32.mrf.mxu0
      %v3728 = vadd.f32 0.0, %v3727
      %v3729 = vpop.f32.mrf.mxu0
      %3730 = vmatprep.mubr.f32.mxu0 0.0
      %3731 = vmatmul.mubr.f32.gmra.mxu0 %v3512
      %v3732 = vpop.f32.mrf.mxu0
      %v3733 = vadd.f32 0.0, %v3732
      %v3734 = vpop.f32.mrf.mxu0
      %3735 = vmatprep.mubr.f32.mxu0 0.0
      %3736 = vmatmul.mubr.f32.gmra.mxu0 %v3515
      %v3737 = vpop.f32.mrf.mxu0
      %v3738 = vadd.f32 0.0, %v3737
      %v3739 = vpop.f32.mrf.mxu0
      %3740 = vmatprep.mubr.f32.mxu0 0.0
      %3741 = vmatmul.mubr.f32.gmra.mxu0 %v3518
      %v3742 = vpop.f32.mrf.mxu0
      %v3743 = vadd.f32 0.0, %v3742
      %v3744 = vpop.f32.mrf.mxu0
      %3745 = vmatprep.mubr.f32.mxu0 0.0
      %3746 = vmatmul.mubr.f32.gmra.mxu0 %v3521
      %v3747 = vpop.f32.mrf.mxu0
      %v3748 = vadd.f32 0.0, %v3747
      %v3749 = vpop.f32.mrf.mxu0
      %3750 = vdwg.mxu0
      %v3751 = vadd.f32 %v3361, %v3593
      %v3752 = vadd.f32 %v3362, %v3598
      %v3753 = vadd.f32 %v3363, %v3603
      %v3754 = vadd.f32 %v3364, %v3608
      %v3755 = vadd.f32 %v3365, %v3613
      %v3756 = vadd.f32 %v3366, %v3618
      %v3757 = vadd.f32 %v3367, %v3623
      %v3758 = vadd.f32 %v3368, %v3628
      %v3759 = vadd.f32 %v3369, %v3633
      %v3760 = vadd.f32 %v3370, %v3638
      %v3761 = vadd.f32 %v3371, %v3643
      %v3762 = vadd.f32 %v3372, %v3648
      %v3763 = vadd.f32 %v3373, %v3653
      %v3764 = vadd.f32 %v3374, %v3658
      %v3765 = vadd.f32 %v3375, %v3663
      %v3766 = vadd.f32 %v3376, %v3668
      %v3767 = vadd.f32 %v3377, %v3673
      %v3768 = vadd.f32 %v3378, %v3678
      %v3769 = vadd.f32 %v3379, %v3683
      %v3770 = vadd.f32 %v3380, %v3688
      %v3771 = vadd.f32 %v3381, %v3693
      %v3772 = vadd.f32 %v3382, %v3698
      %v3773 = vadd.f32 %v3383, %v3703
      %v3774 = vadd.f32 %v3384, %v3708
      %v3775 = vadd.f32 %v3385, %v3713
      %v3776 = vadd.f32 %v3386, %v3718
      %v3777 = vadd.f32 %v3387, %v3723
      %v3778 = vadd.f32 %v3388, %v3728
      %v3779 = vadd.f32 %v3389, %v3733
      %v3780 = vadd.f32 %v3390, %v3738
      %v3781 = vadd.f32 %v3391, %v3743
      %v3782 = vadd.f32 %v3392, %v3748
      %s3783 = scalar_lea.vmem [#allocation2], 48
      %v3784 = vld [vmem:[%s3783] sm:$0xff]
      %v3785 = vld [vmem:[%s3783 + $0x8] sm:$0xff]
      %v3786 = vld [vmem:[%s3783 + $0x18] sm:$0xff]
      %v3787 = vld [vmem:[%s3783 + $0x20] sm:$0xff]
      %v3788 = vld [vmem:[%s3783 + $0x30] sm:$0xff]
      %v3789 = vld [vmem:[%s3783 + $0x38] sm:$0xff]
      %v3790 = vld [vmem:[%s3783 + $0x48] sm:$0xff]
      %v3791 = vld [vmem:[%s3783 + $0x50] sm:$0xff]
      %v3792 = vld [vmem:[%s3783 + $0x60] sm:$0xff]
      %v3793 = vld [vmem:[%s3783 + $0x68] sm:$0xff]
      %v3794 = vld [vmem:[%s3783 + $0x78] sm:$0xff]
      %v3795 = vld [vmem:[%s3783 + $0x80] sm:$0xff]
      %v3796 = vld [vmem:[%s3783 + $0x90] sm:$0xff]
      %v3797 = vld [vmem:[%s3783 + $0x98] sm:$0xff]
      %v3798 = vld [vmem:[%s3783 + $0xa8] sm:$0xff]
      %v3799 = vld [vmem:[%s3783 + $0xb0] sm:$0xff]
      %v3800 = vld [vmem:[%s3783 + $0xc0] sm:$0xff]
      %v3801 = vld [vmem:[%s3783 + $0xc8] sm:$0xff]
      %v3802 = vld [vmem:[%s3783 + $0xd8] sm:$0xff]
      %v3803 = vld [vmem:[%s3783 + $0xe0] sm:$0xff]
      %v3804 = vld [vmem:[%s3783 + $0xf0] sm:$0xff]
      %v3805 = vld [vmem:[%s3783 + $0xf8] sm:$0xff]
      %v3806 = vld [vmem:[%s3783 + $0x108] sm:$0xff]
      %v3807 = vld [vmem:[%s3783 + $0x110] sm:$0xff]
      %v3808 = vld [vmem:[%s3783 + $0x120] sm:$0xff]
      %v3809 = vld [vmem:[%s3783 + $0x128] sm:$0xff]
      %v3810 = vld [vmem:[%s3783 + $0x138] sm:$0xff]
      %v3811 = vld [vmem:[%s3783 + $0x140] sm:$0xff]
      %v3812 = vld [vmem:[%s3783 + $0x150] sm:$0xff]
      %v3813 = vld [vmem:[%s3783 + $0x158] sm:$0xff]
      %v3814 = vld [vmem:[%s3783 + $0x168] sm:$0xff]
      %v3815 = vld [vmem:[%s3783 + $0x170] sm:$0xff]
      %s3816 = scalar_lea.vmem %s6, 24
      %v3817 = vld [vmem:[%s3816] sm:$0xf]
      %v3819 = vsel %vm572, %v3784, 0
      %v3822 = vsel %vm572, %v3785, 0
      %v3825 = vsel %vm572, %v3786, 0
      %v3828 = vsel %vm572, %v3787, 0
      %v3831 = vsel %vm572, %v3788, 0
      %v3834 = vsel %vm572, %v3789, 0
      %v3837 = vsel %vm572, %v3790, 0
      %v3840 = vsel %vm572, %v3791, 0
      %v3843 = vsel %vm572, %v3792, 0
      %v3846 = vsel %vm572, %v3793, 0
      %v3849 = vsel %vm572, %v3794, 0
      %v3852 = vsel %vm572, %v3795, 0
      %v3855 = vsel %vm572, %v3796, 0
      %v3858 = vsel %vm572, %v3797, 0
      %v3861 = vsel %vm572, %v3798, 0
      %v3864 = vsel %vm572, %v3799, 0
      %v3867 = vsel %vm572, %v3800, 0
      %v3870 = vsel %vm572, %v3801, 0
      %v3873 = vsel %vm572, %v3802, 0
      %v3876 = vsel %vm572, %v3803, 0
      %v3879 = vsel %vm572, %v3804, 0
      %v3882 = vsel %vm572, %v3805, 0
      %v3885 = vsel %vm572, %v3806, 0
      %v3888 = vsel %vm572, %v3807, 0
      %v3891 = vsel %vm572, %v3808, 0
      %v3894 = vsel %vm572, %v3809, 0
      %v3897 = vsel %vm572, %v3810, 0
      %v3900 = vsel %vm572, %v3811, 0
      %v3903 = vsel %vm572, %v3812, 0
      %v3906 = vsel %vm572, %v3813, 0
      %v3909 = vsel %vm572, %v3814, 0
      %v3912 = vsel %vm572, %v3815, 0
      %v3915 = vsel %vm647, %v3817, 0
      %3917 = vmatprep.subr.mxu0 0.0
      %3918 = vmatpush1.msra.mxu0 0.0
      %3919 = vmatprep.subr.mxu0 0.0
      %3920 = vmatpush1.msra.mxu0 0.0
      %3921 = vmatprep.subr.mxu0 0.0
      %3922 = vmatpush1.msra.mxu0 0.0
      %3923 = vmatprep.subr.mxu0 0.0
      %3924 = vmatpush1.msra.mxu0 0.0
      %3925 = vmatprep.subr.mxu0 0.0
      %3926 = vmatpush1.msra.mxu0 0.0
      %3927 = vmatprep.subr.mxu0 0.0
      %3928 = vmatpush1.msra.mxu0 0.0
      %3929 = vmatprep.subr.mxu0 0.0
      %3930 = vmatpush1.msra.mxu0 0.0
      %3931 = vmatprep.subr.mxu0 0.0
      %3932 = vmatpush1.msra.mxu0 0.0
      %3933 = vmatprep.subr.mxu0 0.0
      %3934 = vmatpush1.msra.mxu0 0.0
      %3935 = vmatprep.subr.mxu0 0.0
      %3936 = vmatpush1.msra.mxu0 0.0
      %3937 = vmatprep.subr.mxu0 0.0
      %3938 = vmatpush1.msra.mxu0 0.0
      %3939 = vmatprep.subr.mxu0 0.0
      %3940 = vmatpush1.msra.mxu0 0.0
      %3941 = vmatprep.subr.mxu0 0.0
      %3942 = vmatpush1.msra.mxu0 0.0
      %3943 = vmatprep.subr.mxu0 0.0
      %3944 = vmatpush1.msra.mxu0 0.0
      %3945 = vmatprep.subr.mxu0 0.0
      %3946 = vmatpush1.msra.mxu0 0.0
      %3947 = vmatprep.subr.mxu0 0.0
      %3948 = vmatpush1.msra.mxu0 %v3915
      %3949 = vmatprep.subr.mxu0 0.0
      %3950 = vmatpush2.msra.mxu0 0.0
      %3951 = vmatprep.subr.mxu0 0.0
      %3952 = vmatpush2.msra.mxu0 0.0
      %3953 = vmatprep.subr.mxu0 0.0
      %3954 = vmatpush2.msra.mxu0 0.0
      %3955 = vmatprep.subr.mxu0 0.0
      %3956 = vmatpush2.msra.mxu0 0.0
      %3957 = vmatprep.subr.mxu0 0.0
      %3958 = vmatpush2.msra.mxu0 0.0
      %3959 = vmatprep.subr.mxu0 0.0
      %3960 = vmatpush2.msra.mxu0 0.0
      %3961 = vmatprep.subr.mxu0 0.0
      %3962 = vmatpush2.msra.mxu0 0.0
      %3963 = vmatprep.subr.mxu0 0.0
      %3964 = vmatpush2.msra.mxu0 0.0
      %3965 = vmatprep.subr.mxu0 0.0
      %3966 = vmatpush2.msra.mxu0 0.0
      %3967 = vmatprep.subr.mxu0 0.0
      %3968 = vmatpush2.msra.mxu0 0.0
      %3969 = vmatprep.subr.mxu0 0.0
      %3970 = vmatpush2.msra.mxu0 0.0
      %3971 = vmatprep.subr.mxu0 0.0
      %3972 = vmatpush2.msra.mxu0 0.0
      %3973 = vmatprep.subr.mxu0 0.0
      %3974 = vmatpush2.msra.mxu0 0.0
      %3975 = vmatprep.subr.mxu0 0.0
      %3976 = vmatpush2.msra.mxu0 0.0
      %3977 = vmatprep.subr.mxu0 0.0
      %3978 = vmatpush2.msra.mxu0 0.0
      %3979 = vmatprep.subr.mxu0 0.0
      %3980 = vmatpush2.msra.mxu0 0.0
      %3981 = vmatprep.mubr.f32.mxu0 0.0
      %3982 = vmatmul.mubr.f32.gmra.mxu0 %v3819
      %v3983 = vpop.f32.mrf.mxu0
      %v3984 = vadd.f32 0.0, %v3983
      %v3985 = vpop.f32.mrf.mxu0
      %3986 = vmatprep.mubr.f32.mxu0 0.0
      %3987 = vmatmul.mubr.f32.gmra.mxu0 %v3822
      %v3988 = vpop.f32.mrf.mxu0
      %v3989 = vadd.f32 0.0, %v3988
      %v3990 = vpop.f32.mrf.mxu0
      %3991 = vmatprep.mubr.f32.mxu0 0.0
      %3992 = vmatmul.mubr.f32.gmra.mxu0 %v3825
      %v3993 = vpop.f32.mrf.mxu0
      %v3994 = vadd.f32 0.0, %v3993
      %v3995 = vpop.f32.mrf.mxu0
      %3996 = vmatprep.mubr.f32.mxu0 0.0
      %3997 = vmatmul.mubr.f32.gmra.mxu0 %v3828
      %v3998 = vpop.f32.mrf.mxu0
      %v3999 = vadd.f32 0.0, %v3998
      %v4000 = vpop.f32.mrf.mxu0
      %4001 = vmatprep.mubr.f32.mxu0 0.0
      %4002 = vmatmul.mubr.f32.gmra.mxu0 %v3831
      %v4003 = vpop.f32.mrf.mxu0
      %v4004 = vadd.f32 0.0, %v4003
      %v4005 = vpop.f32.mrf.mxu0
      %4006 = vmatprep.mubr.f32.mxu0 0.0
      %4007 = vmatmul.mubr.f32.gmra.mxu0 %v3834
      %v4008 = vpop.f32.mrf.mxu0
      %v4009 = vadd.f32 0.0, %v4008
      %v4010 = vpop.f32.mrf.mxu0
      %4011 = vmatprep.mubr.f32.mxu0 0.0
      %4012 = vmatmul.mubr.f32.gmra.mxu0 %v3837
      %v4013 = vpop.f32.mrf.mxu0
      %v4014 = vadd.f32 0.0, %v4013
      %v4015 = vpop.f32.mrf.mxu0
      %4016 = vmatprep.mubr.f32.mxu0 0.0
      %4017 = vmatmul.mubr.f32.gmra.mxu0 %v3840
      %v4018 = vpop.f32.mrf.mxu0
      %v4019 = vadd.f32 0.0, %v4018
      %v4020 = vpop.f32.mrf.mxu0
      %4021 = vmatprep.mubr.f32.mxu0 0.0
      %4022 = vmatmul.mubr.f32.gmra.mxu0 %v3843
      %v4023 = vpop.f32.mrf.mxu0
      %v4024 = vadd.f32 0.0, %v4023
      %v4025 = vpop.f32.mrf.mxu0
      %4026 = vmatprep.mubr.f32.mxu0 0.0
      %4027 = vmatmul.mubr.f32.gmra.mxu0 %v3846
      %v4028 = vpop.f32.mrf.mxu0
      %v4029 = vadd.f32 0.0, %v4028
      %v4030 = vpop.f32.mrf.mxu0
      %4031 = vmatprep.mubr.f32.mxu0 0.0
      %4032 = vmatmul.mubr.f32.gmra.mxu0 %v3849
      %v4033 = vpop.f32.mrf.mxu0
      %v4034 = vadd.f32 0.0, %v4033
      %v4035 = vpop.f32.mrf.mxu0
      %4036 = vmatprep.mubr.f32.mxu0 0.0
      %4037 = vmatmul.mubr.f32.gmra.mxu0 %v3852
      %v4038 = vpop.f32.mrf.mxu0
      %v4039 = vadd.f32 0.0, %v4038
      %v4040 = vpop.f32.mrf.mxu0
      %4041 = vmatprep.mubr.f32.mxu0 0.0
      %4042 = vmatmul.mubr.f32.gmra.mxu0 %v3855
      %v4043 = vpop.f32.mrf.mxu0
      %v4044 = vadd.f32 0.0, %v4043
      %v4045 = vpop.f32.mrf.mxu0
      %4046 = vmatprep.mubr.f32.mxu0 0.0
      %4047 = vmatmul.mubr.f32.gmra.mxu0 %v3858
      %v4048 = vpop.f32.mrf.mxu0
      %v4049 = vadd.f32 0.0, %v4048
      %v4050 = vpop.f32.mrf.mxu0
      %4051 = vmatprep.mubr.f32.mxu0 0.0
      %4052 = vmatmul.mubr.f32.gmra.mxu0 %v3861
      %v4053 = vpop.f32.mrf.mxu0
      %v4054 = vadd.f32 0.0, %v4053
      %v4055 = vpop.f32.mrf.mxu0
      %4056 = vmatprep.mubr.f32.mxu0 0.0
      %4057 = vmatmul.mubr.f32.gmra.mxu0 %v3864
      %v4058 = vpop.f32.mrf.mxu0
      %v4059 = vadd.f32 0.0, %v4058
      %v4060 = vpop.f32.mrf.mxu0
      %4061 = vmatprep.mubr.f32.mxu0 0.0
      %4062 = vmatmul.mubr.f32.gmra.mxu0 %v3867
      %v4063 = vpop.f32.mrf.mxu0
      %v4064 = vadd.f32 0.0, %v4063
      %v4065 = vpop.f32.mrf.mxu0
      %4066 = vmatprep.mubr.f32.mxu0 0.0
      %4067 = vmatmul.mubr.f32.gmra.mxu0 %v3870
      %v4068 = vpop.f32.mrf.mxu0
      %v4069 = vadd.f32 0.0, %v4068
      %v4070 = vpop.f32.mrf.mxu0
      %4071 = vmatprep.mubr.f32.mxu0 0.0
      %4072 = vmatmul.mubr.f32.gmra.mxu0 %v3873
      %v4073 = vpop.f32.mrf.mxu0
      %v4074 = vadd.f32 0.0, %v4073
      %v4075 = vpop.f32.mrf.mxu0
      %4076 = vmatprep.mubr.f32.mxu0 0.0
      %4077 = vmatmul.mubr.f32.gmra.mxu0 %v3876
      %v4078 = vpop.f32.mrf.mxu0
      %v4079 = vadd.f32 0.0, %v4078
      %v4080 = vpop.f32.mrf.mxu0
      %4081 = vmatprep.mubr.f32.mxu0 0.0
      %4082 = vmatmul.mubr.f32.gmra.mxu0 %v3879
      %v4083 = vpop.f32.mrf.mxu0
      %v4084 = vadd.f32 0.0, %v4083
      %v4085 = vpop.f32.mrf.mxu0
      %4086 = vmatprep.mubr.f32.mxu0 0.0
      %4087 = vmatmul.mubr.f32.gmra.mxu0 %v3882
      %v4088 = vpop.f32.mrf.mxu0
      %v4089 = vadd.f32 0.0, %v4088
      %v4090 = vpop.f32.mrf.mxu0
      %4091 = vmatprep.mubr.f32.mxu0 0.0
      %4092 = vmatmul.mubr.f32.gmra.mxu0 %v3885
      %v4093 = vpop.f32.mrf.mxu0
      %v4094 = vadd.f32 0.0, %v4093
      %v4095 = vpop.f32.mrf.mxu0
      %4096 = vmatprep.mubr.f32.mxu0 0.0
      %4097 = vmatmul.mubr.f32.gmra.mxu0 %v3888
      %v4098 = vpop.f32.mrf.mxu0
      %v4099 = vadd.f32 0.0, %v4098
      %v4100 = vpop.f32.mrf.mxu0
      %4101 = vmatprep.mubr.f32.mxu0 0.0
      %4102 = vmatmul.mubr.f32.gmra.mxu0 %v3891
      %v4103 = vpop.f32.mrf.mxu0
      %v4104 = vadd.f32 0.0, %v4103
      %v4105 = vpop.f32.mrf.mxu0
      %4106 = vmatprep.mubr.f32.mxu0 0.0
      %4107 = vmatmul.mubr.f32.gmra.mxu0 %v3894
      %v4108 = vpop.f32.mrf.mxu0
      %v4109 = vadd.f32 0.0, %v4108
      %v4110 = vpop.f32.mrf.mxu0
      %4111 = vmatprep.mubr.f32.mxu0 0.0
      %4112 = vmatmul.mubr.f32.gmra.mxu0 %v3897
      %v4113 = vpop.f32.mrf.mxu0
      %v4114 = vadd.f32 0.0, %v4113
      %v4115 = vpop.f32.mrf.mxu0
      %4116 = vmatprep.mubr.f32.mxu0 0.0
      %4117 = vmatmul.mubr.f32.gmra.mxu0 %v3900
      %v4118 = vpop.f32.mrf.mxu0
      %v4119 = vadd.f32 0.0, %v4118
      %v4120 = vpop.f32.mrf.mxu0
      %4121 = vmatprep.mubr.f32.mxu0 0.0
      %4122 = vmatmul.mubr.f32.gmra.mxu0 %v3903
      %v4123 = vpop.f32.mrf.mxu0
      %v4124 = vadd.f32 0.0, %v4123
      %v4125 = vpop.f32.mrf.mxu0
      %4126 = vmatprep.mubr.f32.mxu0 0.0
      %4127 = vmatmul.mubr.f32.gmra.mxu0 %v3906
      %v4128 = vpop.f32.mrf.mxu0
      %v4129 = vadd.f32 0.0, %v4128
      %v4130 = vpop.f32.mrf.mxu0
      %4131 = vmatprep.mubr.f32.mxu0 0.0
      %4132 = vmatmul.mubr.f32.gmra.mxu0 %v3909
      %v4133 = vpop.f32.mrf.mxu0
      %v4134 = vadd.f32 0.0, %v4133
      %v4135 = vpop.f32.mrf.mxu0
      %4136 = vmatprep.mubr.f32.mxu0 0.0
      %4137 = vmatmul.mubr.f32.gmra.mxu0 %v3912
      %v4138 = vpop.f32.mrf.mxu0
      %v4139 = vadd.f32 0.0, %v4138
      %v4140 = vpop.f32.mrf.mxu0
      %4141 = vdwg.mxu0
      %v4142 = vadd.f32 %v3751, %v3984
      %v4143 = vadd.f32 %v3752, %v3989
      %v4144 = vadd.f32 %v3753, %v3994
      %v4145 = vadd.f32 %v3754, %v3999
      %v4146 = vadd.f32 %v3755, %v4004
      %v4147 = vadd.f32 %v3756, %v4009
      %v4148 = vadd.f32 %v3757, %v4014
      %v4149 = vadd.f32 %v3758, %v4019
      %v4150 = vadd.f32 %v3759, %v4024
      %v4151 = vadd.f32 %v3760, %v4029
      %v4152 = vadd.f32 %v3761, %v4034
      %v4153 = vadd.f32 %v3762, %v4039
      %v4154 = vadd.f32 %v3763, %v4044
      %v4155 = vadd.f32 %v3764, %v4049
      %v4156 = vadd.f32 %v3765, %v4054
      %v4157 = vadd.f32 %v3766, %v4059
      %v4158 = vadd.f32 %v3767, %v4064
      %v4159 = vadd.f32 %v3768, %v4069
      %v4160 = vadd.f32 %v3769, %v4074
      %v4161 = vadd.f32 %v3770, %v4079
      %v4162 = vadd.f32 %v3771, %v4084
      %v4163 = vadd.f32 %v3772, %v4089
      %v4164 = vadd.f32 %v3773, %v4094
      %v4165 = vadd.f32 %v3774, %v4099
      %v4166 = vadd.f32 %v3775, %v4104
      %v4167 = vadd.f32 %v3776, %v4109
      %v4168 = vadd.f32 %v3777, %v4114
      %v4169 = vadd.f32 %v3778, %v4119
      %v4170 = vadd.f32 %v3779, %v4124
      %v4171 = vadd.f32 %v3780, %v4129
      %v4172 = vadd.f32 %v3781, %v4134
      %v4173 = vadd.f32 %v3782, %v4139
      %v4174 = vld [vmem:[%s3783 + $0x1] sm:$0xff]
      %v4175 = vld [vmem:[%s3783 + $0x9] sm:$0xff]
      %v4176 = vld [vmem:[%s3783 + $0x19] sm:$0xff]
      %v4177 = vld [vmem:[%s3783 + $0x21] sm:$0xff]
      %v4178 = vld [vmem:[%s3783 + $0x31] sm:$0xff]
      %v4179 = vld [vmem:[%s3783 + $0x39] sm:$0xff]
      %v4180 = vld [vmem:[%s3783 + $0x49] sm:$0xff]
      %v4181 = vld [vmem:[%s3783 + $0x51] sm:$0xff]
      %v4182 = vld [vmem:[%s3783 + $0x61] sm:$0xff]
      %v4183 = vld [vmem:[%s3783 + $0x69] sm:$0xff]
      %v4184 = vld [vmem:[%s3783 + $0x79] sm:$0xff]
      %v4185 = vld [vmem:[%s3783 + $0x81] sm:$0xff]
      %v4186 = vld [vmem:[%s3783 + $0x91] sm:$0xff]
      %v4187 = vld [vmem:[%s3783 + $0x99] sm:$0xff]
      %v4188 = vld [vmem:[%s3783 + $0xa9] sm:$0xff]
      %v4189 = vld [vmem:[%s3783 + $0xb1] sm:$0xff]
      %v4190 = vld [vmem:[%s3783 + $0xc1] sm:$0xff]
      %v4191 = vld [vmem:[%s3783 + $0xc9] sm:$0xff]
      %v4192 = vld [vmem:[%s3783 + $0xd9] sm:$0xff]
      %v4193 = vld [vmem:[%s3783 + $0xe1] sm:$0xff]
      %v4194 = vld [vmem:[%s3783 + $0xf1] sm:$0xff]
      %v4195 = vld [vmem:[%s3783 + $0xf9] sm:$0xff]
      %v4196 = vld [vmem:[%s3783 + $0x109] sm:$0xff]
      %v4197 = vld [vmem:[%s3783 + $0x111] sm:$0xff]
      %v4198 = vld [vmem:[%s3783 + $0x121] sm:$0xff]
      %v4199 = vld [vmem:[%s3783 + $0x129] sm:$0xff]
      %v4200 = vld [vmem:[%s3783 + $0x139] sm:$0xff]
      %v4201 = vld [vmem:[%s3783 + $0x141] sm:$0xff]
      %v4202 = vld [vmem:[%s3783 + $0x151] sm:$0xff]
      %v4203 = vld [vmem:[%s3783 + $0x159] sm:$0xff]
      %v4204 = vld [vmem:[%s3783 + $0x169] sm:$0xff]
      %v4205 = vld [vmem:[%s3783 + $0x171] sm:$0xff]
      %s4206 = scalar_lea.vmem %s6, 28
      %v4207 = vld [vmem:[%s4206] sm:$0xf]
      %v4209 = vsel %vm572, %v4174, 0
      %v4212 = vsel %vm572, %v4175, 0
      %v4215 = vsel %vm572, %v4176, 0
      %v4218 = vsel %vm572, %v4177, 0
      %v4221 = vsel %vm572, %v4178, 0
      %v4224 = vsel %vm572, %v4179, 0
      %v4227 = vsel %vm572, %v4180, 0
      %v4230 = vsel %vm572, %v4181, 0
      %v4233 = vsel %vm572, %v4182, 0
      %v4236 = vsel %vm572, %v4183, 0
      %v4239 = vsel %vm572, %v4184, 0
      %v4242 = vsel %vm572, %v4185, 0
      %v4245 = vsel %vm572, %v4186, 0
      %v4248 = vsel %vm572, %v4187, 0
      %v4251 = vsel %vm572, %v4188, 0
      %v4254 = vsel %vm572, %v4189, 0
      %v4257 = vsel %vm572, %v4190, 0
      %v4260 = vsel %vm572, %v4191, 0
      %v4263 = vsel %vm572, %v4192, 0
      %v4266 = vsel %vm572, %v4193, 0
      %v4269 = vsel %vm572, %v4194, 0
      %v4272 = vsel %vm572, %v4195, 0
      %v4275 = vsel %vm572, %v4196, 0
      %v4278 = vsel %vm572, %v4197, 0
      %v4281 = vsel %vm572, %v4198, 0
      %v4284 = vsel %vm572, %v4199, 0
      %v4287 = vsel %vm572, %v4200, 0
      %v4290 = vsel %vm572, %v4201, 0
      %v4293 = vsel %vm572, %v4202, 0
      %v4296 = vsel %vm572, %v4203, 0
      %v4299 = vsel %vm572, %v4204, 0
      %v4302 = vsel %vm572, %v4205, 0
      %v4305 = vsel %vm647, %v4207, 0
      %4307 = vmatprep.subr.mxu0 0.0
      %4308 = vmatpush1.msra.mxu0 0.0
      %4309 = vmatprep.subr.mxu0 0.0
      %4310 = vmatpush1.msra.mxu0 0.0
      %4311 = vmatprep.subr.mxu0 0.0
      %4312 = vmatpush1.msra.mxu0 0.0
      %4313 = vmatprep.subr.mxu0 0.0
      %4314 = vmatpush1.msra.mxu0 0.0
      %4315 = vmatprep.subr.mxu0 0.0
      %4316 = vmatpush1.msra.mxu0 0.0
      %4317 = vmatprep.subr.mxu0 0.0
      %4318 = vmatpush1.msra.mxu0 0.0
      %4319 = vmatprep.subr.mxu0 0.0
      %4320 = vmatpush1.msra.mxu0 0.0
      %4321 = vmatprep.subr.mxu0 0.0
      %4322 = vmatpush1.msra.mxu0 0.0
      %4323 = vmatprep.subr.mxu0 0.0
      %4324 = vmatpush1.msra.mxu0 0.0
      %4325 = vmatprep.subr.mxu0 0.0
      %4326 = vmatpush1.msra.mxu0 0.0
      %4327 = vmatprep.subr.mxu0 0.0
      %4328 = vmatpush1.msra.mxu0 0.0
      %4329 = vmatprep.subr.mxu0 0.0
      %4330 = vmatpush1.msra.mxu0 0.0
      %4331 = vmatprep.subr.mxu0 0.0
      %4332 = vmatpush1.msra.mxu0 0.0
      %4333 = vmatprep.subr.mxu0 0.0
      %4334 = vmatpush1.msra.mxu0 0.0
      %4335 = vmatprep.subr.mxu0 0.0
      %4336 = vmatpush1.msra.mxu0 0.0
      %4337 = vmatprep.subr.mxu0 0.0
      %4338 = vmatpush1.msra.mxu0 %v4305
      %4339 = vmatprep.subr.mxu0 0.0
      %4340 = vmatpush2.msra.mxu0 0.0
      %4341 = vmatprep.subr.mxu0 0.0
      %4342 = vmatpush2.msra.mxu0 0.0
      %4343 = vmatprep.subr.mxu0 0.0
      %4344 = vmatpush2.msra.mxu0 0.0
      %4345 = vmatprep.subr.mxu0 0.0
      %4346 = vmatpush2.msra.mxu0 0.0
      %4347 = vmatprep.subr.mxu0 0.0
      %4348 = vmatpush2.msra.mxu0 0.0
      %4349 = vmatprep.subr.mxu0 0.0
      %4350 = vmatpush2.msra.mxu0 0.0
      %4351 = vmatprep.subr.mxu0 0.0
      %4352 = vmatpush2.msra.mxu0 0.0
      %4353 = vmatprep.subr.mxu0 0.0
      %4354 = vmatpush2.msra.mxu0 0.0
      %4355 = vmatprep.subr.mxu0 0.0
      %4356 = vmatpush2.msra.mxu0 0.0
      %4357 = vmatprep.subr.mxu0 0.0
      %4358 = vmatpush2.msra.mxu0 0.0
      %4359 = vmatprep.subr.mxu0 0.0
      %4360 = vmatpush2.msra.mxu0 0.0
      %4361 = vmatprep.subr.mxu0 0.0
      %4362 = vmatpush2.msra.mxu0 0.0
      %4363 = vmatprep.subr.mxu0 0.0
      %4364 = vmatpush2.msra.mxu0 0.0
      %4365 = vmatprep.subr.mxu0 0.0
      %4366 = vmatpush2.msra.mxu0 0.0
      %4367 = vmatprep.subr.mxu0 0.0
      %4368 = vmatpush2.msra.mxu0 0.0
      %4369 = vmatprep.subr.mxu0 0.0
      %4370 = vmatpush2.msra.mxu0 0.0
      %4371 = vmatprep.mubr.f32.mxu0 0.0
      %4372 = vmatmul.mubr.f32.gmra.mxu0 %v4209
      %v4373 = vpop.f32.mrf.mxu0
      %v4374 = vadd.f32 0.0, %v4373
      %v4375 = vpop.f32.mrf.mxu0
      %4376 = vmatprep.mubr.f32.mxu0 0.0
      %4377 = vmatmul.mubr.f32.gmra.mxu0 %v4212
      %v4378 = vpop.f32.mrf.mxu0
      %v4379 = vadd.f32 0.0, %v4378
      %v4380 = vpop.f32.mrf.mxu0
      %4381 = vmatprep.mubr.f32.mxu0 0.0
      %4382 = vmatmul.mubr.f32.gmra.mxu0 %v4215
      %v4383 = vpop.f32.mrf.mxu0
      %v4384 = vadd.f32 0.0, %v4383
      %v4385 = vpop.f32.mrf.mxu0
      %4386 = vmatprep.mubr.f32.mxu0 0.0
      %4387 = vmatmul.mubr.f32.gmra.mxu0 %v4218
      %v4388 = vpop.f32.mrf.mxu0
      %v4389 = vadd.f32 0.0, %v4388
      %v4390 = vpop.f32.mrf.mxu0
      %4391 = vmatprep.mubr.f32.mxu0 0.0
      %4392 = vmatmul.mubr.f32.gmra.mxu0 %v4221
      %v4393 = vpop.f32.mrf.mxu0
      %v4394 = vadd.f32 0.0, %v4393
      %v4395 = vpop.f32.mrf.mxu0
      %4396 = vmatprep.mubr.f32.mxu0 0.0
      %4397 = vmatmul.mubr.f32.gmra.mxu0 %v4224
      %v4398 = vpop.f32.mrf.mxu0
      %v4399 = vadd.f32 0.0, %v4398
      %v4400 = vpop.f32.mrf.mxu0
      %4401 = vmatprep.mubr.f32.mxu0 0.0
      %4402 = vmatmul.mubr.f32.gmra.mxu0 %v4227
      %v4403 = vpop.f32.mrf.mxu0
      %v4404 = vadd.f32 0.0, %v4403
      %v4405 = vpop.f32.mrf.mxu0
      %4406 = vmatprep.mubr.f32.mxu0 0.0
      %4407 = vmatmul.mubr.f32.gmra.mxu0 %v4230
      %v4408 = vpop.f32.mrf.mxu0
      %v4409 = vadd.f32 0.0, %v4408
      %v4410 = vpop.f32.mrf.mxu0
      %4411 = vmatprep.mubr.f32.mxu0 0.0
      %4412 = vmatmul.mubr.f32.gmra.mxu0 %v4233
      %v4413 = vpop.f32.mrf.mxu0
      %v4414 = vadd.f32 0.0, %v4413
      %v4415 = vpop.f32.mrf.mxu0
      %4416 = vmatprep.mubr.f32.mxu0 0.0
      %4417 = vmatmul.mubr.f32.gmra.mxu0 %v4236
      %v4418 = vpop.f32.mrf.mxu0
      %v4419 = vadd.f32 0.0, %v4418
      %v4420 = vpop.f32.mrf.mxu0
      %4421 = vmatprep.mubr.f32.mxu0 0.0
      %4422 = vmatmul.mubr.f32.gmra.mxu0 %v4239
      %v4423 = vpop.f32.mrf.mxu0
      %v4424 = vadd.f32 0.0, %v4423
      %v4425 = vpop.f32.mrf.mxu0
      %4426 = vmatprep.mubr.f32.mxu0 0.0
      %4427 = vmatmul.mubr.f32.gmra.mxu0 %v4242
      %v4428 = vpop.f32.mrf.mxu0
      %v4429 = vadd.f32 0.0, %v4428
      %v4430 = vpop.f32.mrf.mxu0
      %4431 = vmatprep.mubr.f32.mxu0 0.0
      %4432 = vmatmul.mubr.f32.gmra.mxu0 %v4245
      %v4433 = vpop.f32.mrf.mxu0
      %v4434 = vadd.f32 0.0, %v4433
      %v4435 = vpop.f32.mrf.mxu0
      %4436 = vmatprep.mubr.f32.mxu0 0.0
      %4437 = vmatmul.mubr.f32.gmra.mxu0 %v4248
      %v4438 = vpop.f32.mrf.mxu0
      %v4439 = vadd.f32 0.0, %v4438
      %v4440 = vpop.f32.mrf.mxu0
      %4441 = vmatprep.mubr.f32.mxu0 0.0
      %4442 = vmatmul.mubr.f32.gmra.mxu0 %v4251
      %v4443 = vpop.f32.mrf.mxu0
      %v4444 = vadd.f32 0.0, %v4443
      %v4445 = vpop.f32.mrf.mxu0
      %4446 = vmatprep.mubr.f32.mxu0 0.0
      %4447 = vmatmul.mubr.f32.gmra.mxu0 %v4254
      %v4448 = vpop.f32.mrf.mxu0
      %v4449 = vadd.f32 0.0, %v4448
      %v4450 = vpop.f32.mrf.mxu0
      %4451 = vmatprep.mubr.f32.mxu0 0.0
      %4452 = vmatmul.mubr.f32.gmra.mxu0 %v4257
      %v4453 = vpop.f32.mrf.mxu0
      %v4454 = vadd.f32 0.0, %v4453
      %v4455 = vpop.f32.mrf.mxu0
      %4456 = vmatprep.mubr.f32.mxu0 0.0
      %4457 = vmatmul.mubr.f32.gmra.mxu0 %v4260
      %v4458 = vpop.f32.mrf.mxu0
      %v4459 = vadd.f32 0.0, %v4458
      %v4460 = vpop.f32.mrf.mxu0
      %4461 = vmatprep.mubr.f32.mxu0 0.0
      %4462 = vmatmul.mubr.f32.gmra.mxu0 %v4263
      %v4463 = vpop.f32.mrf.mxu0
      %v4464 = vadd.f32 0.0, %v4463
      %v4465 = vpop.f32.mrf.mxu0
      %4466 = vmatprep.mubr.f32.mxu0 0.0
      %4467 = vmatmul.mubr.f32.gmra.mxu0 %v4266
      %v4468 = vpop.f32.mrf.mxu0
      %v4469 = vadd.f32 0.0, %v4468
      %v4470 = vpop.f32.mrf.mxu0
      %4471 = vmatprep.mubr.f32.mxu0 0.0
      %4472 = vmatmul.mubr.f32.gmra.mxu0 %v4269
      %v4473 = vpop.f32.mrf.mxu0
      %v4474 = vadd.f32 0.0, %v4473
      %v4475 = vpop.f32.mrf.mxu0
      %4476 = vmatprep.mubr.f32.mxu0 0.0
      %4477 = vmatmul.mubr.f32.gmra.mxu0 %v4272
      %v4478 = vpop.f32.mrf.mxu0
      %v4479 = vadd.f32 0.0, %v4478
      %v4480 = vpop.f32.mrf.mxu0
      %4481 = vmatprep.mubr.f32.mxu0 0.0
      %4482 = vmatmul.mubr.f32.gmra.mxu0 %v4275
      %v4483 = vpop.f32.mrf.mxu0
      %v4484 = vadd.f32 0.0, %v4483
      %v4485 = vpop.f32.mrf.mxu0
      %4486 = vmatprep.mubr.f32.mxu0 0.0
      %4487 = vmatmul.mubr.f32.gmra.mxu0 %v4278
      %v4488 = vpop.f32.mrf.mxu0
      %v4489 = vadd.f32 0.0, %v4488
      %v4490 = vpop.f32.mrf.mxu0
      %4491 = vmatprep.mubr.f32.mxu0 0.0
      %4492 = vmatmul.mubr.f32.gmra.mxu0 %v4281
      %v4493 = vpop.f32.mrf.mxu0
      %v4494 = vadd.f32 0.0, %v4493
      %v4495 = vpop.f32.mrf.mxu0
      %4496 = vmatprep.mubr.f32.mxu0 0.0
      %4497 = vmatmul.mubr.f32.gmra.mxu0 %v4284
      %v4498 = vpop.f32.mrf.mxu0
      %v4499 = vadd.f32 0.0, %v4498
      %v4500 = vpop.f32.mrf.mxu0
      %4501 = vmatprep.mubr.f32.mxu0 0.0
      %4502 = vmatmul.mubr.f32.gmra.mxu0 %v4287
      %v4503 = vpop.f32.mrf.mxu0
      %v4504 = vadd.f32 0.0, %v4503
      %v4505 = vpop.f32.mrf.mxu0
      %4506 = vmatprep.mubr.f32.mxu0 0.0
      %4507 = vmatmul.mubr.f32.gmra.mxu0 %v4290
      %v4508 = vpop.f32.mrf.mxu0
      %v4509 = vadd.f32 0.0, %v4508
      %v4510 = vpop.f32.mrf.mxu0
      %4511 = vmatprep.mubr.f32.mxu0 0.0
      %4512 = vmatmul.mubr.f32.gmra.mxu0 %v4293
      %v4513 = vpop.f32.mrf.mxu0
      %v4514 = vadd.f32 0.0, %v4513
      %v4515 = vpop.f32.mrf.mxu0
      %4516 = vmatprep.mubr.f32.mxu0 0.0
      %4517 = vmatmul.mubr.f32.gmra.mxu0 %v4296
      %v4518 = vpop.f32.mrf.mxu0
      %v4519 = vadd.f32 0.0, %v4518
      %v4520 = vpop.f32.mrf.mxu0
      %4521 = vmatprep.mubr.f32.mxu0 0.0
      %4522 = vmatmul.mubr.f32.gmra.mxu0 %v4299
      %v4523 = vpop.f32.mrf.mxu0
      %v4524 = vadd.f32 0.0, %v4523
      %v4525 = vpop.f32.mrf.mxu0
      %4526 = vmatprep.mubr.f32.mxu0 0.0
      %4527 = vmatmul.mubr.f32.gmra.mxu0 %v4302
      %v4528 = vpop.f32.mrf.mxu0
      %v4529 = vadd.f32 0.0, %v4528
      %v4530 = vpop.f32.mrf.mxu0
      %4531 = vdwg.mxu0
      %v4532 = vadd.f32 %v4142, %v4374
      %v4533 = vadd.f32 %v4143, %v4379
      %v4534 = vadd.f32 %v4144, %v4384
      %v4535 = vadd.f32 %v4145, %v4389
      %v4536 = vadd.f32 %v4146, %v4394
      %v4537 = vadd.f32 %v4147, %v4399
      %v4538 = vadd.f32 %v4148, %v4404
      %v4539 = vadd.f32 %v4149, %v4409
      %v4540 = vadd.f32 %v4150, %v4414
      %v4541 = vadd.f32 %v4151, %v4419
      %v4542 = vadd.f32 %v4152, %v4424
      %v4543 = vadd.f32 %v4153, %v4429
      %v4544 = vadd.f32 %v4154, %v4434
      %v4545 = vadd.f32 %v4155, %v4439
      %v4546 = vadd.f32 %v4156, %v4444
      %v4547 = vadd.f32 %v4157, %v4449
      %v4548 = vadd.f32 %v4158, %v4454
      %v4549 = vadd.f32 %v4159, %v4459
      %v4550 = vadd.f32 %v4160, %v4464
      %v4551 = vadd.f32 %v4161, %v4469
      %v4552 = vadd.f32 %v4162, %v4474
      %v4553 = vadd.f32 %v4163, %v4479
      %v4554 = vadd.f32 %v4164, %v4484
      %v4555 = vadd.f32 %v4165, %v4489
      %v4556 = vadd.f32 %v4166, %v4494
      %v4557 = vadd.f32 %v4167, %v4499
      %v4558 = vadd.f32 %v4168, %v4504
      %v4559 = vadd.f32 %v4169, %v4509
      %v4560 = vadd.f32 %v4170, %v4514
      %v4561 = vadd.f32 %v4171, %v4519
      %v4562 = vadd.f32 %v4172, %v4524
      %v4563 = vadd.f32 %v4173, %v4529
      %v4564 = vld [vmem:[%s3783 + $0x2] sm:$0xff]
      %v4565 = vld [vmem:[%s3783 + $0xa] sm:$0xff]
      %v4566 = vld [vmem:[%s3783 + $0x1a] sm:$0xff]
      %v4567 = vld [vmem:[%s3783 + $0x22] sm:$0xff]
      %v4568 = vld [vmem:[%s3783 + $0x32] sm:$0xff]
      %v4569 = vld [vmem:[%s3783 + $0x3a] sm:$0xff]
      %v4570 = vld [vmem:[%s3783 + $0x4a] sm:$0xff]
      %v4571 = vld [vmem:[%s3783 + $0x52] sm:$0xff]
      %v4572 = vld [vmem:[%s3783 + $0x62] sm:$0xff]
      %v4573 = vld [vmem:[%s3783 + $0x6a] sm:$0xff]
      %v4574 = vld [vmem:[%s3783 + $0x7a] sm:$0xff]
      %v4575 = vld [vmem:[%s3783 + $0x82] sm:$0xff]
      %v4576 = vld [vmem:[%s3783 + $0x92] sm:$0xff]
      %v4577 = vld [vmem:[%s3783 + $0x9a] sm:$0xff]
      %v4578 = vld [vmem:[%s3783 + $0xaa] sm:$0xff]
      %v4579 = vld [vmem:[%s3783 + $0xb2] sm:$0xff]
      %v4580 = vld [vmem:[%s3783 + $0xc2] sm:$0xff]
      %v4581 = vld [vmem:[%s3783 + $0xca] sm:$0xff]
      %v4582 = vld [vmem:[%s3783 + $0xda] sm:$0xff]
      %v4583 = vld [vmem:[%s3783 + $0xe2] sm:$0xff]
      %v4584 = vld [vmem:[%s3783 + $0xf2] sm:$0xff]
      %v4585 = vld [vmem:[%s3783 + $0xfa] sm:$0xff]
      %v4586 = vld [vmem:[%s3783 + $0x10a] sm:$0xff]
      %v4587 = vld [vmem:[%s3783 + $0x112] sm:$0xff]
      %v4588 = vld [vmem:[%s3783 + $0x122] sm:$0xff]
      %v4589 = vld [vmem:[%s3783 + $0x12a] sm:$0xff]
      %v4590 = vld [vmem:[%s3783 + $0x13a] sm:$0xff]
      %v4591 = vld [vmem:[%s3783 + $0x142] sm:$0xff]
      %v4592 = vld [vmem:[%s3783 + $0x152] sm:$0xff]
      %v4593 = vld [vmem:[%s3783 + $0x15a] sm:$0xff]
      %v4594 = vld [vmem:[%s3783 + $0x16a] sm:$0xff]
      %v4595 = vld [vmem:[%s3783 + $0x172] sm:$0xff]
      %s4596 = scalar_lea.vmem %s6, 32
      %v4597 = vld [vmem:[%s4596] sm:$0xf]
      %v4599 = vsel %vm572, %v4564, 0
      %v4602 = vsel %vm572, %v4565, 0
      %v4605 = vsel %vm572, %v4566, 0
      %v4608 = vsel %vm572, %v4567, 0
      %v4611 = vsel %vm572, %v4568, 0
      %v4614 = vsel %vm572, %v4569, 0
      %v4617 = vsel %vm572, %v4570, 0
      %v4620 = vsel %vm572, %v4571, 0
      %v4623 = vsel %vm572, %v4572, 0
      %v4626 = vsel %vm572, %v4573, 0
      %v4629 = vsel %vm572, %v4574, 0
      %v4632 = vsel %vm572, %v4575, 0
      %v4635 = vsel %vm572, %v4576, 0
      %v4638 = vsel %vm572, %v4577, 0
      %v4641 = vsel %vm572, %v4578, 0
      %v4644 = vsel %vm572, %v4579, 0
      %v4647 = vsel %vm572, %v4580, 0
      %v4650 = vsel %vm572, %v4581, 0
      %v4653 = vsel %vm572, %v4582, 0
      %v4656 = vsel %vm572, %v4583, 0
      %v4659 = vsel %vm572, %v4584, 0
      %v4662 = vsel %vm572, %v4585, 0
      %v4665 = vsel %vm572, %v4586, 0
      %v4668 = vsel %vm572, %v4587, 0
      %v4671 = vsel %vm572, %v4588, 0
      %v4674 = vsel %vm572, %v4589, 0
      %v4677 = vsel %vm572, %v4590, 0
      %v4680 = vsel %vm572, %v4591, 0
      %v4683 = vsel %vm572, %v4592, 0
      %v4686 = vsel %vm572, %v4593, 0
      %v4689 = vsel %vm572, %v4594, 0
      %v4692 = vsel %vm572, %v4595, 0
      %v4695 = vsel %vm647, %v4597, 0
      %4697 = vmatprep.subr.mxu0 0.0
      %4698 = vmatpush1.msra.mxu0 0.0
      %4699 = vmatprep.subr.mxu0 0.0
      %4700 = vmatpush1.msra.mxu0 0.0
      %4701 = vmatprep.subr.mxu0 0.0
      %4702 = vmatpush1.msra.mxu0 0.0
      %4703 = vmatprep.subr.mxu0 0.0
      %4704 = vmatpush1.msra.mxu0 0.0
      %4705 = vmatprep.subr.mxu0 0.0
      %4706 = vmatpush1.msra.mxu0 0.0
      %4707 = vmatprep.subr.mxu0 0.0
      %4708 = vmatpush1.msra.mxu0 0.0
      %4709 = vmatprep.subr.mxu0 0.0
      %4710 = vmatpush1.msra.mxu0 0.0
      %4711 = vmatprep.subr.mxu0 0.0
      %4712 = vmatpush1.msra.mxu0 0.0
      %4713 = vmatprep.subr.mxu0 0.0
      %4714 = vmatpush1.msra.mxu0 0.0
      %4715 = vmatprep.subr.mxu0 0.0
      %4716 = vmatpush1.msra.mxu0 0.0
      %4717 = vmatprep.subr.mxu0 0.0
      %4718 = vmatpush1.msra.mxu0 0.0
      %4719 = vmatprep.subr.mxu0 0.0
      %4720 = vmatpush1.msra.mxu0 0.0
      %4721 = vmatprep.subr.mxu0 0.0
      %4722 = vmatpush1.msra.mxu0 0.0
      %4723 = vmatprep.subr.mxu0 0.0
      %4724 = vmatpush1.msra.mxu0 0.0
      %4725 = vmatprep.subr.mxu0 0.0
      %4726 = vmatpush1.msra.mxu0 0.0
      %4727 = vmatprep.subr.mxu0 0.0
      %4728 = vmatpush1.msra.mxu0 %v4695
      %4729 = vmatprep.subr.mxu0 0.0
      %4730 = vmatpush2.msra.mxu0 0.0
      %4731 = vmatprep.subr.mxu0 0.0
      %4732 = vmatpush2.msra.mxu0 0.0
      %4733 = vmatprep.subr.mxu0 0.0
      %4734 = vmatpush2.msra.mxu0 0.0
      %4735 = vmatprep.subr.mxu0 0.0
      %4736 = vmatpush2.msra.mxu0 0.0
      %4737 = vmatprep.subr.mxu0 0.0
      %4738 = vmatpush2.msra.mxu0 0.0
      %4739 = vmatprep.subr.mxu0 0.0
      %4740 = vmatpush2.msra.mxu0 0.0
      %4741 = vmatprep.subr.mxu0 0.0
      %4742 = vmatpush2.msra.mxu0 0.0
      %4743 = vmatprep.subr.mxu0 0.0
      %4744 = vmatpush2.msra.mxu0 0.0
      %4745 = vmatprep.subr.mxu0 0.0
      %4746 = vmatpush2.msra.mxu0 0.0
      %4747 = vmatprep.subr.mxu0 0.0
      %4748 = vmatpush2.msra.mxu0 0.0
      %4749 = vmatprep.subr.mxu0 0.0
      %4750 = vmatpush2.msra.mxu0 0.0
      %4751 = vmatprep.subr.mxu0 0.0
      %4752 = vmatpush2.msra.mxu0 0.0
      %4753 = vmatprep.subr.mxu0 0.0
      %4754 = vmatpush2.msra.mxu0 0.0
      %4755 = vmatprep.subr.mxu0 0.0
      %4756 = vmatpush2.msra.mxu0 0.0
      %4757 = vmatprep.subr.mxu0 0.0
      %4758 = vmatpush2.msra.mxu0 0.0
      %4759 = vmatprep.subr.mxu0 0.0
      %4760 = vmatpush2.msra.mxu0 0.0
      %4761 = vmatprep.mubr.f32.mxu0 0.0
      %4762 = vmatmul.mubr.f32.gmra.mxu0 %v4599
      %v4763 = vpop.f32.mrf.mxu0
      %v4764 = vadd.f32 0.0, %v4763
      %v4765 = vpop.f32.mrf.mxu0
      %4766 = vmatprep.mubr.f32.mxu0 0.0
      %4767 = vmatmul.mubr.f32.gmra.mxu0 %v4602
      %v4768 = vpop.f32.mrf.mxu0
      %v4769 = vadd.f32 0.0, %v4768
      %v4770 = vpop.f32.mrf.mxu0
      %4771 = vmatprep.mubr.f32.mxu0 0.0
      %4772 = vmatmul.mubr.f32.gmra.mxu0 %v4605
      %v4773 = vpop.f32.mrf.mxu0
      %v4774 = vadd.f32 0.0, %v4773
      %v4775 = vpop.f32.mrf.mxu0
      %4776 = vmatprep.mubr.f32.mxu0 0.0
      %4777 = vmatmul.mubr.f32.gmra.mxu0 %v4608
      %v4778 = vpop.f32.mrf.mxu0
      %v4779 = vadd.f32 0.0, %v4778
      %v4780 = vpop.f32.mrf.mxu0
      %4781 = vmatprep.mubr.f32.mxu0 0.0
      %4782 = vmatmul.mubr.f32.gmra.mxu0 %v4611
      %v4783 = vpop.f32.mrf.mxu0
      %v4784 = vadd.f32 0.0, %v4783
      %v4785 = vpop.f32.mrf.mxu0
      %4786 = vmatprep.mubr.f32.mxu0 0.0
      %4787 = vmatmul.mubr.f32.gmra.mxu0 %v4614
      %v4788 = vpop.f32.mrf.mxu0
      %v4789 = vadd.f32 0.0, %v4788
      %v4790 = vpop.f32.mrf.mxu0
      %4791 = vmatprep.mubr.f32.mxu0 0.0
      %4792 = vmatmul.mubr.f32.gmra.mxu0 %v4617
      %v4793 = vpop.f32.mrf.mxu0
      %v4794 = vadd.f32 0.0, %v4793
      %v4795 = vpop.f32.mrf.mxu0
      %4796 = vmatprep.mubr.f32.mxu0 0.0
      %4797 = vmatmul.mubr.f32.gmra.mxu0 %v4620
      %v4798 = vpop.f32.mrf.mxu0
      %v4799 = vadd.f32 0.0, %v4798
      %v4800 = vpop.f32.mrf.mxu0
      %4801 = vmatprep.mubr.f32.mxu0 0.0
      %4802 = vmatmul.mubr.f32.gmra.mxu0 %v4623
      %v4803 = vpop.f32.mrf.mxu0
      %v4804 = vadd.f32 0.0, %v4803
      %v4805 = vpop.f32.mrf.mxu0
      %4806 = vmatprep.mubr.f32.mxu0 0.0
      %4807 = vmatmul.mubr.f32.gmra.mxu0 %v4626
      %v4808 = vpop.f32.mrf.mxu0
      %v4809 = vadd.f32 0.0, %v4808
      %v4810 = vpop.f32.mrf.mxu0
      %4811 = vmatprep.mubr.f32.mxu0 0.0
      %4812 = vmatmul.mubr.f32.gmra.mxu0 %v4629
      %v4813 = vpop.f32.mrf.mxu0
      %v4814 = vadd.f32 0.0, %v4813
      %v4815 = vpop.f32.mrf.mxu0
      %4816 = vmatprep.mubr.f32.mxu0 0.0
      %4817 = vmatmul.mubr.f32.gmra.mxu0 %v4632
      %v4818 = vpop.f32.mrf.mxu0
      %v4819 = vadd.f32 0.0, %v4818
      %v4820 = vpop.f32.mrf.mxu0
      %4821 = vmatprep.mubr.f32.mxu0 0.0
      %4822 = vmatmul.mubr.f32.gmra.mxu0 %v4635
      %v4823 = vpop.f32.mrf.mxu0
      %v4824 = vadd.f32 0.0, %v4823
      %v4825 = vpop.f32.mrf.mxu0
      %4826 = vmatprep.mubr.f32.mxu0 0.0
      %4827 = vmatmul.mubr.f32.gmra.mxu0 %v4638
      %v4828 = vpop.f32.mrf.mxu0
      %v4829 = vadd.f32 0.0, %v4828
      %v4830 = vpop.f32.mrf.mxu0
      %4831 = vmatprep.mubr.f32.mxu0 0.0
      %4832 = vmatmul.mubr.f32.gmra.mxu0 %v4641
      %v4833 = vpop.f32.mrf.mxu0
      %v4834 = vadd.f32 0.0, %v4833
      %v4835 = vpop.f32.mrf.mxu0
      %4836 = vmatprep.mubr.f32.mxu0 0.0
      %4837 = vmatmul.mubr.f32.gmra.mxu0 %v4644
      %v4838 = vpop.f32.mrf.mxu0
      %v4839 = vadd.f32 0.0, %v4838
      %v4840 = vpop.f32.mrf.mxu0
      %4841 = vmatprep.mubr.f32.mxu0 0.0
      %4842 = vmatmul.mubr.f32.gmra.mxu0 %v4647
      %v4843 = vpop.f32.mrf.mxu0
      %v4844 = vadd.f32 0.0, %v4843
      %v4845 = vpop.f32.mrf.mxu0
      %4846 = vmatprep.mubr.f32.mxu0 0.0
      %4847 = vmatmul.mubr.f32.gmra.mxu0 %v4650
      %v4848 = vpop.f32.mrf.mxu0
      %v4849 = vadd.f32 0.0, %v4848
      %v4850 = vpop.f32.mrf.mxu0
      %4851 = vmatprep.mubr.f32.mxu0 0.0
      %4852 = vmatmul.mubr.f32.gmra.mxu0 %v4653
      %v4853 = vpop.f32.mrf.mxu0
      %v4854 = vadd.f32 0.0, %v4853
      %v4855 = vpop.f32.mrf.mxu0
      %4856 = vmatprep.mubr.f32.mxu0 0.0
      %4857 = vmatmul.mubr.f32.gmra.mxu0 %v4656
      %v4858 = vpop.f32.mrf.mxu0
      %v4859 = vadd.f32 0.0, %v4858
      %v4860 = vpop.f32.mrf.mxu0
      %4861 = vmatprep.mubr.f32.mxu0 0.0
      %4862 = vmatmul.mubr.f32.gmra.mxu0 %v4659
      %v4863 = vpop.f32.mrf.mxu0
      %v4864 = vadd.f32 0.0, %v4863
      %v4865 = vpop.f32.mrf.mxu0
      %4866 = vmatprep.mubr.f32.mxu0 0.0
      %4867 = vmatmul.mubr.f32.gmra.mxu0 %v4662
      %v4868 = vpop.f32.mrf.mxu0
      %v4869 = vadd.f32 0.0, %v4868
      %v4870 = vpop.f32.mrf.mxu0
      %4871 = vmatprep.mubr.f32.mxu0 0.0
      %4872 = vmatmul.mubr.f32.gmra.mxu0 %v4665
      %v4873 = vpop.f32.mrf.mxu0
      %v4874 = vadd.f32 0.0, %v4873
      %v4875 = vpop.f32.mrf.mxu0
      %4876 = vmatprep.mubr.f32.mxu0 0.0
      %4877 = vmatmul.mubr.f32.gmra.mxu0 %v4668
      %v4878 = vpop.f32.mrf.mxu0
      %v4879 = vadd.f32 0.0, %v4878
      %v4880 = vpop.f32.mrf.mxu0
      %4881 = vmatprep.mubr.f32.mxu0 0.0
      %4882 = vmatmul.mubr.f32.gmra.mxu0 %v4671
      %v4883 = vpop.f32.mrf.mxu0
      %v4884 = vadd.f32 0.0, %v4883
      %v4885 = vpop.f32.mrf.mxu0
      %4886 = vmatprep.mubr.f32.mxu0 0.0
      %4887 = vmatmul.mubr.f32.gmra.mxu0 %v4674
      %v4888 = vpop.f32.mrf.mxu0
      %v4889 = vadd.f32 0.0, %v4888
      %v4890 = vpop.f32.mrf.mxu0
      %4891 = vmatprep.mubr.f32.mxu0 0.0
      %4892 = vmatmul.mubr.f32.gmra.mxu0 %v4677
      %v4893 = vpop.f32.mrf.mxu0
      %v4894 = vadd.f32 0.0, %v4893
      %v4895 = vpop.f32.mrf.mxu0
      %4896 = vmatprep.mubr.f32.mxu0 0.0
      %4897 = vmatmul.mubr.f32.gmra.mxu0 %v4680
      %v4898 = vpop.f32.mrf.mxu0
      %v4899 = vadd.f32 0.0, %v4898
      %v4900 = vpop.f32.mrf.mxu0
      %4901 = vmatprep.mubr.f32.mxu0 0.0
      %4902 = vmatmul.mubr.f32.gmra.mxu0 %v4683
      %v4903 = vpop.f32.mrf.mxu0
      %v4904 = vadd.f32 0.0, %v4903
      %v4905 = vpop.f32.mrf.mxu0
      %4906 = vmatprep.mubr.f32.mxu0 0.0
      %4907 = vmatmul.mubr.f32.gmra.mxu0 %v4686
      %v4908 = vpop.f32.mrf.mxu0
      %v4909 = vadd.f32 0.0, %v4908
      %v4910 = vpop.f32.mrf.mxu0
      %4911 = vmatprep.mubr.f32.mxu0 0.0
      %4912 = vmatmul.mubr.f32.gmra.mxu0 %v4689
      %v4913 = vpop.f32.mrf.mxu0
      %v4914 = vadd.f32 0.0, %v4913
      %v4915 = vpop.f32.mrf.mxu0
      %4916 = vmatprep.mubr.f32.mxu0 0.0
      %4917 = vmatmul.mubr.f32.gmra.mxu0 %v4692
      %v4918 = vpop.f32.mrf.mxu0
      %v4919 = vadd.f32 0.0, %v4918
      %v4920 = vpop.f32.mrf.mxu0
      %4921 = vdwg.mxu0
      %v4922 = vadd.f32 %v4532, %v4764
      %v4923 = vadd.f32 %v4533, %v4769
      %v4924 = vadd.f32 %v4534, %v4774
      %v4925 = vadd.f32 %v4535, %v4779
      %v4926 = vadd.f32 %v4536, %v4784
      %v4927 = vadd.f32 %v4537, %v4789
      %v4928 = vadd.f32 %v4538, %v4794
      %v4929 = vadd.f32 %v4539, %v4799
      %v4930 = vadd.f32 %v4540, %v4804
      %v4931 = vadd.f32 %v4541, %v4809
      %v4932 = vadd.f32 %v4542, %v4814
      %v4933 = vadd.f32 %v4543, %v4819
      %v4934 = vadd.f32 %v4544, %v4824
      %v4935 = vadd.f32 %v4545, %v4829
      %v4936 = vadd.f32 %v4546, %v4834
      %v4937 = vadd.f32 %v4547, %v4839
      %v4938 = vadd.f32 %v4548, %v4844
      %v4939 = vadd.f32 %v4549, %v4849
      %v4940 = vadd.f32 %v4550, %v4854
      %v4941 = vadd.f32 %v4551, %v4859
      %v4942 = vadd.f32 %v4552, %v4864
      %v4943 = vadd.f32 %v4553, %v4869
      %v4944 = vadd.f32 %v4554, %v4874
      %v4945 = vadd.f32 %v4555, %v4879
      %v4946 = vadd.f32 %v4556, %v4884
      %v4947 = vadd.f32 %v4557, %v4889
      %v4948 = vadd.f32 %v4558, %v4894
      %v4949 = vadd.f32 %v4559, %v4899
      %v4950 = vadd.f32 %v4560, %v4904
      %v4951 = vadd.f32 %v4561, %v4909
      %v4952 = vadd.f32 %v4562, %v4914
      %v4953 = vadd.f32 %v4563, %v4919
      %v4954 = vld [vmem:[%s7] sm:$0x1]
      %v4956 = vlaneseq
      %v4957 = vshrl.u32 %v4956, 7
      %v4958 = vsub.s32 0, %v4957
      %v4959 = vrot.slane %v4954, %v4958
      %v4961 = vadd.f32 %v4922, %v4959
      %v4962 = vadd.f32 %v4923, %v4959
      %v4963 = vadd.f32 %v4924, %v4959
      %v4964 = vadd.f32 %v4925, %v4959
      %v4965 = vadd.f32 %v4926, %v4959
      %v4966 = vadd.f32 %v4927, %v4959
      %v4967 = vadd.f32 %v4928, %v4959
      %v4968 = vadd.f32 %v4929, %v4959
      %v4969 = vadd.f32 %v4930, %v4959
      %v4970 = vadd.f32 %v4931, %v4959
      %v4971 = vadd.f32 %v4932, %v4959
      %v4972 = vadd.f32 %v4933, %v4959
      %v4973 = vadd.f32 %v4934, %v4959
      %v4974 = vadd.f32 %v4935, %v4959
      %v4975 = vadd.f32 %v4936, %v4959
      %v4976 = vadd.f32 %v4937, %v4959
      %v4977 = vadd.f32 %v4938, %v4959
      %v4978 = vadd.f32 %v4939, %v4959
      %v4979 = vadd.f32 %v4940, %v4959
      %v4980 = vadd.f32 %v4941, %v4959
      %v4981 = vadd.f32 %v4942, %v4959
      %v4982 = vadd.f32 %v4943, %v4959
      %v4983 = vadd.f32 %v4944, %v4959
      %v4984 = vadd.f32 %v4945, %v4959
      %v4985 = vadd.f32 %v4946, %v4959
      %v4986 = vadd.f32 %v4947, %v4959
      %v4987 = vadd.f32 %v4948, %v4959
      %v4988 = vadd.f32 %v4949, %v4959
      %v4989 = vadd.f32 %v4950, %v4959
      %v4990 = vadd.f32 %v4951, %v4959
      %v4991 = vadd.f32 %v4952, %v4959
      %v4992 = vadd.f32 %v4953, %v4959
      %v4993 = vld [vmem:[%s530] sm:$0x1]
      %v4995 = vlaneseq
      %v4996 = vshrl.u32 %v4995, 7
      %v4997 = vsub.s32 0, %v4996
      %v4998 = vrot.slane %v4993, %v4997
      %v5000 = vadd.f32 %v4961, %v4998
      %v5001 = vadd.f32 %v4962, %v4998
      %v5002 = vadd.f32 %v4963, %v4998
      %v5003 = vadd.f32 %v4964, %v4998
      %v5004 = vadd.f32 %v4965, %v4998
      %v5005 = vadd.f32 %v4966, %v4998
      %v5006 = vadd.f32 %v4967, %v4998
      %v5007 = vadd.f32 %v4968, %v4998
      %v5008 = vadd.f32 %v4969, %v4998
      %v5009 = vadd.f32 %v4970, %v4998
      %v5010 = vadd.f32 %v4971, %v4998
      %v5011 = vadd.f32 %v4972, %v4998
      %v5012 = vadd.f32 %v4973, %v4998
      %v5013 = vadd.f32 %v4974, %v4998
      %v5014 = vadd.f32 %v4975, %v4998
      %v5015 = vadd.f32 %v4976, %v4998
      %v5016 = vadd.f32 %v4977, %v4998
      %v5017 = vadd.f32 %v4978, %v4998
      %v5018 = vadd.f32 %v4979, %v4998
      %v5019 = vadd.f32 %v4980, %v4998
      %v5020 = vadd.f32 %v4981, %v4998
      %v5021 = vadd.f32 %v4982, %v4998
      %v5022 = vadd.f32 %v4983, %v4998
      %v5023 = vadd.f32 %v4984, %v4998
      %v5024 = vadd.f32 %v4985, %v4998
      %v5025 = vadd.f32 %v4986, %v4998
      %v5026 = vadd.f32 %v4987, %v4998
      %v5027 = vadd.f32 %v4988, %v4998
      %v5028 = vadd.f32 %v4989, %v4998
      %v5029 = vadd.f32 %v4990, %v4998
      %v5030 = vadd.f32 %v4991, %v4998
      %v5031 = vadd.f32 %v4992, %v4998
      %v5032 = vld [vmem:[%s10] sm:$0xff]
      %v5033 = vld [vmem:[%s11] sm:$0x3]
      %v5034 = vld [vmem:[%s8] sm:$0x1]
      %v5035 = vld [vmem:[%s9] sm:$0x1]
      %vm5036 = vcmask 64512
      %v5037 = vsel %vm5036, %v5000, 0.0
      %v5038 = vsel %vm5036, %v5001, 0.0
      %v5039 = vadd.f32 %v5037, %v5038
      %v5040 = vsel %vm5036, %v5002, 0.0
      %v5041 = vadd.f32 %v5039, %v5040
      %v5042 = vsel %vm5036, %v5003, 0.0
      %v5043 = vadd.f32 %v5041, %v5042
      %v5044 = vsel %vm5036, %v5004, 0.0
      %v5045 = vadd.f32 %v5043, %v5044
      %v5046 = vsel %vm5036, %v5005, 0.0
      %v5047 = vadd.f32 %v5045, %v5046
      %v5048 = vsel %vm5036, %v5006, 0.0
      %v5049 = vadd.f32 %v5047, %v5048
      %v5050 = vsel %vm5036, %v5007, 0.0
      %v5051 = vadd.f32 %v5049, %v5050
      %v5052 = vsel %vm5036, %v5008, 0.0
      %v5053 = vadd.f32 %v5051, %v5052
      %v5054 = vsel %vm5036, %v5009, 0.0
      %v5055 = vadd.f32 %v5053, %v5054
      %v5056 = vsel %vm5036, %v5010, 0.0
      %v5057 = vadd.f32 %v5055, %v5056
      %v5058 = vsel %vm5036, %v5011, 0.0
      %v5059 = vadd.f32 %v5057, %v5058
      %v5060 = vsel %vm5036, %v5012, 0.0
      %v5061 = vadd.f32 %v5059, %v5060
      %v5062 = vsel %vm5036, %v5013, 0.0
      %v5063 = vadd.f32 %v5061, %v5062
      %v5064 = vsel %vm5036, %v5014, 0.0
      %v5065 = vadd.f32 %v5063, %v5064
      %v5066 = vsel %vm5036, %v5015, 0.0
      %v5067 = vadd.f32 %v5065, %v5066
      %v5068 = vsel %vm5036, %v5016, 0.0
      %v5069 = vadd.f32 %v5067, %v5068
      %v5070 = vsel %vm5036, %v5017, 0.0
      %v5071 = vadd.f32 %v5069, %v5070
      %v5072 = vsel %vm5036, %v5018, 0.0
      %v5073 = vadd.f32 %v5071, %v5072
      %v5074 = vsel %vm5036, %v5019, 0.0
      %v5075 = vadd.f32 %v5073, %v5074
      %v5076 = vsel %vm5036, %v5020, 0.0
      %v5077 = vadd.f32 %v5075, %v5076
      %v5078 = vsel %vm5036, %v5021, 0.0
      %v5079 = vadd.f32 %v5077, %v5078
      %v5080 = vsel %vm5036, %v5022, 0.0
      %v5081 = vadd.f32 %v5079, %v5080
      %v5082 = vsel %vm5036, %v5023, 0.0
      %v5083 = vadd.f32 %v5081, %v5082
      %v5084 = vsel %vm5036, %v5024, 0.0
      %v5085 = vadd.f32 %v5083, %v5084
      %v5086 = vsel %vm5036, %v5025, 0.0
      %v5087 = vadd.f32 %v5085, %v5086
      %v5088 = vsel %vm5036, %v5026, 0.0
      %v5089 = vadd.f32 %v5087, %v5088
      %v5090 = vsel %vm5036, %v5027, 0.0
      %v5091 = vadd.f32 %v5089, %v5090
      %v5092 = vsel %vm5036, %v5028, 0.0
      %v5093 = vadd.f32 %v5091, %v5092
      %v5094 = vsel %vm5036, %v5029, 0.0
      %v5095 = vadd.f32 %v5093, %v5094
      %v5096 = vsel %vm5036, %v5030, 0.0
      %v5097 = vadd.f32 %v5095, %v5096
      %v5098 = vsel %vm5036, %v5031, 0.0
      %v5099 = vadd.f32 %v5097, %v5098
      %v5100 = vrot.slane %v5099, 4
      %v5101 = vadd.f32 %v5099, %v5100
      %v5102 = vrot.slane %v5101, 2
      %v5103 = vadd.f32 %v5101, %v5102
      %v5104 = vrot.slane %v5103, 1
      %v5105 = vadd.f32 %v5103, %v5104
      %v5106 = vmul.f32 %v5105, %v642
      %v5108 = vsel %vm5036, %v5106, 0
      %5110 = vmatprep.subr.mxu0 0.0
      %5111 = vmatpush1.msra.mxu0 0.0
      %5112 = vmatprep.subr.mxu0 0.0
      %5113 = vmatpush1.msra.mxu0 0.0
      %5114 = vmatprep.subr.mxu0 0.0
      %5115 = vmatpush1.msra.mxu0 0.0
      %5116 = vmatprep.subr.mxu0 0.0
      %5117 = vmatpush1.msra.mxu0 0.0
      %5118 = vmatprep.subr.mxu0 0.0
      %5119 = vmatpush1.msra.mxu0 0.0
      %5120 = vmatprep.subr.mxu0 0.0
      %5121 = vmatpush1.msra.mxu0 0.0
      %5122 = vmatprep.subr.mxu0 0.0
      %5123 = vmatpush1.msra.mxu0 0.0
      %5124 = vmatprep.subr.mxu0 0.0
      %5125 = vmatpush1.msra.mxu0 0.0
      %5126 = vmatprep.subr.mxu0 0.0
      %5127 = vmatpush1.msra.mxu0 0.0
      %5128 = vmatprep.subr.mxu0 0.0
      %5129 = vmatpush1.msra.mxu0 0.0
      %5130 = vmatprep.subr.mxu0 0.0
      %5131 = vmatpush1.msra.mxu0 0.0
      %5132 = vmatprep.subr.mxu0 0.0
      %5133 = vmatpush1.msra.mxu0 0.0
      %5134 = vmatprep.subr.mxu0 0.0
      %5135 = vmatpush1.msra.mxu0 0.0
      %5136 = vmatprep.subr.mxu0 0.0
      %5137 = vmatpush1.msra.mxu0 0.0
      %5138 = vmatprep.subr.mxu0 0.0
      %5139 = vmatpush1.msra.mxu0 0.0
      %5140 = vmatprep.subr.mxu0 0.0
      %5141 = vmatpush1.msra.mxu0 %v5032
      %5142 = vmatprep.subr.mxu0 0.0
      %5143 = vmatpush2.msra.mxu0 0.0
      %5144 = vmatprep.subr.mxu0 0.0
      %5145 = vmatpush2.msra.mxu0 0.0
      %5146 = vmatprep.subr.mxu0 0.0
      %5147 = vmatpush2.msra.mxu0 0.0
      %5148 = vmatprep.subr.mxu0 0.0
      %5149 = vmatpush2.msra.mxu0 0.0
      %5150 = vmatprep.subr.mxu0 0.0
      %5151 = vmatpush2.msra.mxu0 0.0
      %5152 = vmatprep.subr.mxu0 0.0
      %5153 = vmatpush2.msra.mxu0 0.0
      %5154 = vmatprep.subr.mxu0 0.0
      %5155 = vmatpush2.msra.mxu0 0.0
      %5156 = vmatprep.subr.mxu0 0.0
      %5157 = vmatpush2.msra.mxu0 0.0
      %5158 = vmatprep.subr.mxu0 0.0
      %5159 = vmatpush2.msra.mxu0 0.0
      %5160 = vmatprep.subr.mxu0 0.0
      %5161 = vmatpush2.msra.mxu0 0.0
      %5162 = vmatprep.subr.mxu0 0.0
      %5163 = vmatpush2.msra.mxu0 0.0
      %5164 = vmatprep.subr.mxu0 0.0
      %5165 = vmatpush2.msra.mxu0 0.0
      %5166 = vmatprep.subr.mxu0 0.0
      %5167 = vmatpush2.msra.mxu0 0.0
      %5168 = vmatprep.subr.mxu0 0.0
      %5169 = vmatpush2.msra.mxu0 0.0
      %5170 = vmatprep.subr.mxu0 0.0
      %5171 = vmatpush2.msra.mxu0 0.0
      %5172 = vmatprep.subr.mxu0 0.0
      %5173 = vmatpush2.msra.mxu0 0.0
      %5174 = vmatprep.mubr.f32.mxu0 0.0
      %5175 = vmatmul.mubr.f32.gmra.mxu0 %v5108
      %v5176 = vpop.f32.mrf.mxu0
      %v5177 = vadd.f32 0.0, %v5176
      %v5178 = vpop.f32.mrf.mxu0
      %5179 = vdwg.mxu0
      %vm5180 = vcmask 15360
      %v5182 = vsel %vm5180, %v5177, 0
      %vm5184 = vcmask 1041408
      %v5186 = vsel %vm5184, %v5033, 0
      %5188 = vmatprep.subr.mxu0 0.0
      %5189 = vmatpush1.msra.mxu0 0.0
      %5190 = vmatprep.subr.mxu0 0.0
      %5191 = vmatpush1.msra.mxu0 0.0
      %5192 = vmatprep.subr.mxu0 0.0
      %5193 = vmatpush1.msra.mxu0 0.0
      %5194 = vmatprep.subr.mxu0 0.0
      %5195 = vmatpush1.msra.mxu0 0.0
      %5196 = vmatprep.subr.mxu0 0.0
      %5197 = vmatpush1.msra.mxu0 0.0
      %5198 = vmatprep.subr.mxu0 0.0
      %5199 = vmatpush1.msra.mxu0 0.0
      %5200 = vmatprep.subr.mxu0 0.0
      %5201 = vmatpush1.msra.mxu0 0.0
      %5202 = vmatprep.subr.mxu0 0.0
      %5203 = vmatpush1.msra.mxu0 0.0
      %5204 = vmatprep.subr.mxu0 0.0
      %5205 = vmatpush1.msra.mxu0 0.0
      %5206 = vmatprep.subr.mxu0 0.0
      %5207 = vmatpush1.msra.mxu0 0.0
      %5208 = vmatprep.subr.mxu0 0.0
      %5209 = vmatpush1.msra.mxu0 0.0
      %5210 = vmatprep.subr.mxu0 0.0
      %5211 = vmatpush1.msra.mxu0 0.0
      %5212 = vmatprep.subr.mxu0 0.0
      %5213 = vmatpush1.msra.mxu0 0.0
      %5214 = vmatprep.subr.mxu0 0.0
      %5215 = vmatpush1.msra.mxu0 0.0
      %5216 = vmatprep.subr.mxu0 0.0
      %5217 = vmatpush1.msra.mxu0 0.0
      %5218 = vmatprep.subr.mxu0 0.0
      %5219 = vmatpush1.msra.mxu0 %v5186
      %5220 = vmatprep.subr.mxu0 0.0
      %5221 = vmatpush2.msra.mxu0 0.0
      %5222 = vmatprep.subr.mxu0 0.0
      %5223 = vmatpush2.msra.mxu0 0.0
      %5224 = vmatprep.subr.mxu0 0.0
      %5225 = vmatpush2.msra.mxu0 0.0
      %5226 = vmatprep.subr.mxu0 0.0
      %5227 = vmatpush2.msra.mxu0 0.0
      %5228 = vmatprep.subr.mxu0 0.0
      %5229 = vmatpush2.msra.mxu0 0.0
      %5230 = vmatprep.subr.mxu0 0.0
      %5231 = vmatpush2.msra.mxu0 0.0
      %5232 = vmatprep.subr.mxu0 0.0
      %5233 = vmatpush2.msra.mxu0 0.0
      %5234 = vmatprep.subr.mxu0 0.0
      %5235 = vmatpush2.msra.mxu0 0.0
      %5236 = vmatprep.subr.mxu0 0.0
      %5237 = vmatpush2.msra.mxu0 0.0
      %5238 = vmatprep.subr.mxu0 0.0
      %5239 = vmatpush2.msra.mxu0 0.0
      %5240 = vmatprep.subr.mxu0 0.0
      %5241 = vmatpush2.msra.mxu0 0.0
      %5242 = vmatprep.subr.mxu0 0.0
      %5243 = vmatpush2.msra.mxu0 0.0
      %5244 = vmatprep.subr.mxu0 0.0
      %5245 = vmatpush2.msra.mxu0 0.0
      %5246 = vmatprep.subr.mxu0 0.0
      %5247 = vmatpush2.msra.mxu0 0.0
      %5248 = vmatprep.subr.mxu0 0.0
      %5249 = vmatpush2.msra.mxu0 0.0
      %5250 = vmatprep.subr.mxu0 0.0
      %5251 = vmatpush2.msra.mxu0 0.0
      %5252 = vmatprep.mubr.f32.mxu0 0.0
      %5253 = vmatmul.mubr.f32.gmra.mxu0 %v5182
      %v5254 = vpop.f32.mrf.mxu0
      %v5255 = vadd.f32 0.0, %v5254
      %v5256 = vpop.f32.mrf.mxu0
      %5257 = vdwg.mxu0
      %v5258 = vlaneseq
      %v5259 = vshrl.u32 %v5258, 7
      %v5260 = vsub.s32 0, %v5259
      %v5261 = vrot.slane %v5255, %v5260
      %v5262 = vsub.f32 %v5000, %v5261
      %v5263 = vsub.f32 %v5001, %v5261
      %v5264 = vsub.f32 %v5002, %v5261
      %v5265 = vsub.f32 %v5003, %v5261
      %v5266 = vsub.f32 %v5004, %v5261
      %v5267 = vsub.f32 %v5005, %v5261
      %v5268 = vsub.f32 %v5006, %v5261
      %v5269 = vsub.f32 %v5007, %v5261
      %v5270 = vsub.f32 %v5008, %v5261
      %v5271 = vsub.f32 %v5009, %v5261
      %v5272 = vsub.f32 %v5010, %v5261
      %v5273 = vsub.f32 %v5011, %v5261
      %v5274 = vsub.f32 %v5012, %v5261
      %v5275 = vsub.f32 %v5013, %v5261
      %v5276 = vsub.f32 %v5014, %v5261
      %v5277 = vsub.f32 %v5015, %v5261
      %v5278 = vsub.f32 %v5016, %v5261
      %v5279 = vsub.f32 %v5017, %v5261
      %v5280 = vsub.f32 %v5018, %v5261
      %v5281 = vsub.f32 %v5019, %v5261
      %v5282 = vsub.f32 %v5020, %v5261
      %v5283 = vsub.f32 %v5021, %v5261
      %v5284 = vsub.f32 %v5022, %v5261
      %v5285 = vsub.f32 %v5023, %v5261
      %v5286 = vsub.f32 %v5024, %v5261
      %v5287 = vsub.f32 %v5025, %v5261
      %v5288 = vsub.f32 %v5026, %v5261
      %v5289 = vsub.f32 %v5027, %v5261
      %v5290 = vsub.f32 %v5028, %v5261
      %v5291 = vsub.f32 %v5029, %v5261
      %v5292 = vsub.f32 %v5030, %v5261
      %v5293 = vsub.f32 %v5031, %v5261
      %v5294 = vmul.f32 %v5262, %v5262
      %v5295 = vmul.f32 %v5263, %v5263
      %v5296 = vmul.f32 %v5264, %v5264
      %v5297 = vmul.f32 %v5265, %v5265
      %v5298 = vmul.f32 %v5266, %v5266
      %v5299 = vmul.f32 %v5267, %v5267
      %v5300 = vmul.f32 %v5268, %v5268
      %v5301 = vmul.f32 %v5269, %v5269
      %v5302 = vmul.f32 %v5270, %v5270
      %v5303 = vmul.f32 %v5271, %v5271
      %v5304 = vmul.f32 %v5272, %v5272
      %v5305 = vmul.f32 %v5273, %v5273
      %v5306 = vmul.f32 %v5274, %v5274
      %v5307 = vmul.f32 %v5275, %v5275
      %v5308 = vmul.f32 %v5276, %v5276
      %v5309 = vmul.f32 %v5277, %v5277
      %v5310 = vmul.f32 %v5278, %v5278
      %v5311 = vmul.f32 %v5279, %v5279
      %v5312 = vmul.f32 %v5280, %v5280
      %v5313 = vmul.f32 %v5281, %v5281
      %v5314 = vmul.f32 %v5282, %v5282
      %v5315 = vmul.f32 %v5283, %v5283
      %v5316 = vmul.f32 %v5284, %v5284
      %v5317 = vmul.f32 %v5285, %v5285
      %v5318 = vmul.f32 %v5286, %v5286
      %v5319 = vmul.f32 %v5287, %v5287
      %v5320 = vmul.f32 %v5288, %v5288
      %v5321 = vmul.f32 %v5289, %v5289
      %v5322 = vmul.f32 %v5290, %v5290
      %v5323 = vmul.f32 %v5291, %v5291
      %v5324 = vmul.f32 %v5292, %v5292
      %v5325 = vmul.f32 %v5293, %v5293
      %v5326 = vsel %vm5036, %v5294, 0.0
      %v5327 = vsel %vm5036, %v5295, 0.0
      %v5328 = vadd.f32 %v5326, %v5327
      %v5329 = vsel %vm5036, %v5296, 0.0
      %v5330 = vadd.f32 %v5328, %v5329
      %v5331 = vsel %vm5036, %v5297, 0.0
      %v5332 = vadd.f32 %v5330, %v5331
      %v5333 = vsel %vm5036, %v5298, 0.0
      %v5334 = vadd.f32 %v5332, %v5333
      %v5335 = vsel %vm5036, %v5299, 0.0
      %v5336 = vadd.f32 %v5334, %v5335
      %v5337 = vsel %vm5036, %v5300, 0.0
      %v5338 = vadd.f32 %v5336, %v5337
      %v5339 = vsel %vm5036, %v5301, 0.0
      %v5340 = vadd.f32 %v5338, %v5339
      %v5341 = vsel %vm5036, %v5302, 0.0
      %v5342 = vadd.f32 %v5340, %v5341
      %v5343 = vsel %vm5036, %v5303, 0.0
      %v5344 = vadd.f32 %v5342, %v5343
      %v5345 = vsel %vm5036, %v5304, 0.0
      %v5346 = vadd.f32 %v5344, %v5345
      %v5347 = vsel %vm5036, %v5305, 0.0
      %v5348 = vadd.f32 %v5346, %v5347
      %v5349 = vsel %vm5036, %v5306, 0.0
      %v5350 = vadd.f32 %v5348, %v5349
      %v5351 = vsel %vm5036, %v5307, 0.0
      %v5352 = vadd.f32 %v5350, %v5351
      %v5353 = vsel %vm5036, %v5308, 0.0
      %v5354 = vadd.f32 %v5352, %v5353
      %v5355 = vsel %vm5036, %v5309, 0.0
      %v5356 = vadd.f32 %v5354, %v5355
      %v5357 = vsel %vm5036, %v5310, 0.0
      %v5358 = vadd.f32 %v5356, %v5357
      %v5359 = vsel %vm5036, %v5311, 0.0
      %v5360 = vadd.f32 %v5358, %v5359
      %v5361 = vsel %vm5036, %v5312, 0.0
      %v5362 = vadd.f32 %v5360, %v5361
      %v5363 = vsel %vm5036, %v5313, 0.0
      %v5364 = vadd.f32 %v5362, %v5363
      %v5365 = vsel %vm5036, %v5314, 0.0
      %v5366 = vadd.f32 %v5364, %v5365
      %v5367 = vsel %vm5036, %v5315, 0.0
      %v5368 = vadd.f32 %v5366, %v5367
      %v5369 = vsel %vm5036, %v5316, 0.0
      %v5370 = vadd.f32 %v5368, %v5369
      %v5371 = vsel %vm5036, %v5317, 0.0
      %v5372 = vadd.f32 %v5370, %v5371
      %v5373 = vsel %vm5036, %v5318, 0.0
      %v5374 = vadd.f32 %v5372, %v5373
      %v5375 = vsel %vm5036, %v5319, 0.0
      %v5376 = vadd.f32 %v5374, %v5375
      %v5377 = vsel %vm5036, %v5320, 0.0
      %v5378 = vadd.f32 %v5376, %v5377
      %v5379 = vsel %vm5036, %v5321, 0.0
      %v5380 = vadd.f32 %v5378, %v5379
      %v5381 = vsel %vm5036, %v5322, 0.0
      %v5382 = vadd.f32 %v5380, %v5381
      %v5383 = vsel %vm5036, %v5323, 0.0
      %v5384 = vadd.f32 %v5382, %v5383
      %v5385 = vsel %vm5036, %v5324, 0.0
      %v5386 = vadd.f32 %v5384, %v5385
      %v5387 = vsel %vm5036, %v5325, 0.0
      %v5388 = vadd.f32 %v5386, %v5387
      %v5389 = vrot.slane %v5388, 4
      %v5390 = vadd.f32 %v5388, %v5389
      %v5391 = vrot.slane %v5390, 2
      %v5392 = vadd.f32 %v5390, %v5391
      %v5393 = vrot.slane %v5392, 1
      %v5394 = vadd.f32 %v5392, %v5393
      %v5395 = vmul.f32 %v5394, %v642
      %v5397 = vsel %vm5036, %v5395, 0
      %5399 = vmatprep.subr.mxu0 0.0
      %5400 = vmatpush1.msra.mxu0 0.0
      %5401 = vmatprep.subr.mxu0 0.0
      %5402 = vmatpush1.msra.mxu0 0.0
      %5403 = vmatprep.subr.mxu0 0.0
      %5404 = vmatpush1.msra.mxu0 0.0
      %5405 = vmatprep.subr.mxu0 0.0
      %5406 = vmatpush1.msra.mxu0 0.0
      %5407 = vmatprep.subr.mxu0 0.0
      %5408 = vmatpush1.msra.mxu0 0.0
      %5409 = vmatprep.subr.mxu0 0.0
      %5410 = vmatpush1.msra.mxu0 0.0
      %5411 = vmatprep.subr.mxu0 0.0
      %5412 = vmatpush1.msra.mxu0 0.0
      %5413 = vmatprep.subr.mxu0 0.0
      %5414 = vmatpush1.msra.mxu0 0.0
      %5415 = vmatprep.subr.mxu0 0.0
      %5416 = vmatpush1.msra.mxu0 0.0
      %5417 = vmatprep.subr.mxu0 0.0
      %5418 = vmatpush1.msra.mxu0 0.0
      %5419 = vmatprep.subr.mxu0 0.0
      %5420 = vmatpush1.msra.mxu0 0.0
      %5421 = vmatprep.subr.mxu0 0.0
      %5422 = vmatpush1.msra.mxu0 0.0
      %5423 = vmatprep.subr.mxu0 0.0
      %5424 = vmatpush1.msra.mxu0 0.0
      %5425 = vmatprep.subr.mxu0 0.0
      %5426 = vmatpush1.msra.mxu0 0.0
      %5427 = vmatprep.subr.mxu0 0.0
      %5428 = vmatpush1.msra.mxu0 0.0
      %5429 = vmatprep.subr.mxu0 0.0
      %5430 = vmatpush1.msra.mxu0 %v5032
      %5431 = vmatprep.subr.mxu0 0.0
      %5432 = vmatpush2.msra.mxu0 0.0
      %5433 = vmatprep.subr.mxu0 0.0
      %5434 = vmatpush2.msra.mxu0 0.0
      %5435 = vmatprep.subr.mxu0 0.0
      %5436 = vmatpush2.msra.mxu0 0.0
      %5437 = vmatprep.subr.mxu0 0.0
      %5438 = vmatpush2.msra.mxu0 0.0
      %5439 = vmatprep.subr.mxu0 0.0
      %5440 = vmatpush2.msra.mxu0 0.0
      %5441 = vmatprep.subr.mxu0 0.0
      %5442 = vmatpush2.msra.mxu0 0.0
      %5443 = vmatprep.subr.mxu0 0.0
      %5444 = vmatpush2.msra.mxu0 0.0
      %5445 = vmatprep.subr.mxu0 0.0
      %5446 = vmatpush2.msra.mxu0 0.0
      %5447 = vmatprep.subr.mxu0 0.0
      %5448 = vmatpush2.msra.mxu0 0.0
      %5449 = vmatprep.subr.mxu0 0.0
      %5450 = vmatpush2.msra.mxu0 0.0
      %5451 = vmatprep.subr.mxu0 0.0
      %5452 = vmatpush2.msra.mxu0 0.0
      %5453 = vmatprep.subr.mxu0 0.0
      %5454 = vmatpush2.msra.mxu0 0.0
      %5455 = vmatprep.subr.mxu0 0.0
      %5456 = vmatpush2.msra.mxu0 0.0
      %5457 = vmatprep.subr.mxu0 0.0
      %5458 = vmatpush2.msra.mxu0 0.0
      %5459 = vmatprep.subr.mxu0 0.0
      %5460 = vmatpush2.msra.mxu0 0.0
      %5461 = vmatprep.subr.mxu0 0.0
      %5462 = vmatpush2.msra.mxu0 0.0
      %5463 = vmatprep.mubr.f32.mxu0 0.0
      %5464 = vmatmul.mubr.f32.gmra.mxu0 %v5397
      %v5465 = vpop.f32.mrf.mxu0
      %v5466 = vadd.f32 0.0, %v5465
      %v5467 = vpop.f32.mrf.mxu0
      %5468 = vdwg.mxu0
      %v5470 = vsel %vm5180, %v5466, 0
      %5472 = vmatprep.subr.mxu0 0.0
      %5473 = vmatpush1.msra.mxu0 0.0
      %5474 = vmatprep.subr.mxu0 0.0
      %5475 = vmatpush1.msra.mxu0 0.0
      %5476 = vmatprep.subr.mxu0 0.0
      %5477 = vmatpush1.msra.mxu0 0.0
      %5478 = vmatprep.subr.mxu0 0.0
      %5479 = vmatpush1.msra.mxu0 0.0
      %5480 = vmatprep.subr.mxu0 0.0
      %5481 = vmatpush1.msra.mxu0 0.0
      %5482 = vmatprep.subr.mxu0 0.0
      %5483 = vmatpush1.msra.mxu0 0.0
      %5484 = vmatprep.subr.mxu0 0.0
      %5485 = vmatpush1.msra.mxu0 0.0
      %5486 = vmatprep.subr.mxu0 0.0
      %5487 = vmatpush1.msra.mxu0 0.0
      %5488 = vmatprep.subr.mxu0 0.0
      %5489 = vmatpush1.msra.mxu0 0.0
      %5490 = vmatprep.subr.mxu0 0.0
      %5491 = vmatpush1.msra.mxu0 0.0
      %5492 = vmatprep.subr.mxu0 0.0
      %5493 = vmatpush1.msra.mxu0 0.0
      %5494 = vmatprep.subr.mxu0 0.0
      %5495 = vmatpush1.msra.mxu0 0.0
      %5496 = vmatprep.subr.mxu0 0.0
      %5497 = vmatpush1.msra.mxu0 0.0
      %5498 = vmatprep.subr.mxu0 0.0
      %5499 = vmatpush1.msra.mxu0 0.0
      %5500 = vmatprep.subr.mxu0 0.0
      %5501 = vmatpush1.msra.mxu0 0.0
      %5502 = vmatprep.subr.mxu0 0.0
      %5503 = vmatpush1.msra.mxu0 %v5186
      %5504 = vmatprep.subr.mxu0 0.0
      %5505 = vmatpush2.msra.mxu0 0.0
      %5506 = vmatprep.subr.mxu0 0.0
      %5507 = vmatpush2.msra.mxu0 0.0
      %5508 = vmatprep.subr.mxu0 0.0
      %5509 = vmatpush2.msra.mxu0 0.0
      %5510 = vmatprep.subr.mxu0 0.0
      %5511 = vmatpush2.msra.mxu0 0.0
      %5512 = vmatprep.subr.mxu0 0.0
      %5513 = vmatpush2.msra.mxu0 0.0
      %5514 = vmatprep.subr.mxu0 0.0
      %5515 = vmatpush2.msra.mxu0 0.0
      %5516 = vmatprep.subr.mxu0 0.0
      %5517 = vmatpush2.msra.mxu0 0.0
      %5518 = vmatprep.subr.mxu0 0.0
      %5519 = vmatpush2.msra.mxu0 0.0
      %5520 = vmatprep.subr.mxu0 0.0
      %5521 = vmatpush2.msra.mxu0 0.0
      %5522 = vmatprep.subr.mxu0 0.0
      %5523 = vmatpush2.msra.mxu0 0.0
      %5524 = vmatprep.subr.mxu0 0.0
      %5525 = vmatpush2.msra.mxu0 0.0
      %5526 = vmatprep.subr.mxu0 0.0
      %5527 = vmatpush2.msra.mxu0 0.0
      %5528 = vmatprep.subr.mxu0 0.0
      %5529 = vmatpush2.msra.mxu0 0.0
      %5530 = vmatprep.subr.mxu0 0.0
      %5531 = vmatpush2.msra.mxu0 0.0
      %5532 = vmatprep.subr.mxu0 0.0
      %5533 = vmatpush2.msra.mxu0 0.0
      %5534 = vmatprep.subr.mxu0 0.0
      %5535 = vmatpush2.msra.mxu0 0.0
      %5536 = vmatprep.mubr.f32.mxu0 0.0
      %5537 = vmatmul.mubr.f32.gmra.mxu0 %v5470
      %v5538 = vpop.f32.mrf.mxu0
      %v5539 = vadd.f32 1e-06, %v5538
      %v5540 = vpop.f32.mrf.mxu0
      %5541 = vdwg.mxu0
      %v5542 = vrsqrt.pop %v5539
      %v5543 = vlaneseq
      %v5544 = vshrl.u32 %v5543, 7
      %v5545 = vsub.s32 0, %v5544
      %v5546 = vrot.slane %v5542, %v5545
      %v5547 = vmul.f32 %v5262, %v5546
      %v5548 = vmul.f32 %v5263, %v5546
      %v5549 = vmul.f32 %v5264, %v5546
      %v5550 = vmul.f32 %v5265, %v5546
      %v5551 = vmul.f32 %v5266, %v5546
      %v5552 = vmul.f32 %v5267, %v5546
      %v5553 = vmul.f32 %v5268, %v5546
      %v5554 = vmul.f32 %v5269, %v5546
      %v5555 = vmul.f32 %v5270, %v5546
      %v5556 = vmul.f32 %v5271, %v5546
      %v5557 = vmul.f32 %v5272, %v5546
      %v5558 = vmul.f32 %v5273, %v5546
      %v5559 = vmul.f32 %v5274, %v5546
      %v5560 = vmul.f32 %v5275, %v5546
      %v5561 = vmul.f32 %v5276, %v5546
      %v5562 = vmul.f32 %v5277, %v5546
      %v5563 = vmul.f32 %v5278, %v5546
      %v5564 = vmul.f32 %v5279, %v5546
      %v5565 = vmul.f32 %v5280, %v5546
      %v5566 = vmul.f32 %v5281, %v5546
      %v5567 = vmul.f32 %v5282, %v5546
      %v5568 = vmul.f32 %v5283, %v5546
      %v5569 = vmul.f32 %v5284, %v5546
      %v5570 = vmul.f32 %v5285, %v5546
      %v5571 = vmul.f32 %v5286, %v5546
      %v5572 = vmul.f32 %v5287, %v5546
      %v5573 = vmul.f32 %v5288, %v5546
      %v5574 = vmul.f32 %v5289, %v5546
      %v5575 = vmul.f32 %v5290, %v5546
      %v5576 = vmul.f32 %v5291, %v5546
      %v5577 = vmul.f32 %v5292, %v5546
      %v5578 = vmul.f32 %v5293, %v5546
      %v5580 = vlaneseq
      %v5581 = vshrl.u32 %v5580, 7
      %v5582 = vsub.s32 0, %v5581
      %v5583 = vrot.slane %v5034, %v5582
      %v5585 = vmul.f32 %v5547, %v5583
      %v5586 = vmul.f32 %v5548, %v5583
      %v5587 = vmul.f32 %v5549, %v5583
      %v5588 = vmul.f32 %v5550, %v5583
      %v5589 = vmul.f32 %v5551, %v5583
      %v5590 = vmul.f32 %v5552, %v5583
      %v5591 = vmul.f32 %v5553, %v5583
      %v5592 = vmul.f32 %v5554, %v5583
      %v5593 = vmul.f32 %v5555, %v5583
      %v5594 = vmul.f32 %v5556, %v5583
      %v5595 = vmul.f32 %v5557, %v5583
      %v5596 = vmul.f32 %v5558, %v5583
      %v5597 = vmul.f32 %v5559, %v5583
      %v5598 = vmul.f32 %v5560, %v5583
      %v5599 = vmul.f32 %v5561, %v5583
      %v5600 = vmul.f32 %v5562, %v5583
      %v5601 = vmul.f32 %v5563, %v5583
      %v5602 = vmul.f32 %v5564, %v5583
      %v5603 = vmul.f32 %v5565, %v5583
      %v5604 = vmul.f32 %v5566, %v5583
      %v5605 = vmul.f32 %v5567, %v5583
      %v5606 = vmul.f32 %v5568, %v5583
      %v5607 = vmul.f32 %v5569, %v5583
      %v5608 = vmul.f32 %v5570, %v5583
      %v5609 = vmul.f32 %v5571, %v5583
      %v5610 = vmul.f32 %v5572, %v5583
      %v5611 = vmul.f32 %v5573, %v5583
      %v5612 = vmul.f32 %v5574, %v5583
      %v5613 = vmul.f32 %v5575, %v5583
      %v5614 = vmul.f32 %v5576, %v5583
      %v5615 = vmul.f32 %v5577, %v5583
      %v5616 = vmul.f32 %v5578, %v5583
      %v5618 = vlaneseq
      %v5619 = vshrl.u32 %v5618, 7
      %v5620 = vsub.s32 0, %v5619
      %v5621 = vrot.slane %v5035, %v5620
      %v5623 = vadd.f32 %v5585, %v5621
      %v5624 = vadd.f32 %v5586, %v5621
      %v5625 = vadd.f32 %v5587, %v5621
      %v5626 = vadd.f32 %v5588, %v5621
      %v5627 = vadd.f32 %v5589, %v5621
      %v5628 = vadd.f32 %v5590, %v5621
      %v5629 = vadd.f32 %v5591, %v5621
      %v5630 = vadd.f32 %v5592, %v5621
      %v5631 = vadd.f32 %v5593, %v5621
      %v5632 = vadd.f32 %v5594, %v5621
      %v5633 = vadd.f32 %v5595, %v5621
      %v5634 = vadd.f32 %v5596, %v5621
      %v5635 = vadd.f32 %v5597, %v5621
      %v5636 = vadd.f32 %v5598, %v5621
      %v5637 = vadd.f32 %v5599, %v5621
      %v5638 = vadd.f32 %v5600, %v5621
      %v5639 = vadd.f32 %v5601, %v5621
      %v5640 = vadd.f32 %v5602, %v5621
      %v5641 = vadd.f32 %v5603, %v5621
      %v5642 = vadd.f32 %v5604, %v5621
      %v5643 = vadd.f32 %v5605, %v5621
      %v5644 = vadd.f32 %v5606, %v5621
      %v5645 = vadd.f32 %v5607, %v5621
      %v5646 = vadd.f32 %v5608, %v5621
      %v5647 = vadd.f32 %v5609, %v5621
      %v5648 = vadd.f32 %v5610, %v5621
      %v5649 = vadd.f32 %v5611, %v5621
      %v5650 = vadd.f32 %v5612, %v5621
      %v5651 = vadd.f32 %v5613, %v5621
      %v5652 = vadd.f32 %v5614, %v5621
      %v5653 = vadd.f32 %v5615, %v5621
      %v5654 = vadd.f32 %v5616, %v5621
      %v5655 = vxor.u32 %v5623, 2147483648
      %v5656 = vxor.u32 %v5624, 2147483648
      %v5657 = vxor.u32 %v5625, 2147483648
      %v5658 = vxor.u32 %v5626, 2147483648
      %v5659 = vxor.u32 %v5627, 2147483648
      %v5660 = vxor.u32 %v5628, 2147483648
      %v5661 = vxor.u32 %v5629, 2147483648
      %v5662 = vxor.u32 %v5630, 2147483648
      %v5663 = vxor.u32 %v5631, 2147483648
      %v5664 = vxor.u32 %v5632, 2147483648
      %v5665 = vxor.u32 %v5633, 2147483648
      %v5666 = vxor.u32 %v5634, 2147483648
      %v5667 = vxor.u32 %v5635, 2147483648
      %v5668 = vxor.u32 %v5636, 2147483648
      %v5669 = vxor.u32 %v5637, 2147483648
      %v5670 = vxor.u32 %v5638, 2147483648
      %v5671 = vxor.u32 %v5639, 2147483648
      %v5672 = vxor.u32 %v5640, 2147483648
      %v5673 = vxor.u32 %v5641, 2147483648
      %v5674 = vxor.u32 %v5642, 2147483648
      %v5675 = vxor.u32 %v5643, 2147483648
      %v5676 = vxor.u32 %v5644, 2147483648
      %v5677 = vxor.u32 %v5645, 2147483648
      %v5678 = vxor.u32 %v5646, 2147483648
      %v5679 = vxor.u32 %v5647, 2147483648
      %v5680 = vxor.u32 %v5648, 2147483648
      %v5681 = vxor.u32 %v5649, 2147483648
      %v5682 = vxor.u32 %v5650, 2147483648
      %v5683 = vxor.u32 %v5651, 2147483648
      %v5684 = vxor.u32 %v5652, 2147483648
      %v5685 = vxor.u32 %v5653, 2147483648
      %v5686 = vxor.u32 %v5654, 2147483648
      %v5687 = vmul.f32 %v5655, 1.442695
      %v5688 = vpow.pop %v5687
      %v5689 = vmul.f32 %v5656, 1.442695
      %v5690 = vpow.pop %v5689
      %v5691 = vmul.f32 %v5657, 1.442695
      %v5692 = vpow.pop %v5691
      %v5693 = vmul.f32 %v5658, 1.442695
      %v5694 = vpow.pop %v5693
      %v5695 = vmul.f32 %v5659, 1.442695
      %v5696 = vpow.pop %v5695
      %v5697 = vmul.f32 %v5660, 1.442695
      %v5698 = vpow.pop %v5697
      %v5699 = vmul.f32 %v5661, 1.442695
      %v5700 = vpow.pop %v5699
      %v5701 = vmul.f32 %v5662, 1.442695
      %v5702 = vpow.pop %v5701
      %v5703 = vmul.f32 %v5663, 1.442695
      %v5704 = vpow.pop %v5703
      %v5705 = vmul.f32 %v5664, 1.442695
      %v5706 = vpow.pop %v5705
      %v5707 = vmul.f32 %v5665, 1.442695
      %v5708 = vpow.pop %v5707
      %v5709 = vmul.f32 %v5666, 1.442695
      %v5710 = vpow.pop %v5709
      %v5711 = vmul.f32 %v5667, 1.442695
      %v5712 = vpow.pop %v5711
      %v5713 = vmul.f32 %v5668, 1.442695
      %v5714 = vpow.pop %v5713
      %v5715 = vmul.f32 %v5669, 1.442695
      %v5716 = vpow.pop %v5715
      %v5717 = vmul.f32 %v5670, 1.442695
      %v5718 = vpow.pop %v5717
      %v5719 = vmul.f32 %v5671, 1.442695
      %v5720 = vpow.pop %v5719
      %v5721 = vmul.f32 %v5672, 1.442695
      %v5722 = vpow.pop %v5721
      %v5723 = vmul.f32 %v5673, 1.442695
      %v5724 = vpow.pop %v5723
      %v5725 = vmul.f32 %v5674, 1.442695
      %v5726 = vpow.pop %v5725
      %v5727 = vmul.f32 %v5675, 1.442695
      %v5728 = vpow.pop %v5727
      %v5729 = vmul.f32 %v5676, 1.442695
      %v5730 = vpow.pop %v5729
      %v5731 = vmul.f32 %v5677, 1.442695
      %v5732 = vpow.pop %v5731
      %v5733 = vmul.f32 %v5678, 1.442695
      %v5734 = vpow.pop %v5733
      %v5735 = vmul.f32 %v5679, 1.442695
      %v5736 = vpow.pop %v5735
      %v5737 = vmul.f32 %v5680, 1.442695
      %v5738 = vpow.pop %v5737
      %v5739 = vmul.f32 %v5681, 1.442695
      %v5740 = vpow.pop %v5739
      %v5741 = vmul.f32 %v5682, 1.442695
      %v5742 = vpow.pop %v5741
      %v5743 = vmul.f32 %v5683, 1.442695
      %v5744 = vpow.pop %v5743
      %v5745 = vmul.f32 %v5684, 1.442695
      %v5746 = vpow.pop %v5745
      %v5747 = vmul.f32 %v5685, 1.442695
      %v5748 = vpow.pop %v5747
      %v5749 = vmul.f32 %v5686, 1.442695
      %v5750 = vpow.pop %v5749
      %v5751 = vadd.f32 %v5688, 1.0
      %v5752 = vadd.f32 %v5690, 1.0
      %v5753 = vadd.f32 %v5692, 1.0
      %v5754 = vadd.f32 %v5694, 1.0
      %v5755 = vadd.f32 %v5696, 1.0
      %v5756 = vadd.f32 %v5698, 1.0
      %v5757 = vadd.f32 %v5700, 1.0
      %v5758 = vadd.f32 %v5702, 1.0
      %v5759 = vadd.f32 %v5704, 1.0
      %v5760 = vadd.f32 %v5706, 1.0
      %v5761 = vadd.f32 %v5708, 1.0
      %v5762 = vadd.f32 %v5710, 1.0
      %v5763 = vadd.f32 %v5712, 1.0
      %v5764 = vadd.f32 %v5714, 1.0
      %v5765 = vadd.f32 %v5716, 1.0
      %v5766 = vadd.f32 %v5718, 1.0
      %v5767 = vadd.f32 %v5720, 1.0
      %v5768 = vadd.f32 %v5722, 1.0
      %v5769 = vadd.f32 %v5724, 1.0
      %v5770 = vadd.f32 %v5726, 1.0
      %v5771 = vadd.f32 %v5728, 1.0
      %v5772 = vadd.f32 %v5730, 1.0
      %v5773 = vadd.f32 %v5732, 1.0
      %v5774 = vadd.f32 %v5734, 1.0
      %v5775 = vadd.f32 %v5736, 1.0
      %v5776 = vadd.f32 %v5738, 1.0
      %v5777 = vadd.f32 %v5740, 1.0
      %v5778 = vadd.f32 %v5742, 1.0
      %v5779 = vadd.f32 %v5744, 1.0
      %v5780 = vadd.f32 %v5746, 1.0
      %v5781 = vadd.f32 %v5748, 1.0
      %v5782 = vadd.f32 %v5750, 1.0
      %v5783 = vrcp.pop %v5751
      %v5784 = vmul.f32 1.0, %v5783
      %v5785 = vrcp.pop %v5752
      %v5786 = vmul.f32 1.0, %v5785
      %v5787 = vrcp.pop %v5753
      %v5788 = vmul.f32 1.0, %v5787
      %v5789 = vrcp.pop %v5754
      %v5790 = vmul.f32 1.0, %v5789
      %v5791 = vrcp.pop %v5755
      %v5792 = vmul.f32 1.0, %v5791
      %v5793 = vrcp.pop %v5756
      %v5794 = vmul.f32 1.0, %v5793
      %v5795 = vrcp.pop %v5757
      %v5796 = vmul.f32 1.0, %v5795
      %v5797 = vrcp.pop %v5758
      %v5798 = vmul.f32 1.0, %v5797
      %v5799 = vrcp.pop %v5759
      %v5800 = vmul.f32 1.0, %v5799
      %v5801 = vrcp.pop %v5760
      %v5802 = vmul.f32 1.0, %v5801
      %v5803 = vrcp.pop %v5761
      %v5804 = vmul.f32 1.0, %v5803
      %v5805 = vrcp.pop %v5762
      %v5806 = vmul.f32 1.0, %v5805
      %v5807 = vrcp.pop %v5763
      %v5808 = vmul.f32 1.0, %v5807
      %v5809 = vrcp.pop %v5764
      %v5810 = vmul.f32 1.0, %v5809
      %v5811 = vrcp.pop %v5765
      %v5812 = vmul.f32 1.0, %v5811
      %v5813 = vrcp.pop %v5766
      %v5814 = vmul.f32 1.0, %v5813
      %v5815 = vrcp.pop %v5767
      %v5816 = vmul.f32 1.0, %v5815
      %v5817 = vrcp.pop %v5768
      %v5818 = vmul.f32 1.0, %v5817
      %v5819 = vrcp.pop %v5769
      %v5820 = vmul.f32 1.0, %v5819
      %v5821 = vrcp.pop %v5770
      %v5822 = vmul.f32 1.0, %v5821
      %v5823 = vrcp.pop %v5771
      %v5824 = vmul.f32 1.0, %v5823
      %v5825 = vrcp.pop %v5772
      %v5826 = vmul.f32 1.0, %v5825
      %v5827 = vrcp.pop %v5773
      %v5828 = vmul.f32 1.0, %v5827
      %v5829 = vrcp.pop %v5774
      %v5830 = vmul.f32 1.0, %v5829
      %v5831 = vrcp.pop %v5775
      %v5832 = vmul.f32 1.0, %v5831
      %v5833 = vrcp.pop %v5776
      %v5834 = vmul.f32 1.0, %v5833
      %v5835 = vrcp.pop %v5777
      %v5836 = vmul.f32 1.0, %v5835
      %v5837 = vrcp.pop %v5778
      %v5838 = vmul.f32 1.0, %v5837
      %v5839 = vrcp.pop %v5779
      %v5840 = vmul.f32 1.0, %v5839
      %v5841 = vrcp.pop %v5780
      %v5842 = vmul.f32 1.0, %v5841
      %v5843 = vrcp.pop %v5781
      %v5844 = vmul.f32 1.0, %v5843
      %v5845 = vrcp.pop %v5782
      %v5846 = vmul.f32 1.0, %v5845
      %v5847 = vmul.f32 %v5623, %v5784
      %v5848 = vmul.f32 %v5624, %v5786
      %v5849 = vmul.f32 %v5625, %v5788
      %v5850 = vmul.f32 %v5626, %v5790
      %v5851 = vmul.f32 %v5627, %v5792
      %v5852 = vmul.f32 %v5628, %v5794
      %v5853 = vmul.f32 %v5629, %v5796
      %v5854 = vmul.f32 %v5630, %v5798
      %v5855 = vmul.f32 %v5631, %v5800
      %v5856 = vmul.f32 %v5632, %v5802
      %v5857 = vmul.f32 %v5633, %v5804
      %v5858 = vmul.f32 %v5634, %v5806
      %v5859 = vmul.f32 %v5635, %v5808
      %v5860 = vmul.f32 %v5636, %v5810
      %v5861 = vmul.f32 %v5637, %v5812
      %v5862 = vmul.f32 %v5638, %v5814
      %v5863 = vmul.f32 %v5639, %v5816
      %v5864 = vmul.f32 %v5640, %v5818
      %v5865 = vmul.f32 %v5641, %v5820
      %v5866 = vmul.f32 %v5642, %v5822
      %v5867 = vmul.f32 %v5643, %v5824
      %v5868 = vmul.f32 %v5644, %v5826
      %v5869 = vmul.f32 %v5645, %v5828
      %v5870 = vmul.f32 %v5646, %v5830
      %v5871 = vmul.f32 %v5647, %v5832
      %v5872 = vmul.f32 %v5648, %v5834
      %v5873 = vmul.f32 %v5649, %v5836
      %v5874 = vmul.f32 %v5650, %v5838
      %v5875 = vmul.f32 %v5651, %v5840
      %v5876 = vmul.f32 %v5652, %v5842
      %v5877 = vmul.f32 %v5653, %v5844
      %v5878 = vmul.f32 %v5654, %v5846
      %5879 = vst.msk [vmem:[#allocation3] sm:$0xff] %vm5036, 0.0
      %5880 = vst.msk [vmem:[#allocation3 + $0x8] sm:$0xff] %vm5036, 0.0
      %vm5881 = vcmask 58368
      %5882 = vst.msk [vmem:[#allocation3 + $0x10] sm:$0x3] %vm5881, 0.0
      %5883 = vst.msk [vmem:[#allocation3 + $0x18] sm:$0xff] %vm5036, 0.0
      %5884 = vst.msk [vmem:[#allocation3 + $0x20] sm:$0xff] %vm5036, 0.0
      %5885 = vst.msk [vmem:[#allocation3 + $0x28] sm:$0x3] %vm5881, 0.0
      %5886 = vst.msk [vmem:[#allocation3 + $0x30] sm:$0xff] %vm5036, 0.0
      %5887 = vst.msk [vmem:[#allocation3 + $0x38] sm:$0xff] %vm5036, 0.0
      %5888 = vst.msk [vmem:[#allocation3 + $0x40] sm:$0x3] %vm5881, 0.0
      %5889 = vst.msk [vmem:[#allocation3 + $0x48] sm:$0xff] %vm5036, 0.0
      %5890 = vst.msk [vmem:[#allocation3 + $0x50] sm:$0xff] %vm5036, 0.0
      %5891 = vst.msk [vmem:[#allocation3 + $0x58] sm:$0x3] %vm5881, 0.0
      %5892 = vst.msk [vmem:[#allocation3 + $0x60] sm:$0xff] %vm5036, 0.0
      %5893 = vst.msk [vmem:[#allocation3 + $0x68] sm:$0xff] %vm5036, 0.0
      %5894 = vst.msk [vmem:[#allocation3 + $0x70] sm:$0x3] %vm5881, 0.0
      %5895 = vst.msk [vmem:[#allocation3 + $0x78] sm:$0xff] %vm5036, 0.0
      %5896 = vst.msk [vmem:[#allocation3 + $0x80] sm:$0xff] %vm5036, 0.0
      %5897 = vst.msk [vmem:[#allocation3 + $0x88] sm:$0x3] %vm5881, 0.0
      %5898 = vst.msk [vmem:[#allocation3 + $0x90] sm:$0xff] %vm5036, 0.0
      %5899 = vst.msk [vmem:[#allocation3 + $0x98] sm:$0xff] %vm5036, 0.0
      %5900 = vst.msk [vmem:[#allocation3 + $0xa0] sm:$0x3] %vm5881, 0.0
      %5901 = vst.msk [vmem:[#allocation3 + $0xa8] sm:$0xff] %vm5036, 0.0
      %5902 = vst.msk [vmem:[#allocation3 + $0xb0] sm:$0xff] %vm5036, 0.0
      %5903 = vst.msk [vmem:[#allocation3 + $0xb8] sm:$0x3] %vm5881, 0.0
      %5904 = vst.msk [vmem:[#allocation3 + $0xc0] sm:$0xff] %vm5036, 0.0
      %5905 = vst.msk [vmem:[#allocation3 + $0xc8] sm:$0xff] %vm5036, 0.0
      %5906 = vst.msk [vmem:[#allocation3 + $0xd0] sm:$0x3] %vm5881, 0.0
      %5907 = vst.msk [vmem:[#allocation3 + $0xd8] sm:$0xff] %vm5036, 0.0
      %5908 = vst.msk [vmem:[#allocation3 + $0xe0] sm:$0xff] %vm5036, 0.0
      %5909 = vst.msk [vmem:[#allocation3 + $0xe8] sm:$0x3] %vm5881, 0.0
      %5910 = vst.msk [vmem:[#allocation3 + $0xf0] sm:$0xff] %vm5036, 0.0
      %5911 = vst.msk [vmem:[#allocation3 + $0xf8] sm:$0xff] %vm5036, 0.0
      %5912 = vst.msk [vmem:[#allocation3 + $0x100] sm:$0x3] %vm5881, 0.0
      %5913 = vst.msk [vmem:[#allocation3 + $0x108] sm:$0xff] %vm5036, 0.0
      %5914 = vst.msk [vmem:[#allocation3 + $0x110] sm:$0xff] %vm5036, 0.0
      %5915 = vst.msk [vmem:[#allocation3 + $0x118] sm:$0x3] %vm5881, 0.0
      %5916 = vst.msk [vmem:[#allocation3 + $0x120] sm:$0xff] %vm5036, 0.0
      %5917 = vst.msk [vmem:[#allocation3 + $0x128] sm:$0xff] %vm5036, 0.0
      %5918 = vst.msk [vmem:[#allocation3 + $0x130] sm:$0x3] %vm5881, 0.0
      %5919 = vst.msk [vmem:[#allocation3 + $0x138] sm:$0xff] %vm5036, 0.0
      %5920 = vst.msk [vmem:[#allocation3 + $0x140] sm:$0xff] %vm5036, 0.0
      %5921 = vst.msk [vmem:[#allocation3 + $0x148] sm:$0x3] %vm5881, 0.0
      %5922 = vst.msk [vmem:[#allocation3 + $0x150] sm:$0xff] %vm5036, 0.0
      %5923 = vst.msk [vmem:[#allocation3 + $0x158] sm:$0xff] %vm5036, 0.0
      %5924 = vst.msk [vmem:[#allocation3 + $0x160] sm:$0x3] %vm5881, 0.0
      %5925 = vst.msk [vmem:[#allocation3 + $0x168] sm:$0xff] %vm5036, 0.0
      %5926 = vst.msk [vmem:[#allocation3 + $0x170] sm:$0xff] %vm5036, 0.0
      %5927 = vst.msk [vmem:[#allocation3 + $0x178] sm:$0x3] %vm5881, 0.0
      %5928 = vst.msk [vmem:[#allocation3 + $0x180] sm:$0xff] %vm5036, 0.0
      %5929 = vst.msk [vmem:[#allocation3 + $0x188] sm:$0xff] %vm5036, 0.0
      %5930 = vst.msk [vmem:[#allocation3 + $0x190] sm:$0x3] %vm5881, 0.0
      %5931 = vst.msk [vmem:[#allocation3 + $0x198] sm:$0xff] %vm5036, 0.0
      %5932 = vst.msk [vmem:[#allocation3 + $0x1a0] sm:$0xff] %vm5036, 0.0
      %5933 = vst.msk [vmem:[#allocation3 + $0x1a8] sm:$0x3] %vm5881, 0.0
      %s5934 = scalar_lea.vmem [#allocation3], 24
      %5935 = vst.msk [vmem:[%s5934 + $0x1] sm:$0xff] %vm5036, %v5847
      %5936 = vst.msk [vmem:[%s5934 + $0x9] sm:$0xff] %vm5036, %v5848
      %5937 = vst.msk [vmem:[%s5934 + $0x19] sm:$0xff] %vm5036, %v5849
      %5938 = vst.msk [vmem:[%s5934 + $0x21] sm:$0xff] %vm5036, %v5850
      %5939 = vst.msk [vmem:[%s5934 + $0x31] sm:$0xff] %vm5036, %v5851
      %5940 = vst.msk [vmem:[%s5934 + $0x39] sm:$0xff] %vm5036, %v5852
      %5941 = vst.msk [vmem:[%s5934 + $0x49] sm:$0xff] %vm5036, %v5853
      %5942 = vst.msk [vmem:[%s5934 + $0x51] sm:$0xff] %vm5036, %v5854
      %5943 = vst.msk [vmem:[%s5934 + $0x61] sm:$0xff] %vm5036, %v5855
      %5944 = vst.msk [vmem:[%s5934 + $0x69] sm:$0xff] %vm5036, %v5856
      %5945 = vst.msk [vmem:[%s5934 + $0x79] sm:$0xff] %vm5036, %v5857
      %5946 = vst.msk [vmem:[%s5934 + $0x81] sm:$0xff] %vm5036, %v5858
      %5947 = vst.msk [vmem:[%s5934 + $0x91] sm:$0xff] %vm5036, %v5859
      %5948 = vst.msk [vmem:[%s5934 + $0x99] sm:$0xff] %vm5036, %v5860
      %5949 = vst.msk [vmem:[%s5934 + $0xa9] sm:$0xff] %vm5036, %v5861
      %5950 = vst.msk [vmem:[%s5934 + $0xb1] sm:$0xff] %vm5036, %v5862
      %5951 = vst.msk [vmem:[%s5934 + $0xc1] sm:$0xff] %vm5036, %v5863
      %5952 = vst.msk [vmem:[%s5934 + $0xc9] sm:$0xff] %vm5036, %v5864
      %5953 = vst.msk [vmem:[%s5934 + $0xd9] sm:$0xff] %vm5036, %v5865
      %5954 = vst.msk [vmem:[%s5934 + $0xe1] sm:$0xff] %vm5036, %v5866
      %5955 = vst.msk [vmem:[%s5934 + $0xf1] sm:$0xff] %vm5036, %v5867
      %5956 = vst.msk [vmem:[%s5934 + $0xf9] sm:$0xff] %vm5036, %v5868
      %5957 = vst.msk [vmem:[%s5934 + $0x109] sm:$0xff] %vm5036, %v5869
      %5958 = vst.msk [vmem:[%s5934 + $0x111] sm:$0xff] %vm5036, %v5870
      %5959 = vst.msk [vmem:[%s5934 + $0x121] sm:$0xff] %vm5036, %v5871
      %5960 = vst.msk [vmem:[%s5934 + $0x129] sm:$0xff] %vm5036, %v5872
      %5961 = vst.msk [vmem:[%s5934 + $0x139] sm:$0xff] %vm5036, %v5873
      %5962 = vst.msk [vmem:[%s5934 + $0x141] sm:$0xff] %vm5036, %v5874
      %5963 = vst.msk [vmem:[%s5934 + $0x151] sm:$0xff] %vm5036, %v5875
      %5964 = vst.msk [vmem:[%s5934 + $0x159] sm:$0xff] %vm5036, %v5876
      %5965 = vst.msk [vmem:[%s5934 + $0x169] sm:$0xff] %vm5036, %v5877
      %5966 = vst.msk [vmem:[%s5934 + $0x171] sm:$0xff] %vm5036, %v5878
      %v5967 = vld [vmem:[#allocation3] sm:$0xff]
      %v5968 = vld [vmem:[#allocation3 + $0x8] sm:$0xff]
      %v5969 = vld [vmem:[#allocation3 + $0x18] sm:$0xff]
      %v5970 = vld [vmem:[#allocation3 + $0x20] sm:$0xff]
      %v5971 = vld [vmem:[#allocation3 + $0x30] sm:$0xff]
      %v5972 = vld [vmem:[#allocation3 + $0x38] sm:$0xff]
      %v5973 = vld [vmem:[#allocation3 + $0x48] sm:$0xff]
      %v5974 = vld [vmem:[#allocation3 + $0x50] sm:$0xff]
      %v5975 = vld [vmem:[#allocation3 + $0x60] sm:$0xff]
      %v5976 = vld [vmem:[#allocation3 + $0x68] sm:$0xff]
      %v5977 = vld [vmem:[#allocation3 + $0x78] sm:$0xff]
      %v5978 = vld [vmem:[#allocation3 + $0x80] sm:$0xff]
      %v5979 = vld [vmem:[#allocation3 + $0x90] sm:$0xff]
      %v5980 = vld [vmem:[#allocation3 + $0x98] sm:$0xff]
      %v5981 = vld [vmem:[#allocation3 + $0xa8] sm:$0xff]
      %v5982 = vld [vmem:[#allocation3 + $0xb0] sm:$0xff]
      %v5983 = vld [vmem:[#allocation3 + $0xc0] sm:$0xff]
      %v5984 = vld [vmem:[#allocation3 + $0xc8] sm:$0xff]
      %v5985 = vld [vmem:[#allocation3 + $0xd8] sm:$0xff]
      %v5986 = vld [vmem:[#allocation3 + $0xe0] sm:$0xff]
      %v5987 = vld [vmem:[#allocation3 + $0xf0] sm:$0xff]
      %v5988 = vld [vmem:[#allocation3 + $0xf8] sm:$0xff]
      %v5989 = vld [vmem:[#allocation3 + $0x108] sm:$0xff]
      %v5990 = vld [vmem:[#allocation3 + $0x110] sm:$0xff]
      %v5991 = vld [vmem:[#allocation3 + $0x120] sm:$0xff]
      %v5992 = vld [vmem:[#allocation3 + $0x128] sm:$0xff]
      %v5993 = vld [vmem:[#allocation3 + $0x138] sm:$0xff]
      %v5994 = vld [vmem:[#allocation3 + $0x140] sm:$0xff]
      %v5995 = vld [vmem:[#allocation3 + $0x150] sm:$0xff]
      %v5996 = vld [vmem:[#allocation3 + $0x158] sm:$0xff]
      %v5997 = vld [vmem:[#allocation3 + $0x168] sm:$0xff]
      %v5998 = vld [vmem:[#allocation3 + $0x170] sm:$0xff]
      %v5999 = vld [vmem:[%s12] sm:$0xff]
      %v6000 = vld [vmem:[#allocation3 + $0x1] sm:$0xff]
      %v6001 = vld [vmem:[#allocation3 + $0x9] sm:$0xff]
      %v6002 = vld [vmem:[#allocation3 + $0x19] sm:$0xff]
      %v6003 = vld [vmem:[#allocation3 + $0x21] sm:$0xff]
      %v6004 = vld [vmem:[#allocation3 + $0x31] sm:$0xff]
      %v6005 = vld [vmem:[#allocation3 + $0x39] sm:$0xff]
      %v6006 = vld [vmem:[#allocation3 + $0x49] sm:$0xff]
      %v6007 = vld [vmem:[#allocation3 + $0x51] sm:$0xff]
      %v6008 = vld [vmem:[#allocation3 + $0x61] sm:$0xff]
      %v6009 = vld [vmem:[#allocation3 + $0x69] sm:$0xff]
      %v6010 = vld [vmem:[#allocation3 + $0x79] sm:$0xff]
      %v6011 = vld [vmem:[#allocation3 + $0x81] sm:$0xff]
      %v6012 = vld [vmem:[#allocation3 + $0x91] sm:$0xff]
      %v6013 = vld [vmem:[#allocation3 + $0x99] sm:$0xff]
      %v6014 = vld [vmem:[#allocation3 + $0xa9] sm:$0xff]
      %v6015 = vld [vmem:[#allocation3 + $0xb1] sm:$0xff]
      %v6016 = vld [vmem:[#allocation3 + $0xc1] sm:$0xff]
      %v6017 = vld [vmem:[#allocation3 + $0xc9] sm:$0xff]
      %v6018 = vld [vmem:[#allocation3 + $0xd9] sm:$0xff]
      %v6019 = vld [vmem:[#allocation3 + $0xe1] sm:$0xff]
      %v6020 = vld [vmem:[#allocation3 + $0xf1] sm:$0xff]
      %v6021 = vld [vmem:[#allocation3 + $0xf9] sm:$0xff]
      %v6022 = vld [vmem:[#allocation3 + $0x109] sm:$0xff]
      %v6023 = vld [vmem:[#allocation3 + $0x111] sm:$0xff]
      %v6024 = vld [vmem:[#allocation3 + $0x121] sm:$0xff]
      %v6025 = vld [vmem:[#allocation3 + $0x129] sm:$0xff]
      %v6026 = vld [vmem:[#allocation3 + $0x139] sm:$0xff]
      %v6027 = vld [vmem:[#allocation3 + $0x141] sm:$0xff]
      %v6028 = vld [vmem:[#allocation3 + $0x151] sm:$0xff]
      %v6029 = vld [vmem:[#allocation3 + $0x159] sm:$0xff]
      %v6030 = vld [vmem:[#allocation3 + $0x169] sm:$0xff]
      %v6031 = vld [vmem:[#allocation3 + $0x171] sm:$0xff]
      %s6032 = scalar_lea.vmem %s12, 8
      %v6033 = vld [vmem:[%s6032] sm:$0xff]
      %v6035 = vsel %vm5036, %v6000, 0
      %v6038 = vsel %vm5036, %v6001, 0
      %v6041 = vsel %vm5036, %v6002, 0
      %v6044 = vsel %vm5036, %v6003, 0
      %v6047 = vsel %vm5036, %v6004, 0
      %v6050 = vsel %vm5036, %v6005, 0
      %v6053 = vsel %vm5036, %v6006, 0
      %v6056 = vsel %vm5036, %v6007, 0
      %v6059 = vsel %vm5036, %v6008, 0
      %v6062 = vsel %vm5036, %v6009, 0
      %v6065 = vsel %vm5036, %v6010, 0
      %v6068 = vsel %vm5036, %v6011, 0
      %v6071 = vsel %vm5036, %v6012, 0
      %v6074 = vsel %vm5036, %v6013, 0
      %v6077 = vsel %vm5036, %v6014, 0
      %v6080 = vsel %vm5036, %v6015, 0
      %v6083 = vsel %vm5036, %v6016, 0
      %v6086 = vsel %vm5036, %v6017, 0
      %v6089 = vsel %vm5036, %v6018, 0
      %v6092 = vsel %vm5036, %v6019, 0
      %v6095 = vsel %vm5036, %v6020, 0
      %v6098 = vsel %vm5036, %v6021, 0
      %v6101 = vsel %vm5036, %v6022, 0
      %v6104 = vsel %vm5036, %v6023, 0
      %v6107 = vsel %vm5036, %v6024, 0
      %v6110 = vsel %vm5036, %v6025, 0
      %v6113 = vsel %vm5036, %v6026, 0
      %v6116 = vsel %vm5036, %v6027, 0
      %v6119 = vsel %vm5036, %v6028, 0
      %v6122 = vsel %vm5036, %v6029, 0
      %v6125 = vsel %vm5036, %v6030, 0
      %v6128 = vsel %vm5036, %v6031, 0
      %6130 = vmatprep.subr.mxu0 0.0
      %6131 = vmatpush1.msra.mxu0 0.0
      %6132 = vmatprep.subr.mxu0 0.0
      %6133 = vmatpush1.msra.mxu0 0.0
      %6134 = vmatprep.subr.mxu0 0.0
      %6135 = vmatpush1.msra.mxu0 0.0
      %6136 = vmatprep.subr.mxu0 0.0
      %6137 = vmatpush1.msra.mxu0 0.0
      %6138 = vmatprep.subr.mxu0 0.0
      %6139 = vmatpush1.msra.mxu0 0.0
      %6140 = vmatprep.subr.mxu0 0.0
      %6141 = vmatpush1.msra.mxu0 0.0
      %6142 = vmatprep.subr.mxu0 0.0
      %6143 = vmatpush1.msra.mxu0 0.0
      %6144 = vmatprep.subr.mxu0 0.0
      %6145 = vmatpush1.msra.mxu0 0.0
      %6146 = vmatprep.subr.mxu0 0.0
      %6147 = vmatpush1.msra.mxu0 0.0
      %6148 = vmatprep.subr.mxu0 0.0
      %6149 = vmatpush1.msra.mxu0 0.0
      %6150 = vmatprep.subr.mxu0 0.0
      %6151 = vmatpush1.msra.mxu0 0.0
      %6152 = vmatprep.subr.mxu0 0.0
      %6153 = vmatpush1.msra.mxu0 0.0
      %6154 = vmatprep.subr.mxu0 0.0
      %6155 = vmatpush1.msra.mxu0 0.0
      %6156 = vmatprep.subr.mxu0 0.0
      %6157 = vmatpush1.msra.mxu0 0.0
      %6158 = vmatprep.subr.mxu0 0.0
      %6159 = vmatpush1.msra.mxu0 0.0
      %6160 = vmatprep.subr.mxu0 0.0
      %6161 = vmatpush1.msra.mxu0 %v6033
      %6162 = vmatprep.subr.mxu0 0.0
      %6163 = vmatpush2.msra.mxu0 0.0
      %6164 = vmatprep.subr.mxu0 0.0
      %6165 = vmatpush2.msra.mxu0 0.0
      %6166 = vmatprep.subr.mxu0 0.0
      %6167 = vmatpush2.msra.mxu0 0.0
      %6168 = vmatprep.subr.mxu0 0.0
      %6169 = vmatpush2.msra.mxu0 0.0
      %6170 = vmatprep.subr.mxu0 0.0
      %6171 = vmatpush2.msra.mxu0 0.0
      %6172 = vmatprep.subr.mxu0 0.0
      %6173 = vmatpush2.msra.mxu0 0.0
      %6174 = vmatprep.subr.mxu0 0.0
      %6175 = vmatpush2.msra.mxu0 0.0
      %6176 = vmatprep.subr.mxu0 0.0
      %6177 = vmatpush2.msra.mxu0 0.0
      %6178 = vmatprep.subr.mxu0 0.0
      %6179 = vmatpush2.msra.mxu0 0.0
      %6180 = vmatprep.subr.mxu0 0.0
      %6181 = vmatpush2.msra.mxu0 0.0
      %6182 = vmatprep.subr.mxu0 0.0
      %6183 = vmatpush2.msra.mxu0 0.0
      %6184 = vmatprep.subr.mxu0 0.0
      %6185 = vmatpush2.msra.mxu0 0.0
      %6186 = vmatprep.subr.mxu0 0.0
      %6187 = vmatpush2.msra.mxu0 0.0
      %6188 = vmatprep.subr.mxu0 0.0
      %6189 = vmatpush2.msra.mxu0 0.0
      %6190 = vmatprep.subr.mxu0 0.0
      %6191 = vmatpush2.msra.mxu0 0.0
      %6192 = vmatprep.subr.mxu0 0.0
      %6193 = vmatpush2.msra.mxu0 0.0
      %6194 = vmatprep.mubr.f32.mxu0 0.0
      %6195 = vmatmul.mubr.f32.gmra.mxu0 %v6035
      %v6196 = vpop.f32.mrf.mxu0
      %v6197 = vadd.f32 0.0, %v6196
      %v6198 = vpop.f32.mrf.mxu0
      %6199 = vmatprep.mubr.f32.mxu0 0.0
      %6200 = vmatmul.mubr.f32.gmra.mxu0 %v6038
      %v6201 = vpop.f32.mrf.mxu0
      %v6202 = vadd.f32 0.0, %v6201
      %v6203 = vpop.f32.mrf.mxu0
      %6204 = vmatprep.mubr.f32.mxu0 0.0
      %6205 = vmatmul.mubr.f32.gmra.mxu0 %v6041
      %v6206 = vpop.f32.mrf.mxu0
      %v6207 = vadd.f32 0.0, %v6206
      %v6208 = vpop.f32.mrf.mxu0
      %6209 = vmatprep.mubr.f32.mxu0 0.0
      %6210 = vmatmul.mubr.f32.gmra.mxu0 %v6044
      %v6211 = vpop.f32.mrf.mxu0
      %v6212 = vadd.f32 0.0, %v6211
      %v6213 = vpop.f32.mrf.mxu0
      %6214 = vmatprep.mubr.f32.mxu0 0.0
      %6215 = vmatmul.mubr.f32.gmra.mxu0 %v6047
      %v6216 = vpop.f32.mrf.mxu0
      %v6217 = vadd.f32 0.0, %v6216
      %v6218 = vpop.f32.mrf.mxu0
      %6219 = vmatprep.mubr.f32.mxu0 0.0
      %6220 = vmatmul.mubr.f32.gmra.mxu0 %v6050
      %v6221 = vpop.f32.mrf.mxu0
      %v6222 = vadd.f32 0.0, %v6221
      %v6223 = vpop.f32.mrf.mxu0
      %6224 = vmatprep.mubr.f32.mxu0 0.0
      %6225 = vmatmul.mubr.f32.gmra.mxu0 %v6053
      %v6226 = vpop.f32.mrf.mxu0
      %v6227 = vadd.f32 0.0, %v6226
      %v6228 = vpop.f32.mrf.mxu0
      %6229 = vmatprep.mubr.f32.mxu0 0.0
      %6230 = vmatmul.mubr.f32.gmra.mxu0 %v6056
      %v6231 = vpop.f32.mrf.mxu0
      %v6232 = vadd.f32 0.0, %v6231
      %v6233 = vpop.f32.mrf.mxu0
      %6234 = vmatprep.mubr.f32.mxu0 0.0
      %6235 = vmatmul.mubr.f32.gmra.mxu0 %v6059
      %v6236 = vpop.f32.mrf.mxu0
      %v6237 = vadd.f32 0.0, %v6236
      %v6238 = vpop.f32.mrf.mxu0
      %6239 = vmatprep.mubr.f32.mxu0 0.0
      %6240 = vmatmul.mubr.f32.gmra.mxu0 %v6062
      %v6241 = vpop.f32.mrf.mxu0
      %v6242 = vadd.f32 0.0, %v6241
      %v6243 = vpop.f32.mrf.mxu0
      %6244 = vmatprep.mubr.f32.mxu0 0.0
      %6245 = vmatmul.mubr.f32.gmra.mxu0 %v6065
      %v6246 = vpop.f32.mrf.mxu0
      %v6247 = vadd.f32 0.0, %v6246
      %v6248 = vpop.f32.mrf.mxu0
      %6249 = vmatprep.mubr.f32.mxu0 0.0
      %6250 = vmatmul.mubr.f32.gmra.mxu0 %v6068
      %v6251 = vpop.f32.mrf.mxu0
      %v6252 = vadd.f32 0.0, %v6251
      %v6253 = vpop.f32.mrf.mxu0
      %6254 = vmatprep.mubr.f32.mxu0 0.0
      %6255 = vmatmul.mubr.f32.gmra.mxu0 %v6071
      %v6256 = vpop.f32.mrf.mxu0
      %v6257 = vadd.f32 0.0, %v6256
      %v6258 = vpop.f32.mrf.mxu0
      %6259 = vmatprep.mubr.f32.mxu0 0.0
      %6260 = vmatmul.mubr.f32.gmra.mxu0 %v6074
      %v6261 = vpop.f32.mrf.mxu0
      %v6262 = vadd.f32 0.0, %v6261
      %v6263 = vpop.f32.mrf.mxu0
      %6264 = vmatprep.mubr.f32.mxu0 0.0
      %6265 = vmatmul.mubr.f32.gmra.mxu0 %v6077
      %v6266 = vpop.f32.mrf.mxu0
      %v6267 = vadd.f32 0.0, %v6266
      %v6268 = vpop.f32.mrf.mxu0
      %6269 = vmatprep.mubr.f32.mxu0 0.0
      %6270 = vmatmul.mubr.f32.gmra.mxu0 %v6080
      %v6271 = vpop.f32.mrf.mxu0
      %v6272 = vadd.f32 0.0, %v6271
      %v6273 = vpop.f32.mrf.mxu0
      %6274 = vmatprep.mubr.f32.mxu0 0.0
      %6275 = vmatmul.mubr.f32.gmra.mxu0 %v6083
      %v6276 = vpop.f32.mrf.mxu0
      %v6277 = vadd.f32 0.0, %v6276
      %v6278 = vpop.f32.mrf.mxu0
      %6279 = vmatprep.mubr.f32.mxu0 0.0
      %6280 = vmatmul.mubr.f32.gmra.mxu0 %v6086
      %v6281 = vpop.f32.mrf.mxu0
      %v6282 = vadd.f32 0.0, %v6281
      %v6283 = vpop.f32.mrf.mxu0
      %6284 = vmatprep.mubr.f32.mxu0 0.0
      %6285 = vmatmul.mubr.f32.gmra.mxu0 %v6089
      %v6286 = vpop.f32.mrf.mxu0
      %v6287 = vadd.f32 0.0, %v6286
      %v6288 = vpop.f32.mrf.mxu0
      %6289 = vmatprep.mubr.f32.mxu0 0.0
      %6290 = vmatmul.mubr.f32.gmra.mxu0 %v6092
      %v6291 = vpop.f32.mrf.mxu0
      %v6292 = vadd.f32 0.0, %v6291
      %v6293 = vpop.f32.mrf.mxu0
      %6294 = vmatprep.mubr.f32.mxu0 0.0
      %6295 = vmatmul.mubr.f32.gmra.mxu0 %v6095
      %v6296 = vpop.f32.mrf.mxu0
      %v6297 = vadd.f32 0.0, %v6296
      %v6298 = vpop.f32.mrf.mxu0
      %6299 = vmatprep.mubr.f32.mxu0 0.0
      %6300 = vmatmul.mubr.f32.gmra.mxu0 %v6098
      %v6301 = vpop.f32.mrf.mxu0
      %v6302 = vadd.f32 0.0, %v6301
      %v6303 = vpop.f32.mrf.mxu0
      %6304 = vmatprep.mubr.f32.mxu0 0.0
      %6305 = vmatmul.mubr.f32.gmra.mxu0 %v6101
      %v6306 = vpop.f32.mrf.mxu0
      %v6307 = vadd.f32 0.0, %v6306
      %v6308 = vpop.f32.mrf.mxu0
      %6309 = vmatprep.mubr.f32.mxu0 0.0
      %6310 = vmatmul.mubr.f32.gmra.mxu0 %v6104
      %v6311 = vpop.f32.mrf.mxu0
      %v6312 = vadd.f32 0.0, %v6311
      %v6313 = vpop.f32.mrf.mxu0
      %6314 = vmatprep.mubr.f32.mxu0 0.0
      %6315 = vmatmul.mubr.f32.gmra.mxu0 %v6107
      %v6316 = vpop.f32.mrf.mxu0
      %v6317 = vadd.f32 0.0, %v6316
      %v6318 = vpop.f32.mrf.mxu0
      %6319 = vmatprep.mubr.f32.mxu0 0.0
      %6320 = vmatmul.mubr.f32.gmra.mxu0 %v6110
      %v6321 = vpop.f32.mrf.mxu0
      %v6322 = vadd.f32 0.0, %v6321
      %v6323 = vpop.f32.mrf.mxu0
      %6324 = vmatprep.mubr.f32.mxu0 0.0
      %6325 = vmatmul.mubr.f32.gmra.mxu0 %v6113
      %v6326 = vpop.f32.mrf.mxu0
      %v6327 = vadd.f32 0.0, %v6326
      %v6328 = vpop.f32.mrf.mxu0
      %6329 = vmatprep.mubr.f32.mxu0 0.0
      %6330 = vmatmul.mubr.f32.gmra.mxu0 %v6116
      %v6331 = vpop.f32.mrf.mxu0
      %v6332 = vadd.f32 0.0, %v6331
      %v6333 = vpop.f32.mrf.mxu0
      %6334 = vmatprep.mubr.f32.mxu0 0.0
      %6335 = vmatmul.mubr.f32.gmra.mxu0 %v6119
      %v6336 = vpop.f32.mrf.mxu0
      %v6337 = vadd.f32 0.0, %v6336
      %v6338 = vpop.f32.mrf.mxu0
      %6339 = vmatprep.mubr.f32.mxu0 0.0
      %6340 = vmatmul.mubr.f32.gmra.mxu0 %v6122
      %v6341 = vpop.f32.mrf.mxu0
      %v6342 = vadd.f32 0.0, %v6341
      %v6343 = vpop.f32.mrf.mxu0
      %6344 = vmatprep.mubr.f32.mxu0 0.0
      %6345 = vmatmul.mubr.f32.gmra.mxu0 %v6125
      %v6346 = vpop.f32.mrf.mxu0
      %v6347 = vadd.f32 0.0, %v6346
      %v6348 = vpop.f32.mrf.mxu0
      %6349 = vmatprep.mubr.f32.mxu0 0.0
      %6350 = vmatmul.mubr.f32.gmra.mxu0 %v6128
      %v6351 = vpop.f32.mrf.mxu0
      %v6352 = vadd.f32 0.0, %v6351
      %v6353 = vpop.f32.mrf.mxu0
      %6354 = vdwg.mxu0
      %v6356 = vsel %vm5036, %v5967, 0
      %v6359 = vsel %vm5036, %v5968, 0
      %v6362 = vsel %vm5036, %v5969, 0
      %v6365 = vsel %vm5036, %v5970, 0
      %v6368 = vsel %vm5036, %v5971, 0
      %v6371 = vsel %vm5036, %v5972, 0
      %v6374 = vsel %vm5036, %v5973, 0
      %v6377 = vsel %vm5036, %v5974, 0
      %v6380 = vsel %vm5036, %v5975, 0
      %v6383 = vsel %vm5036, %v5976, 0
      %v6386 = vsel %vm5036, %v5977, 0
      %v6389 = vsel %vm5036, %v5978, 0
      %v6392 = vsel %vm5036, %v5979, 0
      %v6395 = vsel %vm5036, %v5980, 0
      %v6398 = vsel %vm5036, %v5981, 0
      %v6401 = vsel %vm5036, %v5982, 0
      %v6404 = vsel %vm5036, %v5983, 0
      %v6407 = vsel %vm5036, %v5984, 0
      %v6410 = vsel %vm5036, %v5985, 0
      %v6413 = vsel %vm5036, %v5986, 0
      %v6416 = vsel %vm5036, %v5987, 0
      %v6419 = vsel %vm5036, %v5988, 0
      %v6422 = vsel %vm5036, %v5989, 0
      %v6425 = vsel %vm5036, %v5990, 0
      %v6428 = vsel %vm5036, %v5991, 0
      %v6431 = vsel %vm5036, %v5992, 0
      %v6434 = vsel %vm5036, %v5993, 0
      %v6437 = vsel %vm5036, %v5994, 0
      %v6440 = vsel %vm5036, %v5995, 0
      %v6443 = vsel %vm5036, %v5996, 0
      %v6446 = vsel %vm5036, %v5997, 0
      %v6449 = vsel %vm5036, %v5998, 0
      %6451 = vmatprep.subr.mxu0 0.0
      %6452 = vmatpush1.msra.mxu0 0.0
      %6453 = vmatprep.subr.mxu0 0.0
      %6454 = vmatpush1.msra.mxu0 0.0
      %6455 = vmatprep.subr.mxu0 0.0
      %6456 = vmatpush1.msra.mxu0 0.0
      %6457 = vmatprep.subr.mxu0 0.0
      %6458 = vmatpush1.msra.mxu0 0.0
      %6459 = vmatprep.subr.mxu0 0.0
      %6460 = vmatpush1.msra.mxu0 0.0
      %6461 = vmatprep.subr.mxu0 0.0
      %6462 = vmatpush1.msra.mxu0 0.0
      %6463 = vmatprep.subr.mxu0 0.0
      %6464 = vmatpush1.msra.mxu0 0.0
      %6465 = vmatprep.subr.mxu0 0.0
      %6466 = vmatpush1.msra.mxu0 0.0
      %6467 = vmatprep.subr.mxu0 0.0
      %6468 = vmatpush1.msra.mxu0 0.0
      %6469 = vmatprep.subr.mxu0 0.0
      %6470 = vmatpush1.msra.mxu0 0.0
      %6471 = vmatprep.subr.mxu0 0.0
      %6472 = vmatpush1.msra.mxu0 0.0
      %6473 = vmatprep.subr.mxu0 0.0
      %6474 = vmatpush1.msra.mxu0 0.0
      %6475 = vmatprep.subr.mxu0 0.0
      %6476 = vmatpush1.msra.mxu0 0.0
      %6477 = vmatprep.subr.mxu0 0.0
      %6478 = vmatpush1.msra.mxu0 0.0
      %6479 = vmatprep.subr.mxu0 0.0
      %6480 = vmatpush1.msra.mxu0 0.0
      %6481 = vmatprep.subr.mxu0 0.0
      %6482 = vmatpush1.msra.mxu0 %v5999
      %6483 = vmatprep.subr.mxu0 0.0
      %6484 = vmatpush2.msra.mxu0 0.0
      %6485 = vmatprep.subr.mxu0 0.0
      %6486 = vmatpush2.msra.mxu0 0.0
      %6487 = vmatprep.subr.mxu0 0.0
      %6488 = vmatpush2.msra.mxu0 0.0
      %6489 = vmatprep.subr.mxu0 0.0
      %6490 = vmatpush2.msra.mxu0 0.0
      %6491 = vmatprep.subr.mxu0 0.0
      %6492 = vmatpush2.msra.mxu0 0.0
      %6493 = vmatprep.subr.mxu0 0.0
      %6494 = vmatpush2.msra.mxu0 0.0
      %6495 = vmatprep.subr.mxu0 0.0
      %6496 = vmatpush2.msra.mxu0 0.0
      %6497 = vmatprep.subr.mxu0 0.0
      %6498 = vmatpush2.msra.mxu0 0.0
      %6499 = vmatprep.subr.mxu0 0.0
      %6500 = vmatpush2.msra.mxu0 0.0
      %6501 = vmatprep.subr.mxu0 0.0
      %6502 = vmatpush2.msra.mxu0 0.0
      %6503 = vmatprep.subr.mxu0 0.0
      %6504 = vmatpush2.msra.mxu0 0.0
      %6505 = vmatprep.subr.mxu0 0.0
      %6506 = vmatpush2.msra.mxu0 0.0
      %6507 = vmatprep.subr.mxu0 0.0
      %6508 = vmatpush2.msra.mxu0 0.0
      %6509 = vmatprep.subr.mxu0 0.0
      %6510 = vmatpush2.msra.mxu0 0.0
      %6511 = vmatprep.subr.mxu0 0.0
      %6512 = vmatpush2.msra.mxu0 0.0
      %6513 = vmatprep.subr.mxu0 0.0
      %6514 = vmatpush2.msra.mxu0 0.0
      %6515 = vmatprep.mubr.f32.mxu0 0.0
      %6516 = vmatmul.mubr.f32.gmra.mxu0 %v6356
      %v6517 = vpop.f32.mrf.mxu0
      %v6518 = vadd.f32 %v6197, %v6517
      %v6519 = vpop.f32.mrf.mxu0
      %6520 = vmatprep.mubr.f32.mxu0 0.0
      %6521 = vmatmul.mubr.f32.gmra.mxu0 %v6359
      %v6522 = vpop.f32.mrf.mxu0
      %v6523 = vadd.f32 %v6202, %v6522
      %v6524 = vpop.f32.mrf.mxu0
      %6525 = vmatprep.mubr.f32.mxu0 0.0
      %6526 = vmatmul.mubr.f32.gmra.mxu0 %v6362
      %v6527 = vpop.f32.mrf.mxu0
      %v6528 = vadd.f32 %v6207, %v6527
      %v6529 = vpop.f32.mrf.mxu0
      %6530 = vmatprep.mubr.f32.mxu0 0.0
      %6531 = vmatmul.mubr.f32.gmra.mxu0 %v6365
      %v6532 = vpop.f32.mrf.mxu0
      %v6533 = vadd.f32 %v6212, %v6532
      %v6534 = vpop.f32.mrf.mxu0
      %6535 = vmatprep.mubr.f32.mxu0 0.0
      %6536 = vmatmul.mubr.f32.gmra.mxu0 %v6368
      %v6537 = vpop.f32.mrf.mxu0
      %v6538 = vadd.f32 %v6217, %v6537
      %v6539 = vpop.f32.mrf.mxu0
      %6540 = vmatprep.mubr.f32.mxu0 0.0
      %6541 = vmatmul.mubr.f32.gmra.mxu0 %v6371
      %v6542 = vpop.f32.mrf.mxu0
      %v6543 = vadd.f32 %v6222, %v6542
      %v6544 = vpop.f32.mrf.mxu0
      %6545 = vmatprep.mubr.f32.mxu0 0.0
      %6546 = vmatmul.mubr.f32.gmra.mxu0 %v6374
      %v6547 = vpop.f32.mrf.mxu0
      %v6548 = vadd.f32 %v6227, %v6547
      %v6549 = vpop.f32.mrf.mxu0
      %6550 = vmatprep.mubr.f32.mxu0 0.0
      %6551 = vmatmul.mubr.f32.gmra.mxu0 %v6377
      %v6552 = vpop.f32.mrf.mxu0
      %v6553 = vadd.f32 %v6232, %v6552
      %v6554 = vpop.f32.mrf.mxu0
      %6555 = vmatprep.mubr.f32.mxu0 0.0
      %6556 = vmatmul.mubr.f32.gmra.mxu0 %v6380
      %v6557 = vpop.f32.mrf.mxu0
      %v6558 = vadd.f32 %v6237, %v6557
      %v6559 = vpop.f32.mrf.mxu0
      %6560 = vmatprep.mubr.f32.mxu0 0.0
      %6561 = vmatmul.mubr.f32.gmra.mxu0 %v6383
      %v6562 = vpop.f32.mrf.mxu0
      %v6563 = vadd.f32 %v6242, %v6562
      %v6564 = vpop.f32.mrf.mxu0
      %6565 = vmatprep.mubr.f32.mxu0 0.0
      %6566 = vmatmul.mubr.f32.gmra.mxu0 %v6386
      %v6567 = vpop.f32.mrf.mxu0
      %v6568 = vadd.f32 %v6247, %v6567
      %v6569 = vpop.f32.mrf.mxu0
      %6570 = vmatprep.mubr.f32.mxu0 0.0
      %6571 = vmatmul.mubr.f32.gmra.mxu0 %v6389
      %v6572 = vpop.f32.mrf.mxu0
      %v6573 = vadd.f32 %v6252, %v6572
      %v6574 = vpop.f32.mrf.mxu0
      %6575 = vmatprep.mubr.f32.mxu0 0.0
      %6576 = vmatmul.mubr.f32.gmra.mxu0 %v6392
      %v6577 = vpop.f32.mrf.mxu0
      %v6578 = vadd.f32 %v6257, %v6577
      %v6579 = vpop.f32.mrf.mxu0
      %6580 = vmatprep.mubr.f32.mxu0 0.0
      %6581 = vmatmul.mubr.f32.gmra.mxu0 %v6395
      %v6582 = vpop.f32.mrf.mxu0
      %v6583 = vadd.f32 %v6262, %v6582
      %v6584 = vpop.f32.mrf.mxu0
      %6585 = vmatprep.mubr.f32.mxu0 0.0
      %6586 = vmatmul.mubr.f32.gmra.mxu0 %v6398
      %v6587 = vpop.f32.mrf.mxu0
      %v6588 = vadd.f32 %v6267, %v6587
      %v6589 = vpop.f32.mrf.mxu0
      %6590 = vmatprep.mubr.f32.mxu0 0.0
      %6591 = vmatmul.mubr.f32.gmra.mxu0 %v6401
      %v6592 = vpop.f32.mrf.mxu0
      %v6593 = vadd.f32 %v6272, %v6592
      %v6594 = vpop.f32.mrf.mxu0
      %6595 = vmatprep.mubr.f32.mxu0 0.0
      %6596 = vmatmul.mubr.f32.gmra.mxu0 %v6404
      %v6597 = vpop.f32.mrf.mxu0
      %v6598 = vadd.f32 %v6277, %v6597
      %v6599 = vpop.f32.mrf.mxu0
      %6600 = vmatprep.mubr.f32.mxu0 0.0
      %6601 = vmatmul.mubr.f32.gmra.mxu0 %v6407
      %v6602 = vpop.f32.mrf.mxu0
      %v6603 = vadd.f32 %v6282, %v6602
      %v6604 = vpop.f32.mrf.mxu0
      %6605 = vmatprep.mubr.f32.mxu0 0.0
      %6606 = vmatmul.mubr.f32.gmra.mxu0 %v6410
      %v6607 = vpop.f32.mrf.mxu0
      %v6608 = vadd.f32 %v6287, %v6607
      %v6609 = vpop.f32.mrf.mxu0
      %6610 = vmatprep.mubr.f32.mxu0 0.0
      %6611 = vmatmul.mubr.f32.gmra.mxu0 %v6413
      %v6612 = vpop.f32.mrf.mxu0
      %v6613 = vadd.f32 %v6292, %v6612
      %v6614 = vpop.f32.mrf.mxu0
      %6615 = vmatprep.mubr.f32.mxu0 0.0
      %6616 = vmatmul.mubr.f32.gmra.mxu0 %v6416
      %v6617 = vpop.f32.mrf.mxu0
      %v6618 = vadd.f32 %v6297, %v6617
      %v6619 = vpop.f32.mrf.mxu0
      %6620 = vmatprep.mubr.f32.mxu0 0.0
      %6621 = vmatmul.mubr.f32.gmra.mxu0 %v6419
      %v6622 = vpop.f32.mrf.mxu0
      %v6623 = vadd.f32 %v6302, %v6622
      %v6624 = vpop.f32.mrf.mxu0
      %6625 = vmatprep.mubr.f32.mxu0 0.0
      %6626 = vmatmul.mubr.f32.gmra.mxu0 %v6422
      %v6627 = vpop.f32.mrf.mxu0
      %v6628 = vadd.f32 %v6307, %v6627
      %v6629 = vpop.f32.mrf.mxu0
      %6630 = vmatprep.mubr.f32.mxu0 0.0
      %6631 = vmatmul.mubr.f32.gmra.mxu0 %v6425
      %v6632 = vpop.f32.mrf.mxu0
      %v6633 = vadd.f32 %v6312, %v6632
      %v6634 = vpop.f32.mrf.mxu0
      %6635 = vmatprep.mubr.f32.mxu0 0.0
      %6636 = vmatmul.mubr.f32.gmra.mxu0 %v6428
      %v6637 = vpop.f32.mrf.mxu0
      %v6638 = vadd.f32 %v6317, %v6637
      %v6639 = vpop.f32.mrf.mxu0
      %6640 = vmatprep.mubr.f32.mxu0 0.0
      %6641 = vmatmul.mubr.f32.gmra.mxu0 %v6431
      %v6642 = vpop.f32.mrf.mxu0
      %v6643 = vadd.f32 %v6322, %v6642
      %v6644 = vpop.f32.mrf.mxu0
      %6645 = vmatprep.mubr.f32.mxu0 0.0
      %6646 = vmatmul.mubr.f32.gmra.mxu0 %v6434
      %v6647 = vpop.f32.mrf.mxu0
      %v6648 = vadd.f32 %v6327, %v6647
      %v6649 = vpop.f32.mrf.mxu0
      %6650 = vmatprep.mubr.f32.mxu0 0.0
      %6651 = vmatmul.mubr.f32.gmra.mxu0 %v6437
      %v6652 = vpop.f32.mrf.mxu0
      %v6653 = vadd.f32 %v6332, %v6652
      %v6654 = vpop.f32.mrf.mxu0
      %6655 = vmatprep.mubr.f32.mxu0 0.0
      %6656 = vmatmul.mubr.f32.gmra.mxu0 %v6440
      %v6657 = vpop.f32.mrf.mxu0
      %v6658 = vadd.f32 %v6337, %v6657
      %v6659 = vpop.f32.mrf.mxu0
      %6660 = vmatprep.mubr.f32.mxu0 0.0
      %6661 = vmatmul.mubr.f32.gmra.mxu0 %v6443
      %v6662 = vpop.f32.mrf.mxu0
      %v6663 = vadd.f32 %v6342, %v6662
      %v6664 = vpop.f32.mrf.mxu0
      %6665 = vmatprep.mubr.f32.mxu0 0.0
      %6666 = vmatmul.mubr.f32.gmra.mxu0 %v6446
      %v6667 = vpop.f32.mrf.mxu0
      %v6668 = vadd.f32 %v6347, %v6667
      %v6669 = vpop.f32.mrf.mxu0
      %6670 = vmatprep.mubr.f32.mxu0 0.0
      %6671 = vmatmul.mubr.f32.gmra.mxu0 %v6449
      %v6672 = vpop.f32.mrf.mxu0
      %v6673 = vadd.f32 %v6352, %v6672
      %v6674 = vpop.f32.mrf.mxu0
      %6675 = vdwg.mxu0
      %v6676 = vld [vmem:[#allocation3 + $0x2] sm:$0xff]
      %v6677 = vld [vmem:[#allocation3 + $0xa] sm:$0xff]
      %v6678 = vld [vmem:[#allocation3 + $0x1a] sm:$0xff]
      %v6679 = vld [vmem:[#allocation3 + $0x22] sm:$0xff]
      %v6680 = vld [vmem:[#allocation3 + $0x32] sm:$0xff]
      %v6681 = vld [vmem:[#allocation3 + $0x3a] sm:$0xff]
      %v6682 = vld [vmem:[#allocation3 + $0x4a] sm:$0xff]
      %v6683 = vld [vmem:[#allocation3 + $0x52] sm:$0xff]
      %v6684 = vld [vmem:[#allocation3 + $0x62] sm:$0xff]
      %v6685 = vld [vmem:[#allocation3 + $0x6a] sm:$0xff]
      %v6686 = vld [vmem:[#allocation3 + $0x7a] sm:$0xff]
      %v6687 = vld [vmem:[#allocation3 + $0x82] sm:$0xff]
      %v6688 = vld [vmem:[#allocation3 + $0x92] sm:$0xff]
      %v6689 = vld [vmem:[#allocation3 + $0x9a] sm:$0xff]
      %v6690 = vld [vmem:[#allocation3 + $0xaa] sm:$0xff]
      %v6691 = vld [vmem:[#allocation3 + $0xb2] sm:$0xff]
      %v6692 = vld [vmem:[#allocation3 + $0xc2] sm:$0xff]
      %v6693 = vld [vmem:[#allocation3 + $0xca] sm:$0xff]
      %v6694 = vld [vmem:[#allocation3 + $0xda] sm:$0xff]
      %v6695 = vld [vmem:[#allocation3 + $0xe2] sm:$0xff]
      %v6696 = vld [vmem:[#allocation3 + $0xf2] sm:$0xff]
      %v6697 = vld [vmem:[#allocation3 + $0xfa] sm:$0xff]
      %v6698 = vld [vmem:[#allocation3 + $0x10a] sm:$0xff]
      %v6699 = vld [vmem:[#allocation3 + $0x112] sm:$0xff]
      %v6700 = vld [vmem:[#allocation3 + $0x122] sm:$0xff]
      %v6701 = vld [vmem:[#allocation3 + $0x12a] sm:$0xff]
      %v6702 = vld [vmem:[#allocation3 + $0x13a] sm:$0xff]
      %v6703 = vld [vmem:[#allocation3 + $0x142] sm:$0xff]
      %v6704 = vld [vmem:[#allocation3 + $0x152] sm:$0xff]
      %v6705 = vld [vmem:[#allocation3 + $0x15a] sm:$0xff]
      %v6706 = vld [vmem:[#allocation3 + $0x16a] sm:$0xff]
      %v6707 = vld [vmem:[#allocation3 + $0x172] sm:$0xff]
      %s6708 = scalar_lea.vmem %s12, 16
      %v6709 = vld [vmem:[%s6708] sm:$0xff]
      %v6711 = vsel %vm5036, %v6676, 0
      %v6714 = vsel %vm5036, %v6677, 0
      %v6717 = vsel %vm5036, %v6678, 0
      %v6720 = vsel %vm5036, %v6679, 0
      %v6723 = vsel %vm5036, %v6680, 0
      %v6726 = vsel %vm5036, %v6681, 0
      %v6729 = vsel %vm5036, %v6682, 0
      %v6732 = vsel %vm5036, %v6683, 0
      %v6735 = vsel %vm5036, %v6684, 0
      %v6738 = vsel %vm5036, %v6685, 0
      %v6741 = vsel %vm5036, %v6686, 0
      %v6744 = vsel %vm5036, %v6687, 0
      %v6747 = vsel %vm5036, %v6688, 0
      %v6750 = vsel %vm5036, %v6689, 0
      %v6753 = vsel %vm5036, %v6690, 0
      %v6756 = vsel %vm5036, %v6691, 0
      %v6759 = vsel %vm5036, %v6692, 0
      %v6762 = vsel %vm5036, %v6693, 0
      %v6765 = vsel %vm5036, %v6694, 0
      %v6768 = vsel %vm5036, %v6695, 0
      %v6771 = vsel %vm5036, %v6696, 0
      %v6774 = vsel %vm5036, %v6697, 0
      %v6777 = vsel %vm5036, %v6698, 0
      %v6780 = vsel %vm5036, %v6699, 0
      %v6783 = vsel %vm5036, %v6700, 0
      %v6786 = vsel %vm5036, %v6701, 0
      %v6789 = vsel %vm5036, %v6702, 0
      %v6792 = vsel %vm5036, %v6703, 0
      %v6795 = vsel %vm5036, %v6704, 0
      %v6798 = vsel %vm5036, %v6705, 0
      %v6801 = vsel %vm5036, %v6706, 0
      %v6804 = vsel %vm5036, %v6707, 0
      %6806 = vmatprep.subr.mxu0 0.0
      %6807 = vmatpush1.msra.mxu0 0.0
      %6808 = vmatprep.subr.mxu0 0.0
      %6809 = vmatpush1.msra.mxu0 0.0
      %6810 = vmatprep.subr.mxu0 0.0
      %6811 = vmatpush1.msra.mxu0 0.0
      %6812 = vmatprep.subr.mxu0 0.0
      %6813 = vmatpush1.msra.mxu0 0.0
      %6814 = vmatprep.subr.mxu0 0.0
      %6815 = vmatpush1.msra.mxu0 0.0
      %6816 = vmatprep.subr.mxu0 0.0
      %6817 = vmatpush1.msra.mxu0 0.0
      %6818 = vmatprep.subr.mxu0 0.0
      %6819 = vmatpush1.msra.mxu0 0.0
      %6820 = vmatprep.subr.mxu0 0.0
      %6821 = vmatpush1.msra.mxu0 0.0
      %6822 = vmatprep.subr.mxu0 0.0
      %6823 = vmatpush1.msra.mxu0 0.0
      %6824 = vmatprep.subr.mxu0 0.0
      %6825 = vmatpush1.msra.mxu0 0.0
      %6826 = vmatprep.subr.mxu0 0.0
      %6827 = vmatpush1.msra.mxu0 0.0
      %6828 = vmatprep.subr.mxu0 0.0
      %6829 = vmatpush1.msra.mxu0 0.0
      %6830 = vmatprep.subr.mxu0 0.0
      %6831 = vmatpush1.msra.mxu0 0.0
      %6832 = vmatprep.subr.mxu0 0.0
      %6833 = vmatpush1.msra.mxu0 0.0
      %6834 = vmatprep.subr.mxu0 0.0
      %6835 = vmatpush1.msra.mxu0 0.0
      %6836 = vmatprep.subr.mxu0 0.0
      %6837 = vmatpush1.msra.mxu0 %v6709
      %6838 = vmatprep.subr.mxu0 0.0
      %6839 = vmatpush2.msra.mxu0 0.0
      %6840 = vmatprep.subr.mxu0 0.0
      %6841 = vmatpush2.msra.mxu0 0.0
      %6842 = vmatprep.subr.mxu0 0.0
      %6843 = vmatpush2.msra.mxu0 0.0
      %6844 = vmatprep.subr.mxu0 0.0
      %6845 = vmatpush2.msra.mxu0 0.0
      %6846 = vmatprep.subr.mxu0 0.0
      %6847 = vmatpush2.msra.mxu0 0.0
      %6848 = vmatprep.subr.mxu0 0.0
      %6849 = vmatpush2.msra.mxu0 0.0
      %6850 = vmatprep.subr.mxu0 0.0
      %6851 = vmatpush2.msra.mxu0 0.0
      %6852 = vmatprep.subr.mxu0 0.0
      %6853 = vmatpush2.msra.mxu0 0.0
      %6854 = vmatprep.subr.mxu0 0.0
      %6855 = vmatpush2.msra.mxu0 0.0
      %6856 = vmatprep.subr.mxu0 0.0
      %6857 = vmatpush2.msra.mxu0 0.0
      %6858 = vmatprep.subr.mxu0 0.0
      %6859 = vmatpush2.msra.mxu0 0.0
      %6860 = vmatprep.subr.mxu0 0.0
      %6861 = vmatpush2.msra.mxu0 0.0
      %6862 = vmatprep.subr.mxu0 0.0
      %6863 = vmatpush2.msra.mxu0 0.0
      %6864 = vmatprep.subr.mxu0 0.0
      %6865 = vmatpush2.msra.mxu0 0.0
      %6866 = vmatprep.subr.mxu0 0.0
      %6867 = vmatpush2.msra.mxu0 0.0
      %6868 = vmatprep.subr.mxu0 0.0
      %6869 = vmatpush2.msra.mxu0 0.0
      %6870 = vmatprep.mubr.f32.mxu0 0.0
      %6871 = vmatmul.mubr.f32.gmra.mxu0 %v6711
      %v6872 = vpop.f32.mrf.mxu0
      %v6873 = vadd.f32 0.0, %v6872
      %v6874 = vpop.f32.mrf.mxu0
      %6875 = vmatprep.mubr.f32.mxu0 0.0
      %6876 = vmatmul.mubr.f32.gmra.mxu0 %v6714
      %v6877 = vpop.f32.mrf.mxu0
      %v6878 = vadd.f32 0.0, %v6877
      %v6879 = vpop.f32.mrf.mxu0
      %6880 = vmatprep.mubr.f32.mxu0 0.0
      %6881 = vmatmul.mubr.f32.gmra.mxu0 %v6717
      %v6882 = vpop.f32.mrf.mxu0
      %v6883 = vadd.f32 0.0, %v6882
      %v6884 = vpop.f32.mrf.mxu0
      %6885 = vmatprep.mubr.f32.mxu0 0.0
      %6886 = vmatmul.mubr.f32.gmra.mxu0 %v6720
      %v6887 = vpop.f32.mrf.mxu0
      %v6888 = vadd.f32 0.0, %v6887
      %v6889 = vpop.f32.mrf.mxu0
      %6890 = vmatprep.mubr.f32.mxu0 0.0
      %6891 = vmatmul.mubr.f32.gmra.mxu0 %v6723
      %v6892 = vpop.f32.mrf.mxu0
      %v6893 = vadd.f32 0.0, %v6892
      %v6894 = vpop.f32.mrf.mxu0
      %6895 = vmatprep.mubr.f32.mxu0 0.0
      %6896 = vmatmul.mubr.f32.gmra.mxu0 %v6726
      %v6897 = vpop.f32.mrf.mxu0
      %v6898 = vadd.f32 0.0, %v6897
      %v6899 = vpop.f32.mrf.mxu0
      %6900 = vmatprep.mubr.f32.mxu0 0.0
      %6901 = vmatmul.mubr.f32.gmra.mxu0 %v6729
      %v6902 = vpop.f32.mrf.mxu0
      %v6903 = vadd.f32 0.0, %v6902
      %v6904 = vpop.f32.mrf.mxu0
      %6905 = vmatprep.mubr.f32.mxu0 0.0
      %6906 = vmatmul.mubr.f32.gmra.mxu0 %v6732
      %v6907 = vpop.f32.mrf.mxu0
      %v6908 = vadd.f32 0.0, %v6907
      %v6909 = vpop.f32.mrf.mxu0
      %6910 = vmatprep.mubr.f32.mxu0 0.0
      %6911 = vmatmul.mubr.f32.gmra.mxu0 %v6735
      %v6912 = vpop.f32.mrf.mxu0
      %v6913 = vadd.f32 0.0, %v6912
      %v6914 = vpop.f32.mrf.mxu0
      %6915 = vmatprep.mubr.f32.mxu0 0.0
      %6916 = vmatmul.mubr.f32.gmra.mxu0 %v6738
      %v6917 = vpop.f32.mrf.mxu0
      %v6918 = vadd.f32 0.0, %v6917
      %v6919 = vpop.f32.mrf.mxu0
      %6920 = vmatprep.mubr.f32.mxu0 0.0
      %6921 = vmatmul.mubr.f32.gmra.mxu0 %v6741
      %v6922 = vpop.f32.mrf.mxu0
      %v6923 = vadd.f32 0.0, %v6922
      %v6924 = vpop.f32.mrf.mxu0
      %6925 = vmatprep.mubr.f32.mxu0 0.0
      %6926 = vmatmul.mubr.f32.gmra.mxu0 %v6744
      %v6927 = vpop.f32.mrf.mxu0
      %v6928 = vadd.f32 0.0, %v6927
      %v6929 = vpop.f32.mrf.mxu0
      %6930 = vmatprep.mubr.f32.mxu0 0.0
      %6931 = vmatmul.mubr.f32.gmra.mxu0 %v6747
      %v6932 = vpop.f32.mrf.mxu0
      %v6933 = vadd.f32 0.0, %v6932
      %v6934 = vpop.f32.mrf.mxu0
      %6935 = vmatprep.mubr.f32.mxu0 0.0
      %6936 = vmatmul.mubr.f32.gmra.mxu0 %v6750
      %v6937 = vpop.f32.mrf.mxu0
      %v6938 = vadd.f32 0.0, %v6937
      %v6939 = vpop.f32.mrf.mxu0
      %6940 = vmatprep.mubr.f32.mxu0 0.0
      %6941 = vmatmul.mubr.f32.gmra.mxu0 %v6753
      %v6942 = vpop.f32.mrf.mxu0
      %v6943 = vadd.f32 0.0, %v6942
      %v6944 = vpop.f32.mrf.mxu0
      %6945 = vmatprep.mubr.f32.mxu0 0.0
      %6946 = vmatmul.mubr.f32.gmra.mxu0 %v6756
      %v6947 = vpop.f32.mrf.mxu0
      %v6948 = vadd.f32 0.0, %v6947
      %v6949 = vpop.f32.mrf.mxu0
      %6950 = vmatprep.mubr.f32.mxu0 0.0
      %6951 = vmatmul.mubr.f32.gmra.mxu0 %v6759
      %v6952 = vpop.f32.mrf.mxu0
      %v6953 = vadd.f32 0.0, %v6952
      %v6954 = vpop.f32.mrf.mxu0
      %6955 = vmatprep.mubr.f32.mxu0 0.0
      %6956 = vmatmul.mubr.f32.gmra.mxu0 %v6762
      %v6957 = vpop.f32.mrf.mxu0
      %v6958 = vadd.f32 0.0, %v6957
      %v6959 = vpop.f32.mrf.mxu0
      %6960 = vmatprep.mubr.f32.mxu0 0.0
      %6961 = vmatmul.mubr.f32.gmra.mxu0 %v6765
      %v6962 = vpop.f32.mrf.mxu0
      %v6963 = vadd.f32 0.0, %v6962
      %v6964 = vpop.f32.mrf.mxu0
      %6965 = vmatprep.mubr.f32.mxu0 0.0
      %6966 = vmatmul.mubr.f32.gmra.mxu0 %v6768
      %v6967 = vpop.f32.mrf.mxu0
      %v6968 = vadd.f32 0.0, %v6967
      %v6969 = vpop.f32.mrf.mxu0
      %6970 = vmatprep.mubr.f32.mxu0 0.0
      %6971 = vmatmul.mubr.f32.gmra.mxu0 %v6771
      %v6972 = vpop.f32.mrf.mxu0
      %v6973 = vadd.f32 0.0, %v6972
      %v6974 = vpop.f32.mrf.mxu0
      %6975 = vmatprep.mubr.f32.mxu0 0.0
      %6976 = vmatmul.mubr.f32.gmra.mxu0 %v6774
      %v6977 = vpop.f32.mrf.mxu0
      %v6978 = vadd.f32 0.0, %v6977
      %v6979 = vpop.f32.mrf.mxu0
      %6980 = vmatprep.mubr.f32.mxu0 0.0
      %6981 = vmatmul.mubr.f32.gmra.mxu0 %v6777
      %v6982 = vpop.f32.mrf.mxu0
      %v6983 = vadd.f32 0.0, %v6982
      %v6984 = vpop.f32.mrf.mxu0
      %6985 = vmatprep.mubr.f32.mxu0 0.0
      %6986 = vmatmul.mubr.f32.gmra.mxu0 %v6780
      %v6987 = vpop.f32.mrf.mxu0
      %v6988 = vadd.f32 0.0, %v6987
      %v6989 = vpop.f32.mrf.mxu0
      %6990 = vmatprep.mubr.f32.mxu0 0.0
      %6991 = vmatmul.mubr.f32.gmra.mxu0 %v6783
      %v6992 = vpop.f32.mrf.mxu0
      %v6993 = vadd.f32 0.0, %v6992
      %v6994 = vpop.f32.mrf.mxu0
      %6995 = vmatprep.mubr.f32.mxu0 0.0
      %6996 = vmatmul.mubr.f32.gmra.mxu0 %v6786
      %v6997 = vpop.f32.mrf.mxu0
      %v6998 = vadd.f32 0.0, %v6997
      %v6999 = vpop.f32.mrf.mxu0
      %7000 = vmatprep.mubr.f32.mxu0 0.0
      %7001 = vmatmul.mubr.f32.gmra.mxu0 %v6789
      %v7002 = vpop.f32.mrf.mxu0
      %v7003 = vadd.f32 0.0, %v7002
      %v7004 = vpop.f32.mrf.mxu0
      %7005 = vmatprep.mubr.f32.mxu0 0.0
      %7006 = vmatmul.mubr.f32.gmra.mxu0 %v6792
      %v7007 = vpop.f32.mrf.mxu0
      %v7008 = vadd.f32 0.0, %v7007
      %v7009 = vpop.f32.mrf.mxu0
      %7010 = vmatprep.mubr.f32.mxu0 0.0
      %7011 = vmatmul.mubr.f32.gmra.mxu0 %v6795
      %v7012 = vpop.f32.mrf.mxu0
      %v7013 = vadd.f32 0.0, %v7012
      %v7014 = vpop.f32.mrf.mxu0
      %7015 = vmatprep.mubr.f32.mxu0 0.0
      %7016 = vmatmul.mubr.f32.gmra.mxu0 %v6798
      %v7017 = vpop.f32.mrf.mxu0
      %v7018 = vadd.f32 0.0, %v7017
      %v7019 = vpop.f32.mrf.mxu0
      %7020 = vmatprep.mubr.f32.mxu0 0.0
      %7021 = vmatmul.mubr.f32.gmra.mxu0 %v6801
      %v7022 = vpop.f32.mrf.mxu0
      %v7023 = vadd.f32 0.0, %v7022
      %v7024 = vpop.f32.mrf.mxu0
      %7025 = vmatprep.mubr.f32.mxu0 0.0
      %7026 = vmatmul.mubr.f32.gmra.mxu0 %v6804
      %v7027 = vpop.f32.mrf.mxu0
      %v7028 = vadd.f32 0.0, %v7027
      %v7029 = vpop.f32.mrf.mxu0
      %7030 = vdwg.mxu0
      %v7031 = vadd.f32 %v6518, %v6873
      %v7032 = vadd.f32 %v6523, %v6878
      %v7033 = vadd.f32 %v6528, %v6883
      %v7034 = vadd.f32 %v6533, %v6888
      %v7035 = vadd.f32 %v6538, %v6893
      %v7036 = vadd.f32 %v6543, %v6898
      %v7037 = vadd.f32 %v6548, %v6903
      %v7038 = vadd.f32 %v6553, %v6908
      %v7039 = vadd.f32 %v6558, %v6913
      %v7040 = vadd.f32 %v6563, %v6918
      %v7041 = vadd.f32 %v6568, %v6923
      %v7042 = vadd.f32 %v6573, %v6928
      %v7043 = vadd.f32 %v6578, %v6933
      %v7044 = vadd.f32 %v6583, %v6938
      %v7045 = vadd.f32 %v6588, %v6943
      %v7046 = vadd.f32 %v6593, %v6948
      %v7047 = vadd.f32 %v6598, %v6953
      %v7048 = vadd.f32 %v6603, %v6958
      %v7049 = vadd.f32 %v6608, %v6963
      %v7050 = vadd.f32 %v6613, %v6968
      %v7051 = vadd.f32 %v6618, %v6973
      %v7052 = vadd.f32 %v6623, %v6978
      %v7053 = vadd.f32 %v6628, %v6983
      %v7054 = vadd.f32 %v6633, %v6988
      %v7055 = vadd.f32 %v6638, %v6993
      %v7056 = vadd.f32 %v6643, %v6998
      %v7057 = vadd.f32 %v6648, %v7003
      %v7058 = vadd.f32 %v6653, %v7008
      %v7059 = vadd.f32 %v6658, %v7013
      %v7060 = vadd.f32 %v6663, %v7018
      %v7061 = vadd.f32 %v6668, %v7023
      %v7062 = vadd.f32 %v6673, %v7028
      %v7063 = vld [vmem:[%s5934] sm:$0xff]
      %v7064 = vld [vmem:[%s5934 + $0x8] sm:$0xff]
      %v7065 = vld [vmem:[%s5934 + $0x18] sm:$0xff]
      %v7066 = vld [vmem:[%s5934 + $0x20] sm:$0xff]
      %v7067 = vld [vmem:[%s5934 + $0x30] sm:$0xff]
      %v7068 = vld [vmem:[%s5934 + $0x38] sm:$0xff]
      %v7069 = vld [vmem:[%s5934 + $0x48] sm:$0xff]
      %v7070 = vld [vmem:[%s5934 + $0x50] sm:$0xff]
      %v7071 = vld [vmem:[%s5934 + $0x60] sm:$0xff]
      %v7072 = vld [vmem:[%s5934 + $0x68] sm:$0xff]
      %v7073 = vld [vmem:[%s5934 + $0x78] sm:$0xff]
      %v7074 = vld [vmem:[%s5934 + $0x80] sm:$0xff]
      %v7075 = vld [vmem:[%s5934 + $0x90] sm:$0xff]
      %v7076 = vld [vmem:[%s5934 + $0x98] sm:$0xff]
      %v7077 = vld [vmem:[%s5934 + $0xa8] sm:$0xff]
      %v7078 = vld [vmem:[%s5934 + $0xb0] sm:$0xff]
      %v7079 = vld [vmem:[%s5934 + $0xc0] sm:$0xff]
      %v7080 = vld [vmem:[%s5934 + $0xc8] sm:$0xff]
      %v7081 = vld [vmem:[%s5934 + $0xd8] sm:$0xff]
      %v7082 = vld [vmem:[%s5934 + $0xe0] sm:$0xff]
      %v7083 = vld [vmem:[%s5934 + $0xf0] sm:$0xff]
      %v7084 = vld [vmem:[%s5934 + $0xf8] sm:$0xff]
      %v7085 = vld [vmem:[%s5934 + $0x108] sm:$0xff]
      %v7086 = vld [vmem:[%s5934 + $0x110] sm:$0xff]
      %v7087 = vld [vmem:[%s5934 + $0x120] sm:$0xff]
      %v7088 = vld [vmem:[%s5934 + $0x128] sm:$0xff]
      %v7089 = vld [vmem:[%s5934 + $0x138] sm:$0xff]
      %v7090 = vld [vmem:[%s5934 + $0x140] sm:$0xff]
      %v7091 = vld [vmem:[%s5934 + $0x150] sm:$0xff]
      %v7092 = vld [vmem:[%s5934 + $0x158] sm:$0xff]
      %v7093 = vld [vmem:[%s5934 + $0x168] sm:$0xff]
      %v7094 = vld [vmem:[%s5934 + $0x170] sm:$0xff]
      %s7095 = scalar_lea.vmem %s12, 24
      %v7096 = vld [vmem:[%s7095] sm:$0xff]
      %v7098 = vsel %vm5036, %v7063, 0
      %v7101 = vsel %vm5036, %v7064, 0
      %v7104 = vsel %vm5036, %v7065, 0
      %v7107 = vsel %vm5036, %v7066, 0
      %v7110 = vsel %vm5036, %v7067, 0
      %v7113 = vsel %vm5036, %v7068, 0
      %v7116 = vsel %vm5036, %v7069, 0
      %v7119 = vsel %vm5036, %v7070, 0
      %v7122 = vsel %vm5036, %v7071, 0
      %v7125 = vsel %vm5036, %v7072, 0
      %v7128 = vsel %vm5036, %v7073, 0
      %v7131 = vsel %vm5036, %v7074, 0
      %v7134 = vsel %vm5036, %v7075, 0
      %v7137 = vsel %vm5036, %v7076, 0
      %v7140 = vsel %vm5036, %v7077, 0
      %v7143 = vsel %vm5036, %v7078, 0
      %v7146 = vsel %vm5036, %v7079, 0
      %v7149 = vsel %vm5036, %v7080, 0
      %v7152 = vsel %vm5036, %v7081, 0
      %v7155 = vsel %vm5036, %v7082, 0
      %v7158 = vsel %vm5036, %v7083, 0
      %v7161 = vsel %vm5036, %v7084, 0
      %v7164 = vsel %vm5036, %v7085, 0
      %v7167 = vsel %vm5036, %v7086, 0
      %v7170 = vsel %vm5036, %v7087, 0
      %v7173 = vsel %vm5036, %v7088, 0
      %v7176 = vsel %vm5036, %v7089, 0
      %v7179 = vsel %vm5036, %v7090, 0
      %v7182 = vsel %vm5036, %v7091, 0
      %v7185 = vsel %vm5036, %v7092, 0
      %v7188 = vsel %vm5036, %v7093, 0
      %v7191 = vsel %vm5036, %v7094, 0
      %7193 = vmatprep.subr.mxu0 0.0
      %7194 = vmatpush1.msra.mxu0 0.0
      %7195 = vmatprep.subr.mxu0 0.0
      %7196 = vmatpush1.msra.mxu0 0.0
      %7197 = vmatprep.subr.mxu0 0.0
      %7198 = vmatpush1.msra.mxu0 0.0
      %7199 = vmatprep.subr.mxu0 0.0
      %7200 = vmatpush1.msra.mxu0 0.0
      %7201 = vmatprep.subr.mxu0 0.0
      %7202 = vmatpush1.msra.mxu0 0.0
      %7203 = vmatprep.subr.mxu0 0.0
      %7204 = vmatpush1.msra.mxu0 0.0
      %7205 = vmatprep.subr.mxu0 0.0
      %7206 = vmatpush1.msra.mxu0 0.0
      %7207 = vmatprep.subr.mxu0 0.0
      %7208 = vmatpush1.msra.mxu0 0.0
      %7209 = vmatprep.subr.mxu0 0.0
      %7210 = vmatpush1.msra.mxu0 0.0
      %7211 = vmatprep.subr.mxu0 0.0
      %7212 = vmatpush1.msra.mxu0 0.0
      %7213 = vmatprep.subr.mxu0 0.0
      %7214 = vmatpush1.msra.mxu0 0.0
      %7215 = vmatprep.subr.mxu0 0.0
      %7216 = vmatpush1.msra.mxu0 0.0
      %7217 = vmatprep.subr.mxu0 0.0
      %7218 = vmatpush1.msra.mxu0 0.0
      %7219 = vmatprep.subr.mxu0 0.0
      %7220 = vmatpush1.msra.mxu0 0.0
      %7221 = vmatprep.subr.mxu0 0.0
      %7222 = vmatpush1.msra.mxu0 0.0
      %7223 = vmatprep.subr.mxu0 0.0
      %7224 = vmatpush1.msra.mxu0 %v7096
      %7225 = vmatprep.subr.mxu0 0.0
      %7226 = vmatpush2.msra.mxu0 0.0
      %7227 = vmatprep.subr.mxu0 0.0
      %7228 = vmatpush2.msra.mxu0 0.0
      %7229 = vmatprep.subr.mxu0 0.0
      %7230 = vmatpush2.msra.mxu0 0.0
      %7231 = vmatprep.subr.mxu0 0.0
      %7232 = vmatpush2.msra.mxu0 0.0
      %7233 = vmatprep.subr.mxu0 0.0
      %7234 = vmatpush2.msra.mxu0 0.0
      %7235 = vmatprep.subr.mxu0 0.0
      %7236 = vmatpush2.msra.mxu0 0.0
      %7237 = vmatprep.subr.mxu0 0.0
      %7238 = vmatpush2.msra.mxu0 0.0
      %7239 = vmatprep.subr.mxu0 0.0
      %7240 = vmatpush2.msra.mxu0 0.0
      %7241 = vmatprep.subr.mxu0 0.0
      %7242 = vmatpush2.msra.mxu0 0.0
      %7243 = vmatprep.subr.mxu0 0.0
      %7244 = vmatpush2.msra.mxu0 0.0
      %7245 = vmatprep.subr.mxu0 0.0
      %7246 = vmatpush2.msra.mxu0 0.0
      %7247 = vmatprep.subr.mxu0 0.0
      %7248 = vmatpush2.msra.mxu0 0.0
      %7249 = vmatprep.subr.mxu0 0.0
      %7250 = vmatpush2.msra.mxu0 0.0
      %7251 = vmatprep.subr.mxu0 0.0
      %7252 = vmatpush2.msra.mxu0 0.0
      %7253 = vmatprep.subr.mxu0 0.0
      %7254 = vmatpush2.msra.mxu0 0.0
      %7255 = vmatprep.subr.mxu0 0.0
      %7256 = vmatpush2.msra.mxu0 0.0
      %7257 = vmatprep.mubr.f32.mxu0 0.0
      %7258 = vmatmul.mubr.f32.gmra.mxu0 %v7098
      %v7259 = vpop.f32.mrf.mxu0
      %v7260 = vadd.f32 0.0, %v7259
      %v7261 = vpop.f32.mrf.mxu0
      %7262 = vmatprep.mubr.f32.mxu0 0.0
      %7263 = vmatmul.mubr.f32.gmra.mxu0 %v7101
      %v7264 = vpop.f32.mrf.mxu0
      %v7265 = vadd.f32 0.0, %v7264
      %v7266 = vpop.f32.mrf.mxu0
      %7267 = vmatprep.mubr.f32.mxu0 0.0
      %7268 = vmatmul.mubr.f32.gmra.mxu0 %v7104
      %v7269 = vpop.f32.mrf.mxu0
      %v7270 = vadd.f32 0.0, %v7269
      %v7271 = vpop.f32.mrf.mxu0
      %7272 = vmatprep.mubr.f32.mxu0 0.0
      %7273 = vmatmul.mubr.f32.gmra.mxu0 %v7107
      %v7274 = vpop.f32.mrf.mxu0
      %v7275 = vadd.f32 0.0, %v7274
      %v7276 = vpop.f32.mrf.mxu0
      %7277 = vmatprep.mubr.f32.mxu0 0.0
      %7278 = vmatmul.mubr.f32.gmra.mxu0 %v7110
      %v7279 = vpop.f32.mrf.mxu0
      %v7280 = vadd.f32 0.0, %v7279
      %v7281 = vpop.f32.mrf.mxu0
      %7282 = vmatprep.mubr.f32.mxu0 0.0
      %7283 = vmatmul.mubr.f32.gmra.mxu0 %v7113
      %v7284 = vpop.f32.mrf.mxu0
      %v7285 = vadd.f32 0.0, %v7284
      %v7286 = vpop.f32.mrf.mxu0
      %7287 = vmatprep.mubr.f32.mxu0 0.0
      %7288 = vmatmul.mubr.f32.gmra.mxu0 %v7116
      %v7289 = vpop.f32.mrf.mxu0
      %v7290 = vadd.f32 0.0, %v7289
      %v7291 = vpop.f32.mrf.mxu0
      %7292 = vmatprep.mubr.f32.mxu0 0.0
      %7293 = vmatmul.mubr.f32.gmra.mxu0 %v7119
      %v7294 = vpop.f32.mrf.mxu0
      %v7295 = vadd.f32 0.0, %v7294
      %v7296 = vpop.f32.mrf.mxu0
      %7297 = vmatprep.mubr.f32.mxu0 0.0
      %7298 = vmatmul.mubr.f32.gmra.mxu0 %v7122
      %v7299 = vpop.f32.mrf.mxu0
      %v7300 = vadd.f32 0.0, %v7299
      %v7301 = vpop.f32.mrf.mxu0
      %7302 = vmatprep.mubr.f32.mxu0 0.0
      %7303 = vmatmul.mubr.f32.gmra.mxu0 %v7125
      %v7304 = vpop.f32.mrf.mxu0
      %v7305 = vadd.f32 0.0, %v7304
      %v7306 = vpop.f32.mrf.mxu0
      %7307 = vmatprep.mubr.f32.mxu0 0.0
      %7308 = vmatmul.mubr.f32.gmra.mxu0 %v7128
      %v7309 = vpop.f32.mrf.mxu0
      %v7310 = vadd.f32 0.0, %v7309
      %v7311 = vpop.f32.mrf.mxu0
      %7312 = vmatprep.mubr.f32.mxu0 0.0
      %7313 = vmatmul.mubr.f32.gmra.mxu0 %v7131
      %v7314 = vpop.f32.mrf.mxu0
      %v7315 = vadd.f32 0.0, %v7314
      %v7316 = vpop.f32.mrf.mxu0
      %7317 = vmatprep.mubr.f32.mxu0 0.0
      %7318 = vmatmul.mubr.f32.gmra.mxu0 %v7134
      %v7319 = vpop.f32.mrf.mxu0
      %v7320 = vadd.f32 0.0, %v7319
      %v7321 = vpop.f32.mrf.mxu0
      %7322 = vmatprep.mubr.f32.mxu0 0.0
      %7323 = vmatmul.mubr.f32.gmra.mxu0 %v7137
      %v7324 = vpop.f32.mrf.mxu0
      %v7325 = vadd.f32 0.0, %v7324
      %v7326 = vpop.f32.mrf.mxu0
      %7327 = vmatprep.mubr.f32.mxu0 0.0
      %7328 = vmatmul.mubr.f32.gmra.mxu0 %v7140
      %v7329 = vpop.f32.mrf.mxu0
      %v7330 = vadd.f32 0.0, %v7329
      %v7331 = vpop.f32.mrf.mxu0
      %7332 = vmatprep.mubr.f32.mxu0 0.0
      %7333 = vmatmul.mubr.f32.gmra.mxu0 %v7143
      %v7334 = vpop.f32.mrf.mxu0
      %v7335 = vadd.f32 0.0, %v7334
      %v7336 = vpop.f32.mrf.mxu0
      %7337 = vmatprep.mubr.f32.mxu0 0.0
      %7338 = vmatmul.mubr.f32.gmra.mxu0 %v7146
      %v7339 = vpop.f32.mrf.mxu0
      %v7340 = vadd.f32 0.0, %v7339
      %v7341 = vpop.f32.mrf.mxu0
      %7342 = vmatprep.mubr.f32.mxu0 0.0
      %7343 = vmatmul.mubr.f32.gmra.mxu0 %v7149
      %v7344 = vpop.f32.mrf.mxu0
      %v7345 = vadd.f32 0.0, %v7344
      %v7346 = vpop.f32.mrf.mxu0
      %7347 = vmatprep.mubr.f32.mxu0 0.0
      %7348 = vmatmul.mubr.f32.gmra.mxu0 %v7152
      %v7349 = vpop.f32.mrf.mxu0
      %v7350 = vadd.f32 0.0, %v7349
      %v7351 = vpop.f32.mrf.mxu0
      %7352 = vmatprep.mubr.f32.mxu0 0.0
      %7353 = vmatmul.mubr.f32.gmra.mxu0 %v7155
      %v7354 = vpop.f32.mrf.mxu0
      %v7355 = vadd.f32 0.0, %v7354
      %v7356 = vpop.f32.mrf.mxu0
      %7357 = vmatprep.mubr.f32.mxu0 0.0
      %7358 = vmatmul.mubr.f32.gmra.mxu0 %v7158
      %v7359 = vpop.f32.mrf.mxu0
      %v7360 = vadd.f32 0.0, %v7359
      %v7361 = vpop.f32.mrf.mxu0
      %7362 = vmatprep.mubr.f32.mxu0 0.0
      %7363 = vmatmul.mubr.f32.gmra.mxu0 %v7161
      %v7364 = vpop.f32.mrf.mxu0
      %v7365 = vadd.f32 0.0, %v7364
      %v7366 = vpop.f32.mrf.mxu0
      %7367 = vmatprep.mubr.f32.mxu0 0.0
      %7368 = vmatmul.mubr.f32.gmra.mxu0 %v7164
      %v7369 = vpop.f32.mrf.mxu0
      %v7370 = vadd.f32 0.0, %v7369
      %v7371 = vpop.f32.mrf.mxu0
      %7372 = vmatprep.mubr.f32.mxu0 0.0
      %7373 = vmatmul.mubr.f32.gmra.mxu0 %v7167
      %v7374 = vpop.f32.mrf.mxu0
      %v7375 = vadd.f32 0.0, %v7374
      %v7376 = vpop.f32.mrf.mxu0
      %7377 = vmatprep.mubr.f32.mxu0 0.0
      %7378 = vmatmul.mubr.f32.gmra.mxu0 %v7170
      %v7379 = vpop.f32.mrf.mxu0
      %v7380 = vadd.f32 0.0, %v7379
      %v7381 = vpop.f32.mrf.mxu0
      %7382 = vmatprep.mubr.f32.mxu0 0.0
      %7383 = vmatmul.mubr.f32.gmra.mxu0 %v7173
      %v7384 = vpop.f32.mrf.mxu0
      %v7385 = vadd.f32 0.0, %v7384
      %v7386 = vpop.f32.mrf.mxu0
      %7387 = vmatprep.mubr.f32.mxu0 0.0
      %7388 = vmatmul.mubr.f32.gmra.mxu0 %v7176
      %v7389 = vpop.f32.mrf.mxu0
      %v7390 = vadd.f32 0.0, %v7389
      %v7391 = vpop.f32.mrf.mxu0
      %7392 = vmatprep.mubr.f32.mxu0 0.0
      %7393 = vmatmul.mubr.f32.gmra.mxu0 %v7179
      %v7394 = vpop.f32.mrf.mxu0
      %v7395 = vadd.f32 0.0, %v7394
      %v7396 = vpop.f32.mrf.mxu0
      %7397 = vmatprep.mubr.f32.mxu0 0.0
      %7398 = vmatmul.mubr.f32.gmra.mxu0 %v7182
      %v7399 = vpop.f32.mrf.mxu0
      %v7400 = vadd.f32 0.0, %v7399
      %v7401 = vpop.f32.mrf.mxu0
      %7402 = vmatprep.mubr.f32.mxu0 0.0
      %7403 = vmatmul.mubr.f32.gmra.mxu0 %v7185
      %v7404 = vpop.f32.mrf.mxu0
      %v7405 = vadd.f32 0.0, %v7404
      %v7406 = vpop.f32.mrf.mxu0
      %7407 = vmatprep.mubr.f32.mxu0 0.0
      %7408 = vmatmul.mubr.f32.gmra.mxu0 %v7188
      %v7409 = vpop.f32.mrf.mxu0
      %v7410 = vadd.f32 0.0, %v7409
      %v7411 = vpop.f32.mrf.mxu0
      %7412 = vmatprep.mubr.f32.mxu0 0.0
      %7413 = vmatmul.mubr.f32.gmra.mxu0 %v7191
      %v7414 = vpop.f32.mrf.mxu0
      %v7415 = vadd.f32 0.0, %v7414
      %v7416 = vpop.f32.mrf.mxu0
      %7417 = vdwg.mxu0
      %v7418 = vadd.f32 %v7031, %v7260
      %v7419 = vadd.f32 %v7032, %v7265
      %v7420 = vadd.f32 %v7033, %v7270
      %v7421 = vadd.f32 %v7034, %v7275
      %v7422 = vadd.f32 %v7035, %v7280
      %v7423 = vadd.f32 %v7036, %v7285
      %v7424 = vadd.f32 %v7037, %v7290
      %v7425 = vadd.f32 %v7038, %v7295
      %v7426 = vadd.f32 %v7039, %v7300
      %v7427 = vadd.f32 %v7040, %v7305
      %v7428 = vadd.f32 %v7041, %v7310
      %v7429 = vadd.f32 %v7042, %v7315
      %v7430 = vadd.f32 %v7043, %v7320
      %v7431 = vadd.f32 %v7044, %v7325
      %v7432 = vadd.f32 %v7045, %v7330
      %v7433 = vadd.f32 %v7046, %v7335
      %v7434 = vadd.f32 %v7047, %v7340
      %v7435 = vadd.f32 %v7048, %v7345
      %v7436 = vadd.f32 %v7049, %v7350
      %v7437 = vadd.f32 %v7050, %v7355
      %v7438 = vadd.f32 %v7051, %v7360
      %v7439 = vadd.f32 %v7052, %v7365
      %v7440 = vadd.f32 %v7053, %v7370
      %v7441 = vadd.f32 %v7054, %v7375
      %v7442 = vadd.f32 %v7055, %v7380
      %v7443 = vadd.f32 %v7056, %v7385
      %v7444 = vadd.f32 %v7057, %v7390
      %v7445 = vadd.f32 %v7058, %v7395
      %v7446 = vadd.f32 %v7059, %v7400
      %v7447 = vadd.f32 %v7060, %v7405
      %v7448 = vadd.f32 %v7061, %v7410
      %v7449 = vadd.f32 %v7062, %v7415
      %v7450 = vld [vmem:[%s5934 + $0x1] sm:$0xff]
      %v7451 = vld [vmem:[%s5934 + $0x9] sm:$0xff]
      %v7452 = vld [vmem:[%s5934 + $0x19] sm:$0xff]
      %v7453 = vld [vmem:[%s5934 + $0x21] sm:$0xff]
      %v7454 = vld [vmem:[%s5934 + $0x31] sm:$0xff]
      %v7455 = vld [vmem:[%s5934 + $0x39] sm:$0xff]
      %v7456 = vld [vmem:[%s5934 + $0x49] sm:$0xff]
      %v7457 = vld [vmem:[%s5934 + $0x51] sm:$0xff]
      %v7458 = vld [vmem:[%s5934 + $0x61] sm:$0xff]
      %v7459 = vld [vmem:[%s5934 + $0x69] sm:$0xff]
      %v7460 = vld [vmem:[%s5934 + $0x79] sm:$0xff]
      %v7461 = vld [vmem:[%s5934 + $0x81] sm:$0xff]
      %v7462 = vld [vmem:[%s5934 + $0x91] sm:$0xff]
      %v7463 = vld [vmem:[%s5934 + $0x99] sm:$0xff]
      %v7464 = vld [vmem:[%s5934 + $0xa9] sm:$0xff]
      %v7465 = vld [vmem:[%s5934 + $0xb1] sm:$0xff]
      %v7466 = vld [vmem:[%s5934 + $0xc1] sm:$0xff]
      %v7467 = vld [vmem:[%s5934 + $0xc9] sm:$0xff]
      %v7468 = vld [vmem:[%s5934 + $0xd9] sm:$0xff]
      %v7469 = vld [vmem:[%s5934 + $0xe1] sm:$0xff]
      %v7470 = vld [vmem:[%s5934 + $0xf1] sm:$0xff]
      %v7471 = vld [vmem:[%s5934 + $0xf9] sm:$0xff]
      %v7472 = vld [vmem:[%s5934 + $0x109] sm:$0xff]
      %v7473 = vld [vmem:[%s5934 + $0x111] sm:$0xff]
      %v7474 = vld [vmem:[%s5934 + $0x121] sm:$0xff]
      %v7475 = vld [vmem:[%s5934 + $0x129] sm:$0xff]
      %v7476 = vld [vmem:[%s5934 + $0x139] sm:$0xff]
      %v7477 = vld [vmem:[%s5934 + $0x141] sm:$0xff]
      %v7478 = vld [vmem:[%s5934 + $0x151] sm:$0xff]
      %v7479 = vld [vmem:[%s5934 + $0x159] sm:$0xff]
      %v7480 = vld [vmem:[%s5934 + $0x169] sm:$0xff]
      %v7481 = vld [vmem:[%s5934 + $0x171] sm:$0xff]
      %s7482 = scalar_lea.vmem %s12, 32
      %v7483 = vld [vmem:[%s7482] sm:$0xff]
      %v7485 = vsel %vm5036, %v7450, 0
      %v7488 = vsel %vm5036, %v7451, 0
      %v7491 = vsel %vm5036, %v7452, 0
      %v7494 = vsel %vm5036, %v7453, 0
      %v7497 = vsel %vm5036, %v7454, 0
      %v7500 = vsel %vm5036, %v7455, 0
      %v7503 = vsel %vm5036, %v7456, 0
      %v7506 = vsel %vm5036, %v7457, 0
      %v7509 = vsel %vm5036, %v7458, 0
      %v7512 = vsel %vm5036, %v7459, 0
      %v7515 = vsel %vm5036, %v7460, 0
      %v7518 = vsel %vm5036, %v7461, 0
      %v7521 = vsel %vm5036, %v7462, 0
      %v7524 = vsel %vm5036, %v7463, 0
      %v7527 = vsel %vm5036, %v7464, 0
      %v7530 = vsel %vm5036, %v7465, 0
      %v7533 = vsel %vm5036, %v7466, 0
      %v7536 = vsel %vm5036, %v7467, 0
      %v7539 = vsel %vm5036, %v7468, 0
      %v7542 = vsel %vm5036, %v7469, 0
      %v7545 = vsel %vm5036, %v7470, 0
      %v7548 = vsel %vm5036, %v7471, 0
      %v7551 = vsel %vm5036, %v7472, 0
      %v7554 = vsel %vm5036, %v7473, 0
      %v7557 = vsel %vm5036, %v7474, 0
      %v7560 = vsel %vm5036, %v7475, 0
      %v7563 = vsel %vm5036, %v7476, 0
      %v7566 = vsel %vm5036, %v7477, 0
      %v7569 = vsel %vm5036, %v7478, 0
      %v7572 = vsel %vm5036, %v7479, 0
      %v7575 = vsel %vm5036, %v7480, 0
      %v7578 = vsel %vm5036, %v7481, 0
      %7580 = vmatprep.subr.mxu0 0.0
      %7581 = vmatpush1.msra.mxu0 0.0
      %7582 = vmatprep.subr.mxu0 0.0
      %7583 = vmatpush1.msra.mxu0 0.0
      %7584 = vmatprep.subr.mxu0 0.0
      %7585 = vmatpush1.msra.mxu0 0.0
      %7586 = vmatprep.subr.mxu0 0.0
      %7587 = vmatpush1.msra.mxu0 0.0
      %7588 = vmatprep.subr.mxu0 0.0
      %7589 = vmatpush1.msra.mxu0 0.0
      %7590 = vmatprep.subr.mxu0 0.0
      %7591 = vmatpush1.msra.mxu0 0.0
      %7592 = vmatprep.subr.mxu0 0.0
      %7593 = vmatpush1.msra.mxu0 0.0
      %7594 = vmatprep.subr.mxu0 0.0
      %7595 = vmatpush1.msra.mxu0 0.0
      %7596 = vmatprep.subr.mxu0 0.0
      %7597 = vmatpush1.msra.mxu0 0.0
      %7598 = vmatprep.subr.mxu0 0.0
      %7599 = vmatpush1.msra.mxu0 0.0
      %7600 = vmatprep.subr.mxu0 0.0
      %7601 = vmatpush1.msra.mxu0 0.0
      %7602 = vmatprep.subr.mxu0 0.0
      %7603 = vmatpush1.msra.mxu0 0.0
      %7604 = vmatprep.subr.mxu0 0.0
      %7605 = vmatpush1.msra.mxu0 0.0
      %7606 = vmatprep.subr.mxu0 0.0
      %7607 = vmatpush1.msra.mxu0 0.0
      %7608 = vmatprep.subr.mxu0 0.0
      %7609 = vmatpush1.msra.mxu0 0.0
      %7610 = vmatprep.subr.mxu0 0.0
      %7611 = vmatpush1.msra.mxu0 %v7483
      %7612 = vmatprep.subr.mxu0 0.0
      %7613 = vmatpush2.msra.mxu0 0.0
      %7614 = vmatprep.subr.mxu0 0.0
      %7615 = vmatpush2.msra.mxu0 0.0
      %7616 = vmatprep.subr.mxu0 0.0
      %7617 = vmatpush2.msra.mxu0 0.0
      %7618 = vmatprep.subr.mxu0 0.0
      %7619 = vmatpush2.msra.mxu0 0.0
      %7620 = vmatprep.subr.mxu0 0.0
      %7621 = vmatpush2.msra.mxu0 0.0
      %7622 = vmatprep.subr.mxu0 0.0
      %7623 = vmatpush2.msra.mxu0 0.0
      %7624 = vmatprep.subr.mxu0 0.0
      %7625 = vmatpush2.msra.mxu0 0.0
      %7626 = vmatprep.subr.mxu0 0.0
      %7627 = vmatpush2.msra.mxu0 0.0
      %7628 = vmatprep.subr.mxu0 0.0
      %7629 = vmatpush2.msra.mxu0 0.0
      %7630 = vmatprep.subr.mxu0 0.0
      %7631 = vmatpush2.msra.mxu0 0.0
      %7632 = vmatprep.subr.mxu0 0.0
      %7633 = vmatpush2.msra.mxu0 0.0
      %7634 = vmatprep.subr.mxu0 0.0
      %7635 = vmatpush2.msra.mxu0 0.0
      %7636 = vmatprep.subr.mxu0 0.0
      %7637 = vmatpush2.msra.mxu0 0.0
      %7638 = vmatprep.subr.mxu0 0.0
      %7639 = vmatpush2.msra.mxu0 0.0
      %7640 = vmatprep.subr.mxu0 0.0
      %7641 = vmatpush2.msra.mxu0 0.0
      %7642 = vmatprep.subr.mxu0 0.0
      %7643 = vmatpush2.msra.mxu0 0.0
      %7644 = vmatprep.mubr.f32.mxu0 0.0
      %7645 = vmatmul.mubr.f32.gmra.mxu0 %v7485
      %v7646 = vpop.f32.mrf.mxu0
      %v7647 = vadd.f32 0.0, %v7646
      %v7648 = vpop.f32.mrf.mxu0
      %7649 = vmatprep.mubr.f32.mxu0 0.0
      %7650 = vmatmul.mubr.f32.gmra.mxu0 %v7488
      %v7651 = vpop.f32.mrf.mxu0
      %v7652 = vadd.f32 0.0, %v7651
      %v7653 = vpop.f32.mrf.mxu0
      %7654 = vmatprep.mubr.f32.mxu0 0.0
      %7655 = vmatmul.mubr.f32.gmra.mxu0 %v7491
      %v7656 = vpop.f32.mrf.mxu0
      %v7657 = vadd.f32 0.0, %v7656
      %v7658 = vpop.f32.mrf.mxu0
      %7659 = vmatprep.mubr.f32.mxu0 0.0
      %7660 = vmatmul.mubr.f32.gmra.mxu0 %v7494
      %v7661 = vpop.f32.mrf.mxu0
      %v7662 = vadd.f32 0.0, %v7661
      %v7663 = vpop.f32.mrf.mxu0
      %7664 = vmatprep.mubr.f32.mxu0 0.0
      %7665 = vmatmul.mubr.f32.gmra.mxu0 %v7497
      %v7666 = vpop.f32.mrf.mxu0
      %v7667 = vadd.f32 0.0, %v7666
      %v7668 = vpop.f32.mrf.mxu0
      %7669 = vmatprep.mubr.f32.mxu0 0.0
      %7670 = vmatmul.mubr.f32.gmra.mxu0 %v7500
      %v7671 = vpop.f32.mrf.mxu0
      %v7672 = vadd.f32 0.0, %v7671
      %v7673 = vpop.f32.mrf.mxu0
      %7674 = vmatprep.mubr.f32.mxu0 0.0
      %7675 = vmatmul.mubr.f32.gmra.mxu0 %v7503
      %v7676 = vpop.f32.mrf.mxu0
      %v7677 = vadd.f32 0.0, %v7676
      %v7678 = vpop.f32.mrf.mxu0
      %7679 = vmatprep.mubr.f32.mxu0 0.0
      %7680 = vmatmul.mubr.f32.gmra.mxu0 %v7506
      %v7681 = vpop.f32.mrf.mxu0
      %v7682 = vadd.f32 0.0, %v7681
      %v7683 = vpop.f32.mrf.mxu0
      %7684 = vmatprep.mubr.f32.mxu0 0.0
      %7685 = vmatmul.mubr.f32.gmra.mxu0 %v7509
      %v7686 = vpop.f32.mrf.mxu0
      %v7687 = vadd.f32 0.0, %v7686
      %v7688 = vpop.f32.mrf.mxu0
      %7689 = vmatprep.mubr.f32.mxu0 0.0
      %7690 = vmatmul.mubr.f32.gmra.mxu0 %v7512
      %v7691 = vpop.f32.mrf.mxu0
      %v7692 = vadd.f32 0.0, %v7691
      %v7693 = vpop.f32.mrf.mxu0
      %7694 = vmatprep.mubr.f32.mxu0 0.0
      %7695 = vmatmul.mubr.f32.gmra.mxu0 %v7515
      %v7696 = vpop.f32.mrf.mxu0
      %v7697 = vadd.f32 0.0, %v7696
      %v7698 = vpop.f32.mrf.mxu0
      %7699 = vmatprep.mubr.f32.mxu0 0.0
      %7700 = vmatmul.mubr.f32.gmra.mxu0 %v7518
      %v7701 = vpop.f32.mrf.mxu0
      %v7702 = vadd.f32 0.0, %v7701
      %v7703 = vpop.f32.mrf.mxu0
      %7704 = vmatprep.mubr.f32.mxu0 0.0
      %7705 = vmatmul.mubr.f32.gmra.mxu0 %v7521
      %v7706 = vpop.f32.mrf.mxu0
      %v7707 = vadd.f32 0.0, %v7706
      %v7708 = vpop.f32.mrf.mxu0
      %7709 = vmatprep.mubr.f32.mxu0 0.0
      %7710 = vmatmul.mubr.f32.gmra.mxu0 %v7524
      %v7711 = vpop.f32.mrf.mxu0
      %v7712 = vadd.f32 0.0, %v7711
      %v7713 = vpop.f32.mrf.mxu0
      %7714 = vmatprep.mubr.f32.mxu0 0.0
      %7715 = vmatmul.mubr.f32.gmra.mxu0 %v7527
      %v7716 = vpop.f32.mrf.mxu0
      %v7717 = vadd.f32 0.0, %v7716
      %v7718 = vpop.f32.mrf.mxu0
      %7719 = vmatprep.mubr.f32.mxu0 0.0
      %7720 = vmatmul.mubr.f32.gmra.mxu0 %v7530
      %v7721 = vpop.f32.mrf.mxu0
      %v7722 = vadd.f32 0.0, %v7721
      %v7723 = vpop.f32.mrf.mxu0
      %7724 = vmatprep.mubr.f32.mxu0 0.0
      %7725 = vmatmul.mubr.f32.gmra.mxu0 %v7533
      %v7726 = vpop.f32.mrf.mxu0
      %v7727 = vadd.f32 0.0, %v7726
      %v7728 = vpop.f32.mrf.mxu0
      %7729 = vmatprep.mubr.f32.mxu0 0.0
      %7730 = vmatmul.mubr.f32.gmra.mxu0 %v7536
      %v7731 = vpop.f32.mrf.mxu0
      %v7732 = vadd.f32 0.0, %v7731
      %v7733 = vpop.f32.mrf.mxu0
      %7734 = vmatprep.mubr.f32.mxu0 0.0
      %7735 = vmatmul.mubr.f32.gmra.mxu0 %v7539
      %v7736 = vpop.f32.mrf.mxu0
      %v7737 = vadd.f32 0.0, %v7736
      %v7738 = vpop.f32.mrf.mxu0
      %7739 = vmatprep.mubr.f32.mxu0 0.0
      %7740 = vmatmul.mubr.f32.gmra.mxu0 %v7542
      %v7741 = vpop.f32.mrf.mxu0
      %v7742 = vadd.f32 0.0, %v7741
      %v7743 = vpop.f32.mrf.mxu0
      %7744 = vmatprep.mubr.f32.mxu0 0.0
      %7745 = vmatmul.mubr.f32.gmra.mxu0 %v7545
      %v7746 = vpop.f32.mrf.mxu0
      %v7747 = vadd.f32 0.0, %v7746
      %v7748 = vpop.f32.mrf.mxu0
      %7749 = vmatprep.mubr.f32.mxu0 0.0
      %7750 = vmatmul.mubr.f32.gmra.mxu0 %v7548
      %v7751 = vpop.f32.mrf.mxu0
      %v7752 = vadd.f32 0.0, %v7751
      %v7753 = vpop.f32.mrf.mxu0
      %7754 = vmatprep.mubr.f32.mxu0 0.0
      %7755 = vmatmul.mubr.f32.gmra.mxu0 %v7551
      %v7756 = vpop.f32.mrf.mxu0
      %v7757 = vadd.f32 0.0, %v7756
      %v7758 = vpop.f32.mrf.mxu0
      %7759 = vmatprep.mubr.f32.mxu0 0.0
      %7760 = vmatmul.mubr.f32.gmra.mxu0 %v7554
      %v7761 = vpop.f32.mrf.mxu0
      %v7762 = vadd.f32 0.0, %v7761
      %v7763 = vpop.f32.mrf.mxu0
      %7764 = vmatprep.mubr.f32.mxu0 0.0
      %7765 = vmatmul.mubr.f32.gmra.mxu0 %v7557
      %v7766 = vpop.f32.mrf.mxu0
      %v7767 = vadd.f32 0.0, %v7766
      %v7768 = vpop.f32.mrf.mxu0
      %7769 = vmatprep.mubr.f32.mxu0 0.0
      %7770 = vmatmul.mubr.f32.gmra.mxu0 %v7560
      %v7771 = vpop.f32.mrf.mxu0
      %v7772 = vadd.f32 0.0, %v7771
      %v7773 = vpop.f32.mrf.mxu0
      %7774 = vmatprep.mubr.f32.mxu0 0.0
      %7775 = vmatmul.mubr.f32.gmra.mxu0 %v7563
      %v7776 = vpop.f32.mrf.mxu0
      %v7777 = vadd.f32 0.0, %v7776
      %v7778 = vpop.f32.mrf.mxu0
      %7779 = vmatprep.mubr.f32.mxu0 0.0
      %7780 = vmatmul.mubr.f32.gmra.mxu0 %v7566
      %v7781 = vpop.f32.mrf.mxu0
      %v7782 = vadd.f32 0.0, %v7781
      %v7783 = vpop.f32.mrf.mxu0
      %7784 = vmatprep.mubr.f32.mxu0 0.0
      %7785 = vmatmul.mubr.f32.gmra.mxu0 %v7569
      %v7786 = vpop.f32.mrf.mxu0
      %v7787 = vadd.f32 0.0, %v7786
      %v7788 = vpop.f32.mrf.mxu0
      %7789 = vmatprep.mubr.f32.mxu0 0.0
      %7790 = vmatmul.mubr.f32.gmra.mxu0 %v7572
      %v7791 = vpop.f32.mrf.mxu0
      %v7792 = vadd.f32 0.0, %v7791
      %v7793 = vpop.f32.mrf.mxu0
      %7794 = vmatprep.mubr.f32.mxu0 0.0
      %7795 = vmatmul.mubr.f32.gmra.mxu0 %v7575
      %v7796 = vpop.f32.mrf.mxu0
      %v7797 = vadd.f32 0.0, %v7796
      %v7798 = vpop.f32.mrf.mxu0
      %7799 = vmatprep.mubr.f32.mxu0 0.0
      %7800 = vmatmul.mubr.f32.gmra.mxu0 %v7578
      %v7801 = vpop.f32.mrf.mxu0
      %v7802 = vadd.f32 0.0, %v7801
      %v7803 = vpop.f32.mrf.mxu0
      %7804 = vdwg.mxu0
      %v7805 = vadd.f32 %v7418, %v7647
      %v7806 = vadd.f32 %v7419, %v7652
      %v7807 = vadd.f32 %v7420, %v7657
      %v7808 = vadd.f32 %v7421, %v7662
      %v7809 = vadd.f32 %v7422, %v7667
      %v7810 = vadd.f32 %v7423, %v7672
      %v7811 = vadd.f32 %v7424, %v7677
      %v7812 = vadd.f32 %v7425, %v7682
      %v7813 = vadd.f32 %v7426, %v7687
      %v7814 = vadd.f32 %v7427, %v7692
      %v7815 = vadd.f32 %v7428, %v7697
      %v7816 = vadd.f32 %v7429, %v7702
      %v7817 = vadd.f32 %v7430, %v7707
      %v7818 = vadd.f32 %v7431, %v7712
      %v7819 = vadd.f32 %v7432, %v7717
      %v7820 = vadd.f32 %v7433, %v7722
      %v7821 = vadd.f32 %v7434, %v7727
      %v7822 = vadd.f32 %v7435, %v7732
      %v7823 = vadd.f32 %v7436, %v7737
      %v7824 = vadd.f32 %v7437, %v7742
      %v7825 = vadd.f32 %v7438, %v7747
      %v7826 = vadd.f32 %v7439, %v7752
      %v7827 = vadd.f32 %v7440, %v7757
      %v7828 = vadd.f32 %v7441, %v7762
      %v7829 = vadd.f32 %v7442, %v7767
      %v7830 = vadd.f32 %v7443, %v7772
      %v7831 = vadd.f32 %v7444, %v7777
      %v7832 = vadd.f32 %v7445, %v7782
      %v7833 = vadd.f32 %v7446, %v7787
      %v7834 = vadd.f32 %v7447, %v7792
      %v7835 = vadd.f32 %v7448, %v7797
      %v7836 = vadd.f32 %v7449, %v7802
      %v7837 = vld [vmem:[%s5934 + $0x2] sm:$0xff]
      %v7838 = vld [vmem:[%s5934 + $0xa] sm:$0xff]
      %v7839 = vld [vmem:[%s5934 + $0x1a] sm:$0xff]
      %v7840 = vld [vmem:[%s5934 + $0x22] sm:$0xff]
      %v7841 = vld [vmem:[%s5934 + $0x32] sm:$0xff]
      %v7842 = vld [vmem:[%s5934 + $0x3a] sm:$0xff]
      %v7843 = vld [vmem:[%s5934 + $0x4a] sm:$0xff]
      %v7844 = vld [vmem:[%s5934 + $0x52] sm:$0xff]
      %v7845 = vld [vmem:[%s5934 + $0x62] sm:$0xff]
      %v7846 = vld [vmem:[%s5934 + $0x6a] sm:$0xff]
      %v7847 = vld [vmem:[%s5934 + $0x7a] sm:$0xff]
      %v7848 = vld [vmem:[%s5934 + $0x82] sm:$0xff]
      %v7849 = vld [vmem:[%s5934 + $0x92] sm:$0xff]
      %v7850 = vld [vmem:[%s5934 + $0x9a] sm:$0xff]
      %v7851 = vld [vmem:[%s5934 + $0xaa] sm:$0xff]
      %v7852 = vld [vmem:[%s5934 + $0xb2] sm:$0xff]
      %v7853 = vld [vmem:[%s5934 + $0xc2] sm:$0xff]
      %v7854 = vld [vmem:[%s5934 + $0xca] sm:$0xff]
      %v7855 = vld [vmem:[%s5934 + $0xda] sm:$0xff]
      %v7856 = vld [vmem:[%s5934 + $0xe2] sm:$0xff]
      %v7857 = vld [vmem:[%s5934 + $0xf2] sm:$0xff]
      %v7858 = vld [vmem:[%s5934 + $0xfa] sm:$0xff]
      %v7859 = vld [vmem:[%s5934 + $0x10a] sm:$0xff]
      %v7860 = vld [vmem:[%s5934 + $0x112] sm:$0xff]
      %v7861 = vld [vmem:[%s5934 + $0x122] sm:$0xff]
      %v7862 = vld [vmem:[%s5934 + $0x12a] sm:$0xff]
      %v7863 = vld [vmem:[%s5934 + $0x13a] sm:$0xff]
      %v7864 = vld [vmem:[%s5934 + $0x142] sm:$0xff]
      %v7865 = vld [vmem:[%s5934 + $0x152] sm:$0xff]
      %v7866 = vld [vmem:[%s5934 + $0x15a] sm:$0xff]
      %v7867 = vld [vmem:[%s5934 + $0x16a] sm:$0xff]
      %v7868 = vld [vmem:[%s5934 + $0x172] sm:$0xff]
      %s7869 = scalar_lea.vmem %s12, 40
      %v7870 = vld [vmem:[%s7869] sm:$0xff]
      %v7872 = vsel %vm5036, %v7837, 0
      %v7875 = vsel %vm5036, %v7838, 0
      %v7878 = vsel %vm5036, %v7839, 0
      %v7881 = vsel %vm5036, %v7840, 0
      %v7884 = vsel %vm5036, %v7841, 0
      %v7887 = vsel %vm5036, %v7842, 0
      %v7890 = vsel %vm5036, %v7843, 0
      %v7893 = vsel %vm5036, %v7844, 0
      %v7896 = vsel %vm5036, %v7845, 0
      %v7899 = vsel %vm5036, %v7846, 0
      %v7902 = vsel %vm5036, %v7847, 0
      %v7905 = vsel %vm5036, %v7848, 0
      %v7908 = vsel %vm5036, %v7849, 0
      %v7911 = vsel %vm5036, %v7850, 0
      %v7914 = vsel %vm5036, %v7851, 0
      %v7917 = vsel %vm5036, %v7852, 0
      %v7920 = vsel %vm5036, %v7853, 0
      %v7923 = vsel %vm5036, %v7854, 0
      %v7926 = vsel %vm5036, %v7855, 0
      %v7929 = vsel %vm5036, %v7856, 0
      %v7932 = vsel %vm5036, %v7857, 0
      %v7935 = vsel %vm5036, %v7858, 0
      %v7938 = vsel %vm5036, %v7859, 0
      %v7941 = vsel %vm5036, %v7860, 0
      %v7944 = vsel %vm5036, %v7861, 0
      %v7947 = vsel %vm5036, %v7862, 0
      %v7950 = vsel %vm5036, %v7863, 0
      %v7953 = vsel %vm5036, %v7864, 0
      %v7956 = vsel %vm5036, %v7865, 0
      %v7959 = vsel %vm5036, %v7866, 0
      %v7962 = vsel %vm5036, %v7867, 0
      %v7965 = vsel %vm5036, %v7868, 0
      %7967 = vmatprep.subr.mxu0 0.0
      %7968 = vmatpush1.msra.mxu0 0.0
      %7969 = vmatprep.subr.mxu0 0.0
      %7970 = vmatpush1.msra.mxu0 0.0
      %7971 = vmatprep.subr.mxu0 0.0
      %7972 = vmatpush1.msra.mxu0 0.0
      %7973 = vmatprep.subr.mxu0 0.0
      %7974 = vmatpush1.msra.mxu0 0.0
      %7975 = vmatprep.subr.mxu0 0.0
      %7976 = vmatpush1.msra.mxu0 0.0
      %7977 = vmatprep.subr.mxu0 0.0
      %7978 = vmatpush1.msra.mxu0 0.0
      %7979 = vmatprep.subr.mxu0 0.0
      %7980 = vmatpush1.msra.mxu0 0.0
      %7981 = vmatprep.subr.mxu0 0.0
      %7982 = vmatpush1.msra.mxu0 0.0
      %7983 = vmatprep.subr.mxu0 0.0
      %7984 = vmatpush1.msra.mxu0 0.0
      %7985 = vmatprep.subr.mxu0 0.0
      %7986 = vmatpush1.msra.mxu0 0.0
      %7987 = vmatprep.subr.mxu0 0.0
      %7988 = vmatpush1.msra.mxu0 0.0
      %7989 = vmatprep.subr.mxu0 0.0
      %7990 = vmatpush1.msra.mxu0 0.0
      %7991 = vmatprep.subr.mxu0 0.0
      %7992 = vmatpush1.msra.mxu0 0.0
      %7993 = vmatprep.subr.mxu0 0.0
      %7994 = vmatpush1.msra.mxu0 0.0
      %7995 = vmatprep.subr.mxu0 0.0
      %7996 = vmatpush1.msra.mxu0 0.0
      %7997 = vmatprep.subr.mxu0 0.0
      %7998 = vmatpush1.msra.mxu0 %v7870
      %7999 = vmatprep.subr.mxu0 0.0
      %8000 = vmatpush2.msra.mxu0 0.0
      %8001 = vmatprep.subr.mxu0 0.0
      %8002 = vmatpush2.msra.mxu0 0.0
      %8003 = vmatprep.subr.mxu0 0.0
      %8004 = vmatpush2.msra.mxu0 0.0
      %8005 = vmatprep.subr.mxu0 0.0
      %8006 = vmatpush2.msra.mxu0 0.0
      %8007 = vmatprep.subr.mxu0 0.0
      %8008 = vmatpush2.msra.mxu0 0.0
      %8009 = vmatprep.subr.mxu0 0.0
      %8010 = vmatpush2.msra.mxu0 0.0
      %8011 = vmatprep.subr.mxu0 0.0
      %8012 = vmatpush2.msra.mxu0 0.0
      %8013 = vmatprep.subr.mxu0 0.0
      %8014 = vmatpush2.msra.mxu0 0.0
      %8015 = vmatprep.subr.mxu0 0.0
      %8016 = vmatpush2.msra.mxu0 0.0
      %8017 = vmatprep.subr.mxu0 0.0
      %8018 = vmatpush2.msra.mxu0 0.0
      %8019 = vmatprep.subr.mxu0 0.0
      %8020 = vmatpush2.msra.mxu0 0.0
      %8021 = vmatprep.subr.mxu0 0.0
      %8022 = vmatpush2.msra.mxu0 0.0
      %8023 = vmatprep.subr.mxu0 0.0
      %8024 = vmatpush2.msra.mxu0 0.0
      %8025 = vmatprep.subr.mxu0 0.0
      %8026 = vmatpush2.msra.mxu0 0.0
      %8027 = vmatprep.subr.mxu0 0.0
      %8028 = vmatpush2.msra.mxu0 0.0
      %8029 = vmatprep.subr.mxu0 0.0
      %8030 = vmatpush2.msra.mxu0 0.0
      %8031 = vmatprep.mubr.f32.mxu0 0.0
      %8032 = vmatmul.mubr.f32.gmra.mxu0 %v7872
      %v8033 = vpop.f32.mrf.mxu0
      %v8034 = vadd.f32 0.0, %v8033
      %v8035 = vpop.f32.mrf.mxu0
      %8036 = vmatprep.mubr.f32.mxu0 0.0
      %8037 = vmatmul.mubr.f32.gmra.mxu0 %v7875
      %v8038 = vpop.f32.mrf.mxu0
      %v8039 = vadd.f32 0.0, %v8038
      %v8040 = vpop.f32.mrf.mxu0
      %8041 = vmatprep.mubr.f32.mxu0 0.0
      %8042 = vmatmul.mubr.f32.gmra.mxu0 %v7878
      %v8043 = vpop.f32.mrf.mxu0
      %v8044 = vadd.f32 0.0, %v8043
      %v8045 = vpop.f32.mrf.mxu0
      %8046 = vmatprep.mubr.f32.mxu0 0.0
      %8047 = vmatmul.mubr.f32.gmra.mxu0 %v7881
      %v8048 = vpop.f32.mrf.mxu0
      %v8049 = vadd.f32 0.0, %v8048
      %v8050 = vpop.f32.mrf.mxu0
      %8051 = vmatprep.mubr.f32.mxu0 0.0
      %8052 = vmatmul.mubr.f32.gmra.mxu0 %v7884
      %v8053 = vpop.f32.mrf.mxu0
      %v8054 = vadd.f32 0.0, %v8053
      %v8055 = vpop.f32.mrf.mxu0
      %8056 = vmatprep.mubr.f32.mxu0 0.0
      %8057 = vmatmul.mubr.f32.gmra.mxu0 %v7887
      %v8058 = vpop.f32.mrf.mxu0
      %v8059 = vadd.f32 0.0, %v8058
      %v8060 = vpop.f32.mrf.mxu0
      %8061 = vmatprep.mubr.f32.mxu0 0.0
      %8062 = vmatmul.mubr.f32.gmra.mxu0 %v7890
      %v8063 = vpop.f32.mrf.mxu0
      %v8064 = vadd.f32 0.0, %v8063
      %v8065 = vpop.f32.mrf.mxu0
      %8066 = vmatprep.mubr.f32.mxu0 0.0
      %8067 = vmatmul.mubr.f32.gmra.mxu0 %v7893
      %v8068 = vpop.f32.mrf.mxu0
      %v8069 = vadd.f32 0.0, %v8068
      %v8070 = vpop.f32.mrf.mxu0
      %8071 = vmatprep.mubr.f32.mxu0 0.0
      %8072 = vmatmul.mubr.f32.gmra.mxu0 %v7896
      %v8073 = vpop.f32.mrf.mxu0
      %v8074 = vadd.f32 0.0, %v8073
      %v8075 = vpop.f32.mrf.mxu0
      %8076 = vmatprep.mubr.f32.mxu0 0.0
      %8077 = vmatmul.mubr.f32.gmra.mxu0 %v7899
      %v8078 = vpop.f32.mrf.mxu0
      %v8079 = vadd.f32 0.0, %v8078
      %v8080 = vpop.f32.mrf.mxu0
      %8081 = vmatprep.mubr.f32.mxu0 0.0
      %8082 = vmatmul.mubr.f32.gmra.mxu0 %v7902
      %v8083 = vpop.f32.mrf.mxu0
      %v8084 = vadd.f32 0.0, %v8083
      %v8085 = vpop.f32.mrf.mxu0
      %8086 = vmatprep.mubr.f32.mxu0 0.0
      %8087 = vmatmul.mubr.f32.gmra.mxu0 %v7905
      %v8088 = vpop.f32.mrf.mxu0
      %v8089 = vadd.f32 0.0, %v8088
      %v8090 = vpop.f32.mrf.mxu0
      %8091 = vmatprep.mubr.f32.mxu0 0.0
      %8092 = vmatmul.mubr.f32.gmra.mxu0 %v7908
      %v8093 = vpop.f32.mrf.mxu0
      %v8094 = vadd.f32 0.0, %v8093
      %v8095 = vpop.f32.mrf.mxu0
      %8096 = vmatprep.mubr.f32.mxu0 0.0
      %8097 = vmatmul.mubr.f32.gmra.mxu0 %v7911
      %v8098 = vpop.f32.mrf.mxu0
      %v8099 = vadd.f32 0.0, %v8098
      %v8100 = vpop.f32.mrf.mxu0
      %8101 = vmatprep.mubr.f32.mxu0 0.0
      %8102 = vmatmul.mubr.f32.gmra.mxu0 %v7914
      %v8103 = vpop.f32.mrf.mxu0
      %v8104 = vadd.f32 0.0, %v8103
      %v8105 = vpop.f32.mrf.mxu0
      %8106 = vmatprep.mubr.f32.mxu0 0.0
      %8107 = vmatmul.mubr.f32.gmra.mxu0 %v7917
      %v8108 = vpop.f32.mrf.mxu0
      %v8109 = vadd.f32 0.0, %v8108
      %v8110 = vpop.f32.mrf.mxu0
      %8111 = vmatprep.mubr.f32.mxu0 0.0
      %8112 = vmatmul.mubr.f32.gmra.mxu0 %v7920
      %v8113 = vpop.f32.mrf.mxu0
      %v8114 = vadd.f32 0.0, %v8113
      %v8115 = vpop.f32.mrf.mxu0
      %8116 = vmatprep.mubr.f32.mxu0 0.0
      %8117 = vmatmul.mubr.f32.gmra.mxu0 %v7923
      %v8118 = vpop.f32.mrf.mxu0
      %v8119 = vadd.f32 0.0, %v8118
      %v8120 = vpop.f32.mrf.mxu0
      %8121 = vmatprep.mubr.f32.mxu0 0.0
      %8122 = vmatmul.mubr.f32.gmra.mxu0 %v7926
      %v8123 = vpop.f32.mrf.mxu0
      %v8124 = vadd.f32 0.0, %v8123
      %v8125 = vpop.f32.mrf.mxu0
      %8126 = vmatprep.mubr.f32.mxu0 0.0
      %8127 = vmatmul.mubr.f32.gmra.mxu0 %v7929
      %v8128 = vpop.f32.mrf.mxu0
      %v8129 = vadd.f32 0.0, %v8128
      %v8130 = vpop.f32.mrf.mxu0
      %8131 = vmatprep.mubr.f32.mxu0 0.0
      %8132 = vmatmul.mubr.f32.gmra.mxu0 %v7932
      %v8133 = vpop.f32.mrf.mxu0
      %v8134 = vadd.f32 0.0, %v8133
      %v8135 = vpop.f32.mrf.mxu0
      %8136 = vmatprep.mubr.f32.mxu0 0.0
      %8137 = vmatmul.mubr.f32.gmra.mxu0 %v7935
      %v8138 = vpop.f32.mrf.mxu0
      %v8139 = vadd.f32 0.0, %v8138
      %v8140 = vpop.f32.mrf.mxu0
      %8141 = vmatprep.mubr.f32.mxu0 0.0
      %8142 = vmatmul.mubr.f32.gmra.mxu0 %v7938
      %v8143 = vpop.f32.mrf.mxu0
      %v8144 = vadd.f32 0.0, %v8143
      %v8145 = vpop.f32.mrf.mxu0
      %8146 = vmatprep.mubr.f32.mxu0 0.0
      %8147 = vmatmul.mubr.f32.gmra.mxu0 %v7941
      %v8148 = vpop.f32.mrf.mxu0
      %v8149 = vadd.f32 0.0, %v8148
      %v8150 = vpop.f32.mrf.mxu0
      %8151 = vmatprep.mubr.f32.mxu0 0.0
      %8152 = vmatmul.mubr.f32.gmra.mxu0 %v7944
      %v8153 = vpop.f32.mrf.mxu0
      %v8154 = vadd.f32 0.0, %v8153
      %v8155 = vpop.f32.mrf.mxu0
      %8156 = vmatprep.mubr.f32.mxu0 0.0
      %8157 = vmatmul.mubr.f32.gmra.mxu0 %v7947
      %v8158 = vpop.f32.mrf.mxu0
      %v8159 = vadd.f32 0.0, %v8158
      %v8160 = vpop.f32.mrf.mxu0
      %8161 = vmatprep.mubr.f32.mxu0 0.0
      %8162 = vmatmul.mubr.f32.gmra.mxu0 %v7950
      %v8163 = vpop.f32.mrf.mxu0
      %v8164 = vadd.f32 0.0, %v8163
      %v8165 = vpop.f32.mrf.mxu0
      %8166 = vmatprep.mubr.f32.mxu0 0.0
      %8167 = vmatmul.mubr.f32.gmra.mxu0 %v7953
      %v8168 = vpop.f32.mrf.mxu0
      %v8169 = vadd.f32 0.0, %v8168
      %v8170 = vpop.f32.mrf.mxu0
      %8171 = vmatprep.mubr.f32.mxu0 0.0
      %8172 = vmatmul.mubr.f32.gmra.mxu0 %v7956
      %v8173 = vpop.f32.mrf.mxu0
      %v8174 = vadd.f32 0.0, %v8173
      %v8175 = vpop.f32.mrf.mxu0
      %8176 = vmatprep.mubr.f32.mxu0 0.0
      %8177 = vmatmul.mubr.f32.gmra.mxu0 %v7959
      %v8178 = vpop.f32.mrf.mxu0
      %v8179 = vadd.f32 0.0, %v8178
      %v8180 = vpop.f32.mrf.mxu0
      %8181 = vmatprep.mubr.f32.mxu0 0.0
      %8182 = vmatmul.mubr.f32.gmra.mxu0 %v7962
      %v8183 = vpop.f32.mrf.mxu0
      %v8184 = vadd.f32 0.0, %v8183
      %v8185 = vpop.f32.mrf.mxu0
      %8186 = vmatprep.mubr.f32.mxu0 0.0
      %8187 = vmatmul.mubr.f32.gmra.mxu0 %v7965
      %v8188 = vpop.f32.mrf.mxu0
      %v8189 = vadd.f32 0.0, %v8188
      %v8190 = vpop.f32.mrf.mxu0
      %8191 = vdwg.mxu0
      %v8192 = vadd.f32 %v7805, %v8034
      %v8193 = vadd.f32 %v7806, %v8039
      %v8194 = vadd.f32 %v7807, %v8044
      %v8195 = vadd.f32 %v7808, %v8049
      %v8196 = vadd.f32 %v7809, %v8054
      %v8197 = vadd.f32 %v7810, %v8059
      %v8198 = vadd.f32 %v7811, %v8064
      %v8199 = vadd.f32 %v7812, %v8069
      %v8200 = vadd.f32 %v7813, %v8074
      %v8201 = vadd.f32 %v7814, %v8079
      %v8202 = vadd.f32 %v7815, %v8084
      %v8203 = vadd.f32 %v7816, %v8089
      %v8204 = vadd.f32 %v7817, %v8094
      %v8205 = vadd.f32 %v7818, %v8099
      %v8206 = vadd.f32 %v7819, %v8104
      %v8207 = vadd.f32 %v7820, %v8109
      %v8208 = vadd.f32 %v7821, %v8114
      %v8209 = vadd.f32 %v7822, %v8119
      %v8210 = vadd.f32 %v7823, %v8124
      %v8211 = vadd.f32 %v7824, %v8129
      %v8212 = vadd.f32 %v7825, %v8134
      %v8213 = vadd.f32 %v7826, %v8139
      %v8214 = vadd.f32 %v7827, %v8144
      %v8215 = vadd.f32 %v7828, %v8149
      %v8216 = vadd.f32 %v7829, %v8154
      %v8217 = vadd.f32 %v7830, %v8159
      %v8218 = vadd.f32 %v7831, %v8164
      %v8219 = vadd.f32 %v7832, %v8169
      %v8220 = vadd.f32 %v7833, %v8174
      %v8221 = vadd.f32 %v7834, %v8179
      %v8222 = vadd.f32 %v7835, %v8184
      %v8223 = vadd.f32 %v7836, %v8189
      %s8224 = scalar_lea.vmem [#allocation3], 48
      %v8225 = vld [vmem:[%s8224] sm:$0xff]
      %v8226 = vld [vmem:[%s8224 + $0x8] sm:$0xff]
      %v8227 = vld [vmem:[%s8224 + $0x18] sm:$0xff]
      %v8228 = vld [vmem:[%s8224 + $0x20] sm:$0xff]
      %v8229 = vld [vmem:[%s8224 + $0x30] sm:$0xff]
      %v8230 = vld [vmem:[%s8224 + $0x38] sm:$0xff]
      %v8231 = vld [vmem:[%s8224 + $0x48] sm:$0xff]
      %v8232 = vld [vmem:[%s8224 + $0x50] sm:$0xff]
      %v8233 = vld [vmem:[%s8224 + $0x60] sm:$0xff]
      %v8234 = vld [vmem:[%s8224 + $0x68] sm:$0xff]
      %v8235 = vld [vmem:[%s8224 + $0x78] sm:$0xff]
      %v8236 = vld [vmem:[%s8224 + $0x80] sm:$0xff]
      %v8237 = vld [vmem:[%s8224 + $0x90] sm:$0xff]
      %v8238 = vld [vmem:[%s8224 + $0x98] sm:$0xff]
      %v8239 = vld [vmem:[%s8224 + $0xa8] sm:$0xff]
      %v8240 = vld [vmem:[%s8224 + $0xb0] sm:$0xff]
      %v8241 = vld [vmem:[%s8224 + $0xc0] sm:$0xff]
      %v8242 = vld [vmem:[%s8224 + $0xc8] sm:$0xff]
      %v8243 = vld [vmem:[%s8224 + $0xd8] sm:$0xff]
      %v8244 = vld [vmem:[%s8224 + $0xe0] sm:$0xff]
      %v8245 = vld [vmem:[%s8224 + $0xf0] sm:$0xff]
      %v8246 = vld [vmem:[%s8224 + $0xf8] sm:$0xff]
      %v8247 = vld [vmem:[%s8224 + $0x108] sm:$0xff]
      %v8248 = vld [vmem:[%s8224 + $0x110] sm:$0xff]
      %v8249 = vld [vmem:[%s8224 + $0x120] sm:$0xff]
      %v8250 = vld [vmem:[%s8224 + $0x128] sm:$0xff]
      %v8251 = vld [vmem:[%s8224 + $0x138] sm:$0xff]
      %v8252 = vld [vmem:[%s8224 + $0x140] sm:$0xff]
      %v8253 = vld [vmem:[%s8224 + $0x150] sm:$0xff]
      %v8254 = vld [vmem:[%s8224 + $0x158] sm:$0xff]
      %v8255 = vld [vmem:[%s8224 + $0x168] sm:$0xff]
      %v8256 = vld [vmem:[%s8224 + $0x170] sm:$0xff]
      %s8257 = scalar_lea.vmem %s12, 48
      %v8258 = vld [vmem:[%s8257] sm:$0xff]
      %v8260 = vsel %vm5036, %v8225, 0
      %v8263 = vsel %vm5036, %v8226, 0
      %v8266 = vsel %vm5036, %v8227, 0
      %v8269 = vsel %vm5036, %v8228, 0
      %v8272 = vsel %vm5036, %v8229, 0
      %v8275 = vsel %vm5036, %v8230, 0
      %v8278 = vsel %vm5036, %v8231, 0
      %v8281 = vsel %vm5036, %v8232, 0
      %v8284 = vsel %vm5036, %v8233, 0
      %v8287 = vsel %vm5036, %v8234, 0
      %v8290 = vsel %vm5036, %v8235, 0
      %v8293 = vsel %vm5036, %v8236, 0
      %v8296 = vsel %vm5036, %v8237, 0
      %v8299 = vsel %vm5036, %v8238, 0
      %v8302 = vsel %vm5036, %v8239, 0
      %v8305 = vsel %vm5036, %v8240, 0
      %v8308 = vsel %vm5036, %v8241, 0
      %v8311 = vsel %vm5036, %v8242, 0
      %v8314 = vsel %vm5036, %v8243, 0
      %v8317 = vsel %vm5036, %v8244, 0
      %v8320 = vsel %vm5036, %v8245, 0
      %v8323 = vsel %vm5036, %v8246, 0
      %v8326 = vsel %vm5036, %v8247, 0
      %v8329 = vsel %vm5036, %v8248, 0
      %v8332 = vsel %vm5036, %v8249, 0
      %v8335 = vsel %vm5036, %v8250, 0
      %v8338 = vsel %vm5036, %v8251, 0
      %v8341 = vsel %vm5036, %v8252, 0
      %v8344 = vsel %vm5036, %v8253, 0
      %v8347 = vsel %vm5036, %v8254, 0
      %v8350 = vsel %vm5036, %v8255, 0
      %v8353 = vsel %vm5036, %v8256, 0
      %8355 = vmatprep.subr.mxu0 0.0
      %8356 = vmatpush1.msra.mxu0 0.0
      %8357 = vmatprep.subr.mxu0 0.0
      %8358 = vmatpush1.msra.mxu0 0.0
      %8359 = vmatprep.subr.mxu0 0.0
      %8360 = vmatpush1.msra.mxu0 0.0
      %8361 = vmatprep.subr.mxu0 0.0
      %8362 = vmatpush1.msra.mxu0 0.0
      %8363 = vmatprep.subr.mxu0 0.0
      %8364 = vmatpush1.msra.mxu0 0.0
      %8365 = vmatprep.subr.mxu0 0.0
      %8366 = vmatpush1.msra.mxu0 0.0
      %8367 = vmatprep.subr.mxu0 0.0
      %8368 = vmatpush1.msra.mxu0 0.0
      %8369 = vmatprep.subr.mxu0 0.0
      %8370 = vmatpush1.msra.mxu0 0.0
      %8371 = vmatprep.subr.mxu0 0.0
      %8372 = vmatpush1.msra.mxu0 0.0
      %8373 = vmatprep.subr.mxu0 0.0
      %8374 = vmatpush1.msra.mxu0 0.0
      %8375 = vmatprep.subr.mxu0 0.0
      %8376 = vmatpush1.msra.mxu0 0.0
      %8377 = vmatprep.subr.mxu0 0.0
      %8378 = vmatpush1.msra.mxu0 0.0
      %8379 = vmatprep.subr.mxu0 0.0
      %8380 = vmatpush1.msra.mxu0 0.0
      %8381 = vmatprep.subr.mxu0 0.0
      %8382 = vmatpush1.msra.mxu0 0.0
      %8383 = vmatprep.subr.mxu0 0.0
      %8384 = vmatpush1.msra.mxu0 0.0
      %8385 = vmatprep.subr.mxu0 0.0
      %8386 = vmatpush1.msra.mxu0 %v8258
      %8387 = vmatprep.subr.mxu0 0.0
      %8388 = vmatpush2.msra.mxu0 0.0
      %8389 = vmatprep.subr.mxu0 0.0
      %8390 = vmatpush2.msra.mxu0 0.0
      %8391 = vmatprep.subr.mxu0 0.0
      %8392 = vmatpush2.msra.mxu0 0.0
      %8393 = vmatprep.subr.mxu0 0.0
      %8394 = vmatpush2.msra.mxu0 0.0
      %8395 = vmatprep.subr.mxu0 0.0
      %8396 = vmatpush2.msra.mxu0 0.0
      %8397 = vmatprep.subr.mxu0 0.0
      %8398 = vmatpush2.msra.mxu0 0.0
      %8399 = vmatprep.subr.mxu0 0.0
      %8400 = vmatpush2.msra.mxu0 0.0
      %8401 = vmatprep.subr.mxu0 0.0
      %8402 = vmatpush2.msra.mxu0 0.0
      %8403 = vmatprep.subr.mxu0 0.0
      %8404 = vmatpush2.msra.mxu0 0.0
      %8405 = vmatprep.subr.mxu0 0.0
      %8406 = vmatpush2.msra.mxu0 0.0
      %8407 = vmatprep.subr.mxu0 0.0
      %8408 = vmatpush2.msra.mxu0 0.0
      %8409 = vmatprep.subr.mxu0 0.0
      %8410 = vmatpush2.msra.mxu0 0.0
      %8411 = vmatprep.subr.mxu0 0.0
      %8412 = vmatpush2.msra.mxu0 0.0
      %8413 = vmatprep.subr.mxu0 0.0
      %8414 = vmatpush2.msra.mxu0 0.0
      %8415 = vmatprep.subr.mxu0 0.0
      %8416 = vmatpush2.msra.mxu0 0.0
      %8417 = vmatprep.subr.mxu0 0.0
      %8418 = vmatpush2.msra.mxu0 0.0
      %8419 = vmatprep.mubr.f32.mxu0 0.0
      %8420 = vmatmul.mubr.f32.gmra.mxu0 %v8260
      %v8421 = vpop.f32.mrf.mxu0
      %v8422 = vadd.f32 0.0, %v8421
      %v8423 = vpop.f32.mrf.mxu0
      %8424 = vmatprep.mubr.f32.mxu0 0.0
      %8425 = vmatmul.mubr.f32.gmra.mxu0 %v8263
      %v8426 = vpop.f32.mrf.mxu0
      %v8427 = vadd.f32 0.0, %v8426
      %v8428 = vpop.f32.mrf.mxu0
      %8429 = vmatprep.mubr.f32.mxu0 0.0
      %8430 = vmatmul.mubr.f32.gmra.mxu0 %v8266
      %v8431 = vpop.f32.mrf.mxu0
      %v8432 = vadd.f32 0.0, %v8431
      %v8433 = vpop.f32.mrf.mxu0
      %8434 = vmatprep.mubr.f32.mxu0 0.0
      %8435 = vmatmul.mubr.f32.gmra.mxu0 %v8269
      %v8436 = vpop.f32.mrf.mxu0
      %v8437 = vadd.f32 0.0, %v8436
      %v8438 = vpop.f32.mrf.mxu0
      %8439 = vmatprep.mubr.f32.mxu0 0.0
      %8440 = vmatmul.mubr.f32.gmra.mxu0 %v8272
      %v8441 = vpop.f32.mrf.mxu0
      %v8442 = vadd.f32 0.0, %v8441
      %v8443 = vpop.f32.mrf.mxu0
      %8444 = vmatprep.mubr.f32.mxu0 0.0
      %8445 = vmatmul.mubr.f32.gmra.mxu0 %v8275
      %v8446 = vpop.f32.mrf.mxu0
      %v8447 = vadd.f32 0.0, %v8446
      %v8448 = vpop.f32.mrf.mxu0
      %8449 = vmatprep.mubr.f32.mxu0 0.0
      %8450 = vmatmul.mubr.f32.gmra.mxu0 %v8278
      %v8451 = vpop.f32.mrf.mxu0
      %v8452 = vadd.f32 0.0, %v8451
      %v8453 = vpop.f32.mrf.mxu0
      %8454 = vmatprep.mubr.f32.mxu0 0.0
      %8455 = vmatmul.mubr.f32.gmra.mxu0 %v8281
      %v8456 = vpop.f32.mrf.mxu0
      %v8457 = vadd.f32 0.0, %v8456
      %v8458 = vpop.f32.mrf.mxu0
      %8459 = vmatprep.mubr.f32.mxu0 0.0
      %8460 = vmatmul.mubr.f32.gmra.mxu0 %v8284
      %v8461 = vpop.f32.mrf.mxu0
      %v8462 = vadd.f32 0.0, %v8461
      %v8463 = vpop.f32.mrf.mxu0
      %8464 = vmatprep.mubr.f32.mxu0 0.0
      %8465 = vmatmul.mubr.f32.gmra.mxu0 %v8287
      %v8466 = vpop.f32.mrf.mxu0
      %v8467 = vadd.f32 0.0, %v8466
      %v8468 = vpop.f32.mrf.mxu0
      %8469 = vmatprep.mubr.f32.mxu0 0.0
      %8470 = vmatmul.mubr.f32.gmra.mxu0 %v8290
      %v8471 = vpop.f32.mrf.mxu0
      %v8472 = vadd.f32 0.0, %v8471
      %v8473 = vpop.f32.mrf.mxu0
      %8474 = vmatprep.mubr.f32.mxu0 0.0
      %8475 = vmatmul.mubr.f32.gmra.mxu0 %v8293
      %v8476 = vpop.f32.mrf.mxu0
      %v8477 = vadd.f32 0.0, %v8476
      %v8478 = vpop.f32.mrf.mxu0
      %8479 = vmatprep.mubr.f32.mxu0 0.0
      %8480 = vmatmul.mubr.f32.gmra.mxu0 %v8296
      %v8481 = vpop.f32.mrf.mxu0
      %v8482 = vadd.f32 0.0, %v8481
      %v8483 = vpop.f32.mrf.mxu0
      %8484 = vmatprep.mubr.f32.mxu0 0.0
      %8485 = vmatmul.mubr.f32.gmra.mxu0 %v8299
      %v8486 = vpop.f32.mrf.mxu0
      %v8487 = vadd.f32 0.0, %v8486
      %v8488 = vpop.f32.mrf.mxu0
      %8489 = vmatprep.mubr.f32.mxu0 0.0
      %8490 = vmatmul.mubr.f32.gmra.mxu0 %v8302
      %v8491 = vpop.f32.mrf.mxu0
      %v8492 = vadd.f32 0.0, %v8491
      %v8493 = vpop.f32.mrf.mxu0
      %8494 = vmatprep.mubr.f32.mxu0 0.0
      %8495 = vmatmul.mubr.f32.gmra.mxu0 %v8305
      %v8496 = vpop.f32.mrf.mxu0
      %v8497 = vadd.f32 0.0, %v8496
      %v8498 = vpop.f32.mrf.mxu0
      %8499 = vmatprep.mubr.f32.mxu0 0.0
      %8500 = vmatmul.mubr.f32.gmra.mxu0 %v8308
      %v8501 = vpop.f32.mrf.mxu0
      %v8502 = vadd.f32 0.0, %v8501
      %v8503 = vpop.f32.mrf.mxu0
      %8504 = vmatprep.mubr.f32.mxu0 0.0
      %8505 = vmatmul.mubr.f32.gmra.mxu0 %v8311
      %v8506 = vpop.f32.mrf.mxu0
      %v8507 = vadd.f32 0.0, %v8506
      %v8508 = vpop.f32.mrf.mxu0
      %8509 = vmatprep.mubr.f32.mxu0 0.0
      %8510 = vmatmul.mubr.f32.gmra.mxu0 %v8314
      %v8511 = vpop.f32.mrf.mxu0
      %v8512 = vadd.f32 0.0, %v8511
      %v8513 = vpop.f32.mrf.mxu0
      %8514 = vmatprep.mubr.f32.mxu0 0.0
      %8515 = vmatmul.mubr.f32.gmra.mxu0 %v8317
      %v8516 = vpop.f32.mrf.mxu0
      %v8517 = vadd.f32 0.0, %v8516
      %v8518 = vpop.f32.mrf.mxu0
      %8519 = vmatprep.mubr.f32.mxu0 0.0
      %8520 = vmatmul.mubr.f32.gmra.mxu0 %v8320
      %v8521 = vpop.f32.mrf.mxu0
      %v8522 = vadd.f32 0.0, %v8521
      %v8523 = vpop.f32.mrf.mxu0
      %8524 = vmatprep.mubr.f32.mxu0 0.0
      %8525 = vmatmul.mubr.f32.gmra.mxu0 %v8323
      %v8526 = vpop.f32.mrf.mxu0
      %v8527 = vadd.f32 0.0, %v8526
      %v8528 = vpop.f32.mrf.mxu0
      %8529 = vmatprep.mubr.f32.mxu0 0.0
      %8530 = vmatmul.mubr.f32.gmra.mxu0 %v8326
      %v8531 = vpop.f32.mrf.mxu0
      %v8532 = vadd.f32 0.0, %v8531
      %v8533 = vpop.f32.mrf.mxu0
      %8534 = vmatprep.mubr.f32.mxu0 0.0
      %8535 = vmatmul.mubr.f32.gmra.mxu0 %v8329
      %v8536 = vpop.f32.mrf.mxu0
      %v8537 = vadd.f32 0.0, %v8536
      %v8538 = vpop.f32.mrf.mxu0
      %8539 = vmatprep.mubr.f32.mxu0 0.0
      %8540 = vmatmul.mubr.f32.gmra.mxu0 %v8332
      %v8541 = vpop.f32.mrf.mxu0
      %v8542 = vadd.f32 0.0, %v8541
      %v8543 = vpop.f32.mrf.mxu0
      %8544 = vmatprep.mubr.f32.mxu0 0.0
      %8545 = vmatmul.mubr.f32.gmra.mxu0 %v8335
      %v8546 = vpop.f32.mrf.mxu0
      %v8547 = vadd.f32 0.0, %v8546
      %v8548 = vpop.f32.mrf.mxu0
      %8549 = vmatprep.mubr.f32.mxu0 0.0
      %8550 = vmatmul.mubr.f32.gmra.mxu0 %v8338
      %v8551 = vpop.f32.mrf.mxu0
      %v8552 = vadd.f32 0.0, %v8551
      %v8553 = vpop.f32.mrf.mxu0
      %8554 = vmatprep.mubr.f32.mxu0 0.0
      %8555 = vmatmul.mubr.f32.gmra.mxu0 %v8341
      %v8556 = vpop.f32.mrf.mxu0
      %v8557 = vadd.f32 0.0, %v8556
      %v8558 = vpop.f32.mrf.mxu0
      %8559 = vmatprep.mubr.f32.mxu0 0.0
      %8560 = vmatmul.mubr.f32.gmra.mxu0 %v8344
      %v8561 = vpop.f32.mrf.mxu0
      %v8562 = vadd.f32 0.0, %v8561
      %v8563 = vpop.f32.mrf.mxu0
      %8564 = vmatprep.mubr.f32.mxu0 0.0
      %8565 = vmatmul.mubr.f32.gmra.mxu0 %v8347
      %v8566 = vpop.f32.mrf.mxu0
      %v8567 = vadd.f32 0.0, %v8566
      %v8568 = vpop.f32.mrf.mxu0
      %8569 = vmatprep.mubr.f32.mxu0 0.0
      %8570 = vmatmul.mubr.f32.gmra.mxu0 %v8350
      %v8571 = vpop.f32.mrf.mxu0
      %v8572 = vadd.f32 0.0, %v8571
      %v8573 = vpop.f32.mrf.mxu0
      %8574 = vmatprep.mubr.f32.mxu0 0.0
      %8575 = vmatmul.mubr.f32.gmra.mxu0 %v8353
      %v8576 = vpop.f32.mrf.mxu0
      %v8577 = vadd.f32 0.0, %v8576
      %v8578 = vpop.f32.mrf.mxu0
      %8579 = vdwg.mxu0
      %v8580 = vadd.f32 %v8192, %v8422
      %v8581 = vadd.f32 %v8193, %v8427
      %v8582 = vadd.f32 %v8194, %v8432
      %v8583 = vadd.f32 %v8195, %v8437
      %v8584 = vadd.f32 %v8196, %v8442
      %v8585 = vadd.f32 %v8197, %v8447
      %v8586 = vadd.f32 %v8198, %v8452
      %v8587 = vadd.f32 %v8199, %v8457
      %v8588 = vadd.f32 %v8200, %v8462
      %v8589 = vadd.f32 %v8201, %v8467
      %v8590 = vadd.f32 %v8202, %v8472
      %v8591 = vadd.f32 %v8203, %v8477
      %v8592 = vadd.f32 %v8204, %v8482
      %v8593 = vadd.f32 %v8205, %v8487
      %v8594 = vadd.f32 %v8206, %v8492
      %v8595 = vadd.f32 %v8207, %v8497
      %v8596 = vadd.f32 %v8208, %v8502
      %v8597 = vadd.f32 %v8209, %v8507
      %v8598 = vadd.f32 %v8210, %v8512
      %v8599 = vadd.f32 %v8211, %v8517
      %v8600 = vadd.f32 %v8212, %v8522
      %v8601 = vadd.f32 %v8213, %v8527
      %v8602 = vadd.f32 %v8214, %v8532
      %v8603 = vadd.f32 %v8215, %v8537
      %v8604 = vadd.f32 %v8216, %v8542
      %v8605 = vadd.f32 %v8217, %v8547
      %v8606 = vadd.f32 %v8218, %v8552
      %v8607 = vadd.f32 %v8219, %v8557
      %v8608 = vadd.f32 %v8220, %v8562
      %v8609 = vadd.f32 %v8221, %v8567
      %v8610 = vadd.f32 %v8222, %v8572
      %v8611 = vadd.f32 %v8223, %v8577
      %v8612 = vld [vmem:[%s8224 + $0x1] sm:$0xff]
      %v8613 = vld [vmem:[%s8224 + $0x9] sm:$0xff]
      %v8614 = vld [vmem:[%s8224 + $0x19] sm:$0xff]
      %v8615 = vld [vmem:[%s8224 + $0x21] sm:$0xff]
      %v8616 = vld [vmem:[%s8224 + $0x31] sm:$0xff]
      %v8617 = vld [vmem:[%s8224 + $0x39] sm:$0xff]
      %v8618 = vld [vmem:[%s8224 + $0x49] sm:$0xff]
      %v8619 = vld [vmem:[%s8224 + $0x51] sm:$0xff]
      %v8620 = vld [vmem:[%s8224 + $0x61] sm:$0xff]
      %v8621 = vld [vmem:[%s8224 + $0x69] sm:$0xff]
      %v8622 = vld [vmem:[%s8224 + $0x79] sm:$0xff]
      %v8623 = vld [vmem:[%s8224 + $0x81] sm:$0xff]
      %v8624 = vld [vmem:[%s8224 + $0x91] sm:$0xff]
      %v8625 = vld [vmem:[%s8224 + $0x99] sm:$0xff]
      %v8626 = vld [vmem:[%s8224 + $0xa9] sm:$0xff]
      %v8627 = vld [vmem:[%s8224 + $0xb1] sm:$0xff]
      %v8628 = vld [vmem:[%s8224 + $0xc1] sm:$0xff]
      %v8629 = vld [vmem:[%s8224 + $0xc9] sm:$0xff]
      %v8630 = vld [vmem:[%s8224 + $0xd9] sm:$0xff]
      %v8631 = vld [vmem:[%s8224 + $0xe1] sm:$0xff]
      %v8632 = vld [vmem:[%s8224 + $0xf1] sm:$0xff]
      %v8633 = vld [vmem:[%s8224 + $0xf9] sm:$0xff]
      %v8634 = vld [vmem:[%s8224 + $0x109] sm:$0xff]
      %v8635 = vld [vmem:[%s8224 + $0x111] sm:$0xff]
      %v8636 = vld [vmem:[%s8224 + $0x121] sm:$0xff]
      %v8637 = vld [vmem:[%s8224 + $0x129] sm:$0xff]
      %v8638 = vld [vmem:[%s8224 + $0x139] sm:$0xff]
      %v8639 = vld [vmem:[%s8224 + $0x141] sm:$0xff]
      %v8640 = vld [vmem:[%s8224 + $0x151] sm:$0xff]
      %v8641 = vld [vmem:[%s8224 + $0x159] sm:$0xff]
      %v8642 = vld [vmem:[%s8224 + $0x169] sm:$0xff]
      %v8643 = vld [vmem:[%s8224 + $0x171] sm:$0xff]
      %s8644 = scalar_lea.vmem %s12, 56
      %v8645 = vld [vmem:[%s8644] sm:$0xff]
      %v8647 = vsel %vm5036, %v8612, 0
      %v8650 = vsel %vm5036, %v8613, 0
      %v8653 = vsel %vm5036, %v8614, 0
      %v8656 = vsel %vm5036, %v8615, 0
      %v8659 = vsel %vm5036, %v8616, 0
      %v8662 = vsel %vm5036, %v8617, 0
      %v8665 = vsel %vm5036, %v8618, 0
      %v8668 = vsel %vm5036, %v8619, 0
      %v8671 = vsel %vm5036, %v8620, 0
      %v8674 = vsel %vm5036, %v8621, 0
      %v8677 = vsel %vm5036, %v8622, 0
      %v8680 = vsel %vm5036, %v8623, 0
      %v8683 = vsel %vm5036, %v8624, 0
      %v8686 = vsel %vm5036, %v8625, 0
      %v8689 = vsel %vm5036, %v8626, 0
      %v8692 = vsel %vm5036, %v8627, 0
      %v8695 = vsel %vm5036, %v8628, 0
      %v8698 = vsel %vm5036, %v8629, 0
      %v8701 = vsel %vm5036, %v8630, 0
      %v8704 = vsel %vm5036, %v8631, 0
      %v8707 = vsel %vm5036, %v8632, 0
      %v8710 = vsel %vm5036, %v8633, 0
      %v8713 = vsel %vm5036, %v8634, 0
      %v8716 = vsel %vm5036, %v8635, 0
      %v8719 = vsel %vm5036, %v8636, 0
      %v8722 = vsel %vm5036, %v8637, 0
      %v8725 = vsel %vm5036, %v8638, 0
      %v8728 = vsel %vm5036, %v8639, 0
      %v8731 = vsel %vm5036, %v8640, 0
      %v8734 = vsel %vm5036, %v8641, 0
      %v8737 = vsel %vm5036, %v8642, 0
      %v8740 = vsel %vm5036, %v8643, 0
      %8742 = vmatprep.subr.mxu0 0.0
      %8743 = vmatpush1.msra.mxu0 0.0
      %8744 = vmatprep.subr.mxu0 0.0
      %8745 = vmatpush1.msra.mxu0 0.0
      %8746 = vmatprep.subr.mxu0 0.0
      %8747 = vmatpush1.msra.mxu0 0.0
      %8748 = vmatprep.subr.mxu0 0.0
      %8749 = vmatpush1.msra.mxu0 0.0
      %8750 = vmatprep.subr.mxu0 0.0
      %8751 = vmatpush1.msra.mxu0 0.0
      %8752 = vmatprep.subr.mxu0 0.0
      %8753 = vmatpush1.msra.mxu0 0.0
      %8754 = vmatprep.subr.mxu0 0.0
      %8755 = vmatpush1.msra.mxu0 0.0
      %8756 = vmatprep.subr.mxu0 0.0
      %8757 = vmatpush1.msra.mxu0 0.0
      %8758 = vmatprep.subr.mxu0 0.0
      %8759 = vmatpush1.msra.mxu0 0.0
      %8760 = vmatprep.subr.mxu0 0.0
      %8761 = vmatpush1.msra.mxu0 0.0
      %8762 = vmatprep.subr.mxu0 0.0
      %8763 = vmatpush1.msra.mxu0 0.0
      %8764 = vmatprep.subr.mxu0 0.0
      %8765 = vmatpush1.msra.mxu0 0.0
      %8766 = vmatprep.subr.mxu0 0.0
      %8767 = vmatpush1.msra.mxu0 0.0
      %8768 = vmatprep.subr.mxu0 0.0
      %8769 = vmatpush1.msra.mxu0 0.0
      %8770 = vmatprep.subr.mxu0 0.0
      %8771 = vmatpush1.msra.mxu0 0.0
      %8772 = vmatprep.subr.mxu0 0.0
      %8773 = vmatpush1.msra.mxu0 %v8645
      %8774 = vmatprep.subr.mxu0 0.0
      %8775 = vmatpush2.msra.mxu0 0.0
      %8776 = vmatprep.subr.mxu0 0.0
      %8777 = vmatpush2.msra.mxu0 0.0
      %8778 = vmatprep.subr.mxu0 0.0
      %8779 = vmatpush2.msra.mxu0 0.0
      %8780 = vmatprep.subr.mxu0 0.0
      %8781 = vmatpush2.msra.mxu0 0.0
      %8782 = vmatprep.subr.mxu0 0.0
      %8783 = vmatpush2.msra.mxu0 0.0
      %8784 = vmatprep.subr.mxu0 0.0
      %8785 = vmatpush2.msra.mxu0 0.0
      %8786 = vmatprep.subr.mxu0 0.0
      %8787 = vmatpush2.msra.mxu0 0.0
      %8788 = vmatprep.subr.mxu0 0.0
      %8789 = vmatpush2.msra.mxu0 0.0
      %8790 = vmatprep.subr.mxu0 0.0
      %8791 = vmatpush2.msra.mxu0 0.0
      %8792 = vmatprep.subr.mxu0 0.0
      %8793 = vmatpush2.msra.mxu0 0.0
      %8794 = vmatprep.subr.mxu0 0.0
      %8795 = vmatpush2.msra.mxu0 0.0
      %8796 = vmatprep.subr.mxu0 0.0
      %8797 = vmatpush2.msra.mxu0 0.0
      %8798 = vmatprep.subr.mxu0 0.0
      %8799 = vmatpush2.msra.mxu0 0.0
      %8800 = vmatprep.subr.mxu0 0.0
      %8801 = vmatpush2.msra.mxu0 0.0
      %8802 = vmatprep.subr.mxu0 0.0
      %8803 = vmatpush2.msra.mxu0 0.0
      %8804 = vmatprep.subr.mxu0 0.0
      %8805 = vmatpush2.msra.mxu0 0.0
      %8806 = vmatprep.mubr.f32.mxu0 0.0
      %8807 = vmatmul.mubr.f32.gmra.mxu0 %v8647
      %v8808 = vpop.f32.mrf.mxu0
      %v8809 = vadd.f32 0.0, %v8808
      %v8810 = vpop.f32.mrf.mxu0
      %8811 = vmatprep.mubr.f32.mxu0 0.0
      %8812 = vmatmul.mubr.f32.gmra.mxu0 %v8650
      %v8813 = vpop.f32.mrf.mxu0
      %v8814 = vadd.f32 0.0, %v8813
      %v8815 = vpop.f32.mrf.mxu0
      %8816 = vmatprep.mubr.f32.mxu0 0.0
      %8817 = vmatmul.mubr.f32.gmra.mxu0 %v8653
      %v8818 = vpop.f32.mrf.mxu0
      %v8819 = vadd.f32 0.0, %v8818
      %v8820 = vpop.f32.mrf.mxu0
      %8821 = vmatprep.mubr.f32.mxu0 0.0
      %8822 = vmatmul.mubr.f32.gmra.mxu0 %v8656
      %v8823 = vpop.f32.mrf.mxu0
      %v8824 = vadd.f32 0.0, %v8823
      %v8825 = vpop.f32.mrf.mxu0
      %8826 = vmatprep.mubr.f32.mxu0 0.0
      %8827 = vmatmul.mubr.f32.gmra.mxu0 %v8659
      %v8828 = vpop.f32.mrf.mxu0
      %v8829 = vadd.f32 0.0, %v8828
      %v8830 = vpop.f32.mrf.mxu0
      %8831 = vmatprep.mubr.f32.mxu0 0.0
      %8832 = vmatmul.mubr.f32.gmra.mxu0 %v8662
      %v8833 = vpop.f32.mrf.mxu0
      %v8834 = vadd.f32 0.0, %v8833
      %v8835 = vpop.f32.mrf.mxu0
      %8836 = vmatprep.mubr.f32.mxu0 0.0
      %8837 = vmatmul.mubr.f32.gmra.mxu0 %v8665
      %v8838 = vpop.f32.mrf.mxu0
      %v8839 = vadd.f32 0.0, %v8838
      %v8840 = vpop.f32.mrf.mxu0
      %8841 = vmatprep.mubr.f32.mxu0 0.0
      %8842 = vmatmul.mubr.f32.gmra.mxu0 %v8668
      %v8843 = vpop.f32.mrf.mxu0
      %v8844 = vadd.f32 0.0, %v8843
      %v8845 = vpop.f32.mrf.mxu0
      %8846 = vmatprep.mubr.f32.mxu0 0.0
      %8847 = vmatmul.mubr.f32.gmra.mxu0 %v8671
      %v8848 = vpop.f32.mrf.mxu0
      %v8849 = vadd.f32 0.0, %v8848
      %v8850 = vpop.f32.mrf.mxu0
      %8851 = vmatprep.mubr.f32.mxu0 0.0
      %8852 = vmatmul.mubr.f32.gmra.mxu0 %v8674
      %v8853 = vpop.f32.mrf.mxu0
      %v8854 = vadd.f32 0.0, %v8853
      %v8855 = vpop.f32.mrf.mxu0
      %8856 = vmatprep.mubr.f32.mxu0 0.0
      %8857 = vmatmul.mubr.f32.gmra.mxu0 %v8677
      %v8858 = vpop.f32.mrf.mxu0
      %v8859 = vadd.f32 0.0, %v8858
      %v8860 = vpop.f32.mrf.mxu0
      %8861 = vmatprep.mubr.f32.mxu0 0.0
      %8862 = vmatmul.mubr.f32.gmra.mxu0 %v8680
      %v8863 = vpop.f32.mrf.mxu0
      %v8864 = vadd.f32 0.0, %v8863
      %v8865 = vpop.f32.mrf.mxu0
      %8866 = vmatprep.mubr.f32.mxu0 0.0
      %8867 = vmatmul.mubr.f32.gmra.mxu0 %v8683
      %v8868 = vpop.f32.mrf.mxu0
      %v8869 = vadd.f32 0.0, %v8868
      %v8870 = vpop.f32.mrf.mxu0
      %8871 = vmatprep.mubr.f32.mxu0 0.0
      %8872 = vmatmul.mubr.f32.gmra.mxu0 %v8686
      %v8873 = vpop.f32.mrf.mxu0
      %v8874 = vadd.f32 0.0, %v8873
      %v8875 = vpop.f32.mrf.mxu0
      %8876 = vmatprep.mubr.f32.mxu0 0.0
      %8877 = vmatmul.mubr.f32.gmra.mxu0 %v8689
      %v8878 = vpop.f32.mrf.mxu0
      %v8879 = vadd.f32 0.0, %v8878
      %v8880 = vpop.f32.mrf.mxu0
      %8881 = vmatprep.mubr.f32.mxu0 0.0
      %8882 = vmatmul.mubr.f32.gmra.mxu0 %v8692
      %v8883 = vpop.f32.mrf.mxu0
      %v8884 = vadd.f32 0.0, %v8883
      %v8885 = vpop.f32.mrf.mxu0
      %8886 = vmatprep.mubr.f32.mxu0 0.0
      %8887 = vmatmul.mubr.f32.gmra.mxu0 %v8695
      %v8888 = vpop.f32.mrf.mxu0
      %v8889 = vadd.f32 0.0, %v8888
      %v8890 = vpop.f32.mrf.mxu0
      %8891 = vmatprep.mubr.f32.mxu0 0.0
      %8892 = vmatmul.mubr.f32.gmra.mxu0 %v8698
      %v8893 = vpop.f32.mrf.mxu0
      %v8894 = vadd.f32 0.0, %v8893
      %v8895 = vpop.f32.mrf.mxu0
      %8896 = vmatprep.mubr.f32.mxu0 0.0
      %8897 = vmatmul.mubr.f32.gmra.mxu0 %v8701
      %v8898 = vpop.f32.mrf.mxu0
      %v8899 = vadd.f32 0.0, %v8898
      %v8900 = vpop.f32.mrf.mxu0
      %8901 = vmatprep.mubr.f32.mxu0 0.0
      %8902 = vmatmul.mubr.f32.gmra.mxu0 %v8704
      %v8903 = vpop.f32.mrf.mxu0
      %v8904 = vadd.f32 0.0, %v8903
      %v8905 = vpop.f32.mrf.mxu0
      %8906 = vmatprep.mubr.f32.mxu0 0.0
      %8907 = vmatmul.mubr.f32.gmra.mxu0 %v8707
      %v8908 = vpop.f32.mrf.mxu0
      %v8909 = vadd.f32 0.0, %v8908
      %v8910 = vpop.f32.mrf.mxu0
      %8911 = vmatprep.mubr.f32.mxu0 0.0
      %8912 = vmatmul.mubr.f32.gmra.mxu0 %v8710
      %v8913 = vpop.f32.mrf.mxu0
      %v8914 = vadd.f32 0.0, %v8913
      %v8915 = vpop.f32.mrf.mxu0
      %8916 = vmatprep.mubr.f32.mxu0 0.0
      %8917 = vmatmul.mubr.f32.gmra.mxu0 %v8713
      %v8918 = vpop.f32.mrf.mxu0
      %v8919 = vadd.f32 0.0, %v8918
      %v8920 = vpop.f32.mrf.mxu0
      %8921 = vmatprep.mubr.f32.mxu0 0.0
      %8922 = vmatmul.mubr.f32.gmra.mxu0 %v8716
      %v8923 = vpop.f32.mrf.mxu0
      %v8924 = vadd.f32 0.0, %v8923
      %v8925 = vpop.f32.mrf.mxu0
      %8926 = vmatprep.mubr.f32.mxu0 0.0
      %8927 = vmatmul.mubr.f32.gmra.mxu0 %v8719
      %v8928 = vpop.f32.mrf.mxu0
      %v8929 = vadd.f32 0.0, %v8928
      %v8930 = vpop.f32.mrf.mxu0
      %8931 = vmatprep.mubr.f32.mxu0 0.0
      %8932 = vmatmul.mubr.f32.gmra.mxu0 %v8722
      %v8933 = vpop.f32.mrf.mxu0
      %v8934 = vadd.f32 0.0, %v8933
      %v8935 = vpop.f32.mrf.mxu0
      %8936 = vmatprep.mubr.f32.mxu0 0.0
      %8937 = vmatmul.mubr.f32.gmra.mxu0 %v8725
      %v8938 = vpop.f32.mrf.mxu0
      %v8939 = vadd.f32 0.0, %v8938
      %v8940 = vpop.f32.mrf.mxu0
      %8941 = vmatprep.mubr.f32.mxu0 0.0
      %8942 = vmatmul.mubr.f32.gmra.mxu0 %v8728
      %v8943 = vpop.f32.mrf.mxu0
      %v8944 = vadd.f32 0.0, %v8943
      %v8945 = vpop.f32.mrf.mxu0
      %8946 = vmatprep.mubr.f32.mxu0 0.0
      %8947 = vmatmul.mubr.f32.gmra.mxu0 %v8731
      %v8948 = vpop.f32.mrf.mxu0
      %v8949 = vadd.f32 0.0, %v8948
      %v8950 = vpop.f32.mrf.mxu0
      %8951 = vmatprep.mubr.f32.mxu0 0.0
      %8952 = vmatmul.mubr.f32.gmra.mxu0 %v8734
      %v8953 = vpop.f32.mrf.mxu0
      %v8954 = vadd.f32 0.0, %v8953
      %v8955 = vpop.f32.mrf.mxu0
      %8956 = vmatprep.mubr.f32.mxu0 0.0
      %8957 = vmatmul.mubr.f32.gmra.mxu0 %v8737
      %v8958 = vpop.f32.mrf.mxu0
      %v8959 = vadd.f32 0.0, %v8958
      %v8960 = vpop.f32.mrf.mxu0
      %8961 = vmatprep.mubr.f32.mxu0 0.0
      %8962 = vmatmul.mubr.f32.gmra.mxu0 %v8740
      %v8963 = vpop.f32.mrf.mxu0
      %v8964 = vadd.f32 0.0, %v8963
      %v8965 = vpop.f32.mrf.mxu0
      %8966 = vdwg.mxu0
      %v8967 = vadd.f32 %v8580, %v8809
      %v8968 = vadd.f32 %v8581, %v8814
      %v8969 = vadd.f32 %v8582, %v8819
      %v8970 = vadd.f32 %v8583, %v8824
      %v8971 = vadd.f32 %v8584, %v8829
      %v8972 = vadd.f32 %v8585, %v8834
      %v8973 = vadd.f32 %v8586, %v8839
      %v8974 = vadd.f32 %v8587, %v8844
      %v8975 = vadd.f32 %v8588, %v8849
      %v8976 = vadd.f32 %v8589, %v8854
      %v8977 = vadd.f32 %v8590, %v8859
      %v8978 = vadd.f32 %v8591, %v8864
      %v8979 = vadd.f32 %v8592, %v8869
      %v8980 = vadd.f32 %v8593, %v8874
      %v8981 = vadd.f32 %v8594, %v8879
      %v8982 = vadd.f32 %v8595, %v8884
      %v8983 = vadd.f32 %v8596, %v8889
      %v8984 = vadd.f32 %v8597, %v8894
      %v8985 = vadd.f32 %v8598, %v8899
      %v8986 = vadd.f32 %v8599, %v8904
      %v8987 = vadd.f32 %v8600, %v8909
      %v8988 = vadd.f32 %v8601, %v8914
      %v8989 = vadd.f32 %v8602, %v8919
      %v8990 = vadd.f32 %v8603, %v8924
      %v8991 = vadd.f32 %v8604, %v8929
      %v8992 = vadd.f32 %v8605, %v8934
      %v8993 = vadd.f32 %v8606, %v8939
      %v8994 = vadd.f32 %v8607, %v8944
      %v8995 = vadd.f32 %v8608, %v8949
      %v8996 = vadd.f32 %v8609, %v8954
      %v8997 = vadd.f32 %v8610, %v8959
      %v8998 = vadd.f32 %v8611, %v8964
      %v8999 = vld [vmem:[%s8224 + $0x2] sm:$0xff]
      %v9000 = vld [vmem:[%s8224 + $0xa] sm:$0xff]
      %v9001 = vld [vmem:[%s8224 + $0x1a] sm:$0xff]
      %v9002 = vld [vmem:[%s8224 + $0x22] sm:$0xff]
      %v9003 = vld [vmem:[%s8224 + $0x32] sm:$0xff]
      %v9004 = vld [vmem:[%s8224 + $0x3a] sm:$0xff]
      %v9005 = vld [vmem:[%s8224 + $0x4a] sm:$0xff]
      %v9006 = vld [vmem:[%s8224 + $0x52] sm:$0xff]
      %v9007 = vld [vmem:[%s8224 + $0x62] sm:$0xff]
      %v9008 = vld [vmem:[%s8224 + $0x6a] sm:$0xff]
      %v9009 = vld [vmem:[%s8224 + $0x7a] sm:$0xff]
      %v9010 = vld [vmem:[%s8224 + $0x82] sm:$0xff]
      %v9011 = vld [vmem:[%s8224 + $0x92] sm:$0xff]
      %v9012 = vld [vmem:[%s8224 + $0x9a] sm:$0xff]
      %v9013 = vld [vmem:[%s8224 + $0xaa] sm:$0xff]
      %v9014 = vld [vmem:[%s8224 + $0xb2] sm:$0xff]
      %v9015 = vld [vmem:[%s8224 + $0xc2] sm:$0xff]
      %v9016 = vld [vmem:[%s8224 + $0xca] sm:$0xff]
      %v9017 = vld [vmem:[%s8224 + $0xda] sm:$0xff]
      %v9018 = vld [vmem:[%s8224 + $0xe2] sm:$0xff]
      %v9019 = vld [vmem:[%s8224 + $0xf2] sm:$0xff]
      %v9020 = vld [vmem:[%s8224 + $0xfa] sm:$0xff]
      %v9021 = vld [vmem:[%s8224 + $0x10a] sm:$0xff]
      %v9022 = vld [vmem:[%s8224 + $0x112] sm:$0xff]
      %v9023 = vld [vmem:[%s8224 + $0x122] sm:$0xff]
      %v9024 = vld [vmem:[%s8224 + $0x12a] sm:$0xff]
      %v9025 = vld [vmem:[%s8224 + $0x13a] sm:$0xff]
      %v9026 = vld [vmem:[%s8224 + $0x142] sm:$0xff]
      %v9027 = vld [vmem:[%s8224 + $0x152] sm:$0xff]
      %v9028 = vld [vmem:[%s8224 + $0x15a] sm:$0xff]
      %v9029 = vld [vmem:[%s8224 + $0x16a] sm:$0xff]
      %v9030 = vld [vmem:[%s8224 + $0x172] sm:$0xff]
      %s9031 = scalar_lea.vmem %s12, 64
      %v9032 = vld [vmem:[%s9031] sm:$0xff]
      %v9034 = vsel %vm5036, %v8999, 0
      %v9037 = vsel %vm5036, %v9000, 0
      %v9040 = vsel %vm5036, %v9001, 0
      %v9043 = vsel %vm5036, %v9002, 0
      %v9046 = vsel %vm5036, %v9003, 0
      %v9049 = vsel %vm5036, %v9004, 0
      %v9052 = vsel %vm5036, %v9005, 0
      %v9055 = vsel %vm5036, %v9006, 0
      %v9058 = vsel %vm5036, %v9007, 0
      %v9061 = vsel %vm5036, %v9008, 0
      %v9064 = vsel %vm5036, %v9009, 0
      %v9067 = vsel %vm5036, %v9010, 0
      %v9070 = vsel %vm5036, %v9011, 0
      %v9073 = vsel %vm5036, %v9012, 0
      %v9076 = vsel %vm5036, %v9013, 0
      %v9079 = vsel %vm5036, %v9014, 0
      %v9082 = vsel %vm5036, %v9015, 0
      %v9085 = vsel %vm5036, %v9016, 0
      %v9088 = vsel %vm5036, %v9017, 0
      %v9091 = vsel %vm5036, %v9018, 0
      %v9094 = vsel %vm5036, %v9019, 0
      %v9097 = vsel %vm5036, %v9020, 0
      %v9100 = vsel %vm5036, %v9021, 0
      %v9103 = vsel %vm5036, %v9022, 0
      %v9106 = vsel %vm5036, %v9023, 0
      %v9109 = vsel %vm5036, %v9024, 0
      %v9112 = vsel %vm5036, %v9025, 0
      %v9115 = vsel %vm5036, %v9026, 0
      %v9118 = vsel %vm5036, %v9027, 0
      %v9121 = vsel %vm5036, %v9028, 0
      %v9124 = vsel %vm5036, %v9029, 0
      %v9127 = vsel %vm5036, %v9030, 0
      %9129 = vmatprep.subr.mxu0 0.0
      %9130 = vmatpush1.msra.mxu0 0.0
      %9131 = vmatprep.subr.mxu0 0.0
      %9132 = vmatpush1.msra.mxu0 0.0
      %9133 = vmatprep.subr.mxu0 0.0
      %9134 = vmatpush1.msra.mxu0 0.0
      %9135 = vmatprep.subr.mxu0 0.0
      %9136 = vmatpush1.msra.mxu0 0.0
      %9137 = vmatprep.subr.mxu0 0.0
      %9138 = vmatpush1.msra.mxu0 0.0
      %9139 = vmatprep.subr.mxu0 0.0
      %9140 = vmatpush1.msra.mxu0 0.0
      %9141 = vmatprep.subr.mxu0 0.0
      %9142 = vmatpush1.msra.mxu0 0.0
      %9143 = vmatprep.subr.mxu0 0.0
      %9144 = vmatpush1.msra.mxu0 0.0
      %9145 = vmatprep.subr.mxu0 0.0
      %9146 = vmatpush1.msra.mxu0 0.0
      %9147 = vmatprep.subr.mxu0 0.0
      %9148 = vmatpush1.msra.mxu0 0.0
      %9149 = vmatprep.subr.mxu0 0.0
      %9150 = vmatpush1.msra.mxu0 0.0
      %9151 = vmatprep.subr.mxu0 0.0
      %9152 = vmatpush1.msra.mxu0 0.0
      %9153 = vmatprep.subr.mxu0 0.0
      %9154 = vmatpush1.msra.mxu0 0.0
      %9155 = vmatprep.subr.mxu0 0.0
      %9156 = vmatpush1.msra.mxu0 0.0
      %9157 = vmatprep.subr.mxu0 0.0
      %9158 = vmatpush1.msra.mxu0 0.0
      %9159 = vmatprep.subr.mxu0 0.0
      %9160 = vmatpush1.msra.mxu0 %v9032
      %9161 = vmatprep.subr.mxu0 0.0
      %9162 = vmatpush2.msra.mxu0 0.0
      %9163 = vmatprep.subr.mxu0 0.0
      %9164 = vmatpush2.msra.mxu0 0.0
      %9165 = vmatprep.subr.mxu0 0.0
      %9166 = vmatpush2.msra.mxu0 0.0
      %9167 = vmatprep.subr.mxu0 0.0
      %9168 = vmatpush2.msra.mxu0 0.0
      %9169 = vmatprep.subr.mxu0 0.0
      %9170 = vmatpush2.msra.mxu0 0.0
      %9171 = vmatprep.subr.mxu0 0.0
      %9172 = vmatpush2.msra.mxu0 0.0
      %9173 = vmatprep.subr.mxu0 0.0
      %9174 = vmatpush2.msra.mxu0 0.0
      %9175 = vmatprep.subr.mxu0 0.0
      %9176 = vmatpush2.msra.mxu0 0.0
      %9177 = vmatprep.subr.mxu0 0.0
      %9178 = vmatpush2.msra.mxu0 0.0
      %9179 = vmatprep.subr.mxu0 0.0
      %9180 = vmatpush2.msra.mxu0 0.0
      %9181 = vmatprep.subr.mxu0 0.0
      %9182 = vmatpush2.msra.mxu0 0.0
      %9183 = vmatprep.subr.mxu0 0.0
      %9184 = vmatpush2.msra.mxu0 0.0
      %9185 = vmatprep.subr.mxu0 0.0
      %9186 = vmatpush2.msra.mxu0 0.0
      %9187 = vmatprep.subr.mxu0 0.0
      %9188 = vmatpush2.msra.mxu0 0.0
      %9189 = vmatprep.subr.mxu0 0.0
      %9190 = vmatpush2.msra.mxu0 0.0
      %9191 = vmatprep.subr.mxu0 0.0
      %9192 = vmatpush2.msra.mxu0 0.0
      %9193 = vmatprep.mubr.f32.mxu0 0.0
      %9194 = vmatmul.mubr.f32.gmra.mxu0 %v9034
      %v9195 = vpop.f32.mrf.mxu0
      %v9196 = vadd.f32 0.0, %v9195
      %v9197 = vpop.f32.mrf.mxu0
      %9198 = vmatprep.mubr.f32.mxu0 0.0
      %9199 = vmatmul.mubr.f32.gmra.mxu0 %v9037
      %v9200 = vpop.f32.mrf.mxu0
      %v9201 = vadd.f32 0.0, %v9200
      %v9202 = vpop.f32.mrf.mxu0
      %9203 = vmatprep.mubr.f32.mxu0 0.0
      %9204 = vmatmul.mubr.f32.gmra.mxu0 %v9040
      %v9205 = vpop.f32.mrf.mxu0
      %v9206 = vadd.f32 0.0, %v9205
      %v9207 = vpop.f32.mrf.mxu0
      %9208 = vmatprep.mubr.f32.mxu0 0.0
      %9209 = vmatmul.mubr.f32.gmra.mxu0 %v9043
      %v9210 = vpop.f32.mrf.mxu0
      %v9211 = vadd.f32 0.0, %v9210
      %v9212 = vpop.f32.mrf.mxu0
      %9213 = vmatprep.mubr.f32.mxu0 0.0
      %9214 = vmatmul.mubr.f32.gmra.mxu0 %v9046
      %v9215 = vpop.f32.mrf.mxu0
      %v9216 = vadd.f32 0.0, %v9215
      %v9217 = vpop.f32.mrf.mxu0
      %9218 = vmatprep.mubr.f32.mxu0 0.0
      %9219 = vmatmul.mubr.f32.gmra.mxu0 %v9049
      %v9220 = vpop.f32.mrf.mxu0
      %v9221 = vadd.f32 0.0, %v9220
      %v9222 = vpop.f32.mrf.mxu0
      %9223 = vmatprep.mubr.f32.mxu0 0.0
      %9224 = vmatmul.mubr.f32.gmra.mxu0 %v9052
      %v9225 = vpop.f32.mrf.mxu0
      %v9226 = vadd.f32 0.0, %v9225
      %v9227 = vpop.f32.mrf.mxu0
      %9228 = vmatprep.mubr.f32.mxu0 0.0
      %9229 = vmatmul.mubr.f32.gmra.mxu0 %v9055
      %v9230 = vpop.f32.mrf.mxu0
      %v9231 = vadd.f32 0.0, %v9230
      %v9232 = vpop.f32.mrf.mxu0
      %9233 = vmatprep.mubr.f32.mxu0 0.0
      %9234 = vmatmul.mubr.f32.gmra.mxu0 %v9058
      %v9235 = vpop.f32.mrf.mxu0
      %v9236 = vadd.f32 0.0, %v9235
      %v9237 = vpop.f32.mrf.mxu0
      %9238 = vmatprep.mubr.f32.mxu0 0.0
      %9239 = vmatmul.mubr.f32.gmra.mxu0 %v9061
      %v9240 = vpop.f32.mrf.mxu0
      %v9241 = vadd.f32 0.0, %v9240
      %v9242 = vpop.f32.mrf.mxu0
      %9243 = vmatprep.mubr.f32.mxu0 0.0
      %9244 = vmatmul.mubr.f32.gmra.mxu0 %v9064
      %v9245 = vpop.f32.mrf.mxu0
      %v9246 = vadd.f32 0.0, %v9245
      %v9247 = vpop.f32.mrf.mxu0
      %9248 = vmatprep.mubr.f32.mxu0 0.0
      %9249 = vmatmul.mubr.f32.gmra.mxu0 %v9067
      %v9250 = vpop.f32.mrf.mxu0
      %v9251 = vadd.f32 0.0, %v9250
      %v9252 = vpop.f32.mrf.mxu0
      %9253 = vmatprep.mubr.f32.mxu0 0.0
      %9254 = vmatmul.mubr.f32.gmra.mxu0 %v9070
      %v9255 = vpop.f32.mrf.mxu0
      %v9256 = vadd.f32 0.0, %v9255
      %v9257 = vpop.f32.mrf.mxu0
      %9258 = vmatprep.mubr.f32.mxu0 0.0
      %9259 = vmatmul.mubr.f32.gmra.mxu0 %v9073
      %v9260 = vpop.f32.mrf.mxu0
      %v9261 = vadd.f32 0.0, %v9260
      %v9262 = vpop.f32.mrf.mxu0
      %9263 = vmatprep.mubr.f32.mxu0 0.0
      %9264 = vmatmul.mubr.f32.gmra.mxu0 %v9076
      %v9265 = vpop.f32.mrf.mxu0
      %v9266 = vadd.f32 0.0, %v9265
      %v9267 = vpop.f32.mrf.mxu0
      %9268 = vmatprep.mubr.f32.mxu0 0.0
      %9269 = vmatmul.mubr.f32.gmra.mxu0 %v9079
      %v9270 = vpop.f32.mrf.mxu0
      %v9271 = vadd.f32 0.0, %v9270
      %v9272 = vpop.f32.mrf.mxu0
      %9273 = vmatprep.mubr.f32.mxu0 0.0
      %9274 = vmatmul.mubr.f32.gmra.mxu0 %v9082
      %v9275 = vpop.f32.mrf.mxu0
      %v9276 = vadd.f32 0.0, %v9275
      %v9277 = vpop.f32.mrf.mxu0
      %9278 = vmatprep.mubr.f32.mxu0 0.0
      %9279 = vmatmul.mubr.f32.gmra.mxu0 %v9085
      %v9280 = vpop.f32.mrf.mxu0
      %v9281 = vadd.f32 0.0, %v9280
      %v9282 = vpop.f32.mrf.mxu0
      %9283 = vmatprep.mubr.f32.mxu0 0.0
      %9284 = vmatmul.mubr.f32.gmra.mxu0 %v9088
      %v9285 = vpop.f32.mrf.mxu0
      %v9286 = vadd.f32 0.0, %v9285
      %v9287 = vpop.f32.mrf.mxu0
      %9288 = vmatprep.mubr.f32.mxu0 0.0
      %9289 = vmatmul.mubr.f32.gmra.mxu0 %v9091
      %v9290 = vpop.f32.mrf.mxu0
      %v9291 = vadd.f32 0.0, %v9290
      %v9292 = vpop.f32.mrf.mxu0
      %9293 = vmatprep.mubr.f32.mxu0 0.0
      %9294 = vmatmul.mubr.f32.gmra.mxu0 %v9094
      %v9295 = vpop.f32.mrf.mxu0
      %v9296 = vadd.f32 0.0, %v9295
      %v9297 = vpop.f32.mrf.mxu0
      %9298 = vmatprep.mubr.f32.mxu0 0.0
      %9299 = vmatmul.mubr.f32.gmra.mxu0 %v9097
      %v9300 = vpop.f32.mrf.mxu0
      %v9301 = vadd.f32 0.0, %v9300
      %v9302 = vpop.f32.mrf.mxu0
      %9303 = vmatprep.mubr.f32.mxu0 0.0
      %9304 = vmatmul.mubr.f32.gmra.mxu0 %v9100
      %v9305 = vpop.f32.mrf.mxu0
      %v9306 = vadd.f32 0.0, %v9305
      %v9307 = vpop.f32.mrf.mxu0
      %9308 = vmatprep.mubr.f32.mxu0 0.0
      %9309 = vmatmul.mubr.f32.gmra.mxu0 %v9103
      %v9310 = vpop.f32.mrf.mxu0
      %v9311 = vadd.f32 0.0, %v9310
      %v9312 = vpop.f32.mrf.mxu0
      %9313 = vmatprep.mubr.f32.mxu0 0.0
      %9314 = vmatmul.mubr.f32.gmra.mxu0 %v9106
      %v9315 = vpop.f32.mrf.mxu0
      %v9316 = vadd.f32 0.0, %v9315
      %v9317 = vpop.f32.mrf.mxu0
      %9318 = vmatprep.mubr.f32.mxu0 0.0
      %9319 = vmatmul.mubr.f32.gmra.mxu0 %v9109
      %v9320 = vpop.f32.mrf.mxu0
      %v9321 = vadd.f32 0.0, %v9320
      %v9322 = vpop.f32.mrf.mxu0
      %9323 = vmatprep.mubr.f32.mxu0 0.0
      %9324 = vmatmul.mubr.f32.gmra.mxu0 %v9112
      %v9325 = vpop.f32.mrf.mxu0
      %v9326 = vadd.f32 0.0, %v9325
      %v9327 = vpop.f32.mrf.mxu0
      %9328 = vmatprep.mubr.f32.mxu0 0.0
      %9329 = vmatmul.mubr.f32.gmra.mxu0 %v9115
      %v9330 = vpop.f32.mrf.mxu0
      %v9331 = vadd.f32 0.0, %v9330
      %v9332 = vpop.f32.mrf.mxu0
      %9333 = vmatprep.mubr.f32.mxu0 0.0
      %9334 = vmatmul.mubr.f32.gmra.mxu0 %v9118
      %v9335 = vpop.f32.mrf.mxu0
      %v9336 = vadd.f32 0.0, %v9335
      %v9337 = vpop.f32.mrf.mxu0
      %9338 = vmatprep.mubr.f32.mxu0 0.0
      %9339 = vmatmul.mubr.f32.gmra.mxu0 %v9121
      %v9340 = vpop.f32.mrf.mxu0
      %v9341 = vadd.f32 0.0, %v9340
      %v9342 = vpop.f32.mrf.mxu0
      %9343 = vmatprep.mubr.f32.mxu0 0.0
      %9344 = vmatmul.mubr.f32.gmra.mxu0 %v9124
      %v9345 = vpop.f32.mrf.mxu0
      %v9346 = vadd.f32 0.0, %v9345
      %v9347 = vpop.f32.mrf.mxu0
      %9348 = vmatprep.mubr.f32.mxu0 0.0
      %9349 = vmatmul.mubr.f32.gmra.mxu0 %v9127
      %v9350 = vpop.f32.mrf.mxu0
      %v9351 = vadd.f32 0.0, %v9350
      %v9352 = vpop.f32.mrf.mxu0
      %9353 = vdwg.mxu0
      %v9354 = vadd.f32 %v8967, %v9196
      %v9355 = vadd.f32 %v8968, %v9201
      %v9356 = vadd.f32 %v8969, %v9206
      %v9357 = vadd.f32 %v8970, %v9211
      %v9358 = vadd.f32 %v8971, %v9216
      %v9359 = vadd.f32 %v8972, %v9221
      %v9360 = vadd.f32 %v8973, %v9226
      %v9361 = vadd.f32 %v8974, %v9231
      %v9362 = vadd.f32 %v8975, %v9236
      %v9363 = vadd.f32 %v8976, %v9241
      %v9364 = vadd.f32 %v8977, %v9246
      %v9365 = vadd.f32 %v8978, %v9251
      %v9366 = vadd.f32 %v8979, %v9256
      %v9367 = vadd.f32 %v8980, %v9261
      %v9368 = vadd.f32 %v8981, %v9266
      %v9369 = vadd.f32 %v8982, %v9271
      %v9370 = vadd.f32 %v8983, %v9276
      %v9371 = vadd.f32 %v8984, %v9281
      %v9372 = vadd.f32 %v8985, %v9286
      %v9373 = vadd.f32 %v8986, %v9291
      %v9374 = vadd.f32 %v8987, %v9296
      %v9375 = vadd.f32 %v8988, %v9301
      %v9376 = vadd.f32 %v8989, %v9306
      %v9377 = vadd.f32 %v8990, %v9311
      %v9378 = vadd.f32 %v8991, %v9316
      %v9379 = vadd.f32 %v8992, %v9321
      %v9380 = vadd.f32 %v8993, %v9326
      %v9381 = vadd.f32 %v8994, %v9331
      %v9382 = vadd.f32 %v8995, %v9336
      %v9383 = vadd.f32 %v8996, %v9341
      %v9384 = vadd.f32 %v8997, %v9346
      %v9385 = vadd.f32 %v8998, %v9351
      %v9386 = vld [vmem:[%s13] sm:$0x1]
      %v9388 = vlaneseq
      %v9389 = vshrl.u32 %v9388, 7
      %v9390 = vsub.s32 0, %v9389
      %v9391 = vrot.slane %v9386, %v9390
      %v9393 = vadd.f32 %v9354, %v9391
      %v9394 = vadd.f32 %v9355, %v9391
      %v9395 = vadd.f32 %v9356, %v9391
      %v9396 = vadd.f32 %v9357, %v9391
      %v9397 = vadd.f32 %v9358, %v9391
      %v9398 = vadd.f32 %v9359, %v9391
      %v9399 = vadd.f32 %v9360, %v9391
      %v9400 = vadd.f32 %v9361, %v9391
      %v9401 = vadd.f32 %v9362, %v9391
      %v9402 = vadd.f32 %v9363, %v9391
      %v9403 = vadd.f32 %v9364, %v9391
      %v9404 = vadd.f32 %v9365, %v9391
      %v9405 = vadd.f32 %v9366, %v9391
      %v9406 = vadd.f32 %v9367, %v9391
      %v9407 = vadd.f32 %v9368, %v9391
      %v9408 = vadd.f32 %v9369, %v9391
      %v9409 = vadd.f32 %v9370, %v9391
      %v9410 = vadd.f32 %v9371, %v9391
      %v9411 = vadd.f32 %v9372, %v9391
      %v9412 = vadd.f32 %v9373, %v9391
      %v9413 = vadd.f32 %v9374, %v9391
      %v9414 = vadd.f32 %v9375, %v9391
      %v9415 = vadd.f32 %v9376, %v9391
      %v9416 = vadd.f32 %v9377, %v9391
      %v9417 = vadd.f32 %v9378, %v9391
      %v9418 = vadd.f32 %v9379, %v9391
      %v9419 = vadd.f32 %v9380, %v9391
      %v9420 = vadd.f32 %v9381, %v9391
      %v9421 = vadd.f32 %v9382, %v9391
      %v9422 = vadd.f32 %v9383, %v9391
      %v9423 = vadd.f32 %v9384, %v9391
      %v9424 = vadd.f32 %v9385, %v9391
      %v9425 = vld [vmem:[%s14] sm:$0xf]
      %v9426 = vld [vmem:[%s15] sm:$0x1]
      %v9428 = vlaneseq
      %v9429 = vshrl.u32 %v9428, 7
      %v9430 = vsub.s32 0, %v9429
      %v9431 = vrot.slane %v9426, %v9430
      %v9434 = vsel %vm572, %v536, 0
      %v9437 = vsel %vm572, %v537, 0
      %v9440 = vsel %vm572, %v538, 0
      %v9443 = vsel %vm572, %v539, 0
      %v9446 = vsel %vm572, %v540, 0
      %v9449 = vsel %vm572, %v541, 0
      %v9452 = vsel %vm572, %v542, 0
      %v9455 = vsel %vm572, %v543, 0
      %v9458 = vsel %vm572, %v544, 0
      %v9461 = vsel %vm572, %v545, 0
      %v9464 = vsel %vm572, %v546, 0
      %v9467 = vsel %vm572, %v547, 0
      %v9470 = vsel %vm572, %v548, 0
      %v9473 = vsel %vm572, %v549, 0
      %v9476 = vsel %vm572, %v550, 0
      %v9479 = vsel %vm572, %v551, 0
      %v9482 = vsel %vm572, %v552, 0
      %v9485 = vsel %vm572, %v553, 0
      %v9488 = vsel %vm572, %v554, 0
      %v9491 = vsel %vm572, %v555, 0
      %v9494 = vsel %vm572, %v556, 0
      %v9497 = vsel %vm572, %v557, 0
      %v9500 = vsel %vm572, %v558, 0
      %v9503 = vsel %vm572, %v559, 0
      %v9506 = vsel %vm572, %v560, 0
      %v9509 = vsel %vm572, %v561, 0
      %v9512 = vsel %vm572, %v562, 0
      %v9515 = vsel %vm572, %v563, 0
      %v9518 = vsel %vm572, %v564, 0
      %v9521 = vsel %vm572, %v565, 0
      %v9524 = vsel %vm572, %v566, 0
      %v9527 = vsel %vm572, %v567, 0
      %v9530 = vsel %vm647, %v9425, 0
      %9532 = vmatprep.subr.mxu0 0.0
      %9533 = vmatpush1.msra.mxu0 0.0
      %9534 = vmatprep.subr.mxu0 0.0
      %9535 = vmatpush1.msra.mxu0 0.0
      %9536 = vmatprep.subr.mxu0 0.0
      %9537 = vmatpush1.msra.mxu0 0.0
      %9538 = vmatprep.subr.mxu0 0.0
      %9539 = vmatpush1.msra.mxu0 0.0
      %9540 = vmatprep.subr.mxu0 0.0
      %9541 = vmatpush1.msra.mxu0 0.0
      %9542 = vmatprep.subr.mxu0 0.0
      %9543 = vmatpush1.msra.mxu0 0.0
      %9544 = vmatprep.subr.mxu0 0.0
      %9545 = vmatpush1.msra.mxu0 0.0
      %9546 = vmatprep.subr.mxu0 0.0
      %9547 = vmatpush1.msra.mxu0 0.0
      %9548 = vmatprep.subr.mxu0 0.0
      %9549 = vmatpush1.msra.mxu0 0.0
      %9550 = vmatprep.subr.mxu0 0.0
      %9551 = vmatpush1.msra.mxu0 0.0
      %9552 = vmatprep.subr.mxu0 0.0
      %9553 = vmatpush1.msra.mxu0 0.0
      %9554 = vmatprep.subr.mxu0 0.0
      %9555 = vmatpush1.msra.mxu0 0.0
      %9556 = vmatprep.subr.mxu0 0.0
      %9557 = vmatpush1.msra.mxu0 0.0
      %9558 = vmatprep.subr.mxu0 0.0
      %9559 = vmatpush1.msra.mxu0 0.0
      %9560 = vmatprep.subr.mxu0 0.0
      %9561 = vmatpush1.msra.mxu0 0.0
      %9562 = vmatprep.subr.mxu0 0.0
      %9563 = vmatpush1.msra.mxu0 %v9530
      %9564 = vmatprep.subr.mxu0 0.0
      %9565 = vmatpush2.msra.mxu0 0.0
      %9566 = vmatprep.subr.mxu0 0.0
      %9567 = vmatpush2.msra.mxu0 0.0
      %9568 = vmatprep.subr.mxu0 0.0
      %9569 = vmatpush2.msra.mxu0 0.0
      %9570 = vmatprep.subr.mxu0 0.0
      %9571 = vmatpush2.msra.mxu0 0.0
      %9572 = vmatprep.subr.mxu0 0.0
      %9573 = vmatpush2.msra.mxu0 0.0
      %9574 = vmatprep.subr.mxu0 0.0
      %9575 = vmatpush2.msra.mxu0 0.0
      %9576 = vmatprep.subr.mxu0 0.0
      %9577 = vmatpush2.msra.mxu0 0.0
      %9578 = vmatprep.subr.mxu0 0.0
      %9579 = vmatpush2.msra.mxu0 0.0
      %9580 = vmatprep.subr.mxu0 0.0
      %9581 = vmatpush2.msra.mxu0 0.0
      %9582 = vmatprep.subr.mxu0 0.0
      %9583 = vmatpush2.msra.mxu0 0.0
      %9584 = vmatprep.subr.mxu0 0.0
      %9585 = vmatpush2.msra.mxu0 0.0
      %9586 = vmatprep.subr.mxu0 0.0
      %9587 = vmatpush2.msra.mxu0 0.0
      %9588 = vmatprep.subr.mxu0 0.0
      %9589 = vmatpush2.msra.mxu0 0.0
      %9590 = vmatprep.subr.mxu0 0.0
      %9591 = vmatpush2.msra.mxu0 0.0
      %9592 = vmatprep.subr.mxu0 0.0
      %9593 = vmatpush2.msra.mxu0 0.0
      %9594 = vmatprep.subr.mxu0 0.0
      %9595 = vmatpush2.msra.mxu0 0.0
      %9596 = vmatprep.mubr.f32.mxu0 0.0
      %9597 = vmatmul.mubr.f32.gmra.mxu0 %v9434
      %v9598 = vpop.f32.mrf.mxu0
      %v9599 = vadd.f32 %v9431, %v9598
      %v9600 = vpop.f32.mrf.mxu0
      %9601 = vmatprep.mubr.f32.mxu0 0.0
      %9602 = vmatmul.mubr.f32.gmra.mxu0 %v9437
      %v9603 = vpop.f32.mrf.mxu0
      %v9604 = vadd.f32 %v9431, %v9603
      %v9605 = vpop.f32.mrf.mxu0
      %9606 = vmatprep.mubr.f32.mxu0 0.0
      %9607 = vmatmul.mubr.f32.gmra.mxu0 %v9440
      %v9608 = vpop.f32.mrf.mxu0
      %v9609 = vadd.f32 %v9431, %v9608
      %v9610 = vpop.f32.mrf.mxu0
      %9611 = vmatprep.mubr.f32.mxu0 0.0
      %9612 = vmatmul.mubr.f32.gmra.mxu0 %v9443
      %v9613 = vpop.f32.mrf.mxu0
      %v9614 = vadd.f32 %v9431, %v9613
      %v9615 = vpop.f32.mrf.mxu0
      %9616 = vmatprep.mubr.f32.mxu0 0.0
      %9617 = vmatmul.mubr.f32.gmra.mxu0 %v9446
      %v9618 = vpop.f32.mrf.mxu0
      %v9619 = vadd.f32 %v9431, %v9618
      %v9620 = vpop.f32.mrf.mxu0
      %9621 = vmatprep.mubr.f32.mxu0 0.0
      %9622 = vmatmul.mubr.f32.gmra.mxu0 %v9449
      %v9623 = vpop.f32.mrf.mxu0
      %v9624 = vadd.f32 %v9431, %v9623
      %v9625 = vpop.f32.mrf.mxu0
      %9626 = vmatprep.mubr.f32.mxu0 0.0
      %9627 = vmatmul.mubr.f32.gmra.mxu0 %v9452
      %v9628 = vpop.f32.mrf.mxu0
      %v9629 = vadd.f32 %v9431, %v9628
      %v9630 = vpop.f32.mrf.mxu0
      %9631 = vmatprep.mubr.f32.mxu0 0.0
      %9632 = vmatmul.mubr.f32.gmra.mxu0 %v9455
      %v9633 = vpop.f32.mrf.mxu0
      %v9634 = vadd.f32 %v9431, %v9633
      %v9635 = vpop.f32.mrf.mxu0
      %9636 = vmatprep.mubr.f32.mxu0 0.0
      %9637 = vmatmul.mubr.f32.gmra.mxu0 %v9458
      %v9638 = vpop.f32.mrf.mxu0
      %v9639 = vadd.f32 %v9431, %v9638
      %v9640 = vpop.f32.mrf.mxu0
      %9641 = vmatprep.mubr.f32.mxu0 0.0
      %9642 = vmatmul.mubr.f32.gmra.mxu0 %v9461
      %v9643 = vpop.f32.mrf.mxu0
      %v9644 = vadd.f32 %v9431, %v9643
      %v9645 = vpop.f32.mrf.mxu0
      %9646 = vmatprep.mubr.f32.mxu0 0.0
      %9647 = vmatmul.mubr.f32.gmra.mxu0 %v9464
      %v9648 = vpop.f32.mrf.mxu0
      %v9649 = vadd.f32 %v9431, %v9648
      %v9650 = vpop.f32.mrf.mxu0
      %9651 = vmatprep.mubr.f32.mxu0 0.0
      %9652 = vmatmul.mubr.f32.gmra.mxu0 %v9467
      %v9653 = vpop.f32.mrf.mxu0
      %v9654 = vadd.f32 %v9431, %v9653
      %v9655 = vpop.f32.mrf.mxu0
      %9656 = vmatprep.mubr.f32.mxu0 0.0
      %9657 = vmatmul.mubr.f32.gmra.mxu0 %v9470
      %v9658 = vpop.f32.mrf.mxu0
      %v9659 = vadd.f32 %v9431, %v9658
      %v9660 = vpop.f32.mrf.mxu0
      %9661 = vmatprep.mubr.f32.mxu0 0.0
      %9662 = vmatmul.mubr.f32.gmra.mxu0 %v9473
      %v9663 = vpop.f32.mrf.mxu0
      %v9664 = vadd.f32 %v9431, %v9663
      %v9665 = vpop.f32.mrf.mxu0
      %9666 = vmatprep.mubr.f32.mxu0 0.0
      %9667 = vmatmul.mubr.f32.gmra.mxu0 %v9476
      %v9668 = vpop.f32.mrf.mxu0
      %v9669 = vadd.f32 %v9431, %v9668
      %v9670 = vpop.f32.mrf.mxu0
      %9671 = vmatprep.mubr.f32.mxu0 0.0
      %9672 = vmatmul.mubr.f32.gmra.mxu0 %v9479
      %v9673 = vpop.f32.mrf.mxu0
      %v9674 = vadd.f32 %v9431, %v9673
      %v9675 = vpop.f32.mrf.mxu0
      %9676 = vmatprep.mubr.f32.mxu0 0.0
      %9677 = vmatmul.mubr.f32.gmra.mxu0 %v9482
      %v9678 = vpop.f32.mrf.mxu0
      %v9679 = vadd.f32 %v9431, %v9678
      %v9680 = vpop.f32.mrf.mxu0
      %9681 = vmatprep.mubr.f32.mxu0 0.0
      %9682 = vmatmul.mubr.f32.gmra.mxu0 %v9485
      %v9683 = vpop.f32.mrf.mxu0
      %v9684 = vadd.f32 %v9431, %v9683
      %v9685 = vpop.f32.mrf.mxu0
      %9686 = vmatprep.mubr.f32.mxu0 0.0
      %9687 = vmatmul.mubr.f32.gmra.mxu0 %v9488
      %v9688 = vpop.f32.mrf.mxu0
      %v9689 = vadd.f32 %v9431, %v9688
      %v9690 = vpop.f32.mrf.mxu0
      %9691 = vmatprep.mubr.f32.mxu0 0.0
      %9692 = vmatmul.mubr.f32.gmra.mxu0 %v9491
      %v9693 = vpop.f32.mrf.mxu0
      %v9694 = vadd.f32 %v9431, %v9693
      %v9695 = vpop.f32.mrf.mxu0
      %9696 = vmatprep.mubr.f32.mxu0 0.0
      %9697 = vmatmul.mubr.f32.gmra.mxu0 %v9494
      %v9698 = vpop.f32.mrf.mxu0
      %v9699 = vadd.f32 %v9431, %v9698
      %v9700 = vpop.f32.mrf.mxu0
      %9701 = vmatprep.mubr.f32.mxu0 0.0
      %9702 = vmatmul.mubr.f32.gmra.mxu0 %v9497
      %v9703 = vpop.f32.mrf.mxu0
      %v9704 = vadd.f32 %v9431, %v9703
      %v9705 = vpop.f32.mrf.mxu0
      %9706 = vmatprep.mubr.f32.mxu0 0.0
      %9707 = vmatmul.mubr.f32.gmra.mxu0 %v9500
      %v9708 = vpop.f32.mrf.mxu0
      %v9709 = vadd.f32 %v9431, %v9708
      %v9710 = vpop.f32.mrf.mxu0
      %9711 = vmatprep.mubr.f32.mxu0 0.0
      %9712 = vmatmul.mubr.f32.gmra.mxu0 %v9503
      %v9713 = vpop.f32.mrf.mxu0
      %v9714 = vadd.f32 %v9431, %v9713
      %v9715 = vpop.f32.mrf.mxu0
      %9716 = vmatprep.mubr.f32.mxu0 0.0
      %9717 = vmatmul.mubr.f32.gmra.mxu0 %v9506
      %v9718 = vpop.f32.mrf.mxu0
      %v9719 = vadd.f32 %v9431, %v9718
      %v9720 = vpop.f32.mrf.mxu0
      %9721 = vmatprep.mubr.f32.mxu0 0.0
      %9722 = vmatmul.mubr.f32.gmra.mxu0 %v9509
      %v9723 = vpop.f32.mrf.mxu0
      %v9724 = vadd.f32 %v9431, %v9723
      %v9725 = vpop.f32.mrf.mxu0
      %9726 = vmatprep.mubr.f32.mxu0 0.0
      %9727 = vmatmul.mubr.f32.gmra.mxu0 %v9512
      %v9728 = vpop.f32.mrf.mxu0
      %v9729 = vadd.f32 %v9431, %v9728
      %v9730 = vpop.f32.mrf.mxu0
      %9731 = vmatprep.mubr.f32.mxu0 0.0
      %9732 = vmatmul.mubr.f32.gmra.mxu0 %v9515
      %v9733 = vpop.f32.mrf.mxu0
      %v9734 = vadd.f32 %v9431, %v9733
      %v9735 = vpop.f32.mrf.mxu0
      %9736 = vmatprep.mubr.f32.mxu0 0.0
      %9737 = vmatmul.mubr.f32.gmra.mxu0 %v9518
      %v9738 = vpop.f32.mrf.mxu0
      %v9739 = vadd.f32 %v9431, %v9738
      %v9740 = vpop.f32.mrf.mxu0
      %9741 = vmatprep.mubr.f32.mxu0 0.0
      %9742 = vmatmul.mubr.f32.gmra.mxu0 %v9521
      %v9743 = vpop.f32.mrf.mxu0
      %v9744 = vadd.f32 %v9431, %v9743
      %v9745 = vpop.f32.mrf.mxu0
      %9746 = vmatprep.mubr.f32.mxu0 0.0
      %9747 = vmatmul.mubr.f32.gmra.mxu0 %v9524
      %v9748 = vpop.f32.mrf.mxu0
      %v9749 = vadd.f32 %v9431, %v9748
      %v9750 = vpop.f32.mrf.mxu0
      %9751 = vmatprep.mubr.f32.mxu0 0.0
      %9752 = vmatmul.mubr.f32.gmra.mxu0 %v9527
      %v9753 = vpop.f32.mrf.mxu0
      %v9754 = vadd.f32 %v9431, %v9753
      %v9755 = vpop.f32.mrf.mxu0
      %9756 = vdwg.mxu0
      %v9757 = vadd.f32 %v9599, %v9393
      %v9758 = vadd.f32 %v9604, %v9394
      %v9759 = vadd.f32 %v9609, %v9395
      %v9760 = vadd.f32 %v9614, %v9396
      %v9761 = vadd.f32 %v9619, %v9397
      %v9762 = vadd.f32 %v9624, %v9398
      %v9763 = vadd.f32 %v9629, %v9399
      %v9764 = vadd.f32 %v9634, %v9400
      %v9765 = vadd.f32 %v9639, %v9401
      %v9766 = vadd.f32 %v9644, %v9402
      %v9767 = vadd.f32 %v9649, %v9403
      %v9768 = vadd.f32 %v9654, %v9404
      %v9769 = vadd.f32 %v9659, %v9405
      %v9770 = vadd.f32 %v9664, %v9406
      %v9771 = vadd.f32 %v9669, %v9407
      %v9772 = vadd.f32 %v9674, %v9408
      %v9773 = vadd.f32 %v9679, %v9409
      %v9774 = vadd.f32 %v9684, %v9410
      %v9775 = vadd.f32 %v9689, %v9411
      %v9776 = vadd.f32 %v9694, %v9412
      %v9777 = vadd.f32 %v9699, %v9413
      %v9778 = vadd.f32 %v9704, %v9414
      %v9779 = vadd.f32 %v9709, %v9415
      %v9780 = vadd.f32 %v9714, %v9416
      %v9781 = vadd.f32 %v9719, %v9417
      %v9782 = vadd.f32 %v9724, %v9418
      %v9783 = vadd.f32 %v9729, %v9419
      %v9784 = vadd.f32 %v9734, %v9420
      %v9785 = vadd.f32 %v9739, %v9421
      %v9786 = vadd.f32 %v9744, %v9422
      %v9787 = vadd.f32 %v9749, %v9423
      %v9788 = vadd.f32 %v9754, %v9424
      %v9789 = vmul.f32 %v9757, 0.70710677
      %v9790 = vmul.f32 %v9758, 0.70710677
      %v9791 = vmul.f32 %v9759, 0.70710677
      %v9792 = vmul.f32 %v9760, 0.70710677
      %v9793 = vmul.f32 %v9761, 0.70710677
      %v9794 = vmul.f32 %v9762, 0.70710677
      %v9795 = vmul.f32 %v9763, 0.70710677
      %v9796 = vmul.f32 %v9764, 0.70710677
      %v9797 = vmul.f32 %v9765, 0.70710677
      %v9798 = vmul.f32 %v9766, 0.70710677
      %v9799 = vmul.f32 %v9767, 0.70710677
      %v9800 = vmul.f32 %v9768, 0.70710677
      %v9801 = vmul.f32 %v9769, 0.70710677
      %v9802 = vmul.f32 %v9770, 0.70710677
      %v9803 = vmul.f32 %v9771, 0.70710677
      %v9804 = vmul.f32 %v9772, 0.70710677
      %v9805 = vmul.f32 %v9773, 0.70710677
      %v9806 = vmul.f32 %v9774, 0.70710677
      %v9807 = vmul.f32 %v9775, 0.70710677
      %v9808 = vmul.f32 %v9776, 0.70710677
      %v9809 = vmul.f32 %v9777, 0.70710677
      %v9810 = vmul.f32 %v9778, 0.70710677
      %v9811 = vmul.f32 %v9779, 0.70710677
      %v9812 = vmul.f32 %v9780, 0.70710677
      %v9813 = vmul.f32 %v9781, 0.70710677
      %v9814 = vmul.f32 %v9782, 0.70710677
      %v9815 = vmul.f32 %v9783, 0.70710677
      %v9816 = vmul.f32 %v9784, 0.70710677
      %v9817 = vmul.f32 %v9785, 0.70710677
      %v9818 = vmul.f32 %v9786, 0.70710677
      %v9819 = vmul.f32 %v9787, 0.70710677
      %v9820 = vmul.f32 %v9788, 0.70710677
      %9821 = vst.msk [vmem:[%s535] sm:$0xff] %vm5036, %v9789
      %9822 = vst.msk [vmem:[%s535 + $0x8] sm:$0xff] %vm5036, %v9790
      %9823 = vst.msk [vmem:[%s535 + $0x10] sm:$0xff] %vm5036, %v9791
      %9824 = vst.msk [vmem:[%s535 + $0x18] sm:$0xff] %vm5036, %v9792
      %9825 = vst.msk [vmem:[%s535 + $0x20] sm:$0xff] %vm5036, %v9793
      %9826 = vst.msk [vmem:[%s535 + $0x28] sm:$0xff] %vm5036, %v9794
      %9827 = vst.msk [vmem:[%s535 + $0x30] sm:$0xff] %vm5036, %v9795
      %9828 = vst.msk [vmem:[%s535 + $0x38] sm:$0xff] %vm5036, %v9796
      %9829 = vst.msk [vmem:[%s535 + $0x40] sm:$0xff] %vm5036, %v9797
      %9830 = vst.msk [vmem:[%s535 + $0x48] sm:$0xff] %vm5036, %v9798
      %9831 = vst.msk [vmem:[%s535 + $0x50] sm:$0xff] %vm5036, %v9799
      %9832 = vst.msk [vmem:[%s535 + $0x58] sm:$0xff] %vm5036, %v9800
      %9833 = vst.msk [vmem:[%s535 + $0x60] sm:$0xff] %vm5036, %v9801
      %9834 = vst.msk [vmem:[%s535 + $0x68] sm:$0xff] %vm5036, %v9802
      %9835 = vst.msk [vmem:[%s535 + $0x70] sm:$0xff] %vm5036, %v9803
      %9836 = vst.msk [vmem:[%s535 + $0x78] sm:$0xff] %vm5036, %v9804
      %9837 = vst.msk [vmem:[%s535 + $0x80] sm:$0xff] %vm5036, %v9805
      %9838 = vst.msk [vmem:[%s535 + $0x88] sm:$0xff] %vm5036, %v9806
      %9839 = vst.msk [vmem:[%s535 + $0x90] sm:$0xff] %vm5036, %v9807
      %9840 = vst.msk [vmem:[%s535 + $0x98] sm:$0xff] %vm5036, %v9808
      %9841 = vst.msk [vmem:[%s535 + $0xa0] sm:$0xff] %vm5036, %v9809
      %9842 = vst.msk [vmem:[%s535 + $0xa8] sm:$0xff] %vm5036, %v9810
      %9843 = vst.msk [vmem:[%s535 + $0xb0] sm:$0xff] %vm5036, %v9811
      %9844 = vst.msk [vmem:[%s535 + $0xb8] sm:$0xff] %vm5036, %v9812
      %9845 = vst.msk [vmem:[%s535 + $0xc0] sm:$0xff] %vm5036, %v9813
      %9846 = vst.msk [vmem:[%s535 + $0xc8] sm:$0xff] %vm5036, %v9814
      %9847 = vst.msk [vmem:[%s535 + $0xd0] sm:$0xff] %vm5036, %v9815
      %9848 = vst.msk [vmem:[%s535 + $0xd8] sm:$0xff] %vm5036, %v9816
      %9849 = vst.msk [vmem:[%s535 + $0xe0] sm:$0xff] %vm5036, %v9817
      %9850 = vst.msk [vmem:[%s535 + $0xe8] sm:$0xff] %vm5036, %v9818
      %9851 = vst.msk [vmem:[%s535 + $0xf0] sm:$0xff] %vm5036, %v9819
      %9852 = vst.msk [vmem:[%s535 + $0xf8] sm:$0xff] %vm5036, %v9820
      %p9853 = scmp.lt.s32.totalorder %s27, 1
      %s9854 = scalar_select %p9853, %s27, 1
      %s9855 = smul.addr %s9854, 32
      %s9856 = smul.addr %s9855, 8
      %s9857 = scalar_lea.vmem %s16, %s9856
      // Predicated region
      $region85: #{tpu_custom_call.1} parent=83 // pred_check
        %p9858 = pneg %p391
      $region86: #{tpu_custom_call.1} parent=83 // pred_check_branch
        %9860 = sbr.rel (%p9858) target = $region88
      $region87: #{tpu_custom_call.1} parent=83 // pred_region
        _
      $region88: #{tpu_custom_call.1} parent=83 // pred_fallthru
        _
    $region84: #{tpu_custom_call.1} parent=5 // pred_fallthru
      _
    %p9861 = scmp.le.s32.totalorder 2, %s22
    // Predicated region
    $region89: #{tpu_custom_call.1} parent=5 // pred_check
      %p9862 = pneg %p9861
    $region90: #{tpu_custom_call.1} parent=5 // pred_check_branch
      %9864 = sbr.rel (%p9862) target = $region92
    $region91: #{tpu_custom_call.1} parent=5 // pred_region
      %s9865 = ssub.s32 %s22, 2
      // Predicated region
      $region93: #{tpu_custom_call.1} parent=91 // pred_check
        %p9866 = pneg %p397
      $region94: #{tpu_custom_call.1} parent=91 // pred_check_branch
        %9868 = sbr.rel (%p9866) target = $region96
      $region95: #{tpu_custom_call.1} parent=91 // pred_region
        %p9869 = scmp.lt.s32.totalorder %s28, 1
        %s9870 = scalar_select %p9869, %s28, 1
        %s9871 = smul.addr %s9870, 32
        %s9872 = smul.addr %s9871, 8
        %s9873 = scalar_lea.vmem %s16, %s9872
      $region96: #{tpu_custom_call.1} parent=91 // pred_fallthru
        _
    $region92: #{tpu_custom_call.1} parent=5 // pred_fallthru
      _
  $region6: #{tpu_custom_call.1} parent=0 // loop_footer
    %s26 = sadd.s32 1, %s22
  $region7: #{tpu_custom_call.1} parent=0 // loop_footer_branch
    %21 = sbr.rel target = $region3
  $region8: #{tpu_custom_call.1} parent=0 // loop_exit
    _

</llo_original>
